<compile_context>
chip_gen: v7x
topology: tpu7x:2x2x1
jax: 0.10.0
libtpu: 0.0.40
codegen_flags: <defaults>
</compile_context>

<pallas_src>
import functools

import jax
import jax.numpy as jnp
from jax import lax
from jax.experimental import pallas as pl
from jax.experimental.pallas import tpu as pltpu

# ---- model hyperparameters (small, consistent with the module's forward) ----
HIDDEN = 128       # hidden_size (lane-aligned; module default is 1024)
VOCAB = 64         # input_size (N_CHAR stand-in)
N_LAYERS = 4       # n_layers (module default)
BATCH = 8          # N (multiple of 8 -> sublane-aligned (N, H) slices)
SEQ = 7            # L  (forward prepends start codon -> T = L + 1)
T = SEQ + 1
VPAD = ((VOCAB + 127) // 128) * 128   # lane-dense fc output width (64 -> 128)


def _gru_fc_kernel(x_ref, w_cat_ref, b_cat_ref, w_fc_ref, b_fc_ref,
                   out_ref, seq_ref, *, n_batch, n_steps):
    """Single invocation: wavefront 4-layer GRU over all T timesteps + fc projection.

    Shapes seen by the kernel (all resident in VMEM, ~2.3 MiB total):
      x_ref    : (T*N, H)        embedded inputs, time-major, flattened over (T, N)
      w_cat_ref: (L, 2H, 4H)     fused [W_ih; W_hh] per layer, columns [r|z|n_i|n_h]
      b_cat_ref: (L, N, 4H)      fused bias, pre-broadcast over batch
      w_fc_ref : (H, VPAD)       fc weight, output dim padded to 128 lanes
      b_fc_ref : (1, VPAD)
      out_ref  : (T*N, VPAD)     logits (lane-dense slab)
      seq_ref  : (T*N, H) f32    scratch: final layer's output sequence
    """
    H = x_ref.shape[1]
    N = n_batch
    T_ = n_steps
    L = w_cat_ref.shape[0]

    # Per-layer hidden state (lives in vregs: L x (8,128) f32 = 4 vregs total).
    h = [jnp.zeros((N, H), jnp.float32) for _ in range(L)]
    # Output of layer l-1 at the time index layer l needs next wave.
    layer_in = [None] * L

    # Anti-diagonal wavefront: wave w processes every cell with layer + t == w.
    # All cells within a wave are data-independent -> their matmuls pipeline on
    # the MXU; serial depth is L + T - 1 = 11 instead of L * T = 32.
    for w in range(T_ + L - 1):                 # static, unrolled (11 waves)
        next_in = [None] * L
        for layer in range(L):                  # static, unrolled (<=4 cells/wave)
            t = w - layer
            if t < 0 or t >= T_:
                continue
            x_in = x_ref[t * N:(t + 1) * N, :] if layer == 0 else layer_in[layer]
            xh = jnp.concatenate([x_in, h[layer]], axis=1)          # (N, 2H)
            g = jnp.dot(xh, w_cat_ref[layer],
                        preferred_element_type=jnp.float32)         # (N, 4H)
            g = g + b_cat_ref[layer]                                 # biases pre-folded
            # columns: [gi_r+gh_r | gi_z+gh_z | gi_n | gh_n]  (PyTorch gate order)
            r = jax.nn.sigmoid(g[:, 0:H])
            z = jax.nn.sigmoid(g[:, H:2 * H])
            n = jnp.tanh(g[:, 2 * H:3 * H] + r * g[:, 3 * H:4 * H])
            h_new = (1.0 - z) * n + z * h[layer]
            h[layer] = h_new
            if layer + 1 < L:
                next_in[layer + 1] = h_new      # stays in vregs, consumed next wave
            else:
                seq_ref[t * N:(t + 1) * N, :] = h_new   # final layer -> VMEM for fc
        layer_in = next_in

    # Batched output projection over all timesteps, single lane-dense store.
    logits = jnp.dot(seq_ref[...], w_fc_ref[...],
                     preferred_element_type=jnp.float32) + b_fc_ref[...]
    out_ref[...] = logits.astype(out_ref.dtype)


def gru_fc_pallas(x_flat, w_cat, b_cat_b, w_fc_pad, b_fc_pad, *, n_batch, n_steps):
    """x_flat: (T*N, H) f32 -> logits slab (T*N, VPAD) f32 via one Pallas call."""
    TN, _ = x_flat.shape
    Vp = w_fc_pad.shape[1]
    H = x_flat.shape[1]
    vmem = pl.BlockSpec(memory_space=pltpu.MemorySpace.VMEM)
    kernel = functools.partial(_gru_fc_kernel, n_batch=n_batch, n_steps=n_steps)
    return pl.pallas_call(
        kernel,
        out_shape=jax.ShapeDtypeStruct((TN, Vp), jnp.float32),
        in_specs=[vmem] * 5,
        out_specs=vmem,
        scratch_shapes=[pltpu.VMEM((TN, H), jnp.float32)],
    )(x_flat, w_cat, b_cat_b, w_fc_pad, b_fc_pad)


def init_params(key):
    """Deterministic synthetic parameters matching the module's shapes."""
    ks = jax.random.split(key, 8)
    k = 1.0 / jnp.sqrt(HIDDEN)
    u = lambda key, shape: jax.random.uniform(key, shape, jnp.float32, -k, k)
    params = {
        "embedding": jax.random.normal(ks[0], (VOCAB, HIDDEN), jnp.float32),
        "start_codon": jnp.zeros((HIDDEN,), jnp.float32),   # nn.Parameter(torch.zeros(1,1,H))
        # GRU weights, PyTorch layout (3H, H) per layer, gate order [r|z|n]
        "w_ih": u(ks[1], (N_LAYERS, 3 * HIDDEN, HIDDEN)),
        "w_hh": u(ks[2], (N_LAYERS, 3 * HIDDEN, HIDDEN)),
        "b_ih": u(ks[3], (N_LAYERS, 3 * HIDDEN)),
        "b_hh": u(ks[4], (N_LAYERS, 3 * HIDDEN)),
        # fc: Linear(H, V) -- PyTorch weight layout (V, H)
        "w_fc": u(ks[5], (VOCAB, HIDDEN)),
        "b_fc": u(ks[6], (VOCAB,)),
    }
    return params


@jax.jit
def druglikeness_forward(tokens, embedding, start_codon,
                         w_ih, w_hh, b_ih, b_hh, w_fc, b_fc):
    """Equivalent of DrugLikeness.forward: tokens (N, L) int32 -> logits (N, L+1, V)."""
    N, L = tokens.shape
    Tn = L + 1
    H = HIDDEN

    # glue: embedding lookup + permute + start-codon concat (like the PyTorch code)
    x = embedding[tokens]                               # (N, L, H)
    x = jnp.transpose(x, (1, 0, 2))                     # (L, N, H)
    sc = jnp.broadcast_to(start_codon[None, None, :], (1, N, H))
    x = jnp.concatenate([sc, x], axis=0)                # (T, N, H)
    x_flat = x.reshape(Tn * N, H)                       # (T*N, H)

    # ---- fused per-layer GRU weights / biases for the wavefront kernel -------
    # W_cat[l] (2H, 4H): rows [x; h], columns [r | z | n_from_x | n_from_h]
    w_ih_t = jnp.transpose(w_ih, (0, 2, 1))             # (L, H, 3H), cols [r|z|n]
    w_hh_t = jnp.transpose(w_hh, (0, 2, 1))             # (L, H, 3H)
    zeros_blk = jnp.zeros((N_LAYERS, H, H), jnp.float32)
    w_cat_top = jnp.concatenate(
        [w_ih_t[:, :, :2 * H], w_ih_t[:, :, 2 * H:], zeros_blk], axis=2)   # (L, H, 4H)
    w_cat_bot = jnp.concatenate(
        [w_hh_t[:, :, :2 * H], zeros_blk, w_hh_t[:, :, 2 * H:]], axis=2)   # (L, H, 4H)
    w_cat = jnp.concatenate([w_cat_top, w_cat_bot], axis=1)                # (L, 2H, 4H)

    # b_cat[l] (4H,): [b_ir+b_hr | b_iz+b_hz | b_in | b_hn]; pre-broadcast to (L,N,4H)
    b_cat = jnp.concatenate(
        [b_ih[:, :2 * H] + b_hh[:, :2 * H], b_ih[:, 2 * H:], b_hh[:, 2 * H:]], axis=1)
    b_cat_b = jnp.broadcast_to(b_cat[:, None, :], (N_LAYERS, N, 4 * H))

    # fc weights, lane-dense padded
    w_fc_pad = jnp.pad(jnp.transpose(w_fc, (1, 0)),     # (H, VPAD)
                       ((0, 0), (0, VPAD - VOCAB)))
    b_fc_pad = jnp.pad(b_fc, (0, VPAD - VOCAB))[None, :]  # (1, VPAD)

    logits_pad = gru_fc_pallas(x_flat, w_cat, b_cat_b, w_fc_pad, b_fc_pad,
                               n_batch=N, n_steps=Tn)
    logits = logits_pad.reshape(Tn, N, VPAD)[:, :, :VOCAB]   # (T, N, V)
    return jnp.transpose(logits, (1, 0, 2))             # (N, T, V)


def reference_forward(tokens, p):
    """Pure-JAX reference (lax.scan GRU, HIGHEST matmul precision)."""
    N, L = tokens.shape
    H = HIDDEN
    prec = lax.Precision.HIGHEST
    x = p["embedding"][tokens]
    x = jnp.transpose(x, (1, 0, 2))
    sc = jnp.broadcast_to(p["start_codon"][None, None, :], (1, N, H))
    x = jnp.concatenate([sc, x], axis=0)                # (T, N, H)

    def gru_layer(x_seq, w_ih, w_hh, b_ih, b_hh):
        w_ih_t, w_hh_t = w_ih.T, w_hh.T
        def step(h, x_t):
            gi = jnp.dot(x_t, w_ih_t, precision=prec) + b_ih
            gh = jnp.dot(h, w_hh_t, precision=prec) + b_hh
            r = jax.nn.sigmoid(gi[:, :H] + gh[:, :H])
            z = jax.nn.sigmoid(gi[:, H:2 * H] + gh[:, H:2 * H])
            n = jnp.tanh(gi[:, 2 * H:] + r * gh[:, 2 * H:])
            h_new = (1.0 - z) * n + z * h
            return h_new, h_new
        _, ys = lax.scan(step, jnp.zeros((N, H), jnp.float32), x_seq)
        return ys

    for layer in range(N_LAYERS):
        x = gru_layer(x, p["w_ih"][layer], p["w_hh"][layer],
                      p["b_ih"][layer], p["b_hh"][layer])
    logits = jnp.dot(x, p["w_fc"].T, precision=prec) + p["b_fc"]
    return jnp.transpose(logits, (1, 0, 2))


if __name__ == "__main__":
    key = jax.random.PRNGKey(0)
    pkey, tkey = jax.random.split(key)
    params = init_params(pkey)
    tokens = jax.random.randint(tkey, (BATCH, SEQ), 0, VOCAB, dtype=jnp.int32)

    out = druglikeness_forward(
        tokens, params["embedding"], params["start_codon"],
        params["w_ih"], params["w_hh"], params["b_ih"], params["b_hh"],
        params["w_fc"], params["b_fc"])
    out = jax.block_until_ready(out)

    ref = jax.block_until_ready(reference_forward(tokens, params))
    assert out.shape == (BATCH, SEQ + 1, VOCAB), out.shape
    err = float(jnp.max(jnp.abs(out - ref)))
    assert jnp.allclose(out, ref, atol=5e-3, rtol=5e-3), err

    print("KERNEL_OK")
</pallas_src>

<mosaic_0001>
module attributes {stable_mosaic.version = 11 : i64} {
  func.func @_gru_fc_kernel(%arg0: memref<64x128xf32, #tpu.memory_space<vmem>>, %arg1: memref<4x256x512xf32, #tpu.memory_space<vmem>>, %arg2: memref<4x8x512xf32, #tpu.memory_space<vmem>>, %arg3: memref<128x128xf32, #tpu.memory_space<vmem>>, %arg4: memref<1x128xf32, #tpu.memory_space<vmem>>, %arg5: memref<64x128xf32, #tpu.memory_space<vmem>>, %arg6: memref<64x128xf32, #tpu.memory_space<vmem>>) attributes {dimension_semantics = [], scalar_prefetch = 0 : i64, scratch_operands = 1 : i64, tpu.core_type = #tpu.core_type<tc>} {
    %cst = arith.constant 0.000000e+00 : f32
    %0 = vector.broadcast %cst : f32 to vector<8x128xf32>
    %cst_0 = arith.constant 0.000000e+00 : f32
    %1 = vector.broadcast %cst_0 : f32 to vector<8x128xf32>
    %cst_1 = arith.constant 0.000000e+00 : f32
    %2 = vector.broadcast %cst_1 : f32 to vector<8x128xf32>
    %cst_2 = arith.constant 0.000000e+00 : f32
    %3 = vector.broadcast %cst_2 : f32 to vector<8x128xf32>
    %c0 = arith.constant 0 : index
    %c0_3 = arith.constant 0 : index
    %4 = vector.load %arg0[%c0, %c0_3] : memref<64x128xf32, #tpu.memory_space<vmem>>, vector<8x128xf32>
    %5 = tpu.concatenate %4, %0 in 1 : vector<8x128xf32>, vector<8x128xf32> -> vector<8x256xf32>
    %c0_4 = arith.constant 0 : index
    %c0_5 = arith.constant 0 : index
    %c0_6 = arith.constant 0 : index
    %6 = vector.load %arg1[%c0_4, %c0_5, %c0_6] : memref<4x256x512xf32, #tpu.memory_space<vmem>>, vector<1x256x512xf32>
    %7 = vector.shape_cast %6 : vector<1x256x512xf32> to vector<256x512xf32>
    %cst_7 = arith.constant dense<0.000000e+00> : vector<8x512xf32>
    %8 = tpu.matmul %5, %7, %cst_7 {dimension_numbers = #tpu.dot_dimension_numbers<[1], [0], [0], [1], [0, 0, 1, 1], [], []>} : vector<8x256xf32>, vector<256x512xf32>, vector<8x512xf32> -> vector<8x512xf32>
    %c0_8 = arith.constant 0 : index
    %c0_9 = arith.constant 0 : index
    %c0_10 = arith.constant 0 : index
    %9 = vector.load %arg2[%c0_8, %c0_9, %c0_10] : memref<4x8x512xf32, #tpu.memory_space<vmem>>, vector<1x8x512xf32>
    %10 = vector.shape_cast %9 : vector<1x8x512xf32> to vector<8x512xf32>
    %11 = arith.addf %8, %10 : vector<8x512xf32>
    %12 = vector.extract_strided_slice %11 {offsets = [0, 0], sizes = [8, 128], strides = [1, 1]} : vector<8x512xf32> to vector<8x128xf32>
    %13 = arith.negf %12 : vector<8x128xf32>
    %14 = math.exp %13 : vector<8x128xf32>
    %cst_11 = arith.constant 1.000000e+00 : f32
    %15 = vector.broadcast %cst_11 : f32 to vector<8x128xf32>
    %16 = arith.addf %15, %14 : vector<8x128xf32>
    %17 = arith.divf %15, %16 : vector<8x128xf32>
    %18 = vector.extract_strided_slice %11 {offsets = [0, 128], sizes = [8, 128], strides = [1, 1]} : vector<8x512xf32> to vector<8x128xf32>
    %19 = arith.negf %18 : vector<8x128xf32>
    %20 = math.exp %19 : vector<8x128xf32>
    %cst_12 = arith.constant 1.000000e+00 : f32
    %21 = vector.broadcast %cst_12 : f32 to vector<8x128xf32>
    %22 = arith.addf %21, %20 : vector<8x128xf32>
    %23 = arith.divf %21, %22 : vector<8x128xf32>
    %24 = vector.extract_strided_slice %11 {offsets = [0, 256], sizes = [8, 128], strides = [1, 1]} : vector<8x512xf32> to vector<8x128xf32>
    %25 = vector.extract_strided_slice %11 {offsets = [0, 384], sizes = [8, 128], strides = [1, 1]} : vector<8x512xf32> to vector<8x128xf32>
    %26 = arith.mulf %17, %25 : vector<8x128xf32>
    %27 = arith.addf %24, %26 : vector<8x128xf32>
    %28 = math.tanh %27 : vector<8x128xf32>
    %cst_13 = arith.constant 1.000000e+00 : f32
    %29 = vector.broadcast %cst_13 : f32 to vector<8x128xf32>
    %30 = arith.subf %29, %23 : vector<8x128xf32>
    %31 = arith.mulf %30, %28 : vector<8x128xf32>
    %32 = arith.mulf %23, %0 : vector<8x128xf32>
    %33 = arith.addf %31, %32 : vector<8x128xf32>
    %c8 = arith.constant 8 : index
    %c0_14 = arith.constant 0 : index
    %34 = vector.load %arg0[%c8, %c0_14] : memref<64x128xf32, #tpu.memory_space<vmem>>, vector<8x128xf32>
    %35 = tpu.concatenate %34, %33 in 1 : vector<8x128xf32>, vector<8x128xf32> -> vector<8x256xf32>
    %c0_15 = arith.constant 0 : index
    %c0_16 = arith.constant 0 : index
    %c0_17 = arith.constant 0 : index
    %36 = vector.load %arg1[%c0_15, %c0_16, %c0_17] : memref<4x256x512xf32, #tpu.memory_space<vmem>>, vector<1x256x512xf32>
    %37 = vector.shape_cast %36 : vector<1x256x512xf32> to vector<256x512xf32>
    %cst_18 = arith.constant dense<0.000000e+00> : vector<8x512xf32>
    %38 = tpu.matmul %35, %37, %cst_18 {dimension_numbers = #tpu.dot_dimension_numbers<[1], [0], [0], [1], [0, 0, 1, 1], [], []>} : vector<8x256xf32>, vector<256x512xf32>, vector<8x512xf32> -> vector<8x512xf32>
    %c0_19 = arith.constant 0 : index
    %c0_20 = arith.constant 0 : index
    %c0_21 = arith.constant 0 : index
    %39 = vector.load %arg2[%c0_19, %c0_20, %c0_21] : memref<4x8x512xf32, #tpu.memory_space<vmem>>, vector<1x8x512xf32>
    %40 = vector.shape_cast %39 : vector<1x8x512xf32> to vector<8x512xf32>
    %41 = arith.addf %38, %40 : vector<8x512xf32>
    %42 = vector.extract_strided_slice %41 {offsets = [0, 0], sizes = [8, 128], strides = [1, 1]} : vector<8x512xf32> to vector<8x128xf32>
    %43 = arith.negf %42 : vector<8x128xf32>
    %44 = math.exp %43 : vector<8x128xf32>
    %cst_22 = arith.constant 1.000000e+00 : f32
    %45 = vector.broadcast %cst_22 : f32 to vector<8x128xf32>
    %46 = arith.addf %45, %44 : vector<8x128xf32>
    %47 = arith.divf %45, %46 : vector<8x128xf32>
    %48 = vector.extract_strided_slice %41 {offsets = [0, 128], sizes = [8, 128], strides = [1, 1]} : vector<8x512xf32> to vector<8x128xf32>
    %49 = arith.negf %48 : vector<8x128xf32>
    %50 = math.exp %49 : vector<8x128xf32>
    %cst_23 = arith.constant 1.000000e+00 : f32
    %51 = vector.broadcast %cst_23 : f32 to vector<8x128xf32>
    %52 = arith.addf %51, %50 : vector<8x128xf32>
    %53 = arith.divf %51, %52 : vector<8x128xf32>
    %54 = vector.extract_strided_slice %41 {offsets = [0, 256], sizes = [8, 128], strides = [1, 1]} : vector<8x512xf32> to vector<8x128xf32>
    %55 = vector.extract_strided_slice %41 {offsets = [0, 384], sizes = [8, 128], strides = [1, 1]} : vector<8x512xf32> to vector<8x128xf32>
    %56 = arith.mulf %47, %55 : vector<8x128xf32>
    %57 = arith.addf %54, %56 : vector<8x128xf32>
    %58 = math.tanh %57 : vector<8x128xf32>
    %cst_24 = arith.constant 1.000000e+00 : f32
    %59 = vector.broadcast %cst_24 : f32 to vector<8x128xf32>
    %60 = arith.subf %59, %53 : vector<8x128xf32>
    %61 = arith.mulf %60, %58 : vector<8x128xf32>
    %62 = arith.mulf %53, %33 : vector<8x128xf32>
    %63 = arith.addf %61, %62 : vector<8x128xf32>
    %64 = tpu.concatenate %33, %1 in 1 : vector<8x128xf32>, vector<8x128xf32> -> vector<8x256xf32>
    %c1 = arith.constant 1 : index
    %c0_25 = arith.constant 0 : index
    %c0_26 = arith.constant 0 : index
    %65 = vector.load %arg1[%c1, %c0_25, %c0_26] : memref<4x256x512xf32, #tpu.memory_space<vmem>>, vector<1x256x512xf32>
    %66 = vector.shape_cast %65 : vector<1x256x512xf32> to vector<256x512xf32>
    %cst_27 = arith.constant dense<0.000000e+00> : vector<8x512xf32>
    %67 = tpu.matmul %64, %66, %cst_27 {dimension_numbers = #tpu.dot_dimension_numbers<[1], [0], [0], [1], [0, 0, 1, 1], [], []>} : vector<8x256xf32>, vector<256x512xf32>, vector<8x512xf32> -> vector<8x512xf32>
    %c1_28 = arith.constant 1 : index
    %c0_29 = arith.constant 0 : index
    %c0_30 = arith.constant 0 : index
    %68 = vector.load %arg2[%c1_28, %c0_29, %c0_30] : memref<4x8x512xf32, #tpu.memory_space<vmem>>, vector<1x8x512xf32>
    %69 = vector.shape_cast %68 : vector<1x8x512xf32> to vector<8x512xf32>
    %70 = arith.addf %67, %69 : vector<8x512xf32>
    %71 = vector.extract_strided_slice %70 {offsets = [0, 0], sizes = [8, 128], strides = [1, 1]} : vector<8x512xf32> to vector<8x128xf32>
    %72 = arith.negf %71 : vector<8x128xf32>
    %73 = math.exp %72 : vector<8x128xf32>
    %cst_31 = arith.constant 1.000000e+00 : f32
    %74 = vector.broadcast %cst_31 : f32 to vector<8x128xf32>
    %75 = arith.addf %74, %73 : vector<8x128xf32>
    %76 = arith.divf %74, %75 : vector<8x128xf32>
    %77 = vector.extract_strided_slice %70 {offsets = [0, 128], sizes = [8, 128], strides = [1, 1]} : vector<8x512xf32> to vector<8x128xf32>
    %78 = arith.negf %77 : vector<8x128xf32>
    %79 = math.exp %78 : vector<8x128xf32>
    %cst_32 = arith.constant 1.000000e+00 : f32
    %80 = vector.broadcast %cst_32 : f32 to vector<8x128xf32>
    %81 = arith.addf %80, %79 : vector<8x128xf32>
    %82 = arith.divf %80, %81 : vector<8x128xf32>
    %83 = vector.extract_strided_slice %70 {offsets = [0, 256], sizes = [8, 128], strides = [1, 1]} : vector<8x512xf32> to vector<8x128xf32>
    %84 = vector.extract_strided_slice %70 {offsets = [0, 384], sizes = [8, 128], strides = [1, 1]} : vector<8x512xf32> to vector<8x128xf32>
    %85 = arith.mulf %76, %84 : vector<8x128xf32>
    %86 = arith.addf %83, %85 : vector<8x128xf32>
    %87 = math.tanh %86 : vector<8x128xf32>
    %cst_33 = arith.constant 1.000000e+00 : f32
    %88 = vector.broadcast %cst_33 : f32 to vector<8x128xf32>
    %89 = arith.subf %88, %82 : vector<8x128xf32>
    %90 = arith.mulf %89, %87 : vector<8x128xf32>
    %91 = arith.mulf %82, %1 : vector<8x128xf32>
    %92 = arith.addf %90, %91 : vector<8x128xf32>
    %c16 = arith.constant 16 : index
    %c0_34 = arith.constant 0 : index
    %93 = vector.load %arg0[%c16, %c0_34] : memref<64x128xf32, #tpu.memory_space<vmem>>, vector<8x128xf32>
    %94 = tpu.concatenate %93, %63 in 1 : vector<8x128xf32>, vector<8x128xf32> -> vector<8x256xf32>
    %c0_35 = arith.constant 0 : index
    %c0_36 = arith.constant 0 : index
    %c0_37 = arith.constant 0 : index
    %95 = vector.load %arg1[%c0_35, %c0_36, %c0_37] : memref<4x256x512xf32, #tpu.memory_space<vmem>>, vector<1x256x512xf32>
    %96 = vector.shape_cast %95 : vector<1x256x512xf32> to vector<256x512xf32>
    %cst_38 = arith.constant dense<0.000000e+00> : vector<8x512xf32>
    %97 = tpu.matmul %94, %96, %cst_38 {dimension_numbers = #tpu.dot_dimension_numbers<[1], [0], [0], [1], [0, 0, 1, 1], [], []>} : vector<8x256xf32>, vector<256x512xf32>, vector<8x512xf32> -> vector<8x512xf32>
    %c0_39 = arith.constant 0 : index
    %c0_40 = arith.constant 0 : index
    %c0_41 = arith.constant 0 : index
    %98 = vector.load %arg2[%c0_39, %c0_40, %c0_41] : memref<4x8x512xf32, #tpu.memory_space<vmem>>, vector<1x8x512xf32>
    %99 = vector.shape_cast %98 : vector<1x8x512xf32> to vector<8x512xf32>
    %100 = arith.addf %97, %99 : vector<8x512xf32>
    %101 = vector.extract_strided_slice %100 {offsets = [0, 0], sizes = [8, 128], strides = [1, 1]} : vector<8x512xf32> to vector<8x128xf32>
    %102 = arith.negf %101 : vector<8x128xf32>
    %103 = math.exp %102 : vector<8x128xf32>
    %cst_42 = arith.constant 1.000000e+00 : f32
    %104 = vector.broadcast %cst_42 : f32 to vector<8x128xf32>
    %105 = arith.addf %104, %103 : vector<8x128xf32>
    %106 = arith.divf %104, %105 : vector<8x128xf32>
    %107 = vector.extract_strided_slice %100 {offsets = [0, 128], sizes = [8, 128], strides = [1, 1]} : vector<8x512xf32> to vector<8x128xf32>
    %108 = arith.negf %107 : vector<8x128xf32>
    %109 = math.exp %108 : vector<8x128xf32>
    %cst_43 = arith.constant 1.000000e+00 : f32
    %110 = vector.broadcast %cst_43 : f32 to vector<8x128xf32>
    %111 = arith.addf %110, %109 : vector<8x128xf32>
    %112 = arith.divf %110, %111 : vector<8x128xf32>
    %113 = vector.extract_strided_slice %100 {offsets = [0, 256], sizes = [8, 128], strides = [1, 1]} : vector<8x512xf32> to vector<8x128xf32>
    %114 = vector.extract_strided_slice %100 {offsets = [0, 384], sizes = [8, 128], strides = [1, 1]} : vector<8x512xf32> to vector<8x128xf32>
    %115 = arith.mulf %106, %114 : vector<8x128xf32>
    %116 = arith.addf %113, %115 : vector<8x128xf32>
    %117 = math.tanh %116 : vector<8x128xf32>
    %cst_44 = arith.constant 1.000000e+00 : f32
    %118 = vector.broadcast %cst_44 : f32 to vector<8x128xf32>
    %119 = arith.subf %118, %112 : vector<8x128xf32>
    %120 = arith.mulf %119, %117 : vector<8x128xf32>
    %121 = arith.mulf %112, %63 : vector<8x128xf32>
    %122 = arith.addf %120, %121 : vector<8x128xf32>
    %123 = tpu.concatenate %63, %92 in 1 : vector<8x128xf32>, vector<8x128xf32> -> vector<8x256xf32>
    %c1_45 = arith.constant 1 : index
    %c0_46 = arith.constant 0 : index
    %c0_47 = arith.constant 0 : index
    %124 = vector.load %arg1[%c1_45, %c0_46, %c0_47] : memref<4x256x512xf32, #tpu.memory_space<vmem>>, vector<1x256x512xf32>
    %125 = vector.shape_cast %124 : vector<1x256x512xf32> to vector<256x512xf32>
    %cst_48 = arith.constant dense<0.000000e+00> : vector<8x512xf32>
    %126 = tpu.matmul %123, %125, %cst_48 {dimension_numbers = #tpu.dot_dimension_numbers<[1], [0], [0], [1], [0, 0, 1, 1], [], []>} : vector<8x256xf32>, vector<256x512xf32>, vector<8x512xf32> -> vector<8x512xf32>
    %c1_49 = arith.constant 1 : index
    %c0_50 = arith.constant 0 : index
    %c0_51 = arith.constant 0 : index
    %127 = vector.load %arg2[%c1_49, %c0_50, %c0_51] : memref<4x8x512xf32, #tpu.memory_space<vmem>>, vector<1x8x512xf32>
    %128 = vector.shape_cast %127 : vector<1x8x512xf32> to vector<8x512xf32>
    %129 = arith.addf %126, %128 : vector<8x512xf32>
    %130 = vector.extract_strided_slice %129 {offsets = [0, 0], sizes = [8, 128], strides = [1, 1]} : vector<8x512xf32> to vector<8x128xf32>
    %131 = arith.negf %130 : vector<8x128xf32>
    %132 = math.exp %131 : vector<8x128xf32>
    %cst_52 = arith.constant 1.000000e+00 : f32
    %133 = vector.broadcast %cst_52 : f32 to vector<8x128xf32>
    %134 = arith.addf %133, %132 : vector<8x128xf32>
    %135 = arith.divf %133, %134 : vector<8x128xf32>
    %136 = vector.extract_strided_slice %129 {offsets = [0, 128], sizes = [8, 128], strides = [1, 1]} : vector<8x512xf32> to vector<8x128xf32>
    %137 = arith.negf %136 : vector<8x128xf32>
    %138 = math.exp %137 : vector<8x128xf32>
    %cst_53 = arith.constant 1.000000e+00 : f32
    %139 = vector.broadcast %cst_53 : f32 to vector<8x128xf32>
    %140 = arith.addf %139, %138 : vector<8x128xf32>
    %141 = arith.divf %139, %140 : vector<8x128xf32>
    %142 = vector.extract_strided_slice %129 {offsets = [0, 256], sizes = [8, 128], strides = [1, 1]} : vector<8x512xf32> to vector<8x128xf32>
    %143 = vector.extract_strided_slice %129 {offsets = [0, 384], sizes = [8, 128], strides = [1, 1]} : vector<8x512xf32> to vector<8x128xf32>
    %144 = arith.mulf %135, %143 : vector<8x128xf32>
    %145 = arith.addf %142, %144 : vector<8x128xf32>
    %146 = math.tanh %145 : vector<8x128xf32>
    %cst_54 = arith.constant 1.000000e+00 : f32
    %147 = vector.broadcast %cst_54 : f32 to vector<8x128xf32>
    %148 = arith.subf %147, %141 : vector<8x128xf32>
    %149 = arith.mulf %148, %146 : vector<8x128xf32>
    %150 = arith.mulf %141, %92 : vector<8x128xf32>
    %151 = arith.addf %149, %150 : vector<8x128xf32>
    %152 = tpu.concatenate %92, %2 in 1 : vector<8x128xf32>, vector<8x128xf32> -> vector<8x256xf32>
    %c2 = arith.constant 2 : index
    %c0_55 = arith.constant 0 : index
    %c0_56 = arith.constant 0 : index
    %153 = vector.load %arg1[%c2, %c0_55, %c0_56] : memref<4x256x512xf32, #tpu.memory_space<vmem>>, vector<1x256x512xf32>
    %154 = vector.shape_cast %153 : vector<1x256x512xf32> to vector<256x512xf32>
    %cst_57 = arith.constant dense<0.000000e+00> : vector<8x512xf32>
    %155 = tpu.matmul %152, %154, %cst_57 {dimension_numbers = #tpu.dot_dimension_numbers<[1], [0], [0], [1], [0, 0, 1, 1], [], []>} : vector<8x256xf32>, vector<256x512xf32>, vector<8x512xf32> -> vector<8x512xf32>
    %c2_58 = arith.constant 2 : index
    %c0_59 = arith.constant 0 : index
    %c0_60 = arith.constant 0 : index
    %156 = vector.load %arg2[%c2_58, %c0_59, %c0_60] : memref<4x8x512xf32, #tpu.memory_space<vmem>>, vector<1x8x512xf32>
    %157 = vector.shape_cast %156 : vector<1x8x512xf32> to vector<8x512xf32>
    %158 = arith.addf %155, %157 : vector<8x512xf32>
    %159 = vector.extract_strided_slice %158 {offsets = [0, 0], sizes = [8, 128], strides = [1, 1]} : vector<8x512xf32> to vector<8x128xf32>
    %160 = arith.negf %159 : vector<8x128xf32>
    %161 = math.exp %160 : vector<8x128xf32>
    %cst_61 = arith.constant 1.000000e+00 : f32
    %162 = vector.broadcast %cst_61 : f32 to vector<8x128xf32>
    %163 = arith.addf %162, %161 : vector<8x128xf32>
    %164 = arith.divf %162, %163 : vector<8x128xf32>
    %165 = vector.extract_strided_slice %158 {offsets = [0, 128], sizes = [8, 128], strides = [1, 1]} : vector<8x512xf32> to vector<8x128xf32>
    %166 = arith.negf %165 : vector<8x128xf32>
    %167 = math.exp %166 : vector<8x128xf32>
    %cst_62 = arith.constant 1.000000e+00 : f32
    %168 = vector.broadcast %cst_62 : f32 to vector<8x128xf32>
    %169 = arith.addf %168, %167 : vector<8x128xf32>
    %170 = arith.divf %168, %169 : vector<8x128xf32>
    %171 = vector.extract_strided_slice %158 {offsets = [0, 256], sizes = [8, 128], strides = [1, 1]} : vector<8x512xf32> to vector<8x128xf32>
    %172 = vector.extract_strided_slice %158 {offsets = [0, 384], sizes = [8, 128], strides = [1, 1]} : vector<8x512xf32> to vector<8x128xf32>
    %173 = arith.mulf %164, %172 : vector<8x128xf32>
    %174 = arith.addf %171, %173 : vector<8x128xf32>
    %175 = math.tanh %174 : vector<8x128xf32>
    %cst_63 = arith.constant 1.000000e+00 : f32
    %176 = vector.broadcast %cst_63 : f32 to vector<8x128xf32>
    %177 = arith.subf %176, %170 : vector<8x128xf32>
    %178 = arith.mulf %177, %175 : vector<8x128xf32>
    %179 = arith.mulf %170, %2 : vector<8x128xf32>
    %180 = arith.addf %178, %179 : vector<8x128xf32>
    %c24 = arith.constant 24 : index
    %c0_64 = arith.constant 0 : index
    %181 = vector.load %arg0[%c24, %c0_64] : memref<64x128xf32, #tpu.memory_space<vmem>>, vector<8x128xf32>
    %182 = tpu.concatenate %181, %122 in 1 : vector<8x128xf32>, vector<8x128xf32> -> vector<8x256xf32>
    %c0_65 = arith.constant 0 : index
    %c0_66 = arith.constant 0 : index
    %c0_67 = arith.constant 0 : index
    %183 = vector.load %arg1[%c0_65, %c0_66, %c0_67] : memref<4x256x512xf32, #tpu.memory_space<vmem>>, vector<1x256x512xf32>
    %184 = vector.shape_cast %183 : vector<1x256x512xf32> to vector<256x512xf32>
    %cst_68 = arith.constant dense<0.000000e+00> : vector<8x512xf32>
    %185 = tpu.matmul %182, %184, %cst_68 {dimension_numbers = #tpu.dot_dimension_numbers<[1], [0], [0], [1], [0, 0, 1, 1], [], []>} : vector<8x256xf32>, vector<256x512xf32>, vector<8x512xf32> -> vector<8x512xf32>
    %c0_69 = arith.constant 0 : index
    %c0_70 = arith.constant 0 : index
    %c0_71 = arith.constant 0 : index
    %186 = vector.load %arg2[%c0_69, %c0_70, %c0_71] : memref<4x8x512xf32, #tpu.memory_space<vmem>>, vector<1x8x512xf32>
    %187 = vector.shape_cast %186 : vector<1x8x512xf32> to vector<8x512xf32>
    %188 = arith.addf %185, %187 : vector<8x512xf32>
    %189 = vector.extract_strided_slice %188 {offsets = [0, 0], sizes = [8, 128], strides = [1, 1]} : vector<8x512xf32> to vector<8x128xf32>
    %190 = arith.negf %189 : vector<8x128xf32>
    %191 = math.exp %190 : vector<8x128xf32>
    %cst_72 = arith.constant 1.000000e+00 : f32
    %192 = vector.broadcast %cst_72 : f32 to vector<8x128xf32>
    %193 = arith.addf %192, %191 : vector<8x128xf32>
    %194 = arith.divf %192, %193 : vector<8x128xf32>
    %195 = vector.extract_strided_slice %188 {offsets = [0, 128], sizes = [8, 128], strides = [1, 1]} : vector<8x512xf32> to vector<8x128xf32>
    %196 = arith.negf %195 : vector<8x128xf32>
    %197 = math.exp %196 : vector<8x128xf32>
    %cst_73 = arith.constant 1.000000e+00 : f32
    %198 = vector.broadcast %cst_73 : f32 to vector<8x128xf32>
    %199 = arith.addf %198, %197 : vector<8x128xf32>
    %200 = arith.divf %198, %199 : vector<8x128xf32>
    %201 = vector.extract_strided_slice %188 {offsets = [0, 256], sizes = [8, 128], strides = [1, 1]} : vector<8x512xf32> to vector<8x128xf32>
    %202 = vector.extract_strided_slice %188 {offsets = [0, 384], sizes = [8, 128], strides = [1, 1]} : vector<8x512xf32> to vector<8x128xf32>
    %203 = arith.mulf %194, %202 : vector<8x128xf32>
    %204 = arith.addf %201, %203 : vector<8x128xf32>
    %205 = math.tanh %204 : vector<8x128xf32>
    %cst_74 = arith.constant 1.000000e+00 : f32
    %206 = vector.broadcast %cst_74 : f32 to vector<8x128xf32>
    %207 = arith.subf %206, %200 : vector<8x128xf32>
    %208 = arith.mulf %207, %205 : vector<8x128xf32>
    %209 = arith.mulf %200, %122 : vector<8x128xf32>
    %210 = arith.addf %208, %209 : vector<8x128xf32>
    %211 = tpu.concatenate %122, %151 in 1 : vector<8x128xf32>, vector<8x128xf32> -> vector<8x256xf32>
    %c1_75 = arith.constant 1 : index
    %c0_76 = arith.constant 0 : index
    %c0_77 = arith.constant 0 : index
    %212 = vector.load %arg1[%c1_75, %c0_76, %c0_77] : memref<4x256x512xf32, #tpu.memory_space<vmem>>, vector<1x256x512xf32>
    %213 = vector.shape_cast %212 : vector<1x256x512xf32> to vector<256x512xf32>
    %cst_78 = arith.constant dense<0.000000e+00> : vector<8x512xf32>
    %214 = tpu.matmul %211, %213, %cst_78 {dimension_numbers = #tpu.dot_dimension_numbers<[1], [0], [0], [1], [0, 0, 1, 1], [], []>} : vector<8x256xf32>, vector<256x512xf32>, vector<8x512xf32> -> vector<8x512xf32>
    %c1_79 = arith.constant 1 : index
    %c0_80 = arith.constant 0 : index
    %c0_81 = arith.constant 0 : index
    %215 = vector.load %arg2[%c1_79, %c0_80, %c0_81] : memref<4x8x512xf32, #tpu.memory_space<vmem>>, vector<1x8x512xf32>
    %216 = vector.shape_cast %215 : vector<1x8x512xf32> to vector<8x512xf32>
    %217 = arith.addf %214, %216 : vector<8x512xf32>
    %218 = vector.extract_strided_slice %217 {offsets = [0, 0], sizes = [8, 128], strides = [1, 1]} : vector<8x512xf32> to vector<8x128xf32>
    %219 = arith.negf %218 : vector<8x128xf32>
    %220 = math.exp %219 : vector<8x128xf32>
    %cst_82 = arith.constant 1.000000e+00 : f32
    %221 = vector.broadcast %cst_82 : f32 to vector<8x128xf32>
    %222 = arith.addf %221, %220 : vector<8x128xf32>
    %223 = arith.divf %221, %222 : vector<8x128xf32>
    %224 = vector.extract_strided_slice %217 {offsets = [0, 128], sizes = [8, 128], strides = [1, 1]} : vector<8x512xf32> to vector<8x128xf32>
    %225 = arith.negf %224 : vector<8x128xf32>
    %226 = math.exp %225 : vector<8x128xf32>
    %cst_83 = arith.constant 1.000000e+00 : f32
    %227 = vector.broadcast %cst_83 : f32 to vector<8x128xf32>
    %228 = arith.addf %227, %226 : vector<8x128xf32>
    %229 = arith.divf %227, %228 : vector<8x128xf32>
    %230 = vector.extract_strided_slice %217 {offsets = [0, 256], sizes = [8, 128], strides = [1, 1]} : vector<8x512xf32> to vector<8x128xf32>
    %231 = vector.extract_strided_slice %217 {offsets = [0, 384], sizes = [8, 128], strides = [1, 1]} : vector<8x512xf32> to vector<8x128xf32>
    %232 = arith.mulf %223, %231 : vector<8x128xf32>
    %233 = arith.addf %230, %232 : vector<8x128xf32>
    %234 = math.tanh %233 : vector<8x128xf32>
    %cst_84 = arith.constant 1.000000e+00 : f32
    %235 = vector.broadcast %cst_84 : f32 to vector<8x128xf32>
    %236 = arith.subf %235, %229 : vector<8x128xf32>
    %237 = arith.mulf %236, %234 : vector<8x128xf32>
    %238 = arith.mulf %229, %151 : vector<8x128xf32>
    %239 = arith.addf %237, %238 : vector<8x128xf32>
    %240 = tpu.concatenate %151, %180 in 1 : vector<8x128xf32>, vector<8x128xf32> -> vector<8x256xf32>
    %c2_85 = arith.constant 2 : index
    %c0_86 = arith.constant 0 : index
    %c0_87 = arith.constant 0 : index
    %241 = vector.load %arg1[%c2_85, %c0_86, %c0_87] : memref<4x256x512xf32, #tpu.memory_space<vmem>>, vector<1x256x512xf32>
    %242 = vector.shape_cast %241 : vector<1x256x512xf32> to vector<256x512xf32>
    %cst_88 = arith.constant dense<0.000000e+00> : vector<8x512xf32>
    %243 = tpu.matmul %240, %242, %cst_88 {dimension_numbers = #tpu.dot_dimension_numbers<[1], [0], [0], [1], [0, 0, 1, 1], [], []>} : vector<8x256xf32>, vector<256x512xf32>, vector<8x512xf32> -> vector<8x512xf32>
    %c2_89 = arith.constant 2 : index
    %c0_90 = arith.constant 0 : index
    %c0_91 = arith.constant 0 : index
    %244 = vector.load %arg2[%c2_89, %c0_90, %c0_91] : memref<4x8x512xf32, #tpu.memory_space<vmem>>, vector<1x8x512xf32>
    %245 = vector.shape_cast %244 : vector<1x8x512xf32> to vector<8x512xf32>
    %246 = arith.addf %243, %245 : vector<8x512xf32>
    %247 = vector.extract_strided_slice %246 {offsets = [0, 0], sizes = [8, 128], strides = [1, 1]} : vector<8x512xf32> to vector<8x128xf32>
    %248 = arith.negf %247 : vector<8x128xf32>
    %249 = math.exp %248 : vector<8x128xf32>
    %cst_92 = arith.constant 1.000000e+00 : f32
    %250 = vector.broadcast %cst_92 : f32 to vector<8x128xf32>
    %251 = arith.addf %250, %249 : vector<8x128xf32>
    %252 = arith.divf %250, %251 : vector<8x128xf32>
    %253 = vector.extract_strided_slice %246 {offsets = [0, 128], sizes = [8, 128], strides = [1, 1]} : vector<8x512xf32> to vector<8x128xf32>
    %254 = arith.negf %253 : vector<8x128xf32>
    %255 = math.exp %254 : vector<8x128xf32>
    %cst_93 = arith.constant 1.000000e+00 : f32
    %256 = vector.broadcast %cst_93 : f32 to vector<8x128xf32>
    %257 = arith.addf %256, %255 : vector<8x128xf32>
    %258 = arith.divf %256, %257 : vector<8x128xf32>
    %259 = vector.extract_strided_slice %246 {offsets = [0, 256], sizes = [8, 128], strides = [1, 1]} : vector<8x512xf32> to vector<8x128xf32>
    %260 = vector.extract_strided_slice %246 {offsets = [0, 384], sizes = [8, 128], strides = [1, 1]} : vector<8x512xf32> to vector<8x128xf32>
    %261 = arith.mulf %252, %260 : vector<8x128xf32>
    %262 = arith.addf %259, %261 : vector<8x128xf32>
    %263 = math.tanh %262 : vector<8x128xf32>
    %cst_94 = arith.constant 1.000000e+00 : f32
    %264 = vector.broadcast %cst_94 : f32 to vector<8x128xf32>
    %265 = arith.subf %264, %258 : vector<8x128xf32>
    %266 = arith.mulf %265, %263 : vector<8x128xf32>
    %267 = arith.mulf %258, %180 : vector<8x128xf32>
    %268 = arith.addf %266, %267 : vector<8x128xf32>
    %269 = tpu.concatenate %180, %3 in 1 : vector<8x128xf32>, vector<8x128xf32> -> vector<8x256xf32>
    %c3 = arith.constant 3 : index
    %c0_95 = arith.constant 0 : index
    %c0_96 = arith.constant 0 : index
    %270 = vector.load %arg1[%c3, %c0_95, %c0_96] : memref<4x256x512xf32, #tpu.memory_space<vmem>>, vector<1x256x512xf32>
    %271 = vector.shape_cast %270 : vector<1x256x512xf32> to vector<256x512xf32>
    %cst_97 = arith.constant dense<0.000000e+00> : vector<8x512xf32>
    %272 = tpu.matmul %269, %271, %cst_97 {dimension_numbers = #tpu.dot_dimension_numbers<[1], [0], [0], [1], [0, 0, 1, 1], [], []>} : vector<8x256xf32>, vector<256x512xf32>, vector<8x512xf32> -> vector<8x512xf32>
    %c3_98 = arith.constant 3 : index
    %c0_99 = arith.constant 0 : index
    %c0_100 = arith.constant 0 : index
    %273 = vector.load %arg2[%c3_98, %c0_99, %c0_100] : memref<4x8x512xf32, #tpu.memory_space<vmem>>, vector<1x8x512xf32>
    %274 = vector.shape_cast %273 : vector<1x8x512xf32> to vector<8x512xf32>
    %275 = arith.addf %272, %274 : vector<8x512xf32>
    %276 = vector.extract_strided_slice %275 {offsets = [0, 0], sizes = [8, 128], strides = [1, 1]} : vector<8x512xf32> to vector<8x128xf32>
    %277 = arith.negf %276 : vector<8x128xf32>
    %278 = math.exp %277 : vector<8x128xf32>
    %cst_101 = arith.constant 1.000000e+00 : f32
    %279 = vector.broadcast %cst_101 : f32 to vector<8x128xf32>
    %280 = arith.addf %279, %278 : vector<8x128xf32>
    %281 = arith.divf %279, %280 : vector<8x128xf32>
    %282 = vector.extract_strided_slice %275 {offsets = [0, 128], sizes = [8, 128], strides = [1, 1]} : vector<8x512xf32> to vector<8x128xf32>
    %283 = arith.negf %282 : vector<8x128xf32>
    %284 = math.exp %283 : vector<8x128xf32>
    %cst_102 = arith.constant 1.000000e+00 : f32
    %285 = vector.broadcast %cst_102 : f32 to vector<8x128xf32>
    %286 = arith.addf %285, %284 : vector<8x128xf32>
    %287 = arith.divf %285, %286 : vector<8x128xf32>
    %288 = vector.extract_strided_slice %275 {offsets = [0, 256], sizes = [8, 128], strides = [1, 1]} : vector<8x512xf32> to vector<8x128xf32>
    %289 = vector.extract_strided_slice %275 {offsets = [0, 384], sizes = [8, 128], strides = [1, 1]} : vector<8x512xf32> to vector<8x128xf32>
    %290 = arith.mulf %281, %289 : vector<8x128xf32>
    %291 = arith.addf %288, %290 : vector<8x128xf32>
    %292 = math.tanh %291 : vector<8x128xf32>
    %cst_103 = arith.constant 1.000000e+00 : f32
    %293 = vector.broadcast %cst_103 : f32 to vector<8x128xf32>
    %294 = arith.subf %293, %287 : vector<8x128xf32>
    %295 = arith.mulf %294, %292 : vector<8x128xf32>
    %296 = arith.mulf %287, %3 : vector<8x128xf32>
    %297 = arith.addf %295, %296 : vector<8x128xf32>
    %c0_104 = arith.constant 0 : index
    %c0_105 = arith.constant 0 : index
    %298 = vector.load %arg6[%c0_104, %c0_105] : memref<64x128xf32, #tpu.memory_space<vmem>>, vector<8x128xf32>
    tpu.vector_store %arg6[%c0_104, %c0_105], %297 {strides = array<i32>} : memref<64x128xf32, #tpu.memory_space<vmem>>, vector<8x128xf32>,
    %c32 = arith.constant 32 : index
    %c0_106 = arith.constant 0 : index
    %299 = vector.load %arg0[%c32, %c0_106] : memref<64x128xf32, #tpu.memory_space<vmem>>, vector<8x128xf32>
    %300 = tpu.concatenate %299, %210 in 1 : vector<8x128xf32>, vector<8x128xf32> -> vector<8x256xf32>
    %c0_107 = arith.constant 0 : index
    %c0_108 = arith.constant 0 : index
    %c0_109 = arith.constant 0 : index
    %301 = vector.load %arg1[%c0_107, %c0_108, %c0_109] : memref<4x256x512xf32, #tpu.memory_space<vmem>>, vector<1x256x512xf32>
    %302 = vector.shape_cast %301 : vector<1x256x512xf32> to vector<256x512xf32>
    %cst_110 = arith.constant dense<0.000000e+00> : vector<8x512xf32>
    %303 = tpu.matmul %300, %302, %cst_110 {dimension_numbers = #tpu.dot_dimension_numbers<[1], [0], [0], [1], [0, 0, 1, 1], [], []>} : vector<8x256xf32>, vector<256x512xf32>, vector<8x512xf32> -> vector<8x512xf32>
    %c0_111 = arith.constant 0 : index
    %c0_112 = arith.constant 0 : index
    %c0_113 = arith.constant 0 : index
    %304 = vector.load %arg2[%c0_111, %c0_112, %c0_113] : memref<4x8x512xf32, #tpu.memory_space<vmem>>, vector<1x8x512xf32>
    %305 = vector.shape_cast %304 : vector<1x8x512xf32> to vector<8x512xf32>
    %306 = arith.addf %303, %305 : vector<8x512xf32>
    %307 = vector.extract_strided_slice %306 {offsets = [0, 0], sizes = [8, 128], strides = [1, 1]} : vector<8x512xf32> to vector<8x128xf32>
    %308 = arith.negf %307 : vector<8x128xf32>
    %309 = math.exp %308 : vector<8x128xf32>
    %cst_114 = arith.constant 1.000000e+00 : f32
    %310 = vector.broadcast %cst_114 : f32 to vector<8x128xf32>
    %311 = arith.addf %310, %309 : vector<8x128xf32>
    %312 = arith.divf %310, %311 : vector<8x128xf32>
    %313 = vector.extract_strided_slice %306 {offsets = [0, 128], sizes = [8, 128], strides = [1, 1]} : vector<8x512xf32> to vector<8x128xf32>
    %314 = arith.negf %313 : vector<8x128xf32>
    %315 = math.exp %314 : vector<8x128xf32>
    %cst_115 = arith.constant 1.000000e+00 : f32
    %316 = vector.broadcast %cst_115 : f32 to vector<8x128xf32>
    %317 = arith.addf %316, %315 : vector<8x128xf32>
    %318 = arith.divf %316, %317 : vector<8x128xf32>
    %319 = vector.extract_strided_slice %306 {offsets = [0, 256], sizes = [8, 128], strides = [1, 1]} : vector<8x512xf32> to vector<8x128xf32>
    %320 = vector.extract_strided_slice %306 {offsets = [0, 384], sizes = [8, 128], strides = [1, 1]} : vector<8x512xf32> to vector<8x128xf32>
    %321 = arith.mulf %312, %320 : vector<8x128xf32>
    %322 = arith.addf %319, %321 : vector<8x128xf32>
    %323 = math.tanh %322 : vector<8x128xf32>
    %cst_116 = arith.constant 1.000000e+00 : f32
    %324 = vector.broadcast %cst_116 : f32 to vector<8x128xf32>
    %325 = arith.subf %324, %318 : vector<8x128xf32>
    %326 = arith.mulf %325, %323 : vector<8x128xf32>
    %327 = arith.mulf %318, %210 : vector<8x128xf32>
    %328 = arith.addf %326, %327 : vector<8x128xf32>
    %329 = tpu.concatenate %210, %239 in 1 : vector<8x128xf32>, vector<8x128xf32> -> vector<8x256xf32>
    %c1_117 = arith.constant 1 : index
    %c0_118 = arith.constant 0 : index
    %c0_119 = arith.constant 0 : index
    %330 = vector.load %arg1[%c1_117, %c0_118, %c0_119] : memref<4x256x512xf32, #tpu.memory_space<vmem>>, vector<1x256x512xf32>
    %331 = vector.shape_cast %330 : vector<1x256x512xf32> to vector<256x512xf32>
    %cst_120 = arith.constant dense<0.000000e+00> : vector<8x512xf32>
    %332 = tpu.matmul %329, %331, %cst_120 {dimension_numbers = #tpu.dot_dimension_numbers<[1], [0], [0], [1], [0, 0, 1, 1], [], []>} : vector<8x256xf32>, vector<256x512xf32>, vector<8x512xf32> -> vector<8x512xf32>
    %c1_121 = arith.constant 1 : index
    %c0_122 = arith.constant 0 : index
    %c0_123 = arith.constant 0 : index
    %333 = vector.load %arg2[%c1_121, %c0_122, %c0_123] : memref<4x8x512xf32, #tpu.memory_space<vmem>>, vector<1x8x512xf32>
    %334 = vector.shape_cast %333 : vector<1x8x512xf32> to vector<8x512xf32>
    %335 = arith.addf %332, %334 : vector<8x512xf32>
    %336 = vector.extract_strided_slice %335 {offsets = [0, 0], sizes = [8, 128], strides = [1, 1]} : vector<8x512xf32> to vector<8x128xf32>
    %337 = arith.negf %336 : vector<8x128xf32>
    %338 = math.exp %337 : vector<8x128xf32>
    %cst_124 = arith.constant 1.000000e+00 : f32
    %339 = vector.broadcast %cst_124 : f32 to vector<8x128xf32>
    %340 = arith.addf %339, %338 : vector<8x128xf32>
    %341 = arith.divf %339, %340 : vector<8x128xf32>
    %342 = vector.extract_strided_slice %335 {offsets = [0, 128], sizes = [8, 128], strides = [1, 1]} : vector<8x512xf32> to vector<8x128xf32>
    %343 = arith.negf %342 : vector<8x128xf32>
    %344 = math.exp %343 : vector<8x128xf32>
    %cst_125 = arith.constant 1.000000e+00 : f32
    %345 = vector.broadcast %cst_125 : f32 to vector<8x128xf32>
    %346 = arith.addf %345, %344 : vector<8x128xf32>
    %347 = arith.divf %345, %346 : vector<8x128xf32>
    %348 = vector.extract_strided_slice %335 {offsets = [0, 256], sizes = [8, 128], strides = [1, 1]} : vector<8x512xf32> to vector<8x128xf32>
    %349 = vector.extract_strided_slice %335 {offsets = [0, 384], sizes = [8, 128], strides = [1, 1]} : vector<8x512xf32> to vector<8x128xf32>
    %350 = arith.mulf %341, %349 : vector<8x128xf32>
    %351 = arith.addf %348, %350 : vector<8x128xf32>
    %352 = math.tanh %351 : vector<8x128xf32>
    %cst_126 = arith.constant 1.000000e+00 : f32
    %353 = vector.broadcast %cst_126 : f32 to vector<8x128xf32>
    %354 = arith.subf %353, %347 : vector<8x128xf32>
    %355 = arith.mulf %354, %352 : vector<8x128xf32>
    %356 = arith.mulf %347, %239 : vector<8x128xf32>
    %357 = arith.addf %355, %356 : vector<8x128xf32>
    %358 = tpu.concatenate %239, %268 in 1 : vector<8x128xf32>, vector<8x128xf32> -> vector<8x256xf32>
    %c2_127 = arith.constant 2 : index
    %c0_128 = arith.constant 0 : index
    %c0_129 = arith.constant 0 : index
    %359 = vector.load %arg1[%c2_127, %c0_128, %c0_129] : memref<4x256x512xf32, #tpu.memory_space<vmem>>, vector<1x256x512xf32>
    %360 = vector.shape_cast %359 : vector<1x256x512xf32> to vector<256x512xf32>
    %cst_130 = arith.constant dense<0.000000e+00> : vector<8x512xf32>
    %361 = tpu.matmul %358, %360, %cst_130 {dimension_numbers = #tpu.dot_dimension_numbers<[1], [0], [0], [1], [0, 0, 1, 1], [], []>} : vector<8x256xf32>, vector<256x512xf32>, vector<8x512xf32> -> vector<8x512xf32>
    %c2_131 = arith.constant 2 : index
    %c0_132 = arith.constant 0 : index
    %c0_133 = arith.constant 0 : index
    %362 = vector.load %arg2[%c2_131, %c0_132, %c0_133] : memref<4x8x512xf32, #tpu.memory_space<vmem>>, vector<1x8x512xf32>
    %363 = vector.shape_cast %362 : vector<1x8x512xf32> to vector<8x512xf32>
    %364 = arith.addf %361, %363 : vector<8x512xf32>
    %365 = vector.extract_strided_slice %364 {offsets = [0, 0], sizes = [8, 128], strides = [1, 1]} : vector<8x512xf32> to vector<8x128xf32>
    %366 = arith.negf %365 : vector<8x128xf32>
    %367 = math.exp %366 : vector<8x128xf32>
    %cst_134 = arith.constant 1.000000e+00 : f32
    %368 = vector.broadcast %cst_134 : f32 to vector<8x128xf32>
    %369 = arith.addf %368, %367 : vector<8x128xf32>
    %370 = arith.divf %368, %369 : vector<8x128xf32>
    %371 = vector.extract_strided_slice %364 {offsets = [0, 128], sizes = [8, 128], strides = [1, 1]} : vector<8x512xf32> to vector<8x128xf32>
    %372 = arith.negf %371 : vector<8x128xf32>
    %373 = math.exp %372 : vector<8x128xf32>
    %cst_135 = arith.constant 1.000000e+00 : f32
    %374 = vector.broadcast %cst_135 : f32 to vector<8x128xf32>
    %375 = arith.addf %374, %373 : vector<8x128xf32>
    %376 = arith.divf %374, %375 : vector<8x128xf32>
    %377 = vector.extract_strided_slice %364 {offsets = [0, 256], sizes = [8, 128], strides = [1, 1]} : vector<8x512xf32> to vector<8x128xf32>
    %378 = vector.extract_strided_slice %364 {offsets = [0, 384], sizes = [8, 128], strides = [1, 1]} : vector<8x512xf32> to vector<8x128xf32>
    %379 = arith.mulf %370, %378 : vector<8x128xf32>
    %380 = arith.addf %377, %379 : vector<8x128xf32>
    %381 = math.tanh %380 : vector<8x128xf32>
    %cst_136 = arith.constant 1.000000e+00 : f32
    %382 = vector.broadcast %cst_136 : f32 to vector<8x128xf32>
    %383 = arith.subf %382, %376 : vector<8x128xf32>
    %384 = arith.mulf %383, %381 : vector<8x128xf32>
    %385 = arith.mulf %376, %268 : vector<8x128xf32>
    %386 = arith.addf %384, %385 : vector<8x128xf32>
    %387 = tpu.concatenate %268, %297 in 1 : vector<8x128xf32>, vector<8x128xf32> -> vector<8x256xf32>
    %c3_137 = arith.constant 3 : index
    %c0_138 = arith.constant 0 : index
    %c0_139 = arith.constant 0 : index
    %388 = vector.load %arg1[%c3_137, %c0_138, %c0_139] : memref<4x256x512xf32, #tpu.memory_space<vmem>>, vector<1x256x512xf32>
    %389 = vector.shape_cast %388 : vector<1x256x512xf32> to vector<256x512xf32>
    %cst_140 = arith.constant dense<0.000000e+00> : vector<8x512xf32>
    %390 = tpu.matmul %387, %389, %cst_140 {dimension_numbers = #tpu.dot_dimension_numbers<[1], [0], [0], [1], [0, 0, 1, 1], [], []>} : vector<8x256xf32>, vector<256x512xf32>, vector<8x512xf32> -> vector<8x512xf32>
    %c3_141 = arith.constant 3 : index
    %c0_142 = arith.constant 0 : index
    %c0_143 = arith.constant 0 : index
    %391 = vector.load %arg2[%c3_141, %c0_142, %c0_143] : memref<4x8x512xf32, #tpu.memory_space<vmem>>, vector<1x8x512xf32>
    %392 = vector.shape_cast %391 : vector<1x8x512xf32> to vector<8x512xf32>
    %393 = arith.addf %390, %392 : vector<8x512xf32>
    %394 = vector.extract_strided_slice %393 {offsets = [0, 0], sizes = [8, 128], strides = [1, 1]} : vector<8x512xf32> to vector<8x128xf32>
    %395 = arith.negf %394 : vector<8x128xf32>
    %396 = math.exp %395 : vector<8x128xf32>
    %cst_144 = arith.constant 1.000000e+00 : f32
    %397 = vector.broadcast %cst_144 : f32 to vector<8x128xf32>
    %398 = arith.addf %397, %396 : vector<8x128xf32>
    %399 = arith.divf %397, %398 : vector<8x128xf32>
    %400 = vector.extract_strided_slice %393 {offsets = [0, 128], sizes = [8, 128], strides = [1, 1]} : vector<8x512xf32> to vector<8x128xf32>
    %401 = arith.negf %400 : vector<8x128xf32>
    %402 = math.exp %401 : vector<8x128xf32>
    %cst_145 = arith.constant 1.000000e+00 : f32
    %403 = vector.broadcast %cst_145 : f32 to vector<8x128xf32>
    %404 = arith.addf %403, %402 : vector<8x128xf32>
    %405 = arith.divf %403, %404 : vector<8x128xf32>
    %406 = vector.extract_strided_slice %393 {offsets = [0, 256], sizes = [8, 128], strides = [1, 1]} : vector<8x512xf32> to vector<8x128xf32>
    %407 = vector.extract_strided_slice %393 {offsets = [0, 384], sizes = [8, 128], strides = [1, 1]} : vector<8x512xf32> to vector<8x128xf32>
    %408 = arith.mulf %399, %407 : vector<8x128xf32>
    %409 = arith.addf %406, %408 : vector<8x128xf32>
    %410 = math.tanh %409 : vector<8x128xf32>
    %cst_146 = arith.constant 1.000000e+00 : f32
    %411 = vector.broadcast %cst_146 : f32 to vector<8x128xf32>
    %412 = arith.subf %411, %405 : vector<8x128xf32>
    %413 = arith.mulf %412, %410 : vector<8x128xf32>
    %414 = arith.mulf %405, %297 : vector<8x128xf32>
    %415 = arith.addf %413, %414 : vector<8x128xf32>
    %c8_147 = arith.constant 8 : index
    %c0_148 = arith.constant 0 : index
    %416 = vector.load %arg6[%c8_147, %c0_148] : memref<64x128xf32, #tpu.memory_space<vmem>>, vector<8x128xf32>
    tpu.vector_store %arg6[%c8_147, %c0_148], %415 {strides = array<i32>} : memref<64x128xf32, #tpu.memory_space<vmem>>, vector<8x128xf32>,
    %c40 = arith.constant 40 : index
    %c0_149 = arith.constant 0 : index
    %417 = vector.load %arg0[%c40, %c0_149] : memref<64x128xf32, #tpu.memory_space<vmem>>, vector<8x128xf32>
    %418 = tpu.concatenate %417, %328 in 1 : vector<8x128xf32>, vector<8x128xf32> -> vector<8x256xf32>
    %c0_150 = arith.constant 0 : index
    %c0_151 = arith.constant 0 : index
    %c0_152 = arith.constant 0 : index
    %419 = vector.load %arg1[%c0_150, %c0_151, %c0_152] : memref<4x256x512xf32, #tpu.memory_space<vmem>>, vector<1x256x512xf32>
    %420 = vector.shape_cast %419 : vector<1x256x512xf32> to vector<256x512xf32>
    %cst_153 = arith.constant dense<0.000000e+00> : vector<8x512xf32>
    %421 = tpu.matmul %418, %420, %cst_153 {dimension_numbers = #tpu.dot_dimension_numbers<[1], [0], [0], [1], [0, 0, 1, 1], [], []>} : vector<8x256xf32>, vector<256x512xf32>, vector<8x512xf32> -> vector<8x512xf32>
    %c0_154 = arith.constant 0 : index
    %c0_155 = arith.constant 0 : index
    %c0_156 = arith.constant 0 : index
    %422 = vector.load %arg2[%c0_154, %c0_155, %c0_156] : memref<4x8x512xf32, #tpu.memory_space<vmem>>, vector<1x8x512xf32>
    %423 = vector.shape_cast %422 : vector<1x8x512xf32> to vector<8x512xf32>
    %424 = arith.addf %421, %423 : vector<8x512xf32>
    %425 = vector.extract_strided_slice %424 {offsets = [0, 0], sizes = [8, 128], strides = [1, 1]} : vector<8x512xf32> to vector<8x128xf32>
    %426 = arith.negf %425 : vector<8x128xf32>
    %427 = math.exp %426 : vector<8x128xf32>
    %cst_157 = arith.constant 1.000000e+00 : f32
    %428 = vector.broadcast %cst_157 : f32 to vector<8x128xf32>
    %429 = arith.addf %428, %427 : vector<8x128xf32>
    %430 = arith.divf %428, %429 : vector<8x128xf32>
    %431 = vector.extract_strided_slice %424 {offsets = [0, 128], sizes = [8, 128], strides = [1, 1]} : vector<8x512xf32> to vector<8x128xf32>
    %432 = arith.negf %431 : vector<8x128xf32>
    %433 = math.exp %432 : vector<8x128xf32>
    %cst_158 = arith.constant 1.000000e+00 : f32
    %434 = vector.broadcast %cst_158 : f32 to vector<8x128xf32>
    %435 = arith.addf %434, %433 : vector<8x128xf32>
    %436 = arith.divf %434, %435 : vector<8x128xf32>
    %437 = vector.extract_strided_slice %424 {offsets = [0, 256], sizes = [8, 128], strides = [1, 1]} : vector<8x512xf32> to vector<8x128xf32>
    %438 = vector.extract_strided_slice %424 {offsets = [0, 384], sizes = [8, 128], strides = [1, 1]} : vector<8x512xf32> to vector<8x128xf32>
    %439 = arith.mulf %430, %438 : vector<8x128xf32>
    %440 = arith.addf %437, %439 : vector<8x128xf32>
    %441 = math.tanh %440 : vector<8x128xf32>
    %cst_159 = arith.constant 1.000000e+00 : f32
    %442 = vector.broadcast %cst_159 : f32 to vector<8x128xf32>
    %443 = arith.subf %442, %436 : vector<8x128xf32>
    %444 = arith.mulf %443, %441 : vector<8x128xf32>
    %445 = arith.mulf %436, %328 : vector<8x128xf32>
    %446 = arith.addf %444, %445 : vector<8x128xf32>
    %447 = tpu.concatenate %328, %357 in 1 : vector<8x128xf32>, vector<8x128xf32> -> vector<8x256xf32>
    %c1_160 = arith.constant 1 : index
    %c0_161 = arith.constant 0 : index
    %c0_162 = arith.constant 0 : index
    %448 = vector.load %arg1[%c1_160, %c0_161, %c0_162] : memref<4x256x512xf32, #tpu.memory_space<vmem>>, vector<1x256x512xf32>
    %449 = vector.shape_cast %448 : vector<1x256x512xf32> to vector<256x512xf32>
    %cst_163 = arith.constant dense<0.000000e+00> : vector<8x512xf32>
    %450 = tpu.matmul %447, %449, %cst_163 {dimension_numbers = #tpu.dot_dimension_numbers<[1], [0], [0], [1], [0, 0, 1, 1], [], []>} : vector<8x256xf32>, vector<256x512xf32>, vector<8x512xf32> -> vector<8x512xf32>
    %c1_164 = arith.constant 1 : index
    %c0_165 = arith.constant 0 : index
    %c0_166 = arith.constant 0 : index
    %451 = vector.load %arg2[%c1_164, %c0_165, %c0_166] : memref<4x8x512xf32, #tpu.memory_space<vmem>>, vector<1x8x512xf32>
    %452 = vector.shape_cast %451 : vector<1x8x512xf32> to vector<8x512xf32>
    %453 = arith.addf %450, %452 : vector<8x512xf32>
    %454 = vector.extract_strided_slice %453 {offsets = [0, 0], sizes = [8, 128], strides = [1, 1]} : vector<8x512xf32> to vector<8x128xf32>
    %455 = arith.negf %454 : vector<8x128xf32>
    %456 = math.exp %455 : vector<8x128xf32>
    %cst_167 = arith.constant 1.000000e+00 : f32
    %457 = vector.broadcast %cst_167 : f32 to vector<8x128xf32>
    %458 = arith.addf %457, %456 : vector<8x128xf32>
    %459 = arith.divf %457, %458 : vector<8x128xf32>
    %460 = vector.extract_strided_slice %453 {offsets = [0, 128], sizes = [8, 128], strides = [1, 1]} : vector<8x512xf32> to vector<8x128xf32>
    %461 = arith.negf %460 : vector<8x128xf32>
    %462 = math.exp %461 : vector<8x128xf32>
    %cst_168 = arith.constant 1.000000e+00 : f32
    %463 = vector.broadcast %cst_168 : f32 to vector<8x128xf32>
    %464 = arith.addf %463, %462 : vector<8x128xf32>
    %465 = arith.divf %463, %464 : vector<8x128xf32>
    %466 = vector.extract_strided_slice %453 {offsets = [0, 256], sizes = [8, 128], strides = [1, 1]} : vector<8x512xf32> to vector<8x128xf32>
    %467 = vector.extract_strided_slice %453 {offsets = [0, 384], sizes = [8, 128], strides = [1, 1]} : vector<8x512xf32> to vector<8x128xf32>
    %468 = arith.mulf %459, %467 : vector<8x128xf32>
    %469 = arith.addf %466, %468 : vector<8x128xf32>
    %470 = math.tanh %469 : vector<8x128xf32>
    %cst_169 = arith.constant 1.000000e+00 : f32
    %471 = vector.broadcast %cst_169 : f32 to vector<8x128xf32>
    %472 = arith.subf %471, %465 : vector<8x128xf32>
    %473 = arith.mulf %472, %470 : vector<8x128xf32>
    %474 = arith.mulf %465, %357 : vector<8x128xf32>
    %475 = arith.addf %473, %474 : vector<8x128xf32>
    %476 = tpu.concatenate %357, %386 in 1 : vector<8x128xf32>, vector<8x128xf32> -> vector<8x256xf32>
    %c2_170 = arith.constant 2 : index
    %c0_171 = arith.constant 0 : index
    %c0_172 = arith.constant 0 : index
    %477 = vector.load %arg1[%c2_170, %c0_171, %c0_172] : memref<4x256x512xf32, #tpu.memory_space<vmem>>, vector<1x256x512xf32>
    %478 = vector.shape_cast %477 : vector<1x256x512xf32> to vector<256x512xf32>
    %cst_173 = arith.constant dense<0.000000e+00> : vector<8x512xf32>
    %479 = tpu.matmul %476, %478, %cst_173 {dimension_numbers = #tpu.dot_dimension_numbers<[1], [0], [0], [1], [0, 0, 1, 1], [], []>} : vector<8x256xf32>, vector<256x512xf32>, vector<8x512xf32> -> vector<8x512xf32>
    %c2_174 = arith.constant 2 : index
    %c0_175 = arith.constant 0 : index
    %c0_176 = arith.constant 0 : index
    %480 = vector.load %arg2[%c2_174, %c0_175, %c0_176] : memref<4x8x512xf32, #tpu.memory_space<vmem>>, vector<1x8x512xf32>
    %481 = vector.shape_cast %480 : vector<1x8x512xf32> to vector<8x512xf32>
    %482 = arith.addf %479, %481 : vector<8x512xf32>
    %483 = vector.extract_strided_slice %482 {offsets = [0, 0], sizes = [8, 128], strides = [1, 1]} : vector<8x512xf32> to vector<8x128xf32>
    %484 = arith.negf %483 : vector<8x128xf32>
    %485 = math.exp %484 : vector<8x128xf32>
    %cst_177 = arith.constant 1.000000e+00 : f32
    %486 = vector.broadcast %cst_177 : f32 to vector<8x128xf32>
    %487 = arith.addf %486, %485 : vector<8x128xf32>
    %488 = arith.divf %486, %487 : vector<8x128xf32>
    %489 = vector.extract_strided_slice %482 {offsets = [0, 128], sizes = [8, 128], strides = [1, 1]} : vector<8x512xf32> to vector<8x128xf32>
    %490 = arith.negf %489 : vector<8x128xf32>
    %491 = math.exp %490 : vector<8x128xf32>
    %cst_178 = arith.constant 1.000000e+00 : f32
    %492 = vector.broadcast %cst_178 : f32 to vector<8x128xf32>
    %493 = arith.addf %492, %491 : vector<8x128xf32>
    %494 = arith.divf %492, %493 : vector<8x128xf32>
    %495 = vector.extract_strided_slice %482 {offsets = [0, 256], sizes = [8, 128], strides = [1, 1]} : vector<8x512xf32> to vector<8x128xf32>
    %496 = vector.extract_strided_slice %482 {offsets = [0, 384], sizes = [8, 128], strides = [1, 1]} : vector<8x512xf32> to vector<8x128xf32>
    %497 = arith.mulf %488, %496 : vector<8x128xf32>
    %498 = arith.addf %495, %497 : vector<8x128xf32>
    %499 = math.tanh %498 : vector<8x128xf32>
    %cst_179 = arith.constant 1.000000e+00 : f32
    %500 = vector.broadcast %cst_179 : f32 to vector<8x128xf32>
    %501 = arith.subf %500, %494 : vector<8x128xf32>
    %502 = arith.mulf %501, %499 : vector<8x128xf32>
    %503 = arith.mulf %494, %386 : vector<8x128xf32>
    %504 = arith.addf %502, %503 : vector<8x128xf32>
    %505 = tpu.concatenate %386, %415 in 1 : vector<8x128xf32>, vector<8x128xf32> -> vector<8x256xf32>
    %c3_180 = arith.constant 3 : index
    %c0_181 = arith.constant 0 : index
    %c0_182 = arith.constant 0 : index
    %506 = vector.load %arg1[%c3_180, %c0_181, %c0_182] : memref<4x256x512xf32, #tpu.memory_space<vmem>>, vector<1x256x512xf32>
    %507 = vector.shape_cast %506 : vector<1x256x512xf32> to vector<256x512xf32>
    %cst_183 = arith.constant dense<0.000000e+00> : vector<8x512xf32>
    %508 = tpu.matmul %505, %507, %cst_183 {dimension_numbers = #tpu.dot_dimension_numbers<[1], [0], [0], [1], [0, 0, 1, 1], [], []>} : vector<8x256xf32>, vector<256x512xf32>, vector<8x512xf32> -> vector<8x512xf32>
    %c3_184 = arith.constant 3 : index
    %c0_185 = arith.constant 0 : index
    %c0_186 = arith.constant 0 : index
    %509 = vector.load %arg2[%c3_184, %c0_185, %c0_186] : memref<4x8x512xf32, #tpu.memory_space<vmem>>, vector<1x8x512xf32>
    %510 = vector.shape_cast %509 : vector<1x8x512xf32> to vector<8x512xf32>
    %511 = arith.addf %508, %510 : vector<8x512xf32>
    %512 = vector.extract_strided_slice %511 {offsets = [0, 0], sizes = [8, 128], strides = [1, 1]} : vector<8x512xf32> to vector<8x128xf32>
    %513 = arith.negf %512 : vector<8x128xf32>
    %514 = math.exp %513 : vector<8x128xf32>
    %cst_187 = arith.constant 1.000000e+00 : f32
    %515 = vector.broadcast %cst_187 : f32 to vector<8x128xf32>
    %516 = arith.addf %515, %514 : vector<8x128xf32>
    %517 = arith.divf %515, %516 : vector<8x128xf32>
    %518 = vector.extract_strided_slice %511 {offsets = [0, 128], sizes = [8, 128], strides = [1, 1]} : vector<8x512xf32> to vector<8x128xf32>
    %519 = arith.negf %518 : vector<8x128xf32>
    %520 = math.exp %519 : vector<8x128xf32>
    %cst_188 = arith.constant 1.000000e+00 : f32
    %521 = vector.broadcast %cst_188 : f32 to vector<8x128xf32>
    %522 = arith.addf %521, %520 : vector<8x128xf32>
    %523 = arith.divf %521, %522 : vector<8x128xf32>
    %524 = vector.extract_strided_slice %511 {offsets = [0, 256], sizes = [8, 128], strides = [1, 1]} : vector<8x512xf32> to vector<8x128xf32>
    %525 = vector.extract_strided_slice %511 {offsets = [0, 384], sizes = [8, 128], strides = [1, 1]} : vector<8x512xf32> to vector<8x128xf32>
    %526 = arith.mulf %517, %525 : vector<8x128xf32>
    %527 = arith.addf %524, %526 : vector<8x128xf32>
    %528 = math.tanh %527 : vector<8x128xf32>
    %cst_189 = arith.constant 1.000000e+00 : f32
    %529 = vector.broadcast %cst_189 : f32 to vector<8x128xf32>
    %530 = arith.subf %529, %523 : vector<8x128xf32>
    %531 = arith.mulf %530, %528 : vector<8x128xf32>
    %532 = arith.mulf %523, %415 : vector<8x128xf32>
    %533 = arith.addf %531, %532 : vector<8x128xf32>
    %c16_190 = arith.constant 16 : index
    %c0_191 = arith.constant 0 : index
    %534 = vector.load %arg6[%c16_190, %c0_191] : memref<64x128xf32, #tpu.memory_space<vmem>>, vector<8x128xf32>
    tpu.vector_store %arg6[%c16_190, %c0_191], %533 {strides = array<i32>} : memref<64x128xf32, #tpu.memory_space<vmem>>, vector<8x128xf32>,
    %c48 = arith.constant 48 : index
    %c0_192 = arith.constant 0 : index
    %535 = vector.load %arg0[%c48, %c0_192] : memref<64x128xf32, #tpu.memory_space<vmem>>, vector<8x128xf32>
    %536 = tpu.concatenate %535, %446 in 1 : vector<8x128xf32>, vector<8x128xf32> -> vector<8x256xf32>
    %c0_193 = arith.constant 0 : index
    %c0_194 = arith.constant 0 : index
    %c0_195 = arith.constant 0 : index
    %537 = vector.load %arg1[%c0_193, %c0_194, %c0_195] : memref<4x256x512xf32, #tpu.memory_space<vmem>>, vector<1x256x512xf32>
    %538 = vector.shape_cast %537 : vector<1x256x512xf32> to vector<256x512xf32>
    %cst_196 = arith.constant dense<0.000000e+00> : vector<8x512xf32>
    %539 = tpu.matmul %536, %538, %cst_196 {dimension_numbers = #tpu.dot_dimension_numbers<[1], [0], [0], [1], [0, 0, 1, 1], [], []>} : vector<8x256xf32>, vector<256x512xf32>, vector<8x512xf32> -> vector<8x512xf32>
    %c0_197 = arith.constant 0 : index
    %c0_198 = arith.constant 0 : index
    %c0_199 = arith.constant 0 : index
    %540 = vector.load %arg2[%c0_197, %c0_198, %c0_199] : memref<4x8x512xf32, #tpu.memory_space<vmem>>, vector<1x8x512xf32>
    %541 = vector.shape_cast %540 : vector<1x8x512xf32> to vector<8x512xf32>
    %542 = arith.addf %539, %541 : vector<8x512xf32>
    %543 = vector.extract_strided_slice %542 {offsets = [0, 0], sizes = [8, 128], strides = [1, 1]} : vector<8x512xf32> to vector<8x128xf32>
    %544 = arith.negf %543 : vector<8x128xf32>
    %545 = math.exp %544 : vector<8x128xf32>
    %cst_200 = arith.constant 1.000000e+00 : f32
    %546 = vector.broadcast %cst_200 : f32 to vector<8x128xf32>
    %547 = arith.addf %546, %545 : vector<8x128xf32>
    %548 = arith.divf %546, %547 : vector<8x128xf32>
    %549 = vector.extract_strided_slice %542 {offsets = [0, 128], sizes = [8, 128], strides = [1, 1]} : vector<8x512xf32> to vector<8x128xf32>
    %550 = arith.negf %549 : vector<8x128xf32>
    %551 = math.exp %550 : vector<8x128xf32>
    %cst_201 = arith.constant 1.000000e+00 : f32
    %552 = vector.broadcast %cst_201 : f32 to vector<8x128xf32>
    %553 = arith.addf %552, %551 : vector<8x128xf32>
    %554 = arith.divf %552, %553 : vector<8x128xf32>
    %555 = vector.extract_strided_slice %542 {offsets = [0, 256], sizes = [8, 128], strides = [1, 1]} : vector<8x512xf32> to vector<8x128xf32>
    %556 = vector.extract_strided_slice %542 {offsets = [0, 384], sizes = [8, 128], strides = [1, 1]} : vector<8x512xf32> to vector<8x128xf32>
    %557 = arith.mulf %548, %556 : vector<8x128xf32>
    %558 = arith.addf %555, %557 : vector<8x128xf32>
    %559 = math.tanh %558 : vector<8x128xf32>
    %cst_202 = arith.constant 1.000000e+00 : f32
    %560 = vector.broadcast %cst_202 : f32 to vector<8x128xf32>
    %561 = arith.subf %560, %554 : vector<8x128xf32>
    %562 = arith.mulf %561, %559 : vector<8x128xf32>
    %563 = arith.mulf %554, %446 : vector<8x128xf32>
    %564 = arith.addf %562, %563 : vector<8x128xf32>
    %565 = tpu.concatenate %446, %475 in 1 : vector<8x128xf32>, vector<8x128xf32> -> vector<8x256xf32>
    %c1_203 = arith.constant 1 : index
    %c0_204 = arith.constant 0 : index
    %c0_205 = arith.constant 0 : index
    %566 = vector.load %arg1[%c1_203, %c0_204, %c0_205] : memref<4x256x512xf32, #tpu.memory_space<vmem>>, vector<1x256x512xf32>
    %567 = vector.shape_cast %566 : vector<1x256x512xf32> to vector<256x512xf32>
    %cst_206 = arith.constant dense<0.000000e+00> : vector<8x512xf32>
    %568 = tpu.matmul %565, %567, %cst_206 {dimension_numbers = #tpu.dot_dimension_numbers<[1], [0], [0], [1], [0, 0, 1, 1], [], []>} : vector<8x256xf32>, vector<256x512xf32>, vector<8x512xf32> -> vector<8x512xf32>
    %c1_207 = arith.constant 1 : index
    %c0_208 = arith.constant 0 : index
    %c0_209 = arith.constant 0 : index
    %569 = vector.load %arg2[%c1_207, %c0_208, %c0_209] : memref<4x8x512xf32, #tpu.memory_space<vmem>>, vector<1x8x512xf32>
    %570 = vector.shape_cast %569 : vector<1x8x512xf32> to vector<8x512xf32>
    %571 = arith.addf %568, %570 : vector<8x512xf32>
    %572 = vector.extract_strided_slice %571 {offsets = [0, 0], sizes = [8, 128], strides = [1, 1]} : vector<8x512xf32> to vector<8x128xf32>
    %573 = arith.negf %572 : vector<8x128xf32>
    %574 = math.exp %573 : vector<8x128xf32>
    %cst_210 = arith.constant 1.000000e+00 : f32
    %575 = vector.broadcast %cst_210 : f32 to vector<8x128xf32>
    %576 = arith.addf %575, %574 : vector<8x128xf32>
    %577 = arith.divf %575, %576 : vector<8x128xf32>
    %578 = vector.extract_strided_slice %571 {offsets = [0, 128], sizes = [8, 128], strides = [1, 1]} : vector<8x512xf32> to vector<8x128xf32>
    %579 = arith.negf %578 : vector<8x128xf32>
    %580 = math.exp %579 : vector<8x128xf32>
    %cst_211 = arith.constant 1.000000e+00 : f32
    %581 = vector.broadcast %cst_211 : f32 to vector<8x128xf32>
    %582 = arith.addf %581, %580 : vector<8x128xf32>
    %583 = arith.divf %581, %582 : vector<8x128xf32>
    %584 = vector.extract_strided_slice %571 {offsets = [0, 256], sizes = [8, 128], strides = [1, 1]} : vector<8x512xf32> to vector<8x128xf32>
    %585 = vector.extract_strided_slice %571 {offsets = [0, 384], sizes = [8, 128], strides = [1, 1]} : vector<8x512xf32> to vector<8x128xf32>
    %586 = arith.mulf %577, %585 : vector<8x128xf32>
    %587 = arith.addf %584, %586 : vector<8x128xf32>
    %588 = math.tanh %587 : vector<8x128xf32>
    %cst_212 = arith.constant 1.000000e+00 : f32
    %589 = vector.broadcast %cst_212 : f32 to vector<8x128xf32>
    %590 = arith.subf %589, %583 : vector<8x128xf32>
    %591 = arith.mulf %590, %588 : vector<8x128xf32>
    %592 = arith.mulf %583, %475 : vector<8x128xf32>
    %593 = arith.addf %591, %592 : vector<8x128xf32>
    %594 = tpu.concatenate %475, %504 in 1 : vector<8x128xf32>, vector<8x128xf32> -> vector<8x256xf32>
    %c2_213 = arith.constant 2 : index
    %c0_214 = arith.constant 0 : index
    %c0_215 = arith.constant 0 : index
    %595 = vector.load %arg1[%c2_213, %c0_214, %c0_215] : memref<4x256x512xf32, #tpu.memory_space<vmem>>, vector<1x256x512xf32>
    %596 = vector.shape_cast %595 : vector<1x256x512xf32> to vector<256x512xf32>
    %cst_216 = arith.constant dense<0.000000e+00> : vector<8x512xf32>
    %597 = tpu.matmul %594, %596, %cst_216 {dimension_numbers = #tpu.dot_dimension_numbers<[1], [0], [0], [1], [0, 0, 1, 1], [], []>} : vector<8x256xf32>, vector<256x512xf32>, vector<8x512xf32> -> vector<8x512xf32>
    %c2_217 = arith.constant 2 : index
    %c0_218 = arith.constant 0 : index
    %c0_219 = arith.constant 0 : index
    %598 = vector.load %arg2[%c2_217, %c0_218, %c0_219] : memref<4x8x512xf32, #tpu.memory_space<vmem>>, vector<1x8x512xf32>
    %599 = vector.shape_cast %598 : vector<1x8x512xf32> to vector<8x512xf32>
    %600 = arith.addf %597, %599 : vector<8x512xf32>
    %601 = vector.extract_strided_slice %600 {offsets = [0, 0], sizes = [8, 128], strides = [1, 1]} : vector<8x512xf32> to vector<8x128xf32>
    %602 = arith.negf %601 : vector<8x128xf32>
    %603 = math.exp %602 : vector<8x128xf32>
    %cst_220 = arith.constant 1.000000e+00 : f32
    %604 = vector.broadcast %cst_220 : f32 to vector<8x128xf32>
    %605 = arith.addf %604, %603 : vector<8x128xf32>
    %606 = arith.divf %604, %605 : vector<8x128xf32>
    %607 = vector.extract_strided_slice %600 {offsets = [0, 128], sizes = [8, 128], strides = [1, 1]} : vector<8x512xf32> to vector<8x128xf32>
    %608 = arith.negf %607 : vector<8x128xf32>
    %609 = math.exp %608 : vector<8x128xf32>
    %cst_221 = arith.constant 1.000000e+00 : f32
    %610 = vector.broadcast %cst_221 : f32 to vector<8x128xf32>
    %611 = arith.addf %610, %609 : vector<8x128xf32>
    %612 = arith.divf %610, %611 : vector<8x128xf32>
    %613 = vector.extract_strided_slice %600 {offsets = [0, 256], sizes = [8, 128], strides = [1, 1]} : vector<8x512xf32> to vector<8x128xf32>
    %614 = vector.extract_strided_slice %600 {offsets = [0, 384], sizes = [8, 128], strides = [1, 1]} : vector<8x512xf32> to vector<8x128xf32>
    %615 = arith.mulf %606, %614 : vector<8x128xf32>
    %616 = arith.addf %613, %615 : vector<8x128xf32>
    %617 = math.tanh %616 : vector<8x128xf32>
    %cst_222 = arith.constant 1.000000e+00 : f32
    %618 = vector.broadcast %cst_222 : f32 to vector<8x128xf32>
    %619 = arith.subf %618, %612 : vector<8x128xf32>
    %620 = arith.mulf %619, %617 : vector<8x128xf32>
    %621 = arith.mulf %612, %504 : vector<8x128xf32>
    %622 = arith.addf %620, %621 : vector<8x128xf32>
    %623 = tpu.concatenate %504, %533 in 1 : vector<8x128xf32>, vector<8x128xf32> -> vector<8x256xf32>
    %c3_223 = arith.constant 3 : index
    %c0_224 = arith.constant 0 : index
    %c0_225 = arith.constant 0 : index
    %624 = vector.load %arg1[%c3_223, %c0_224, %c0_225] : memref<4x256x512xf32, #tpu.memory_space<vmem>>, vector<1x256x512xf32>
    %625 = vector.shape_cast %624 : vector<1x256x512xf32> to vector<256x512xf32>
    %cst_226 = arith.constant dense<0.000000e+00> : vector<8x512xf32>
    %626 = tpu.matmul %623, %625, %cst_226 {dimension_numbers = #tpu.dot_dimension_numbers<[1], [0], [0], [1], [0, 0, 1, 1], [], []>} : vector<8x256xf32>, vector<256x512xf32>, vector<8x512xf32> -> vector<8x512xf32>
    %c3_227 = arith.constant 3 : index
    %c0_228 = arith.constant 0 : index
    %c0_229 = arith.constant 0 : index
    %627 = vector.load %arg2[%c3_227, %c0_228, %c0_229] : memref<4x8x512xf32, #tpu.memory_space<vmem>>, vector<1x8x512xf32>
    %628 = vector.shape_cast %627 : vector<1x8x512xf32> to vector<8x512xf32>
    %629 = arith.addf %626, %628 : vector<8x512xf32>
    %630 = vector.extract_strided_slice %629 {offsets = [0, 0], sizes = [8, 128], strides = [1, 1]} : vector<8x512xf32> to vector<8x128xf32>
    %631 = arith.negf %630 : vector<8x128xf32>
    %632 = math.exp %631 : vector<8x128xf32>
    %cst_230 = arith.constant 1.000000e+00 : f32
    %633 = vector.broadcast %cst_230 : f32 to vector<8x128xf32>
    %634 = arith.addf %633, %632 : vector<8x128xf32>
    %635 = arith.divf %633, %634 : vector<8x128xf32>
    %636 = vector.extract_strided_slice %629 {offsets = [0, 128], sizes = [8, 128], strides = [1, 1]} : vector<8x512xf32> to vector<8x128xf32>
    %637 = arith.negf %636 : vector<8x128xf32>
    %638 = math.exp %637 : vector<8x128xf32>
    %cst_231 = arith.constant 1.000000e+00 : f32
    %639 = vector.broadcast %cst_231 : f32 to vector<8x128xf32>
    %640 = arith.addf %639, %638 : vector<8x128xf32>
    %641 = arith.divf %639, %640 : vector<8x128xf32>
    %642 = vector.extract_strided_slice %629 {offsets = [0, 256], sizes = [8, 128], strides = [1, 1]} : vector<8x512xf32> to vector<8x128xf32>
    %643 = vector.extract_strided_slice %629 {offsets = [0, 384], sizes = [8, 128], strides = [1, 1]} : vector<8x512xf32> to vector<8x128xf32>
    %644 = arith.mulf %635, %643 : vector<8x128xf32>
    %645 = arith.addf %642, %644 : vector<8x128xf32>
    %646 = math.tanh %645 : vector<8x128xf32>
    %cst_232 = arith.constant 1.000000e+00 : f32
    %647 = vector.broadcast %cst_232 : f32 to vector<8x128xf32>
    %648 = arith.subf %647, %641 : vector<8x128xf32>
    %649 = arith.mulf %648, %646 : vector<8x128xf32>
    %650 = arith.mulf %641, %533 : vector<8x128xf32>
    %651 = arith.addf %649, %650 : vector<8x128xf32>
    %c24_233 = arith.constant 24 : index
    %c0_234 = arith.constant 0 : index
    %652 = vector.load %arg6[%c24_233, %c0_234] : memref<64x128xf32, #tpu.memory_space<vmem>>, vector<8x128xf32>
    tpu.vector_store %arg6[%c24_233, %c0_234], %651 {strides = array<i32>} : memref<64x128xf32, #tpu.memory_space<vmem>>, vector<8x128xf32>,
    %c56 = arith.constant 56 : index
    %c0_235 = arith.constant 0 : index
    %653 = vector.load %arg0[%c56, %c0_235] : memref<64x128xf32, #tpu.memory_space<vmem>>, vector<8x128xf32>
    %654 = tpu.concatenate %653, %564 in 1 : vector<8x128xf32>, vector<8x128xf32> -> vector<8x256xf32>
    %c0_236 = arith.constant 0 : index
    %c0_237 = arith.constant 0 : index
    %c0_238 = arith.constant 0 : index
    %655 = vector.load %arg1[%c0_236, %c0_237, %c0_238] : memref<4x256x512xf32, #tpu.memory_space<vmem>>, vector<1x256x512xf32>
    %656 = vector.shape_cast %655 : vector<1x256x512xf32> to vector<256x512xf32>
    %cst_239 = arith.constant dense<0.000000e+00> : vector<8x512xf32>
    %657 = tpu.matmul %654, %656, %cst_239 {dimension_numbers = #tpu.dot_dimension_numbers<[1], [0], [0], [1], [0, 0, 1, 1], [], []>} : vector<8x256xf32>, vector<256x512xf32>, vector<8x512xf32> -> vector<8x512xf32>
    %c0_240 = arith.constant 0 : index
    %c0_241 = arith.constant 0 : index
    %c0_242 = arith.constant 0 : index
    %658 = vector.load %arg2[%c0_240, %c0_241, %c0_242] : memref<4x8x512xf32, #tpu.memory_space<vmem>>, vector<1x8x512xf32>
    %659 = vector.shape_cast %658 : vector<1x8x512xf32> to vector<8x512xf32>
    %660 = arith.addf %657, %659 : vector<8x512xf32>
    %661 = vector.extract_strided_slice %660 {offsets = [0, 0], sizes = [8, 128], strides = [1, 1]} : vector<8x512xf32> to vector<8x128xf32>
    %662 = arith.negf %661 : vector<8x128xf32>
    %663 = math.exp %662 : vector<8x128xf32>
    %cst_243 = arith.constant 1.000000e+00 : f32
    %664 = vector.broadcast %cst_243 : f32 to vector<8x128xf32>
    %665 = arith.addf %664, %663 : vector<8x128xf32>
    %666 = arith.divf %664, %665 : vector<8x128xf32>
    %667 = vector.extract_strided_slice %660 {offsets = [0, 128], sizes = [8, 128], strides = [1, 1]} : vector<8x512xf32> to vector<8x128xf32>
    %668 = arith.negf %667 : vector<8x128xf32>
    %669 = math.exp %668 : vector<8x128xf32>
    %cst_244 = arith.constant 1.000000e+00 : f32
    %670 = vector.broadcast %cst_244 : f32 to vector<8x128xf32>
    %671 = arith.addf %670, %669 : vector<8x128xf32>
    %672 = arith.divf %670, %671 : vector<8x128xf32>
    %673 = vector.extract_strided_slice %660 {offsets = [0, 256], sizes = [8, 128], strides = [1, 1]} : vector<8x512xf32> to vector<8x128xf32>
    %674 = vector.extract_strided_slice %660 {offsets = [0, 384], sizes = [8, 128], strides = [1, 1]} : vector<8x512xf32> to vector<8x128xf32>
    %675 = arith.mulf %666, %674 : vector<8x128xf32>
    %676 = arith.addf %673, %675 : vector<8x128xf32>
    %677 = math.tanh %676 : vector<8x128xf32>
    %cst_245 = arith.constant 1.000000e+00 : f32
    %678 = vector.broadcast %cst_245 : f32 to vector<8x128xf32>
    %679 = arith.subf %678, %672 : vector<8x128xf32>
    %680 = arith.mulf %679, %677 : vector<8x128xf32>
    %681 = arith.mulf %672, %564 : vector<8x128xf32>
    %682 = arith.addf %680, %681 : vector<8x128xf32>
    %683 = tpu.concatenate %564, %593 in 1 : vector<8x128xf32>, vector<8x128xf32> -> vector<8x256xf32>
    %c1_246 = arith.constant 1 : index
    %c0_247 = arith.constant 0 : index
    %c0_248 = arith.constant 0 : index
    %684 = vector.load %arg1[%c1_246, %c0_247, %c0_248] : memref<4x256x512xf32, #tpu.memory_space<vmem>>, vector<1x256x512xf32>
    %685 = vector.shape_cast %684 : vector<1x256x512xf32> to vector<256x512xf32>
    %cst_249 = arith.constant dense<0.000000e+00> : vector<8x512xf32>
    %686 = tpu.matmul %683, %685, %cst_249 {dimension_numbers = #tpu.dot_dimension_numbers<[1], [0], [0], [1], [0, 0, 1, 1], [], []>} : vector<8x256xf32>, vector<256x512xf32>, vector<8x512xf32> -> vector<8x512xf32>
    %c1_250 = arith.constant 1 : index
    %c0_251 = arith.constant 0 : index
    %c0_252 = arith.constant 0 : index
    %687 = vector.load %arg2[%c1_250, %c0_251, %c0_252] : memref<4x8x512xf32, #tpu.memory_space<vmem>>, vector<1x8x512xf32>
    %688 = vector.shape_cast %687 : vector<1x8x512xf32> to vector<8x512xf32>
    %689 = arith.addf %686, %688 : vector<8x512xf32>
    %690 = vector.extract_strided_slice %689 {offsets = [0, 0], sizes = [8, 128], strides = [1, 1]} : vector<8x512xf32> to vector<8x128xf32>
    %691 = arith.negf %690 : vector<8x128xf32>
    %692 = math.exp %691 : vector<8x128xf32>
    %cst_253 = arith.constant 1.000000e+00 : f32
    %693 = vector.broadcast %cst_253 : f32 to vector<8x128xf32>
    %694 = arith.addf %693, %692 : vector<8x128xf32>
    %695 = arith.divf %693, %694 : vector<8x128xf32>
    %696 = vector.extract_strided_slice %689 {offsets = [0, 128], sizes = [8, 128], strides = [1, 1]} : vector<8x512xf32> to vector<8x128xf32>
    %697 = arith.negf %696 : vector<8x128xf32>
    %698 = math.exp %697 : vector<8x128xf32>
    %cst_254 = arith.constant 1.000000e+00 : f32
    %699 = vector.broadcast %cst_254 : f32 to vector<8x128xf32>
    %700 = arith.addf %699, %698 : vector<8x128xf32>
    %701 = arith.divf %699, %700 : vector<8x128xf32>
    %702 = vector.extract_strided_slice %689 {offsets = [0, 256], sizes = [8, 128], strides = [1, 1]} : vector<8x512xf32> to vector<8x128xf32>
    %703 = vector.extract_strided_slice %689 {offsets = [0, 384], sizes = [8, 128], strides = [1, 1]} : vector<8x512xf32> to vector<8x128xf32>
    %704 = arith.mulf %695, %703 : vector<8x128xf32>
    %705 = arith.addf %702, %704 : vector<8x128xf32>
    %706 = math.tanh %705 : vector<8x128xf32>
    %cst_255 = arith.constant 1.000000e+00 : f32
    %707 = vector.broadcast %cst_255 : f32 to vector<8x128xf32>
    %708 = arith.subf %707, %701 : vector<8x128xf32>
    %709 = arith.mulf %708, %706 : vector<8x128xf32>
    %710 = arith.mulf %701, %593 : vector<8x128xf32>
    %711 = arith.addf %709, %710 : vector<8x128xf32>
    %712 = tpu.concatenate %593, %622 in 1 : vector<8x128xf32>, vector<8x128xf32> -> vector<8x256xf32>
    %c2_256 = arith.constant 2 : index
    %c0_257 = arith.constant 0 : index
    %c0_258 = arith.constant 0 : index
    %713 = vector.load %arg1[%c2_256, %c0_257, %c0_258] : memref<4x256x512xf32, #tpu.memory_space<vmem>>, vector<1x256x512xf32>
    %714 = vector.shape_cast %713 : vector<1x256x512xf32> to vector<256x512xf32>
    %cst_259 = arith.constant dense<0.000000e+00> : vector<8x512xf32>
    %715 = tpu.matmul %712, %714, %cst_259 {dimension_numbers = #tpu.dot_dimension_numbers<[1], [0], [0], [1], [0, 0, 1, 1], [], []>} : vector<8x256xf32>, vector<256x512xf32>, vector<8x512xf32> -> vector<8x512xf32>
    %c2_260 = arith.constant 2 : index
    %c0_261 = arith.constant 0 : index
    %c0_262 = arith.constant 0 : index
    %716 = vector.load %arg2[%c2_260, %c0_261, %c0_262] : memref<4x8x512xf32, #tpu.memory_space<vmem>>, vector<1x8x512xf32>
    %717 = vector.shape_cast %716 : vector<1x8x512xf32> to vector<8x512xf32>
    %718 = arith.addf %715, %717 : vector<8x512xf32>
    %719 = vector.extract_strided_slice %718 {offsets = [0, 0], sizes = [8, 128], strides = [1, 1]} : vector<8x512xf32> to vector<8x128xf32>
    %720 = arith.negf %719 : vector<8x128xf32>
    %721 = math.exp %720 : vector<8x128xf32>
    %cst_263 = arith.constant 1.000000e+00 : f32
    %722 = vector.broadcast %cst_263 : f32 to vector<8x128xf32>
    %723 = arith.addf %722, %721 : vector<8x128xf32>
    %724 = arith.divf %722, %723 : vector<8x128xf32>
    %725 = vector.extract_strided_slice %718 {offsets = [0, 128], sizes = [8, 128], strides = [1, 1]} : vector<8x512xf32> to vector<8x128xf32>
    %726 = arith.negf %725 : vector<8x128xf32>
    %727 = math.exp %726 : vector<8x128xf32>
    %cst_264 = arith.constant 1.000000e+00 : f32
    %728 = vector.broadcast %cst_264 : f32 to vector<8x128xf32>
    %729 = arith.addf %728, %727 : vector<8x128xf32>
    %730 = arith.divf %728, %729 : vector<8x128xf32>
    %731 = vector.extract_strided_slice %718 {offsets = [0, 256], sizes = [8, 128], strides = [1, 1]} : vector<8x512xf32> to vector<8x128xf32>
    %732 = vector.extract_strided_slice %718 {offsets = [0, 384], sizes = [8, 128], strides = [1, 1]} : vector<8x512xf32> to vector<8x128xf32>
    %733 = arith.mulf %724, %732 : vector<8x128xf32>
    %734 = arith.addf %731, %733 : vector<8x128xf32>
    %735 = math.tanh %734 : vector<8x128xf32>
    %cst_265 = arith.constant 1.000000e+00 : f32
    %736 = vector.broadcast %cst_265 : f32 to vector<8x128xf32>
    %737 = arith.subf %736, %730 : vector<8x128xf32>
    %738 = arith.mulf %737, %735 : vector<8x128xf32>
    %739 = arith.mulf %730, %622 : vector<8x128xf32>
    %740 = arith.addf %738, %739 : vector<8x128xf32>
    %741 = tpu.concatenate %622, %651 in 1 : vector<8x128xf32>, vector<8x128xf32> -> vector<8x256xf32>
    %c3_266 = arith.constant 3 : index
    %c0_267 = arith.constant 0 : index
    %c0_268 = arith.constant 0 : index
    %742 = vector.load %arg1[%c3_266, %c0_267, %c0_268] : memref<4x256x512xf32, #tpu.memory_space<vmem>>, vector<1x256x512xf32>
    %743 = vector.shape_cast %742 : vector<1x256x512xf32> to vector<256x512xf32>
    %cst_269 = arith.constant dense<0.000000e+00> : vector<8x512xf32>
    %744 = tpu.matmul %741, %743, %cst_269 {dimension_numbers = #tpu.dot_dimension_numbers<[1], [0], [0], [1], [0, 0, 1, 1], [], []>} : vector<8x256xf32>, vector<256x512xf32>, vector<8x512xf32> -> vector<8x512xf32>
    %c3_270 = arith.constant 3 : index
    %c0_271 = arith.constant 0 : index
    %c0_272 = arith.constant 0 : index
    %745 = vector.load %arg2[%c3_270, %c0_271, %c0_272] : memref<4x8x512xf32, #tpu.memory_space<vmem>>, vector<1x8x512xf32>
    %746 = vector.shape_cast %745 : vector<1x8x512xf32> to vector<8x512xf32>
    %747 = arith.addf %744, %746 : vector<8x512xf32>
    %748 = vector.extract_strided_slice %747 {offsets = [0, 0], sizes = [8, 128], strides = [1, 1]} : vector<8x512xf32> to vector<8x128xf32>
    %749 = arith.negf %748 : vector<8x128xf32>
    %750 = math.exp %749 : vector<8x128xf32>
    %cst_273 = arith.constant 1.000000e+00 : f32
    %751 = vector.broadcast %cst_273 : f32 to vector<8x128xf32>
    %752 = arith.addf %751, %750 : vector<8x128xf32>
    %753 = arith.divf %751, %752 : vector<8x128xf32>
    %754 = vector.extract_strided_slice %747 {offsets = [0, 128], sizes = [8, 128], strides = [1, 1]} : vector<8x512xf32> to vector<8x128xf32>
    %755 = arith.negf %754 : vector<8x128xf32>
    %756 = math.exp %755 : vector<8x128xf32>
    %cst_274 = arith.constant 1.000000e+00 : f32
    %757 = vector.broadcast %cst_274 : f32 to vector<8x128xf32>
    %758 = arith.addf %757, %756 : vector<8x128xf32>
    %759 = arith.divf %757, %758 : vector<8x128xf32>
    %760 = vector.extract_strided_slice %747 {offsets = [0, 256], sizes = [8, 128], strides = [1, 1]} : vector<8x512xf32> to vector<8x128xf32>
    %761 = vector.extract_strided_slice %747 {offsets = [0, 384], sizes = [8, 128], strides = [1, 1]} : vector<8x512xf32> to vector<8x128xf32>
    %762 = arith.mulf %753, %761 : vector<8x128xf32>
    %763 = arith.addf %760, %762 : vector<8x128xf32>
    %764 = math.tanh %763 : vector<8x128xf32>
    %cst_275 = arith.constant 1.000000e+00 : f32
    %765 = vector.broadcast %cst_275 : f32 to vector<8x128xf32>
    %766 = arith.subf %765, %759 : vector<8x128xf32>
    %767 = arith.mulf %766, %764 : vector<8x128xf32>
    %768 = arith.mulf %759, %651 : vector<8x128xf32>
    %769 = arith.addf %767, %768 : vector<8x128xf32>
    %c32_276 = arith.constant 32 : index
    %c0_277 = arith.constant 0 : index
    %770 = vector.load %arg6[%c32_276, %c0_277] : memref<64x128xf32, #tpu.memory_space<vmem>>, vector<8x128xf32>
    tpu.vector_store %arg6[%c32_276, %c0_277], %769 {strides = array<i32>} : memref<64x128xf32, #tpu.memory_space<vmem>>, vector<8x128xf32>,
    %771 = tpu.concatenate %682, %711 in 1 : vector<8x128xf32>, vector<8x128xf32> -> vector<8x256xf32>
    %c1_278 = arith.constant 1 : index
    %c0_279 = arith.constant 0 : index
    %c0_280 = arith.constant 0 : index
    %772 = vector.load %arg1[%c1_278, %c0_279, %c0_280] : memref<4x256x512xf32, #tpu.memory_space<vmem>>, vector<1x256x512xf32>
    %773 = vector.shape_cast %772 : vector<1x256x512xf32> to vector<256x512xf32>
    %cst_281 = arith.constant dense<0.000000e+00> : vector<8x512xf32>
    %774 = tpu.matmul %771, %773, %cst_281 {dimension_numbers = #tpu.dot_dimension_numbers<[1], [0], [0], [1], [0, 0, 1, 1], [], []>} : vector<8x256xf32>, vector<256x512xf32>, vector<8x512xf32> -> vector<8x512xf32>
    %c1_282 = arith.constant 1 : index
    %c0_283 = arith.constant 0 : index
    %c0_284 = arith.constant 0 : index
    %775 = vector.load %arg2[%c1_282, %c0_283, %c0_284] : memref<4x8x512xf32, #tpu.memory_space<vmem>>, vector<1x8x512xf32>
    %776 = vector.shape_cast %775 : vector<1x8x512xf32> to vector<8x512xf32>
    %777 = arith.addf %774, %776 : vector<8x512xf32>
    %778 = vector.extract_strided_slice %777 {offsets = [0, 0], sizes = [8, 128], strides = [1, 1]} : vector<8x512xf32> to vector<8x128xf32>
    %779 = arith.negf %778 : vector<8x128xf32>
    %780 = math.exp %779 : vector<8x128xf32>
    %cst_285 = arith.constant 1.000000e+00 : f32
    %781 = vector.broadcast %cst_285 : f32 to vector<8x128xf32>
    %782 = arith.addf %781, %780 : vector<8x128xf32>
    %783 = arith.divf %781, %782 : vector<8x128xf32>
    %784 = vector.extract_strided_slice %777 {offsets = [0, 128], sizes = [8, 128], strides = [1, 1]} : vector<8x512xf32> to vector<8x128xf32>
    %785 = arith.negf %784 : vector<8x128xf32>
    %786 = math.exp %785 : vector<8x128xf32>
    %cst_286 = arith.constant 1.000000e+00 : f32
    %787 = vector.broadcast %cst_286 : f32 to vector<8x128xf32>
    %788 = arith.addf %787, %786 : vector<8x128xf32>
    %789 = arith.divf %787, %788 : vector<8x128xf32>
    %790 = vector.extract_strided_slice %777 {offsets = [0, 256], sizes = [8, 128], strides = [1, 1]} : vector<8x512xf32> to vector<8x128xf32>
    %791 = vector.extract_strided_slice %777 {offsets = [0, 384], sizes = [8, 128], strides = [1, 1]} : vector<8x512xf32> to vector<8x128xf32>
    %792 = arith.mulf %783, %791 : vector<8x128xf32>
    %793 = arith.addf %790, %792 : vector<8x128xf32>
    %794 = math.tanh %793 : vector<8x128xf32>
    %cst_287 = arith.constant 1.000000e+00 : f32
    %795 = vector.broadcast %cst_287 : f32 to vector<8x128xf32>
    %796 = arith.subf %795, %789 : vector<8x128xf32>
    %797 = arith.mulf %796, %794 : vector<8x128xf32>
    %798 = arith.mulf %789, %711 : vector<8x128xf32>
    %799 = arith.addf %797, %798 : vector<8x128xf32>
    %800 = tpu.concatenate %711, %740 in 1 : vector<8x128xf32>, vector<8x128xf32> -> vector<8x256xf32>
    %c2_288 = arith.constant 2 : index
    %c0_289 = arith.constant 0 : index
    %c0_290 = arith.constant 0 : index
    %801 = vector.load %arg1[%c2_288, %c0_289, %c0_290] : memref<4x256x512xf32, #tpu.memory_space<vmem>>, vector<1x256x512xf32>
    %802 = vector.shape_cast %801 : vector<1x256x512xf32> to vector<256x512xf32>
    %cst_291 = arith.constant dense<0.000000e+00> : vector<8x512xf32>
    %803 = tpu.matmul %800, %802, %cst_291 {dimension_numbers = #tpu.dot_dimension_numbers<[1], [0], [0], [1], [0, 0, 1, 1], [], []>} : vector<8x256xf32>, vector<256x512xf32>, vector<8x512xf32> -> vector<8x512xf32>
    %c2_292 = arith.constant 2 : index
    %c0_293 = arith.constant 0 : index
    %c0_294 = arith.constant 0 : index
    %804 = vector.load %arg2[%c2_292, %c0_293, %c0_294] : memref<4x8x512xf32, #tpu.memory_space<vmem>>, vector<1x8x512xf32>
    %805 = vector.shape_cast %804 : vector<1x8x512xf32> to vector<8x512xf32>
    %806 = arith.addf %803, %805 : vector<8x512xf32>
    %807 = vector.extract_strided_slice %806 {offsets = [0, 0], sizes = [8, 128], strides = [1, 1]} : vector<8x512xf32> to vector<8x128xf32>
    %808 = arith.negf %807 : vector<8x128xf32>
    %809 = math.exp %808 : vector<8x128xf32>
    %cst_295 = arith.constant 1.000000e+00 : f32
    %810 = vector.broadcast %cst_295 : f32 to vector<8x128xf32>
    %811 = arith.addf %810, %809 : vector<8x128xf32>
    %812 = arith.divf %810, %811 : vector<8x128xf32>
    %813 = vector.extract_strided_slice %806 {offsets = [0, 128], sizes = [8, 128], strides = [1, 1]} : vector<8x512xf32> to vector<8x128xf32>
    %814 = arith.negf %813 : vector<8x128xf32>
    %815 = math.exp %814 : vector<8x128xf32>
    %cst_296 = arith.constant 1.000000e+00 : f32
    %816 = vector.broadcast %cst_296 : f32 to vector<8x128xf32>
    %817 = arith.addf %816, %815 : vector<8x128xf32>
    %818 = arith.divf %816, %817 : vector<8x128xf32>
    %819 = vector.extract_strided_slice %806 {offsets = [0, 256], sizes = [8, 128], strides = [1, 1]} : vector<8x512xf32> to vector<8x128xf32>
    %820 = vector.extract_strided_slice %806 {offsets = [0, 384], sizes = [8, 128], strides = [1, 1]} : vector<8x512xf32> to vector<8x128xf32>
    %821 = arith.mulf %812, %820 : vector<8x128xf32>
    %822 = arith.addf %819, %821 : vector<8x128xf32>
    %823 = math.tanh %822 : vector<8x128xf32>
    %cst_297 = arith.constant 1.000000e+00 : f32
    %824 = vector.broadcast %cst_297 : f32 to vector<8x128xf32>
    %825 = arith.subf %824, %818 : vector<8x128xf32>
    %826 = arith.mulf %825, %823 : vector<8x128xf32>
    %827 = arith.mulf %818, %740 : vector<8x128xf32>
    %828 = arith.addf %826, %827 : vector<8x128xf32>
    %829 = tpu.concatenate %740, %769 in 1 : vector<8x128xf32>, vector<8x128xf32> -> vector<8x256xf32>
    %c3_298 = arith.constant 3 : index
    %c0_299 = arith.constant 0 : index
    %c0_300 = arith.constant 0 : index
    %830 = vector.load %arg1[%c3_298, %c0_299, %c0_300] : memref<4x256x512xf32, #tpu.memory_space<vmem>>, vector<1x256x512xf32>
    %831 = vector.shape_cast %830 : vector<1x256x512xf32> to vector<256x512xf32>
    %cst_301 = arith.constant dense<0.000000e+00> : vector<8x512xf32>
    %832 = tpu.matmul %829, %831, %cst_301 {dimension_numbers = #tpu.dot_dimension_numbers<[1], [0], [0], [1], [0, 0, 1, 1], [], []>} : vector<8x256xf32>, vector<256x512xf32>, vector<8x512xf32> -> vector<8x512xf32>
    %c3_302 = arith.constant 3 : index
    %c0_303 = arith.constant 0 : index
    %c0_304 = arith.constant 0 : index
    %833 = vector.load %arg2[%c3_302, %c0_303, %c0_304] : memref<4x8x512xf32, #tpu.memory_space<vmem>>, vector<1x8x512xf32>
    %834 = vector.shape_cast %833 : vector<1x8x512xf32> to vector<8x512xf32>
    %835 = arith.addf %832, %834 : vector<8x512xf32>
    %836 = vector.extract_strided_slice %835 {offsets = [0, 0], sizes = [8, 128], strides = [1, 1]} : vector<8x512xf32> to vector<8x128xf32>
    %837 = arith.negf %836 : vector<8x128xf32>
    %838 = math.exp %837 : vector<8x128xf32>
    %cst_305 = arith.constant 1.000000e+00 : f32
    %839 = vector.broadcast %cst_305 : f32 to vector<8x128xf32>
    %840 = arith.addf %839, %838 : vector<8x128xf32>
    %841 = arith.divf %839, %840 : vector<8x128xf32>
    %842 = vector.extract_strided_slice %835 {offsets = [0, 128], sizes = [8, 128], strides = [1, 1]} : vector<8x512xf32> to vector<8x128xf32>
    %843 = arith.negf %842 : vector<8x128xf32>
    %844 = math.exp %843 : vector<8x128xf32>
    %cst_306 = arith.constant 1.000000e+00 : f32
    %845 = vector.broadcast %cst_306 : f32 to vector<8x128xf32>
    %846 = arith.addf %845, %844 : vector<8x128xf32>
    %847 = arith.divf %845, %846 : vector<8x128xf32>
    %848 = vector.extract_strided_slice %835 {offsets = [0, 256], sizes = [8, 128], strides = [1, 1]} : vector<8x512xf32> to vector<8x128xf32>
    %849 = vector.extract_strided_slice %835 {offsets = [0, 384], sizes = [8, 128], strides = [1, 1]} : vector<8x512xf32> to vector<8x128xf32>
    %850 = arith.mulf %841, %849 : vector<8x128xf32>
    %851 = arith.addf %848, %850 : vector<8x128xf32>
    %852 = math.tanh %851 : vector<8x128xf32>
    %cst_307 = arith.constant 1.000000e+00 : f32
    %853 = vector.broadcast %cst_307 : f32 to vector<8x128xf32>
    %854 = arith.subf %853, %847 : vector<8x128xf32>
    %855 = arith.mulf %854, %852 : vector<8x128xf32>
    %856 = arith.mulf %847, %769 : vector<8x128xf32>
    %857 = arith.addf %855, %856 : vector<8x128xf32>
    %c40_308 = arith.constant 40 : index
    %c0_309 = arith.constant 0 : index
    %858 = vector.load %arg6[%c40_308, %c0_309] : memref<64x128xf32, #tpu.memory_space<vmem>>, vector<8x128xf32>
    tpu.vector_store %arg6[%c40_308, %c0_309], %857 {strides = array<i32>} : memref<64x128xf32, #tpu.memory_space<vmem>>, vector<8x128xf32>,
    %859 = tpu.concatenate %799, %828 in 1 : vector<8x128xf32>, vector<8x128xf32> -> vector<8x256xf32>
    %c2_310 = arith.constant 2 : index
    %c0_311 = arith.constant 0 : index
    %c0_312 = arith.constant 0 : index
    %860 = vector.load %arg1[%c2_310, %c0_311, %c0_312] : memref<4x256x512xf32, #tpu.memory_space<vmem>>, vector<1x256x512xf32>
    %861 = vector.shape_cast %860 : vector<1x256x512xf32> to vector<256x512xf32>
    %cst_313 = arith.constant dense<0.000000e+00> : vector<8x512xf32>
    %862 = tpu.matmul %859, %861, %cst_313 {dimension_numbers = #tpu.dot_dimension_numbers<[1], [0], [0], [1], [0, 0, 1, 1], [], []>} : vector<8x256xf32>, vector<256x512xf32>, vector<8x512xf32> -> vector<8x512xf32>
    %c2_314 = arith.constant 2 : index
    %c0_315 = arith.constant 0 : index
    %c0_316 = arith.constant 0 : index
    %863 = vector.load %arg2[%c2_314, %c0_315, %c0_316] : memref<4x8x512xf32, #tpu.memory_space<vmem>>, vector<1x8x512xf32>
    %864 = vector.shape_cast %863 : vector<1x8x512xf32> to vector<8x512xf32>
    %865 = arith.addf %862, %864 : vector<8x512xf32>
    %866 = vector.extract_strided_slice %865 {offsets = [0, 0], sizes = [8, 128], strides = [1, 1]} : vector<8x512xf32> to vector<8x128xf32>
    %867 = arith.negf %866 : vector<8x128xf32>
    %868 = math.exp %867 : vector<8x128xf32>
    %cst_317 = arith.constant 1.000000e+00 : f32
    %869 = vector.broadcast %cst_317 : f32 to vector<8x128xf32>
    %870 = arith.addf %869, %868 : vector<8x128xf32>
    %871 = arith.divf %869, %870 : vector<8x128xf32>
    %872 = vector.extract_strided_slice %865 {offsets = [0, 128], sizes = [8, 128], strides = [1, 1]} : vector<8x512xf32> to vector<8x128xf32>
    %873 = arith.negf %872 : vector<8x128xf32>
    %874 = math.exp %873 : vector<8x128xf32>
    %cst_318 = arith.constant 1.000000e+00 : f32
    %875 = vector.broadcast %cst_318 : f32 to vector<8x128xf32>
    %876 = arith.addf %875, %874 : vector<8x128xf32>
    %877 = arith.divf %875, %876 : vector<8x128xf32>
    %878 = vector.extract_strided_slice %865 {offsets = [0, 256], sizes = [8, 128], strides = [1, 1]} : vector<8x512xf32> to vector<8x128xf32>
    %879 = vector.extract_strided_slice %865 {offsets = [0, 384], sizes = [8, 128], strides = [1, 1]} : vector<8x512xf32> to vector<8x128xf32>
    %880 = arith.mulf %871, %879 : vector<8x128xf32>
    %881 = arith.addf %878, %880 : vector<8x128xf32>
    %882 = math.tanh %881 : vector<8x128xf32>
    %cst_319 = arith.constant 1.000000e+00 : f32
    %883 = vector.broadcast %cst_319 : f32 to vector<8x128xf32>
    %884 = arith.subf %883, %877 : vector<8x128xf32>
    %885 = arith.mulf %884, %882 : vector<8x128xf32>
    %886 = arith.mulf %877, %828 : vector<8x128xf32>
    %887 = arith.addf %885, %886 : vector<8x128xf32>
    %888 = tpu.concatenate %828, %857 in 1 : vector<8x128xf32>, vector<8x128xf32> -> vector<8x256xf32>
    %c3_320 = arith.constant 3 : index
    %c0_321 = arith.constant 0 : index
    %c0_322 = arith.constant 0 : index
    %889 = vector.load %arg1[%c3_320, %c0_321, %c0_322] : memref<4x256x512xf32, #tpu.memory_space<vmem>>, vector<1x256x512xf32>
    %890 = vector.shape_cast %889 : vector<1x256x512xf32> to vector<256x512xf32>
    %cst_323 = arith.constant dense<0.000000e+00> : vector<8x512xf32>
    %891 = tpu.matmul %888, %890, %cst_323 {dimension_numbers = #tpu.dot_dimension_numbers<[1], [0], [0], [1], [0, 0, 1, 1], [], []>} : vector<8x256xf32>, vector<256x512xf32>, vector<8x512xf32> -> vector<8x512xf32>
    %c3_324 = arith.constant 3 : index
    %c0_325 = arith.constant 0 : index
    %c0_326 = arith.constant 0 : index
    %892 = vector.load %arg2[%c3_324, %c0_325, %c0_326] : memref<4x8x512xf32, #tpu.memory_space<vmem>>, vector<1x8x512xf32>
    %893 = vector.shape_cast %892 : vector<1x8x512xf32> to vector<8x512xf32>
    %894 = arith.addf %891, %893 : vector<8x512xf32>
    %895 = vector.extract_strided_slice %894 {offsets = [0, 0], sizes = [8, 128], strides = [1, 1]} : vector<8x512xf32> to vector<8x128xf32>
    %896 = arith.negf %895 : vector<8x128xf32>
    %897 = math.exp %896 : vector<8x128xf32>
    %cst_327 = arith.constant 1.000000e+00 : f32
    %898 = vector.broadcast %cst_327 : f32 to vector<8x128xf32>
    %899 = arith.addf %898, %897 : vector<8x128xf32>
    %900 = arith.divf %898, %899 : vector<8x128xf32>
    %901 = vector.extract_strided_slice %894 {offsets = [0, 128], sizes = [8, 128], strides = [1, 1]} : vector<8x512xf32> to vector<8x128xf32>
    %902 = arith.negf %901 : vector<8x128xf32>
    %903 = math.exp %902 : vector<8x128xf32>
    %cst_328 = arith.constant 1.000000e+00 : f32
    %904 = vector.broadcast %cst_328 : f32 to vector<8x128xf32>
    %905 = arith.addf %904, %903 : vector<8x128xf32>
    %906 = arith.divf %904, %905 : vector<8x128xf32>
    %907 = vector.extract_strided_slice %894 {offsets = [0, 256], sizes = [8, 128], strides = [1, 1]} : vector<8x512xf32> to vector<8x128xf32>
    %908 = vector.extract_strided_slice %894 {offsets = [0, 384], sizes = [8, 128], strides = [1, 1]} : vector<8x512xf32> to vector<8x128xf32>
    %909 = arith.mulf %900, %908 : vector<8x128xf32>
    %910 = arith.addf %907, %909 : vector<8x128xf32>
    %911 = math.tanh %910 : vector<8x128xf32>
    %cst_329 = arith.constant 1.000000e+00 : f32
    %912 = vector.broadcast %cst_329 : f32 to vector<8x128xf32>
    %913 = arith.subf %912, %906 : vector<8x128xf32>
    %914 = arith.mulf %913, %911 : vector<8x128xf32>
    %915 = arith.mulf %906, %857 : vector<8x128xf32>
    %916 = arith.addf %914, %915 : vector<8x128xf32>
    %c48_330 = arith.constant 48 : index
    %c0_331 = arith.constant 0 : index
    %917 = vector.load %arg6[%c48_330, %c0_331] : memref<64x128xf32, #tpu.memory_space<vmem>>, vector<8x128xf32>
    tpu.vector_store %arg6[%c48_330, %c0_331], %916 {strides = array<i32>} : memref<64x128xf32, #tpu.memory_space<vmem>>, vector<8x128xf32>,
    %918 = tpu.concatenate %887, %916 in 1 : vector<8x128xf32>, vector<8x128xf32> -> vector<8x256xf32>
    %c3_332 = arith.constant 3 : index
    %c0_333 = arith.constant 0 : index
    %c0_334 = arith.constant 0 : index
    %919 = vector.load %arg1[%c3_332, %c0_333, %c0_334] : memref<4x256x512xf32, #tpu.memory_space<vmem>>, vector<1x256x512xf32>
    %920 = vector.shape_cast %919 : vector<1x256x512xf32> to vector<256x512xf32>
    %cst_335 = arith.constant dense<0.000000e+00> : vector<8x512xf32>
    %921 = tpu.matmul %918, %920, %cst_335 {dimension_numbers = #tpu.dot_dimension_numbers<[1], [0], [0], [1], [0, 0, 1, 1], [], []>} : vector<8x256xf32>, vector<256x512xf32>, vector<8x512xf32> -> vector<8x512xf32>
    %c3_336 = arith.constant 3 : index
    %c0_337 = arith.constant 0 : index
    %c0_338 = arith.constant 0 : index
    %922 = vector.load %arg2[%c3_336, %c0_337, %c0_338] : memref<4x8x512xf32, #tpu.memory_space<vmem>>, vector<1x8x512xf32>
    %923 = vector.shape_cast %922 : vector<1x8x512xf32> to vector<8x512xf32>
    %924 = arith.addf %921, %923 : vector<8x512xf32>
    %925 = vector.extract_strided_slice %924 {offsets = [0, 0], sizes = [8, 128], strides = [1, 1]} : vector<8x512xf32> to vector<8x128xf32>
    %926 = arith.negf %925 : vector<8x128xf32>
    %927 = math.exp %926 : vector<8x128xf32>
    %cst_339 = arith.constant 1.000000e+00 : f32
    %928 = vector.broadcast %cst_339 : f32 to vector<8x128xf32>
    %929 = arith.addf %928, %927 : vector<8x128xf32>
    %930 = arith.divf %928, %929 : vector<8x128xf32>
    %931 = vector.extract_strided_slice %924 {offsets = [0, 128], sizes = [8, 128], strides = [1, 1]} : vector<8x512xf32> to vector<8x128xf32>
    %932 = arith.negf %931 : vector<8x128xf32>
    %933 = math.exp %932 : vector<8x128xf32>
    %cst_340 = arith.constant 1.000000e+00 : f32
    %934 = vector.broadcast %cst_340 : f32 to vector<8x128xf32>
    %935 = arith.addf %934, %933 : vector<8x128xf32>
    %936 = arith.divf %934, %935 : vector<8x128xf32>
    %937 = vector.extract_strided_slice %924 {offsets = [0, 256], sizes = [8, 128], strides = [1, 1]} : vector<8x512xf32> to vector<8x128xf32>
    %938 = vector.extract_strided_slice %924 {offsets = [0, 384], sizes = [8, 128], strides = [1, 1]} : vector<8x512xf32> to vector<8x128xf32>
    %939 = arith.mulf %930, %938 : vector<8x128xf32>
    %940 = arith.addf %937, %939 : vector<8x128xf32>
    %941 = math.tanh %940 : vector<8x128xf32>
    %cst_341 = arith.constant 1.000000e+00 : f32
    %942 = vector.broadcast %cst_341 : f32 to vector<8x128xf32>
    %943 = arith.subf %942, %936 : vector<8x128xf32>
    %944 = arith.mulf %943, %941 : vector<8x128xf32>
    %945 = arith.mulf %936, %916 : vector<8x128xf32>
    %946 = arith.addf %944, %945 : vector<8x128xf32>
    %c56_342 = arith.constant 56 : index
    %c0_343 = arith.constant 0 : index
    %947 = vector.load %arg6[%c56_342, %c0_343] : memref<64x128xf32, #tpu.memory_space<vmem>>, vector<8x128xf32>
    tpu.vector_store %arg6[%c56_342, %c0_343], %946 {strides = array<i32>} : memref<64x128xf32, #tpu.memory_space<vmem>>, vector<8x128xf32>,
    %c0_344 = arith.constant 0 : index
    %c0_345 = arith.constant 0 : index
    %948 = vector.load %arg6[%c0_344, %c0_345] : memref<64x128xf32, #tpu.memory_space<vmem>>, vector<64x128xf32>
    %c0_346 = arith.constant 0 : index
    %c0_347 = arith.constant 0 : index
    %949 = vector.load %arg3[%c0_346, %c0_347] : memref<128x128xf32, #tpu.memory_space<vmem>>, vector<128x128xf32>
    %cst_348 = arith.constant dense<0.000000e+00> : vector<64x128xf32>
    %950 = tpu.matmul %948, %949, %cst_348 {dimension_numbers = #tpu.dot_dimension_numbers<[1], [0], [0], [1], [0, 0, 1, 1], [], []>} : vector<64x128xf32>, vector<128x128xf32>, vector<64x128xf32> -> vector<64x128xf32>
    %c0_349 = arith.constant 0 : index
    %c0_350 = arith.constant 0 : index
    %951 = vector.load %arg4[%c0_349, %c0_350] : memref<1x128xf32, #tpu.memory_space<vmem>>, vector<1x128xf32>
    %952 = vector.broadcast %951 : vector<1x128xf32> to vector<64x128xf32>
    %953 = arith.addf %950, %952 : vector<64x128xf32>
    %c0_351 = arith.constant 0 : index
    %c0_352 = arith.constant 0 : index
    %954 = vector.load %arg5[%c0_351, %c0_352] : memref<64x128xf32, #tpu.memory_space<vmem>>, vector<64x128xf32>
    tpu.vector_store %arg5[%c0_351, %c0_352], %953 {strides = array<i32>} : memref<64x128xf32, #tpu.memory_space<vmem>>, vector<64x128xf32>,
    return
  }
}

</mosaic_0001>

<llo_original>
// kernel: druglikeness_forward.1
$region0: #{druglikeness_forward.1}
  #allocation0 [shape = 'u32[]', space=smem, size = 0x4, offset = 0x4, fixed_abs, tag = 'smem constant byte address 0x4 - core index']
  #allocation1 [shape = 'u32[144,128]{1,0:T(1,128)}', space=vmem, size = 0x12000, scoped, tag = 'internal scratch']
  #allocation2 [shape = 'f32[64,128]{1,0:T(8,128)}', space=vmem, size = 0x8000, scoped, tag = 'scratch operand']
  %s0 = inlined_call_operand.vmem [shape: f32[64,128], index: 0, kind: input, shape index: {}]
  %s1 = inlined_call_operand.vmem [shape: f32[4,256,512], index: 1, kind: input, shape index: {}]
  %s2 = inlined_call_operand.vmem [shape: f32[4,8,512], index: 2, kind: input, shape index: {}]
  %s3 = inlined_call_operand.vmem [shape: f32[128,128], index: 3, kind: input, shape index: {}]
  %s4 = inlined_call_operand.vmem [shape: f32[1,128], index: 4, kind: input, shape index: {}]
  %s5 = inlined_call_operand.vmem [shape: f32[64,128], index: 5, kind: output, shape index: {}]
  %s6 = sld [smem:[#allocation0]]
  $region30: #{druglikeness_forward.1} parent=0
    _
  %s8 = ssub.s32 1, %s6
  %s9 = scalar_select 0, %s8, %s6
  // Predicated region
  $region2: #{druglikeness_forward.1} parent=0 // pred_check
    _
  $region3: #{druglikeness_forward.1} parent=0 // pred_check_branch
    %11 = sbr.rel (0) target = $region5
  $region4: #{druglikeness_forward.1} parent=0 // pred_region
    _
  $region5: #{druglikeness_forward.1} parent=0 // pred_fallthru
    _
  // Predicated region
  $region6: #{druglikeness_forward.1} parent=0 // pred_check
    _
  $region7: #{druglikeness_forward.1} parent=0 // pred_check_branch
    %13 = sbr.rel (0) target = $region9
  $region8: #{druglikeness_forward.1} parent=0 // pred_region
    _
  $region9: #{druglikeness_forward.1} parent=0 // pred_fallthru
    _
  // Predicated region
  $region10: #{druglikeness_forward.1} parent=0 // pred_check
    _
  $region11: #{druglikeness_forward.1} parent=0 // pred_check_branch
    %15 = sbr.rel (0) target = $region13
  $region12: #{druglikeness_forward.1} parent=0 // pred_region
    _
  $region13: #{druglikeness_forward.1} parent=0 // pred_fallthru
    _
  // Predicated region
  $region14: #{druglikeness_forward.1} parent=0 // pred_check
    _
  $region15: #{druglikeness_forward.1} parent=0 // pred_check_branch
    %17 = sbr.rel (0) target = $region17
  $region16: #{druglikeness_forward.1} parent=0 // pred_region
    _
  $region17: #{druglikeness_forward.1} parent=0 // pred_fallthru
    _
  // Predicated region
  $region18: #{druglikeness_forward.1} parent=0 // pred_check
    _
  $region19: #{druglikeness_forward.1} parent=0 // pred_check_branch
    %19 = sbr.rel (0) target = $region21
  $region20: #{druglikeness_forward.1} parent=0 // pred_region
    _
  $region21: #{druglikeness_forward.1} parent=0 // pred_fallthru
    _
  %v20 = vld [vmem:[%s0] sm:$0xff]
  %v21 = vld [vmem:[%s1] sm:$0xff]
  %v22 = vld [vmem:[%s1 + $0x8] sm:$0xff]
  %v23 = vld [vmem:[%s1 + $0x10] sm:$0xff]
  %v24 = vld [vmem:[%s1 + $0x18] sm:$0xff]
  %v25 = vld [vmem:[%s1 + $0x20] sm:$0xff]
  %v26 = vld [vmem:[%s1 + $0x28] sm:$0xff]
  %v27 = vld [vmem:[%s1 + $0x30] sm:$0xff]
  %v28 = vld [vmem:[%s1 + $0x38] sm:$0xff]
  %v29 = vld [vmem:[%s1 + $0x40] sm:$0xff]
  %v30 = vld [vmem:[%s1 + $0x48] sm:$0xff]
  %v31 = vld [vmem:[%s1 + $0x50] sm:$0xff]
  %v32 = vld [vmem:[%s1 + $0x58] sm:$0xff]
  %v33 = vld [vmem:[%s1 + $0x60] sm:$0xff]
  %v34 = vld [vmem:[%s1 + $0x68] sm:$0xff]
  %v35 = vld [vmem:[%s1 + $0x70] sm:$0xff]
  %v36 = vld [vmem:[%s1 + $0x78] sm:$0xff]
  %v37 = vld [vmem:[%s1 + $0x80] sm:$0xff]
  %v38 = vld [vmem:[%s1 + $0x88] sm:$0xff]
  %v39 = vld [vmem:[%s1 + $0x90] sm:$0xff]
  %v40 = vld [vmem:[%s1 + $0x98] sm:$0xff]
  %v41 = vld [vmem:[%s1 + $0xa0] sm:$0xff]
  %v42 = vld [vmem:[%s1 + $0xa8] sm:$0xff]
  %v43 = vld [vmem:[%s1 + $0xb0] sm:$0xff]
  %v44 = vld [vmem:[%s1 + $0xb8] sm:$0xff]
  %v45 = vld [vmem:[%s1 + $0xc0] sm:$0xff]
  %v46 = vld [vmem:[%s1 + $0xc8] sm:$0xff]
  %v47 = vld [vmem:[%s1 + $0xd0] sm:$0xff]
  %v48 = vld [vmem:[%s1 + $0xd8] sm:$0xff]
  %v49 = vld [vmem:[%s1 + $0xe0] sm:$0xff]
  %v50 = vld [vmem:[%s1 + $0xe8] sm:$0xff]
  %v51 = vld [vmem:[%s1 + $0xf0] sm:$0xff]
  %v52 = vld [vmem:[%s1 + $0xf8] sm:$0xff]
  %v53 = vld [vmem:[%s1 + $0x100] sm:$0xff]
  %v54 = vld [vmem:[%s1 + $0x108] sm:$0xff]
  %v55 = vld [vmem:[%s1 + $0x110] sm:$0xff]
  %v56 = vld [vmem:[%s1 + $0x118] sm:$0xff]
  %v57 = vld [vmem:[%s1 + $0x120] sm:$0xff]
  %v58 = vld [vmem:[%s1 + $0x128] sm:$0xff]
  %v59 = vld [vmem:[%s1 + $0x130] sm:$0xff]
  %v60 = vld [vmem:[%s1 + $0x138] sm:$0xff]
  %v61 = vld [vmem:[%s1 + $0x140] sm:$0xff]
  %v62 = vld [vmem:[%s1 + $0x148] sm:$0xff]
  %v63 = vld [vmem:[%s1 + $0x150] sm:$0xff]
  %v64 = vld [vmem:[%s1 + $0x158] sm:$0xff]
  %v65 = vld [vmem:[%s1 + $0x160] sm:$0xff]
  %v66 = vld [vmem:[%s1 + $0x168] sm:$0xff]
  %v67 = vld [vmem:[%s1 + $0x170] sm:$0xff]
  %v68 = vld [vmem:[%s1 + $0x178] sm:$0xff]
  %v69 = vld [vmem:[%s1 + $0x180] sm:$0xff]
  %v70 = vld [vmem:[%s1 + $0x188] sm:$0xff]
  %v71 = vld [vmem:[%s1 + $0x190] sm:$0xff]
  %v72 = vld [vmem:[%s1 + $0x198] sm:$0xff]
  %v73 = vld [vmem:[%s1 + $0x1a0] sm:$0xff]
  %v74 = vld [vmem:[%s1 + $0x1a8] sm:$0xff]
  %v75 = vld [vmem:[%s1 + $0x1b0] sm:$0xff]
  %v76 = vld [vmem:[%s1 + $0x1b8] sm:$0xff]
  %v77 = vld [vmem:[%s1 + $0x1c0] sm:$0xff]
  %v78 = vld [vmem:[%s1 + $0x1c8] sm:$0xff]
  %v79 = vld [vmem:[%s1 + $0x1d0] sm:$0xff]
  %v80 = vld [vmem:[%s1 + $0x1d8] sm:$0xff]
  %v81 = vld [vmem:[%s1 + $0x1e0] sm:$0xff]
  %v82 = vld [vmem:[%s1 + $0x1e8] sm:$0xff]
  %v83 = vld [vmem:[%s1 + $0x1f0] sm:$0xff]
  %v84 = vld [vmem:[%s1 + $0x1f8] sm:$0xff]
  %v85 = vld [vmem:[%s1 + $0x200] sm:$0xff]
  %v86 = vld [vmem:[%s1 + $0x208] sm:$0xff]
  %v87 = vld [vmem:[%s1 + $0x210] sm:$0xff]
  %v88 = vld [vmem:[%s1 + $0x218] sm:$0xff]
  %v89 = vld [vmem:[%s1 + $0x220] sm:$0xff]
  %v90 = vld [vmem:[%s1 + $0x228] sm:$0xff]
  %v91 = vld [vmem:[%s1 + $0x230] sm:$0xff]
  %v92 = vld [vmem:[%s1 + $0x238] sm:$0xff]
  %v93 = vld [vmem:[%s1 + $0x240] sm:$0xff]
  %v94 = vld [vmem:[%s1 + $0x248] sm:$0xff]
  %v95 = vld [vmem:[%s1 + $0x250] sm:$0xff]
  %v96 = vld [vmem:[%s1 + $0x258] sm:$0xff]
  %v97 = vld [vmem:[%s1 + $0x260] sm:$0xff]
  %v98 = vld [vmem:[%s1 + $0x268] sm:$0xff]
  %v99 = vld [vmem:[%s1 + $0x270] sm:$0xff]
  %v100 = vld [vmem:[%s1 + $0x278] sm:$0xff]
  %v101 = vld [vmem:[%s1 + $0x280] sm:$0xff]
  %v102 = vld [vmem:[%s1 + $0x288] sm:$0xff]
  %v103 = vld [vmem:[%s1 + $0x290] sm:$0xff]
  %v104 = vld [vmem:[%s1 + $0x298] sm:$0xff]
  %v105 = vld [vmem:[%s1 + $0x2a0] sm:$0xff]
  %v106 = vld [vmem:[%s1 + $0x2a8] sm:$0xff]
  %v107 = vld [vmem:[%s1 + $0x2b0] sm:$0xff]
  %v108 = vld [vmem:[%s1 + $0x2b8] sm:$0xff]
  %v109 = vld [vmem:[%s1 + $0x2c0] sm:$0xff]
  %v110 = vld [vmem:[%s1 + $0x2c8] sm:$0xff]
  %v111 = vld [vmem:[%s1 + $0x2d0] sm:$0xff]
  %v112 = vld [vmem:[%s1 + $0x2d8] sm:$0xff]
  %v113 = vld [vmem:[%s1 + $0x2e0] sm:$0xff]
  %v114 = vld [vmem:[%s1 + $0x2e8] sm:$0xff]
  %v115 = vld [vmem:[%s1 + $0x2f0] sm:$0xff]
  %v116 = vld [vmem:[%s1 + $0x2f8] sm:$0xff]
  %v117 = vld [vmem:[%s1 + $0x300] sm:$0xff]
  %v118 = vld [vmem:[%s1 + $0x308] sm:$0xff]
  %v119 = vld [vmem:[%s1 + $0x310] sm:$0xff]
  %v120 = vld [vmem:[%s1 + $0x318] sm:$0xff]
  %v121 = vld [vmem:[%s1 + $0x320] sm:$0xff]
  %v122 = vld [vmem:[%s1 + $0x328] sm:$0xff]
  %v123 = vld [vmem:[%s1 + $0x330] sm:$0xff]
  %v124 = vld [vmem:[%s1 + $0x338] sm:$0xff]
  %v125 = vld [vmem:[%s1 + $0x340] sm:$0xff]
  %v126 = vld [vmem:[%s1 + $0x348] sm:$0xff]
  %v127 = vld [vmem:[%s1 + $0x350] sm:$0xff]
  %v128 = vld [vmem:[%s1 + $0x358] sm:$0xff]
  %v129 = vld [vmem:[%s1 + $0x360] sm:$0xff]
  %v130 = vld [vmem:[%s1 + $0x368] sm:$0xff]
  %v131 = vld [vmem:[%s1 + $0x370] sm:$0xff]
  %v132 = vld [vmem:[%s1 + $0x378] sm:$0xff]
  %v133 = vld [vmem:[%s1 + $0x380] sm:$0xff]
  %v134 = vld [vmem:[%s1 + $0x388] sm:$0xff]
  %v135 = vld [vmem:[%s1 + $0x390] sm:$0xff]
  %v136 = vld [vmem:[%s1 + $0x398] sm:$0xff]
  %v137 = vld [vmem:[%s1 + $0x3a0] sm:$0xff]
  %v138 = vld [vmem:[%s1 + $0x3a8] sm:$0xff]
  %v139 = vld [vmem:[%s1 + $0x3b0] sm:$0xff]
  %v140 = vld [vmem:[%s1 + $0x3b8] sm:$0xff]
  %v141 = vld [vmem:[%s1 + $0x3c0] sm:$0xff]
  %v142 = vld [vmem:[%s1 + $0x3c8] sm:$0xff]
  %v143 = vld [vmem:[%s1 + $0x3d0] sm:$0xff]
  %v144 = vld [vmem:[%s1 + $0x3d8] sm:$0xff]
  %v145 = vld [vmem:[%s1 + $0x3e0] sm:$0xff]
  %v146 = vld [vmem:[%s1 + $0x3e8] sm:$0xff]
  %v147 = vld [vmem:[%s1 + $0x3f0] sm:$0xff]
  %v148 = vld [vmem:[%s1 + $0x3f8] sm:$0xff]
  %v149 = vld [vmem:[%s2] sm:$0xff]
  %v150 = vld [vmem:[%s2 + $0x8] sm:$0xff]
  %v151 = vld [vmem:[%s2 + $0x10] sm:$0xff]
  %v152 = vld [vmem:[%s2 + $0x18] sm:$0xff]
  %153 = vmatprep.subr.mxu0 %v22
  %154 = vmatpush1.msra.mxu0 %v21
  %155 = vmatprep.subr.mxu0 %v26
  %156 = vmatpush1.msra.mxu0 %v25
  %157 = vmatprep.subr.mxu0 %v30
  %158 = vmatpush1.msra.mxu0 %v29
  %159 = vmatprep.subr.mxu0 %v34
  %160 = vmatpush1.msra.mxu0 %v33
  %161 = vmatprep.subr.mxu0 %v38
  %162 = vmatpush1.msra.mxu0 %v37
  %163 = vmatprep.subr.mxu0 %v42
  %164 = vmatpush1.msra.mxu0 %v41
  %165 = vmatprep.subr.mxu0 %v46
  %166 = vmatpush1.msra.mxu0 %v45
  %167 = vmatprep.subr.mxu0 %v50
  %168 = vmatpush1.msra.mxu0 %v49
  %169 = vmatprep.subr.mxu0 %v54
  %170 = vmatpush1.msra.mxu0 %v53
  %171 = vmatprep.subr.mxu0 %v58
  %172 = vmatpush1.msra.mxu0 %v57
  %173 = vmatprep.subr.mxu0 %v62
  %174 = vmatpush1.msra.mxu0 %v61
  %175 = vmatprep.subr.mxu0 %v66
  %176 = vmatpush1.msra.mxu0 %v65
  %177 = vmatprep.subr.mxu0 %v70
  %178 = vmatpush1.msra.mxu0 %v69
  %179 = vmatprep.subr.mxu0 %v74
  %180 = vmatpush1.msra.mxu0 %v73
  %181 = vmatprep.subr.mxu0 %v78
  %182 = vmatpush1.msra.mxu0 %v77
  %183 = vmatprep.subr.mxu0 %v82
  %184 = vmatpush1.msra.mxu0 %v81
  %185 = vmatprep.subr.mxu0 %v86
  %186 = vmatpush1.msra.mxu0 %v85
  %187 = vmatprep.subr.mxu0 %v90
  %188 = vmatpush1.msra.mxu0 %v89
  %189 = vmatprep.subr.mxu0 %v94
  %190 = vmatpush1.msra.mxu0 %v93
  %191 = vmatprep.subr.mxu0 %v98
  %192 = vmatpush1.msra.mxu0 %v97
  %193 = vmatprep.subr.mxu0 %v102
  %194 = vmatpush1.msra.mxu0 %v101
  %195 = vmatprep.subr.mxu0 %v106
  %196 = vmatpush1.msra.mxu0 %v105
  %197 = vmatprep.subr.mxu0 %v110
  %198 = vmatpush1.msra.mxu0 %v109
  %199 = vmatprep.subr.mxu0 %v114
  %200 = vmatpush1.msra.mxu0 %v113
  %201 = vmatprep.subr.mxu0 %v118
  %202 = vmatpush1.msra.mxu0 %v117
  %203 = vmatprep.subr.mxu0 %v122
  %204 = vmatpush1.msra.mxu0 %v121
  %205 = vmatprep.subr.mxu0 %v126
  %206 = vmatpush1.msra.mxu0 %v125
  %207 = vmatprep.subr.mxu0 %v130
  %208 = vmatpush1.msra.mxu0 %v129
  %209 = vmatprep.subr.mxu0 %v134
  %210 = vmatpush1.msra.mxu0 %v133
  %211 = vmatprep.subr.mxu0 %v138
  %212 = vmatpush1.msra.mxu0 %v137
  %213 = vmatprep.subr.mxu0 %v142
  %214 = vmatpush1.msra.mxu0 %v141
  %215 = vmatprep.subr.mxu0 %v146
  %216 = vmatpush1.msra.mxu0 %v145
  %217 = vmatprep.mubr.f32.mxu0 0.0
  %218 = vmatmul.mubr.f32.gmra.mrb[0].mxu0 %v20
  %v219 = vpop.f32.mrb[0].mxu0
  %v220 = vadd.f32 %v149, %v219
  %v221 = vpop.f32.mrb[0].mxu0
  %v222 = vadd.f32 %v150, %v221
  %223 = vdwg.mxu0
  %224 = vmatprep.subr.mxu0 %v24
  %225 = vmatpush1.msra.mxu0 %v23
  %226 = vmatprep.subr.mxu0 %v28
  %227 = vmatpush1.msra.mxu0 %v27
  %228 = vmatprep.subr.mxu0 %v32
  %229 = vmatpush1.msra.mxu0 %v31
  %230 = vmatprep.subr.mxu0 %v36
  %231 = vmatpush1.msra.mxu0 %v35
  %232 = vmatprep.subr.mxu0 %v40
  %233 = vmatpush1.msra.mxu0 %v39
  %234 = vmatprep.subr.mxu0 %v44
  %235 = vmatpush1.msra.mxu0 %v43
  %236 = vmatprep.subr.mxu0 %v48
  %237 = vmatpush1.msra.mxu0 %v47
  %238 = vmatprep.subr.mxu0 %v52
  %239 = vmatpush1.msra.mxu0 %v51
  %240 = vmatprep.subr.mxu0 %v56
  %241 = vmatpush1.msra.mxu0 %v55
  %242 = vmatprep.subr.mxu0 %v60
  %243 = vmatpush1.msra.mxu0 %v59
  %244 = vmatprep.subr.mxu0 %v64
  %245 = vmatpush1.msra.mxu0 %v63
  %246 = vmatprep.subr.mxu0 %v68
  %247 = vmatpush1.msra.mxu0 %v67
  %248 = vmatprep.subr.mxu0 %v72
  %249 = vmatpush1.msra.mxu0 %v71
  %250 = vmatprep.subr.mxu0 %v76
  %251 = vmatpush1.msra.mxu0 %v75
  %252 = vmatprep.subr.mxu0 %v80
  %253 = vmatpush1.msra.mxu0 %v79
  %254 = vmatprep.subr.mxu0 %v84
  %255 = vmatpush1.msra.mxu0 %v83
  %256 = vmatprep.subr.mxu0 %v88
  %257 = vmatpush1.msra.mxu0 %v87
  %258 = vmatprep.subr.mxu0 %v92
  %259 = vmatpush1.msra.mxu0 %v91
  %260 = vmatprep.subr.mxu0 %v96
  %261 = vmatpush1.msra.mxu0 %v95
  %262 = vmatprep.subr.mxu0 %v100
  %263 = vmatpush1.msra.mxu0 %v99
  %264 = vmatprep.subr.mxu0 %v104
  %265 = vmatpush1.msra.mxu0 %v103
  %266 = vmatprep.subr.mxu0 %v108
  %267 = vmatpush1.msra.mxu0 %v107
  %268 = vmatprep.subr.mxu0 %v112
  %269 = vmatpush1.msra.mxu0 %v111
  %270 = vmatprep.subr.mxu0 %v116
  %271 = vmatpush1.msra.mxu0 %v115
  %272 = vmatprep.subr.mxu0 %v120
  %273 = vmatpush1.msra.mxu0 %v119
  %274 = vmatprep.subr.mxu0 %v124
  %275 = vmatpush1.msra.mxu0 %v123
  %276 = vmatprep.subr.mxu0 %v128
  %277 = vmatpush1.msra.mxu0 %v127
  %278 = vmatprep.subr.mxu0 %v132
  %279 = vmatpush1.msra.mxu0 %v131
  %280 = vmatprep.subr.mxu0 %v136
  %281 = vmatpush1.msra.mxu0 %v135
  %282 = vmatprep.subr.mxu0 %v140
  %283 = vmatpush1.msra.mxu0 %v139
  %284 = vmatprep.subr.mxu0 %v144
  %285 = vmatpush1.msra.mxu0 %v143
  %286 = vmatprep.subr.mxu0 %v148
  %287 = vmatpush1.msra.mxu0 %v147
  %288 = vmatprep.mubr.f32.mxu0 0.0
  %289 = vmatmul.mubr.f32.gmra.mrb[0].mxu0 %v20
  %v290 = vpop.f32.mrb[0].mxu0
  %v291 = vadd.f32 %v151, %v290
  %v292 = vpop.f32.mrb[0].mxu0
  %v293 = vadd.f32 %v152, %v292
  %294 = vdwg.mxu0
  %v295 = vxor.u32 %v220, 2147483648
  %v296 = vmul.f32 %v295, 1.442695
  %v297 = vpow.pop %v296
  %v298 = vadd.f32 %v297, 1.0
  %v299 = vrcp.pop %v298
  %v300 = vmul.f32 1.0, %v299
  %v301 = vxor.u32 %v222, 2147483648
  %v302 = vmul.f32 %v301, 1.442695
  %v303 = vpow.pop %v302
  %v304 = vadd.f32 %v303, 1.0
  %v305 = vrcp.pop %v304
  %v306 = vmul.f32 1.0, %v305
  %v307 = vmul.f32 %v300, %v293
  %v308 = vadd.f32 %v291, %v307
  %v309 = vtanh.pop %v308
  %v310 = vsub.f32 1.0, %v306
  %v311 = vmul.f32 %v310, %v309
  %v312 = vmul.f32 %v306, 0.0
  %v313 = vadd.f32 %v311, %v312
  %v314 = vld [vmem:[%s0 + $0x8] sm:$0xff]
  %315 = vmatprep.subr.mxu0 %v22
  %316 = vmatpush1.msra.mxu0 %v21
  %317 = vmatprep.subr.mxu0 %v26
  %318 = vmatpush1.msra.mxu0 %v25
  %319 = vmatprep.subr.mxu0 %v30
  %320 = vmatpush1.msra.mxu0 %v29
  %321 = vmatprep.subr.mxu0 %v34
  %322 = vmatpush1.msra.mxu0 %v33
  %323 = vmatprep.subr.mxu0 %v38
  %324 = vmatpush1.msra.mxu0 %v37
  %325 = vmatprep.subr.mxu0 %v42
  %326 = vmatpush1.msra.mxu0 %v41
  %327 = vmatprep.subr.mxu0 %v46
  %328 = vmatpush1.msra.mxu0 %v45
  %329 = vmatprep.subr.mxu0 %v50
  %330 = vmatpush1.msra.mxu0 %v49
  %331 = vmatprep.subr.mxu0 %v54
  %332 = vmatpush1.msra.mxu0 %v53
  %333 = vmatprep.subr.mxu0 %v58
  %334 = vmatpush1.msra.mxu0 %v57
  %335 = vmatprep.subr.mxu0 %v62
  %336 = vmatpush1.msra.mxu0 %v61
  %337 = vmatprep.subr.mxu0 %v66
  %338 = vmatpush1.msra.mxu0 %v65
  %339 = vmatprep.subr.mxu0 %v70
  %340 = vmatpush1.msra.mxu0 %v69
  %341 = vmatprep.subr.mxu0 %v74
  %342 = vmatpush1.msra.mxu0 %v73
  %343 = vmatprep.subr.mxu0 %v78
  %344 = vmatpush1.msra.mxu0 %v77
  %345 = vmatprep.subr.mxu0 %v82
  %346 = vmatpush1.msra.mxu0 %v81
  %347 = vmatprep.subr.mxu0 %v86
  %348 = vmatpush1.msra.mxu0 %v85
  %349 = vmatprep.subr.mxu0 %v90
  %350 = vmatpush1.msra.mxu0 %v89
  %351 = vmatprep.subr.mxu0 %v94
  %352 = vmatpush1.msra.mxu0 %v93
  %353 = vmatprep.subr.mxu0 %v98
  %354 = vmatpush1.msra.mxu0 %v97
  %355 = vmatprep.subr.mxu0 %v102
  %356 = vmatpush1.msra.mxu0 %v101
  %357 = vmatprep.subr.mxu0 %v106
  %358 = vmatpush1.msra.mxu0 %v105
  %359 = vmatprep.subr.mxu0 %v110
  %360 = vmatpush1.msra.mxu0 %v109
  %361 = vmatprep.subr.mxu0 %v114
  %362 = vmatpush1.msra.mxu0 %v113
  %363 = vmatprep.subr.mxu0 %v118
  %364 = vmatpush1.msra.mxu0 %v117
  %365 = vmatprep.subr.mxu0 %v122
  %366 = vmatpush1.msra.mxu0 %v121
  %367 = vmatprep.subr.mxu0 %v126
  %368 = vmatpush1.msra.mxu0 %v125
  %369 = vmatprep.subr.mxu0 %v130
  %370 = vmatpush1.msra.mxu0 %v129
  %371 = vmatprep.subr.mxu0 %v134
  %372 = vmatpush1.msra.mxu0 %v133
  %373 = vmatprep.subr.mxu0 %v138
  %374 = vmatpush1.msra.mxu0 %v137
  %375 = vmatprep.subr.mxu0 %v142
  %376 = vmatpush1.msra.mxu0 %v141
  %377 = vmatprep.subr.mxu0 %v146
  %378 = vmatpush1.msra.mxu0 %v145
  %379 = vmatprep.mubr.f32.mxu0 %v313
  %380 = vmatmul.mubr.f32.gmra.mrb[0].mxu0 %v314
  %v381 = vpop.f32.mrb[0].mxu0
  %v382 = vadd.f32 %v149, %v381
  %v383 = vpop.f32.mrb[0].mxu0
  %v384 = vadd.f32 %v150, %v383
  %385 = vdwg.mxu0
  %386 = vmatprep.subr.mxu0 %v24
  %387 = vmatpush1.msra.mxu0 %v23
  %388 = vmatprep.subr.mxu0 %v28
  %389 = vmatpush1.msra.mxu0 %v27
  %390 = vmatprep.subr.mxu0 %v32
  %391 = vmatpush1.msra.mxu0 %v31
  %392 = vmatprep.subr.mxu0 %v36
  %393 = vmatpush1.msra.mxu0 %v35
  %394 = vmatprep.subr.mxu0 %v40
  %395 = vmatpush1.msra.mxu0 %v39
  %396 = vmatprep.subr.mxu0 %v44
  %397 = vmatpush1.msra.mxu0 %v43
  %398 = vmatprep.subr.mxu0 %v48
  %399 = vmatpush1.msra.mxu0 %v47
  %400 = vmatprep.subr.mxu0 %v52
  %401 = vmatpush1.msra.mxu0 %v51
  %402 = vmatprep.subr.mxu0 %v56
  %403 = vmatpush1.msra.mxu0 %v55
  %404 = vmatprep.subr.mxu0 %v60
  %405 = vmatpush1.msra.mxu0 %v59
  %406 = vmatprep.subr.mxu0 %v64
  %407 = vmatpush1.msra.mxu0 %v63
  %408 = vmatprep.subr.mxu0 %v68
  %409 = vmatpush1.msra.mxu0 %v67
  %410 = vmatprep.subr.mxu0 %v72
  %411 = vmatpush1.msra.mxu0 %v71
  %412 = vmatprep.subr.mxu0 %v76
  %413 = vmatpush1.msra.mxu0 %v75
  %414 = vmatprep.subr.mxu0 %v80
  %415 = vmatpush1.msra.mxu0 %v79
  %416 = vmatprep.subr.mxu0 %v84
  %417 = vmatpush1.msra.mxu0 %v83
  %418 = vmatprep.subr.mxu0 %v88
  %419 = vmatpush1.msra.mxu0 %v87
  %420 = vmatprep.subr.mxu0 %v92
  %421 = vmatpush1.msra.mxu0 %v91
  %422 = vmatprep.subr.mxu0 %v96
  %423 = vmatpush1.msra.mxu0 %v95
  %424 = vmatprep.subr.mxu0 %v100
  %425 = vmatpush1.msra.mxu0 %v99
  %426 = vmatprep.subr.mxu0 %v104
  %427 = vmatpush1.msra.mxu0 %v103
  %428 = vmatprep.subr.mxu0 %v108
  %429 = vmatpush1.msra.mxu0 %v107
  %430 = vmatprep.subr.mxu0 %v112
  %431 = vmatpush1.msra.mxu0 %v111
  %432 = vmatprep.subr.mxu0 %v116
  %433 = vmatpush1.msra.mxu0 %v115
  %434 = vmatprep.subr.mxu0 %v120
  %435 = vmatpush1.msra.mxu0 %v119
  %436 = vmatprep.subr.mxu0 %v124
  %437 = vmatpush1.msra.mxu0 %v123
  %438 = vmatprep.subr.mxu0 %v128
  %439 = vmatpush1.msra.mxu0 %v127
  %440 = vmatprep.subr.mxu0 %v132
  %441 = vmatpush1.msra.mxu0 %v131
  %442 = vmatprep.subr.mxu0 %v136
  %443 = vmatpush1.msra.mxu0 %v135
  %444 = vmatprep.subr.mxu0 %v140
  %445 = vmatpush1.msra.mxu0 %v139
  %446 = vmatprep.subr.mxu0 %v144
  %447 = vmatpush1.msra.mxu0 %v143
  %448 = vmatprep.subr.mxu0 %v148
  %449 = vmatpush1.msra.mxu0 %v147
  %450 = vmatprep.mubr.f32.mxu0 %v313
  %451 = vmatmul.mubr.f32.gmra.mrb[0].mxu0 %v314
  %v452 = vpop.f32.mrb[0].mxu0
  %v453 = vadd.f32 %v151, %v452
  %v454 = vpop.f32.mrb[0].mxu0
  %v455 = vadd.f32 %v152, %v454
  %456 = vdwg.mxu0
  %v457 = vxor.u32 %v382, 2147483648
  %v458 = vmul.f32 %v457, 1.442695
  %v459 = vpow.pop %v458
  %v460 = vadd.f32 %v459, 1.0
  %v461 = vrcp.pop %v460
  %v462 = vmul.f32 1.0, %v461
  %v463 = vxor.u32 %v384, 2147483648
  %v464 = vmul.f32 %v463, 1.442695
  %v465 = vpow.pop %v464
  %v466 = vadd.f32 %v465, 1.0
  %v467 = vrcp.pop %v466
  %v468 = vmul.f32 1.0, %v467
  %v469 = vmul.f32 %v462, %v455
  %v470 = vadd.f32 %v453, %v469
  %v471 = vtanh.pop %v470
  %v472 = vsub.f32 1.0, %v468
  %v473 = vmul.f32 %v472, %v471
  %v474 = vmul.f32 %v468, %v313
  %v475 = vadd.f32 %v473, %v474
  %s476 = scalar_lea.vmem %s1, 1024
  %v477 = vld [vmem:[%s476] sm:$0xff]
  %v478 = vld [vmem:[%s476 + $0x8] sm:$0xff]
  %v479 = vld [vmem:[%s476 + $0x10] sm:$0xff]
  %v480 = vld [vmem:[%s476 + $0x18] sm:$0xff]
  %v481 = vld [vmem:[%s476 + $0x20] sm:$0xff]
  %v482 = vld [vmem:[%s476 + $0x28] sm:$0xff]
  %v483 = vld [vmem:[%s476 + $0x30] sm:$0xff]
  %v484 = vld [vmem:[%s476 + $0x38] sm:$0xff]
  %v485 = vld [vmem:[%s476 + $0x40] sm:$0xff]
  %v486 = vld [vmem:[%s476 + $0x48] sm:$0xff]
  %v487 = vld [vmem:[%s476 + $0x50] sm:$0xff]
  %v488 = vld [vmem:[%s476 + $0x58] sm:$0xff]
  %v489 = vld [vmem:[%s476 + $0x60] sm:$0xff]
  %v490 = vld [vmem:[%s476 + $0x68] sm:$0xff]
  %v491 = vld [vmem:[%s476 + $0x70] sm:$0xff]
  %v492 = vld [vmem:[%s476 + $0x78] sm:$0xff]
  %v493 = vld [vmem:[%s476 + $0x80] sm:$0xff]
  %v494 = vld [vmem:[%s476 + $0x88] sm:$0xff]
  %v495 = vld [vmem:[%s476 + $0x90] sm:$0xff]
  %v496 = vld [vmem:[%s476 + $0x98] sm:$0xff]
  %v497 = vld [vmem:[%s476 + $0xa0] sm:$0xff]
  %v498 = vld [vmem:[%s476 + $0xa8] sm:$0xff]
  %v499 = vld [vmem:[%s476 + $0xb0] sm:$0xff]
  %v500 = vld [vmem:[%s476 + $0xb8] sm:$0xff]
  %v501 = vld [vmem:[%s476 + $0xc0] sm:$0xff]
  %v502 = vld [vmem:[%s476 + $0xc8] sm:$0xff]
  %v503 = vld [vmem:[%s476 + $0xd0] sm:$0xff]
  %v504 = vld [vmem:[%s476 + $0xd8] sm:$0xff]
  %v505 = vld [vmem:[%s476 + $0xe0] sm:$0xff]
  %v506 = vld [vmem:[%s476 + $0xe8] sm:$0xff]
  %v507 = vld [vmem:[%s476 + $0xf0] sm:$0xff]
  %v508 = vld [vmem:[%s476 + $0xf8] sm:$0xff]
  %v509 = vld [vmem:[%s476 + $0x100] sm:$0xff]
  %v510 = vld [vmem:[%s476 + $0x108] sm:$0xff]
  %v511 = vld [vmem:[%s476 + $0x110] sm:$0xff]
  %v512 = vld [vmem:[%s476 + $0x118] sm:$0xff]
  %v513 = vld [vmem:[%s476 + $0x120] sm:$0xff]
  %v514 = vld [vmem:[%s476 + $0x128] sm:$0xff]
  %v515 = vld [vmem:[%s476 + $0x130] sm:$0xff]
  %v516 = vld [vmem:[%s476 + $0x138] sm:$0xff]
  %v517 = vld [vmem:[%s476 + $0x140] sm:$0xff]
  %v518 = vld [vmem:[%s476 + $0x148] sm:$0xff]
  %v519 = vld [vmem:[%s476 + $0x150] sm:$0xff]
  %v520 = vld [vmem:[%s476 + $0x158] sm:$0xff]
  %v521 = vld [vmem:[%s476 + $0x160] sm:$0xff]
  %v522 = vld [vmem:[%s476 + $0x168] sm:$0xff]
  %v523 = vld [vmem:[%s476 + $0x170] sm:$0xff]
  %v524 = vld [vmem:[%s476 + $0x178] sm:$0xff]
  %v525 = vld [vmem:[%s476 + $0x180] sm:$0xff]
  %v526 = vld [vmem:[%s476 + $0x188] sm:$0xff]
  %v527 = vld [vmem:[%s476 + $0x190] sm:$0xff]
  %v528 = vld [vmem:[%s476 + $0x198] sm:$0xff]
  %v529 = vld [vmem:[%s476 + $0x1a0] sm:$0xff]
  %v530 = vld [vmem:[%s476 + $0x1a8] sm:$0xff]
  %v531 = vld [vmem:[%s476 + $0x1b0] sm:$0xff]
  %v532 = vld [vmem:[%s476 + $0x1b8] sm:$0xff]
  %v533 = vld [vmem:[%s476 + $0x1c0] sm:$0xff]
  %v534 = vld [vmem:[%s476 + $0x1c8] sm:$0xff]
  %v535 = vld [vmem:[%s476 + $0x1d0] sm:$0xff]
  %v536 = vld [vmem:[%s476 + $0x1d8] sm:$0xff]
  %v537 = vld [vmem:[%s476 + $0x1e0] sm:$0xff]
  %v538 = vld [vmem:[%s476 + $0x1e8] sm:$0xff]
  %v539 = vld [vmem:[%s476 + $0x1f0] sm:$0xff]
  %v540 = vld [vmem:[%s476 + $0x1f8] sm:$0xff]
  %v541 = vld [vmem:[%s476 + $0x200] sm:$0xff]
  %v542 = vld [vmem:[%s476 + $0x208] sm:$0xff]
  %v543 = vld [vmem:[%s476 + $0x210] sm:$0xff]
  %v544 = vld [vmem:[%s476 + $0x218] sm:$0xff]
  %v545 = vld [vmem:[%s476 + $0x220] sm:$0xff]
  %v546 = vld [vmem:[%s476 + $0x228] sm:$0xff]
  %v547 = vld [vmem:[%s476 + $0x230] sm:$0xff]
  %v548 = vld [vmem:[%s476 + $0x238] sm:$0xff]
  %v549 = vld [vmem:[%s476 + $0x240] sm:$0xff]
  %v550 = vld [vmem:[%s476 + $0x248] sm:$0xff]
  %v551 = vld [vmem:[%s476 + $0x250] sm:$0xff]
  %v552 = vld [vmem:[%s476 + $0x258] sm:$0xff]
  %v553 = vld [vmem:[%s476 + $0x260] sm:$0xff]
  %v554 = vld [vmem:[%s476 + $0x268] sm:$0xff]
  %v555 = vld [vmem:[%s476 + $0x270] sm:$0xff]
  %v556 = vld [vmem:[%s476 + $0x278] sm:$0xff]
  %v557 = vld [vmem:[%s476 + $0x280] sm:$0xff]
  %v558 = vld [vmem:[%s476 + $0x288] sm:$0xff]
  %v559 = vld [vmem:[%s476 + $0x290] sm:$0xff]
  %v560 = vld [vmem:[%s476 + $0x298] sm:$0xff]
  %v561 = vld [vmem:[%s476 + $0x2a0] sm:$0xff]
  %v562 = vld [vmem:[%s476 + $0x2a8] sm:$0xff]
  %v563 = vld [vmem:[%s476 + $0x2b0] sm:$0xff]
  %v564 = vld [vmem:[%s476 + $0x2b8] sm:$0xff]
  %v565 = vld [vmem:[%s476 + $0x2c0] sm:$0xff]
  %v566 = vld [vmem:[%s476 + $0x2c8] sm:$0xff]
  %v567 = vld [vmem:[%s476 + $0x2d0] sm:$0xff]
  %v568 = vld [vmem:[%s476 + $0x2d8] sm:$0xff]
  %v569 = vld [vmem:[%s476 + $0x2e0] sm:$0xff]
  %v570 = vld [vmem:[%s476 + $0x2e8] sm:$0xff]
  %v571 = vld [vmem:[%s476 + $0x2f0] sm:$0xff]
  %v572 = vld [vmem:[%s476 + $0x2f8] sm:$0xff]
  %v573 = vld [vmem:[%s476 + $0x300] sm:$0xff]
  %v574 = vld [vmem:[%s476 + $0x308] sm:$0xff]
  %v575 = vld [vmem:[%s476 + $0x310] sm:$0xff]
  %v576 = vld [vmem:[%s476 + $0x318] sm:$0xff]
  %v577 = vld [vmem:[%s476 + $0x320] sm:$0xff]
  %v578 = vld [vmem:[%s476 + $0x328] sm:$0xff]
  %v579 = vld [vmem:[%s476 + $0x330] sm:$0xff]
  %v580 = vld [vmem:[%s476 + $0x338] sm:$0xff]
  %v581 = vld [vmem:[%s476 + $0x340] sm:$0xff]
  %v582 = vld [vmem:[%s476 + $0x348] sm:$0xff]
  %v583 = vld [vmem:[%s476 + $0x350] sm:$0xff]
  %v584 = vld [vmem:[%s476 + $0x358] sm:$0xff]
  %v585 = vld [vmem:[%s476 + $0x360] sm:$0xff]
  %v586 = vld [vmem:[%s476 + $0x368] sm:$0xff]
  %v587 = vld [vmem:[%s476 + $0x370] sm:$0xff]
  %v588 = vld [vmem:[%s476 + $0x378] sm:$0xff]
  %v589 = vld [vmem:[%s476 + $0x380] sm:$0xff]
  %v590 = vld [vmem:[%s476 + $0x388] sm:$0xff]
  %v591 = vld [vmem:[%s476 + $0x390] sm:$0xff]
  %v592 = vld [vmem:[%s476 + $0x398] sm:$0xff]
  %v593 = vld [vmem:[%s476 + $0x3a0] sm:$0xff]
  %v594 = vld [vmem:[%s476 + $0x3a8] sm:$0xff]
  %v595 = vld [vmem:[%s476 + $0x3b0] sm:$0xff]
  %v596 = vld [vmem:[%s476 + $0x3b8] sm:$0xff]
  %v597 = vld [vmem:[%s476 + $0x3c0] sm:$0xff]
  %v598 = vld [vmem:[%s476 + $0x3c8] sm:$0xff]
  %v599 = vld [vmem:[%s476 + $0x3d0] sm:$0xff]
  %v600 = vld [vmem:[%s476 + $0x3d8] sm:$0xff]
  %v601 = vld [vmem:[%s476 + $0x3e0] sm:$0xff]
  %v602 = vld [vmem:[%s476 + $0x3e8] sm:$0xff]
  %v603 = vld [vmem:[%s476 + $0x3f0] sm:$0xff]
  %v604 = vld [vmem:[%s476 + $0x3f8] sm:$0xff]
  %s605 = scalar_lea.vmem %s2, 32
  %v606 = vld [vmem:[%s605] sm:$0xff]
  %v607 = vld [vmem:[%s605 + $0x8] sm:$0xff]
  %v608 = vld [vmem:[%s605 + $0x10] sm:$0xff]
  %v609 = vld [vmem:[%s605 + $0x18] sm:$0xff]
  %610 = vmatprep.subr.mxu0 %v478
  %611 = vmatpush1.msra.mxu0 %v477
  %612 = vmatprep.subr.mxu0 %v482
  %613 = vmatpush1.msra.mxu0 %v481
  %614 = vmatprep.subr.mxu0 %v486
  %615 = vmatpush1.msra.mxu0 %v485
  %616 = vmatprep.subr.mxu0 %v490
  %617 = vmatpush1.msra.mxu0 %v489
  %618 = vmatprep.subr.mxu0 %v494
  %619 = vmatpush1.msra.mxu0 %v493
  %620 = vmatprep.subr.mxu0 %v498
  %621 = vmatpush1.msra.mxu0 %v497
  %622 = vmatprep.subr.mxu0 %v502
  %623 = vmatpush1.msra.mxu0 %v501
  %624 = vmatprep.subr.mxu0 %v506
  %625 = vmatpush1.msra.mxu0 %v505
  %626 = vmatprep.subr.mxu0 %v510
  %627 = vmatpush1.msra.mxu0 %v509
  %628 = vmatprep.subr.mxu0 %v514
  %629 = vmatpush1.msra.mxu0 %v513
  %630 = vmatprep.subr.mxu0 %v518
  %631 = vmatpush1.msra.mxu0 %v517
  %632 = vmatprep.subr.mxu0 %v522
  %633 = vmatpush1.msra.mxu0 %v521
  %634 = vmatprep.subr.mxu0 %v526
  %635 = vmatpush1.msra.mxu0 %v525
  %636 = vmatprep.subr.mxu0 %v530
  %637 = vmatpush1.msra.mxu0 %v529
  %638 = vmatprep.subr.mxu0 %v534
  %639 = vmatpush1.msra.mxu0 %v533
  %640 = vmatprep.subr.mxu0 %v538
  %641 = vmatpush1.msra.mxu0 %v537
  %642 = vmatprep.subr.mxu0 %v542
  %643 = vmatpush1.msra.mxu0 %v541
  %644 = vmatprep.subr.mxu0 %v546
  %645 = vmatpush1.msra.mxu0 %v545
  %646 = vmatprep.subr.mxu0 %v550
  %647 = vmatpush1.msra.mxu0 %v549
  %648 = vmatprep.subr.mxu0 %v554
  %649 = vmatpush1.msra.mxu0 %v553
  %650 = vmatprep.subr.mxu0 %v558
  %651 = vmatpush1.msra.mxu0 %v557
  %652 = vmatprep.subr.mxu0 %v562
  %653 = vmatpush1.msra.mxu0 %v561
  %654 = vmatprep.subr.mxu0 %v566
  %655 = vmatpush1.msra.mxu0 %v565
  %656 = vmatprep.subr.mxu0 %v570
  %657 = vmatpush1.msra.mxu0 %v569
  %658 = vmatprep.subr.mxu0 %v574
  %659 = vmatpush1.msra.mxu0 %v573
  %660 = vmatprep.subr.mxu0 %v578
  %661 = vmatpush1.msra.mxu0 %v577
  %662 = vmatprep.subr.mxu0 %v582
  %663 = vmatpush1.msra.mxu0 %v581
  %664 = vmatprep.subr.mxu0 %v586
  %665 = vmatpush1.msra.mxu0 %v585
  %666 = vmatprep.subr.mxu0 %v590
  %667 = vmatpush1.msra.mxu0 %v589
  %668 = vmatprep.subr.mxu0 %v594
  %669 = vmatpush1.msra.mxu0 %v593
  %670 = vmatprep.subr.mxu0 %v598
  %671 = vmatpush1.msra.mxu0 %v597
  %672 = vmatprep.subr.mxu0 %v602
  %673 = vmatpush1.msra.mxu0 %v601
  %674 = vmatprep.mubr.f32.mxu0 0.0
  %675 = vmatmul.mubr.f32.gmra.mrb[0].mxu0 %v313
  %v676 = vpop.f32.mrb[0].mxu0
  %v677 = vadd.f32 %v606, %v676
  %v678 = vpop.f32.mrb[0].mxu0
  %v679 = vadd.f32 %v607, %v678
  %680 = vdwg.mxu0
  %681 = vmatprep.subr.mxu0 %v480
  %682 = vmatpush1.msra.mxu0 %v479
  %683 = vmatprep.subr.mxu0 %v484
  %684 = vmatpush1.msra.mxu0 %v483
  %685 = vmatprep.subr.mxu0 %v488
  %686 = vmatpush1.msra.mxu0 %v487
  %687 = vmatprep.subr.mxu0 %v492
  %688 = vmatpush1.msra.mxu0 %v491
  %689 = vmatprep.subr.mxu0 %v496
  %690 = vmatpush1.msra.mxu0 %v495
  %691 = vmatprep.subr.mxu0 %v500
  %692 = vmatpush1.msra.mxu0 %v499
  %693 = vmatprep.subr.mxu0 %v504
  %694 = vmatpush1.msra.mxu0 %v503
  %695 = vmatprep.subr.mxu0 %v508
  %696 = vmatpush1.msra.mxu0 %v507
  %697 = vmatprep.subr.mxu0 %v512
  %698 = vmatpush1.msra.mxu0 %v511
  %699 = vmatprep.subr.mxu0 %v516
  %700 = vmatpush1.msra.mxu0 %v515
  %701 = vmatprep.subr.mxu0 %v520
  %702 = vmatpush1.msra.mxu0 %v519
  %703 = vmatprep.subr.mxu0 %v524
  %704 = vmatpush1.msra.mxu0 %v523
  %705 = vmatprep.subr.mxu0 %v528
  %706 = vmatpush1.msra.mxu0 %v527
  %707 = vmatprep.subr.mxu0 %v532
  %708 = vmatpush1.msra.mxu0 %v531
  %709 = vmatprep.subr.mxu0 %v536
  %710 = vmatpush1.msra.mxu0 %v535
  %711 = vmatprep.subr.mxu0 %v540
  %712 = vmatpush1.msra.mxu0 %v539
  %713 = vmatprep.subr.mxu0 %v544
  %714 = vmatpush1.msra.mxu0 %v543
  %715 = vmatprep.subr.mxu0 %v548
  %716 = vmatpush1.msra.mxu0 %v547
  %717 = vmatprep.subr.mxu0 %v552
  %718 = vmatpush1.msra.mxu0 %v551
  %719 = vmatprep.subr.mxu0 %v556
  %720 = vmatpush1.msra.mxu0 %v555
  %721 = vmatprep.subr.mxu0 %v560
  %722 = vmatpush1.msra.mxu0 %v559
  %723 = vmatprep.subr.mxu0 %v564
  %724 = vmatpush1.msra.mxu0 %v563
  %725 = vmatprep.subr.mxu0 %v568
  %726 = vmatpush1.msra.mxu0 %v567
  %727 = vmatprep.subr.mxu0 %v572
  %728 = vmatpush1.msra.mxu0 %v571
  %729 = vmatprep.subr.mxu0 %v576
  %730 = vmatpush1.msra.mxu0 %v575
  %731 = vmatprep.subr.mxu0 %v580
  %732 = vmatpush1.msra.mxu0 %v579
  %733 = vmatprep.subr.mxu0 %v584
  %734 = vmatpush1.msra.mxu0 %v583
  %735 = vmatprep.subr.mxu0 %v588
  %736 = vmatpush1.msra.mxu0 %v587
  %737 = vmatprep.subr.mxu0 %v592
  %738 = vmatpush1.msra.mxu0 %v591
  %739 = vmatprep.subr.mxu0 %v596
  %740 = vmatpush1.msra.mxu0 %v595
  %741 = vmatprep.subr.mxu0 %v600
  %742 = vmatpush1.msra.mxu0 %v599
  %743 = vmatprep.subr.mxu0 %v604
  %744 = vmatpush1.msra.mxu0 %v603
  %745 = vmatprep.mubr.f32.mxu0 0.0
  %746 = vmatmul.mubr.f32.gmra.mrb[0].mxu0 %v313
  %v747 = vpop.f32.mrb[0].mxu0
  %v748 = vadd.f32 %v608, %v747
  %v749 = vpop.f32.mrb[0].mxu0
  %v750 = vadd.f32 %v609, %v749
  %751 = vdwg.mxu0
  %v752 = vxor.u32 %v677, 2147483648
  %v753 = vmul.f32 %v752, 1.442695
  %v754 = vpow.pop %v753
  %v755 = vadd.f32 %v754, 1.0
  %v756 = vrcp.pop %v755
  %v757 = vmul.f32 1.0, %v756
  %v758 = vxor.u32 %v679, 2147483648
  %v759 = vmul.f32 %v758, 1.442695
  %v760 = vpow.pop %v759
  %v761 = vadd.f32 %v760, 1.0
  %v762 = vrcp.pop %v761
  %v763 = vmul.f32 1.0, %v762
  %v764 = vmul.f32 %v757, %v750
  %v765 = vadd.f32 %v748, %v764
  %v766 = vtanh.pop %v765
  %v767 = vsub.f32 1.0, %v763
  %v768 = vmul.f32 %v767, %v766
  %v769 = vmul.f32 %v763, 0.0
  %v770 = vadd.f32 %v768, %v769
  %v771 = vld [vmem:[%s0 + $0x10] sm:$0xff]
  %772 = vmatprep.subr.mxu0 %v22
  %773 = vmatpush1.msra.mxu0 %v21
  %774 = vmatprep.subr.mxu0 %v26
  %775 = vmatpush1.msra.mxu0 %v25
  %776 = vmatprep.subr.mxu0 %v30
  %777 = vmatpush1.msra.mxu0 %v29
  %778 = vmatprep.subr.mxu0 %v34
  %779 = vmatpush1.msra.mxu0 %v33
  %780 = vmatprep.subr.mxu0 %v38
  %781 = vmatpush1.msra.mxu0 %v37
  %782 = vmatprep.subr.mxu0 %v42
  %783 = vmatpush1.msra.mxu0 %v41
  %784 = vmatprep.subr.mxu0 %v46
  %785 = vmatpush1.msra.mxu0 %v45
  %786 = vmatprep.subr.mxu0 %v50
  %787 = vmatpush1.msra.mxu0 %v49
  %788 = vmatprep.subr.mxu0 %v54
  %789 = vmatpush1.msra.mxu0 %v53
  %790 = vmatprep.subr.mxu0 %v58
  %791 = vmatpush1.msra.mxu0 %v57
  %792 = vmatprep.subr.mxu0 %v62
  %793 = vmatpush1.msra.mxu0 %v61
  %794 = vmatprep.subr.mxu0 %v66
  %795 = vmatpush1.msra.mxu0 %v65
  %796 = vmatprep.subr.mxu0 %v70
  %797 = vmatpush1.msra.mxu0 %v69
  %798 = vmatprep.subr.mxu0 %v74
  %799 = vmatpush1.msra.mxu0 %v73
  %800 = vmatprep.subr.mxu0 %v78
  %801 = vmatpush1.msra.mxu0 %v77
  %802 = vmatprep.subr.mxu0 %v82
  %803 = vmatpush1.msra.mxu0 %v81
  %804 = vmatprep.subr.mxu0 %v86
  %805 = vmatpush1.msra.mxu0 %v85
  %806 = vmatprep.subr.mxu0 %v90
  %807 = vmatpush1.msra.mxu0 %v89
  %808 = vmatprep.subr.mxu0 %v94
  %809 = vmatpush1.msra.mxu0 %v93
  %810 = vmatprep.subr.mxu0 %v98
  %811 = vmatpush1.msra.mxu0 %v97
  %812 = vmatprep.subr.mxu0 %v102
  %813 = vmatpush1.msra.mxu0 %v101
  %814 = vmatprep.subr.mxu0 %v106
  %815 = vmatpush1.msra.mxu0 %v105
  %816 = vmatprep.subr.mxu0 %v110
  %817 = vmatpush1.msra.mxu0 %v109
  %818 = vmatprep.subr.mxu0 %v114
  %819 = vmatpush1.msra.mxu0 %v113
  %820 = vmatprep.subr.mxu0 %v118
  %821 = vmatpush1.msra.mxu0 %v117
  %822 = vmatprep.subr.mxu0 %v122
  %823 = vmatpush1.msra.mxu0 %v121
  %824 = vmatprep.subr.mxu0 %v126
  %825 = vmatpush1.msra.mxu0 %v125
  %826 = vmatprep.subr.mxu0 %v130
  %827 = vmatpush1.msra.mxu0 %v129
  %828 = vmatprep.subr.mxu0 %v134
  %829 = vmatpush1.msra.mxu0 %v133
  %830 = vmatprep.subr.mxu0 %v138
  %831 = vmatpush1.msra.mxu0 %v137
  %832 = vmatprep.subr.mxu0 %v142
  %833 = vmatpush1.msra.mxu0 %v141
  %834 = vmatprep.subr.mxu0 %v146
  %835 = vmatpush1.msra.mxu0 %v145
  %836 = vmatprep.mubr.f32.mxu0 %v475
  %837 = vmatmul.mubr.f32.gmra.mrb[0].mxu0 %v771
  %v838 = vpop.f32.mrb[0].mxu0
  %v839 = vadd.f32 %v149, %v838
  %v840 = vpop.f32.mrb[0].mxu0
  %v841 = vadd.f32 %v150, %v840
  %842 = vdwg.mxu0
  %843 = vmatprep.subr.mxu0 %v24
  %844 = vmatpush1.msra.mxu0 %v23
  %845 = vmatprep.subr.mxu0 %v28
  %846 = vmatpush1.msra.mxu0 %v27
  %847 = vmatprep.subr.mxu0 %v32
  %848 = vmatpush1.msra.mxu0 %v31
  %849 = vmatprep.subr.mxu0 %v36
  %850 = vmatpush1.msra.mxu0 %v35
  %851 = vmatprep.subr.mxu0 %v40
  %852 = vmatpush1.msra.mxu0 %v39
  %853 = vmatprep.subr.mxu0 %v44
  %854 = vmatpush1.msra.mxu0 %v43
  %855 = vmatprep.subr.mxu0 %v48
  %856 = vmatpush1.msra.mxu0 %v47
  %857 = vmatprep.subr.mxu0 %v52
  %858 = vmatpush1.msra.mxu0 %v51
  %859 = vmatprep.subr.mxu0 %v56
  %860 = vmatpush1.msra.mxu0 %v55
  %861 = vmatprep.subr.mxu0 %v60
  %862 = vmatpush1.msra.mxu0 %v59
  %863 = vmatprep.subr.mxu0 %v64
  %864 = vmatpush1.msra.mxu0 %v63
  %865 = vmatprep.subr.mxu0 %v68
  %866 = vmatpush1.msra.mxu0 %v67
  %867 = vmatprep.subr.mxu0 %v72
  %868 = vmatpush1.msra.mxu0 %v71
  %869 = vmatprep.subr.mxu0 %v76
  %870 = vmatpush1.msra.mxu0 %v75
  %871 = vmatprep.subr.mxu0 %v80
  %872 = vmatpush1.msra.mxu0 %v79
  %873 = vmatprep.subr.mxu0 %v84
  %874 = vmatpush1.msra.mxu0 %v83
  %875 = vmatprep.subr.mxu0 %v88
  %876 = vmatpush1.msra.mxu0 %v87
  %877 = vmatprep.subr.mxu0 %v92
  %878 = vmatpush1.msra.mxu0 %v91
  %879 = vmatprep.subr.mxu0 %v96
  %880 = vmatpush1.msra.mxu0 %v95
  %881 = vmatprep.subr.mxu0 %v100
  %882 = vmatpush1.msra.mxu0 %v99
  %883 = vmatprep.subr.mxu0 %v104
  %884 = vmatpush1.msra.mxu0 %v103
  %885 = vmatprep.subr.mxu0 %v108
  %886 = vmatpush1.msra.mxu0 %v107
  %887 = vmatprep.subr.mxu0 %v112
  %888 = vmatpush1.msra.mxu0 %v111
  %889 = vmatprep.subr.mxu0 %v116
  %890 = vmatpush1.msra.mxu0 %v115
  %891 = vmatprep.subr.mxu0 %v120
  %892 = vmatpush1.msra.mxu0 %v119
  %893 = vmatprep.subr.mxu0 %v124
  %894 = vmatpush1.msra.mxu0 %v123
  %895 = vmatprep.subr.mxu0 %v128
  %896 = vmatpush1.msra.mxu0 %v127
  %897 = vmatprep.subr.mxu0 %v132
  %898 = vmatpush1.msra.mxu0 %v131
  %899 = vmatprep.subr.mxu0 %v136
  %900 = vmatpush1.msra.mxu0 %v135
  %901 = vmatprep.subr.mxu0 %v140
  %902 = vmatpush1.msra.mxu0 %v139
  %903 = vmatprep.subr.mxu0 %v144
  %904 = vmatpush1.msra.mxu0 %v143
  %905 = vmatprep.subr.mxu0 %v148
  %906 = vmatpush1.msra.mxu0 %v147
  %907 = vmatprep.mubr.f32.mxu0 %v475
  %908 = vmatmul.mubr.f32.gmra.mrb[0].mxu0 %v771
  %v909 = vpop.f32.mrb[0].mxu0
  %v910 = vadd.f32 %v151, %v909
  %v911 = vpop.f32.mrb[0].mxu0
  %v912 = vadd.f32 %v152, %v911
  %913 = vdwg.mxu0
  %v914 = vxor.u32 %v839, 2147483648
  %v915 = vmul.f32 %v914, 1.442695
  %v916 = vpow.pop %v915
  %v917 = vadd.f32 %v916, 1.0
  %v918 = vrcp.pop %v917
  %v919 = vmul.f32 1.0, %v918
  %v920 = vxor.u32 %v841, 2147483648
  %v921 = vmul.f32 %v920, 1.442695
  %v922 = vpow.pop %v921
  %v923 = vadd.f32 %v922, 1.0
  %v924 = vrcp.pop %v923
  %v925 = vmul.f32 1.0, %v924
  %v926 = vmul.f32 %v919, %v912
  %v927 = vadd.f32 %v910, %v926
  %v928 = vtanh.pop %v927
  %v929 = vsub.f32 1.0, %v925
  %v930 = vmul.f32 %v929, %v928
  %v931 = vmul.f32 %v925, %v475
  %v932 = vadd.f32 %v930, %v931
  %933 = vmatprep.subr.mxu0 %v478
  %934 = vmatpush1.msra.mxu0 %v477
  %935 = vmatprep.subr.mxu0 %v482
  %936 = vmatpush1.msra.mxu0 %v481
  %937 = vmatprep.subr.mxu0 %v486
  %938 = vmatpush1.msra.mxu0 %v485
  %939 = vmatprep.subr.mxu0 %v490
  %940 = vmatpush1.msra.mxu0 %v489
  %941 = vmatprep.subr.mxu0 %v494
  %942 = vmatpush1.msra.mxu0 %v493
  %943 = vmatprep.subr.mxu0 %v498
  %944 = vmatpush1.msra.mxu0 %v497
  %945 = vmatprep.subr.mxu0 %v502
  %946 = vmatpush1.msra.mxu0 %v501
  %947 = vmatprep.subr.mxu0 %v506
  %948 = vmatpush1.msra.mxu0 %v505
  %949 = vmatprep.subr.mxu0 %v510
  %950 = vmatpush1.msra.mxu0 %v509
  %951 = vmatprep.subr.mxu0 %v514
  %952 = vmatpush1.msra.mxu0 %v513
  %953 = vmatprep.subr.mxu0 %v518
  %954 = vmatpush1.msra.mxu0 %v517
  %955 = vmatprep.subr.mxu0 %v522
  %956 = vmatpush1.msra.mxu0 %v521
  %957 = vmatprep.subr.mxu0 %v526
  %958 = vmatpush1.msra.mxu0 %v525
  %959 = vmatprep.subr.mxu0 %v530
  %960 = vmatpush1.msra.mxu0 %v529
  %961 = vmatprep.subr.mxu0 %v534
  %962 = vmatpush1.msra.mxu0 %v533
  %963 = vmatprep.subr.mxu0 %v538
  %964 = vmatpush1.msra.mxu0 %v537
  %965 = vmatprep.subr.mxu0 %v542
  %966 = vmatpush1.msra.mxu0 %v541
  %967 = vmatprep.subr.mxu0 %v546
  %968 = vmatpush1.msra.mxu0 %v545
  %969 = vmatprep.subr.mxu0 %v550
  %970 = vmatpush1.msra.mxu0 %v549
  %971 = vmatprep.subr.mxu0 %v554
  %972 = vmatpush1.msra.mxu0 %v553
  %973 = vmatprep.subr.mxu0 %v558
  %974 = vmatpush1.msra.mxu0 %v557
  %975 = vmatprep.subr.mxu0 %v562
  %976 = vmatpush1.msra.mxu0 %v561
  %977 = vmatprep.subr.mxu0 %v566
  %978 = vmatpush1.msra.mxu0 %v565
  %979 = vmatprep.subr.mxu0 %v570
  %980 = vmatpush1.msra.mxu0 %v569
  %981 = vmatprep.subr.mxu0 %v574
  %982 = vmatpush1.msra.mxu0 %v573
  %983 = vmatprep.subr.mxu0 %v578
  %984 = vmatpush1.msra.mxu0 %v577
  %985 = vmatprep.subr.mxu0 %v582
  %986 = vmatpush1.msra.mxu0 %v581
  %987 = vmatprep.subr.mxu0 %v586
  %988 = vmatpush1.msra.mxu0 %v585
  %989 = vmatprep.subr.mxu0 %v590
  %990 = vmatpush1.msra.mxu0 %v589
  %991 = vmatprep.subr.mxu0 %v594
  %992 = vmatpush1.msra.mxu0 %v593
  %993 = vmatprep.subr.mxu0 %v598
  %994 = vmatpush1.msra.mxu0 %v597
  %995 = vmatprep.subr.mxu0 %v602
  %996 = vmatpush1.msra.mxu0 %v601
  %997 = vmatprep.mubr.f32.mxu0 %v770
  %998 = vmatmul.mubr.f32.gmra.mrb[0].mxu0 %v475
  %v999 = vpop.f32.mrb[0].mxu0
  %v1000 = vadd.f32 %v606, %v999
  %v1001 = vpop.f32.mrb[0].mxu0
  %v1002 = vadd.f32 %v607, %v1001
  %1003 = vdwg.mxu0
  %1004 = vmatprep.subr.mxu0 %v480
  %1005 = vmatpush1.msra.mxu0 %v479
  %1006 = vmatprep.subr.mxu0 %v484
  %1007 = vmatpush1.msra.mxu0 %v483
  %1008 = vmatprep.subr.mxu0 %v488
  %1009 = vmatpush1.msra.mxu0 %v487
  %1010 = vmatprep.subr.mxu0 %v492
  %1011 = vmatpush1.msra.mxu0 %v491
  %1012 = vmatprep.subr.mxu0 %v496
  %1013 = vmatpush1.msra.mxu0 %v495
  %1014 = vmatprep.subr.mxu0 %v500
  %1015 = vmatpush1.msra.mxu0 %v499
  %1016 = vmatprep.subr.mxu0 %v504
  %1017 = vmatpush1.msra.mxu0 %v503
  %1018 = vmatprep.subr.mxu0 %v508
  %1019 = vmatpush1.msra.mxu0 %v507
  %1020 = vmatprep.subr.mxu0 %v512
  %1021 = vmatpush1.msra.mxu0 %v511
  %1022 = vmatprep.subr.mxu0 %v516
  %1023 = vmatpush1.msra.mxu0 %v515
  %1024 = vmatprep.subr.mxu0 %v520
  %1025 = vmatpush1.msra.mxu0 %v519
  %1026 = vmatprep.subr.mxu0 %v524
  %1027 = vmatpush1.msra.mxu0 %v523
  %1028 = vmatprep.subr.mxu0 %v528
  %1029 = vmatpush1.msra.mxu0 %v527
  %1030 = vmatprep.subr.mxu0 %v532
  %1031 = vmatpush1.msra.mxu0 %v531
  %1032 = vmatprep.subr.mxu0 %v536
  %1033 = vmatpush1.msra.mxu0 %v535
  %1034 = vmatprep.subr.mxu0 %v540
  %1035 = vmatpush1.msra.mxu0 %v539
  %1036 = vmatprep.subr.mxu0 %v544
  %1037 = vmatpush1.msra.mxu0 %v543
  %1038 = vmatprep.subr.mxu0 %v548
  %1039 = vmatpush1.msra.mxu0 %v547
  %1040 = vmatprep.subr.mxu0 %v552
  %1041 = vmatpush1.msra.mxu0 %v551
  %1042 = vmatprep.subr.mxu0 %v556
  %1043 = vmatpush1.msra.mxu0 %v555
  %1044 = vmatprep.subr.mxu0 %v560
  %1045 = vmatpush1.msra.mxu0 %v559
  %1046 = vmatprep.subr.mxu0 %v564
  %1047 = vmatpush1.msra.mxu0 %v563
  %1048 = vmatprep.subr.mxu0 %v568
  %1049 = vmatpush1.msra.mxu0 %v567
  %1050 = vmatprep.subr.mxu0 %v572
  %1051 = vmatpush1.msra.mxu0 %v571
  %1052 = vmatprep.subr.mxu0 %v576
  %1053 = vmatpush1.msra.mxu0 %v575
  %1054 = vmatprep.subr.mxu0 %v580
  %1055 = vmatpush1.msra.mxu0 %v579
  %1056 = vmatprep.subr.mxu0 %v584
  %1057 = vmatpush1.msra.mxu0 %v583
  %1058 = vmatprep.subr.mxu0 %v588
  %1059 = vmatpush1.msra.mxu0 %v587
  %1060 = vmatprep.subr.mxu0 %v592
  %1061 = vmatpush1.msra.mxu0 %v591
  %1062 = vmatprep.subr.mxu0 %v596
  %1063 = vmatpush1.msra.mxu0 %v595
  %1064 = vmatprep.subr.mxu0 %v600
  %1065 = vmatpush1.msra.mxu0 %v599
  %1066 = vmatprep.subr.mxu0 %v604
  %1067 = vmatpush1.msra.mxu0 %v603
  %1068 = vmatprep.mubr.f32.mxu0 %v770
  %1069 = vmatmul.mubr.f32.gmra.mrb[0].mxu0 %v475
  %v1070 = vpop.f32.mrb[0].mxu0
  %v1071 = vadd.f32 %v608, %v1070
  %v1072 = vpop.f32.mrb[0].mxu0
  %v1073 = vadd.f32 %v609, %v1072
  %1074 = vdwg.mxu0
  %v1075 = vxor.u32 %v1000, 2147483648
  %v1076 = vmul.f32 %v1075, 1.442695
  %v1077 = vpow.pop %v1076
  %v1078 = vadd.f32 %v1077, 1.0
  %v1079 = vrcp.pop %v1078
  %v1080 = vmul.f32 1.0, %v1079
  %v1081 = vxor.u32 %v1002, 2147483648
  %v1082 = vmul.f32 %v1081, 1.442695
  %v1083 = vpow.pop %v1082
  %v1084 = vadd.f32 %v1083, 1.0
  %v1085 = vrcp.pop %v1084
  %v1086 = vmul.f32 1.0, %v1085
  %v1087 = vmul.f32 %v1080, %v1073
  %v1088 = vadd.f32 %v1071, %v1087
  %v1089 = vtanh.pop %v1088
  %v1090 = vsub.f32 1.0, %v1086
  %v1091 = vmul.f32 %v1090, %v1089
  %v1092 = vmul.f32 %v1086, %v770
  %v1093 = vadd.f32 %v1091, %v1092
  %s1094 = scalar_lea.vmem %s1, 2048
  %v1095 = vld [vmem:[%s1094] sm:$0xff]
  %v1096 = vld [vmem:[%s1094 + $0x8] sm:$0xff]
  %v1097 = vld [vmem:[%s1094 + $0x10] sm:$0xff]
  %v1098 = vld [vmem:[%s1094 + $0x18] sm:$0xff]
  %v1099 = vld [vmem:[%s1094 + $0x20] sm:$0xff]
  %v1100 = vld [vmem:[%s1094 + $0x28] sm:$0xff]
  %v1101 = vld [vmem:[%s1094 + $0x30] sm:$0xff]
  %v1102 = vld [vmem:[%s1094 + $0x38] sm:$0xff]
  %v1103 = vld [vmem:[%s1094 + $0x40] sm:$0xff]
  %v1104 = vld [vmem:[%s1094 + $0x48] sm:$0xff]
  %v1105 = vld [vmem:[%s1094 + $0x50] sm:$0xff]
  %v1106 = vld [vmem:[%s1094 + $0x58] sm:$0xff]
  %v1107 = vld [vmem:[%s1094 + $0x60] sm:$0xff]
  %v1108 = vld [vmem:[%s1094 + $0x68] sm:$0xff]
  %v1109 = vld [vmem:[%s1094 + $0x70] sm:$0xff]
  %v1110 = vld [vmem:[%s1094 + $0x78] sm:$0xff]
  %v1111 = vld [vmem:[%s1094 + $0x80] sm:$0xff]
  %v1112 = vld [vmem:[%s1094 + $0x88] sm:$0xff]
  %v1113 = vld [vmem:[%s1094 + $0x90] sm:$0xff]
  %v1114 = vld [vmem:[%s1094 + $0x98] sm:$0xff]
  %v1115 = vld [vmem:[%s1094 + $0xa0] sm:$0xff]
  %v1116 = vld [vmem:[%s1094 + $0xa8] sm:$0xff]
  %v1117 = vld [vmem:[%s1094 + $0xb0] sm:$0xff]
  %v1118 = vld [vmem:[%s1094 + $0xb8] sm:$0xff]
  %v1119 = vld [vmem:[%s1094 + $0xc0] sm:$0xff]
  %v1120 = vld [vmem:[%s1094 + $0xc8] sm:$0xff]
  %v1121 = vld [vmem:[%s1094 + $0xd0] sm:$0xff]
  %v1122 = vld [vmem:[%s1094 + $0xd8] sm:$0xff]
  %v1123 = vld [vmem:[%s1094 + $0xe0] sm:$0xff]
  %v1124 = vld [vmem:[%s1094 + $0xe8] sm:$0xff]
  %v1125 = vld [vmem:[%s1094 + $0xf0] sm:$0xff]
  %v1126 = vld [vmem:[%s1094 + $0xf8] sm:$0xff]
  %v1127 = vld [vmem:[%s1094 + $0x100] sm:$0xff]
  %v1128 = vld [vmem:[%s1094 + $0x108] sm:$0xff]
  %v1129 = vld [vmem:[%s1094 + $0x110] sm:$0xff]
  %v1130 = vld [vmem:[%s1094 + $0x118] sm:$0xff]
  %v1131 = vld [vmem:[%s1094 + $0x120] sm:$0xff]
  %v1132 = vld [vmem:[%s1094 + $0x128] sm:$0xff]
  %v1133 = vld [vmem:[%s1094 + $0x130] sm:$0xff]
  %v1134 = vld [vmem:[%s1094 + $0x138] sm:$0xff]
  %v1135 = vld [vmem:[%s1094 + $0x140] sm:$0xff]
  %v1136 = vld [vmem:[%s1094 + $0x148] sm:$0xff]
  %v1137 = vld [vmem:[%s1094 + $0x150] sm:$0xff]
  %v1138 = vld [vmem:[%s1094 + $0x158] sm:$0xff]
  %v1139 = vld [vmem:[%s1094 + $0x160] sm:$0xff]
  %v1140 = vld [vmem:[%s1094 + $0x168] sm:$0xff]
  %v1141 = vld [vmem:[%s1094 + $0x170] sm:$0xff]
  %v1142 = vld [vmem:[%s1094 + $0x178] sm:$0xff]
  %v1143 = vld [vmem:[%s1094 + $0x180] sm:$0xff]
  %v1144 = vld [vmem:[%s1094 + $0x188] sm:$0xff]
  %v1145 = vld [vmem:[%s1094 + $0x190] sm:$0xff]
  %v1146 = vld [vmem:[%s1094 + $0x198] sm:$0xff]
  %v1147 = vld [vmem:[%s1094 + $0x1a0] sm:$0xff]
  %v1148 = vld [vmem:[%s1094 + $0x1a8] sm:$0xff]
  %v1149 = vld [vmem:[%s1094 + $0x1b0] sm:$0xff]
  %v1150 = vld [vmem:[%s1094 + $0x1b8] sm:$0xff]
  %v1151 = vld [vmem:[%s1094 + $0x1c0] sm:$0xff]
  %v1152 = vld [vmem:[%s1094 + $0x1c8] sm:$0xff]
  %v1153 = vld [vmem:[%s1094 + $0x1d0] sm:$0xff]
  %v1154 = vld [vmem:[%s1094 + $0x1d8] sm:$0xff]
  %v1155 = vld [vmem:[%s1094 + $0x1e0] sm:$0xff]
  %v1156 = vld [vmem:[%s1094 + $0x1e8] sm:$0xff]
  %v1157 = vld [vmem:[%s1094 + $0x1f0] sm:$0xff]
  %v1158 = vld [vmem:[%s1094 + $0x1f8] sm:$0xff]
  %v1159 = vld [vmem:[%s1094 + $0x200] sm:$0xff]
  %v1160 = vld [vmem:[%s1094 + $0x208] sm:$0xff]
  %v1161 = vld [vmem:[%s1094 + $0x210] sm:$0xff]
  %v1162 = vld [vmem:[%s1094 + $0x218] sm:$0xff]
  %v1163 = vld [vmem:[%s1094 + $0x220] sm:$0xff]
  %v1164 = vld [vmem:[%s1094 + $0x228] sm:$0xff]
  %v1165 = vld [vmem:[%s1094 + $0x230] sm:$0xff]
  %v1166 = vld [vmem:[%s1094 + $0x238] sm:$0xff]
  %v1167 = vld [vmem:[%s1094 + $0x240] sm:$0xff]
  %v1168 = vld [vmem:[%s1094 + $0x248] sm:$0xff]
  %v1169 = vld [vmem:[%s1094 + $0x250] sm:$0xff]
  %v1170 = vld [vmem:[%s1094 + $0x258] sm:$0xff]
  %v1171 = vld [vmem:[%s1094 + $0x260] sm:$0xff]
  %v1172 = vld [vmem:[%s1094 + $0x268] sm:$0xff]
  %v1173 = vld [vmem:[%s1094 + $0x270] sm:$0xff]
  %v1174 = vld [vmem:[%s1094 + $0x278] sm:$0xff]
  %v1175 = vld [vmem:[%s1094 + $0x280] sm:$0xff]
  %v1176 = vld [vmem:[%s1094 + $0x288] sm:$0xff]
  %v1177 = vld [vmem:[%s1094 + $0x290] sm:$0xff]
  %v1178 = vld [vmem:[%s1094 + $0x298] sm:$0xff]
  %v1179 = vld [vmem:[%s1094 + $0x2a0] sm:$0xff]
  %v1180 = vld [vmem:[%s1094 + $0x2a8] sm:$0xff]
  %v1181 = vld [vmem:[%s1094 + $0x2b0] sm:$0xff]
  %v1182 = vld [vmem:[%s1094 + $0x2b8] sm:$0xff]
  %v1183 = vld [vmem:[%s1094 + $0x2c0] sm:$0xff]
  %v1184 = vld [vmem:[%s1094 + $0x2c8] sm:$0xff]
  %v1185 = vld [vmem:[%s1094 + $0x2d0] sm:$0xff]
  %v1186 = vld [vmem:[%s1094 + $0x2d8] sm:$0xff]
  %v1187 = vld [vmem:[%s1094 + $0x2e0] sm:$0xff]
  %v1188 = vld [vmem:[%s1094 + $0x2e8] sm:$0xff]
  %v1189 = vld [vmem:[%s1094 + $0x2f0] sm:$0xff]
  %v1190 = vld [vmem:[%s1094 + $0x2f8] sm:$0xff]
  %v1191 = vld [vmem:[%s1094 + $0x300] sm:$0xff]
  %v1192 = vld [vmem:[%s1094 + $0x308] sm:$0xff]
  %v1193 = vld [vmem:[%s1094 + $0x310] sm:$0xff]
  %v1194 = vld [vmem:[%s1094 + $0x318] sm:$0xff]
  %v1195 = vld [vmem:[%s1094 + $0x320] sm:$0xff]
  %v1196 = vld [vmem:[%s1094 + $0x328] sm:$0xff]
  %v1197 = vld [vmem:[%s1094 + $0x330] sm:$0xff]
  %v1198 = vld [vmem:[%s1094 + $0x338] sm:$0xff]
  %v1199 = vld [vmem:[%s1094 + $0x340] sm:$0xff]
  %v1200 = vld [vmem:[%s1094 + $0x348] sm:$0xff]
  %v1201 = vld [vmem:[%s1094 + $0x350] sm:$0xff]
  %v1202 = vld [vmem:[%s1094 + $0x358] sm:$0xff]
  %v1203 = vld [vmem:[%s1094 + $0x360] sm:$0xff]
  %v1204 = vld [vmem:[%s1094 + $0x368] sm:$0xff]
  %v1205 = vld [vmem:[%s1094 + $0x370] sm:$0xff]
  %v1206 = vld [vmem:[%s1094 + $0x378] sm:$0xff]
  %v1207 = vld [vmem:[%s1094 + $0x380] sm:$0xff]
  %v1208 = vld [vmem:[%s1094 + $0x388] sm:$0xff]
  %v1209 = vld [vmem:[%s1094 + $0x390] sm:$0xff]
  %v1210 = vld [vmem:[%s1094 + $0x398] sm:$0xff]
  %v1211 = vld [vmem:[%s1094 + $0x3a0] sm:$0xff]
  %v1212 = vld [vmem:[%s1094 + $0x3a8] sm:$0xff]
  %v1213 = vld [vmem:[%s1094 + $0x3b0] sm:$0xff]
  %v1214 = vld [vmem:[%s1094 + $0x3b8] sm:$0xff]
  %v1215 = vld [vmem:[%s1094 + $0x3c0] sm:$0xff]
  %v1216 = vld [vmem:[%s1094 + $0x3c8] sm:$0xff]
  %v1217 = vld [vmem:[%s1094 + $0x3d0] sm:$0xff]
  %v1218 = vld [vmem:[%s1094 + $0x3d8] sm:$0xff]
  %v1219 = vld [vmem:[%s1094 + $0x3e0] sm:$0xff]
  %v1220 = vld [vmem:[%s1094 + $0x3e8] sm:$0xff]
  %v1221 = vld [vmem:[%s1094 + $0x3f0] sm:$0xff]
  %v1222 = vld [vmem:[%s1094 + $0x3f8] sm:$0xff]
  %s1223 = scalar_lea.vmem %s2, 64
  %v1224 = vld [vmem:[%s1223] sm:$0xff]
  %v1225 = vld [vmem:[%s1223 + $0x8] sm:$0xff]
  %v1226 = vld [vmem:[%s1223 + $0x10] sm:$0xff]
  %v1227 = vld [vmem:[%s1223 + $0x18] sm:$0xff]
  %1228 = vmatprep.subr.mxu0 %v1096
  %1229 = vmatpush1.msra.mxu0 %v1095
  %1230 = vmatprep.subr.mxu0 %v1100
  %1231 = vmatpush1.msra.mxu0 %v1099
  %1232 = vmatprep.subr.mxu0 %v1104
  %1233 = vmatpush1.msra.mxu0 %v1103
  %1234 = vmatprep.subr.mxu0 %v1108
  %1235 = vmatpush1.msra.mxu0 %v1107
  %1236 = vmatprep.subr.mxu0 %v1112
  %1237 = vmatpush1.msra.mxu0 %v1111
  %1238 = vmatprep.subr.mxu0 %v1116
  %1239 = vmatpush1.msra.mxu0 %v1115
  %1240 = vmatprep.subr.mxu0 %v1120
  %1241 = vmatpush1.msra.mxu0 %v1119
  %1242 = vmatprep.subr.mxu0 %v1124
  %1243 = vmatpush1.msra.mxu0 %v1123
  %1244 = vmatprep.subr.mxu0 %v1128
  %1245 = vmatpush1.msra.mxu0 %v1127
  %1246 = vmatprep.subr.mxu0 %v1132
  %1247 = vmatpush1.msra.mxu0 %v1131
  %1248 = vmatprep.subr.mxu0 %v1136
  %1249 = vmatpush1.msra.mxu0 %v1135
  %1250 = vmatprep.subr.mxu0 %v1140
  %1251 = vmatpush1.msra.mxu0 %v1139
  %1252 = vmatprep.subr.mxu0 %v1144
  %1253 = vmatpush1.msra.mxu0 %v1143
  %1254 = vmatprep.subr.mxu0 %v1148
  %1255 = vmatpush1.msra.mxu0 %v1147
  %1256 = vmatprep.subr.mxu0 %v1152
  %1257 = vmatpush1.msra.mxu0 %v1151
  %1258 = vmatprep.subr.mxu0 %v1156
  %1259 = vmatpush1.msra.mxu0 %v1155
  %1260 = vmatprep.subr.mxu0 %v1160
  %1261 = vmatpush1.msra.mxu0 %v1159
  %1262 = vmatprep.subr.mxu0 %v1164
  %1263 = vmatpush1.msra.mxu0 %v1163
  %1264 = vmatprep.subr.mxu0 %v1168
  %1265 = vmatpush1.msra.mxu0 %v1167
  %1266 = vmatprep.subr.mxu0 %v1172
  %1267 = vmatpush1.msra.mxu0 %v1171
  %1268 = vmatprep.subr.mxu0 %v1176
  %1269 = vmatpush1.msra.mxu0 %v1175
  %1270 = vmatprep.subr.mxu0 %v1180
  %1271 = vmatpush1.msra.mxu0 %v1179
  %1272 = vmatprep.subr.mxu0 %v1184
  %1273 = vmatpush1.msra.mxu0 %v1183
  %1274 = vmatprep.subr.mxu0 %v1188
  %1275 = vmatpush1.msra.mxu0 %v1187
  %1276 = vmatprep.subr.mxu0 %v1192
  %1277 = vmatpush1.msra.mxu0 %v1191
  %1278 = vmatprep.subr.mxu0 %v1196
  %1279 = vmatpush1.msra.mxu0 %v1195
  %1280 = vmatprep.subr.mxu0 %v1200
  %1281 = vmatpush1.msra.mxu0 %v1199
  %1282 = vmatprep.subr.mxu0 %v1204
  %1283 = vmatpush1.msra.mxu0 %v1203
  %1284 = vmatprep.subr.mxu0 %v1208
  %1285 = vmatpush1.msra.mxu0 %v1207
  %1286 = vmatprep.subr.mxu0 %v1212
  %1287 = vmatpush1.msra.mxu0 %v1211
  %1288 = vmatprep.subr.mxu0 %v1216
  %1289 = vmatpush1.msra.mxu0 %v1215
  %1290 = vmatprep.subr.mxu0 %v1220
  %1291 = vmatpush1.msra.mxu0 %v1219
  %1292 = vmatprep.mubr.f32.mxu0 0.0
  %1293 = vmatmul.mubr.f32.gmra.mrb[0].mxu0 %v770
  %v1294 = vpop.f32.mrb[0].mxu0
  %v1295 = vadd.f32 %v1224, %v1294
  %v1296 = vpop.f32.mrb[0].mxu0
  %v1297 = vadd.f32 %v1225, %v1296
  %1298 = vdwg.mxu0
  %1299 = vmatprep.subr.mxu0 %v1098
  %1300 = vmatpush1.msra.mxu0 %v1097
  %1301 = vmatprep.subr.mxu0 %v1102
  %1302 = vmatpush1.msra.mxu0 %v1101
  %1303 = vmatprep.subr.mxu0 %v1106
  %1304 = vmatpush1.msra.mxu0 %v1105
  %1305 = vmatprep.subr.mxu0 %v1110
  %1306 = vmatpush1.msra.mxu0 %v1109
  %1307 = vmatprep.subr.mxu0 %v1114
  %1308 = vmatpush1.msra.mxu0 %v1113
  %1309 = vmatprep.subr.mxu0 %v1118
  %1310 = vmatpush1.msra.mxu0 %v1117
  %1311 = vmatprep.subr.mxu0 %v1122
  %1312 = vmatpush1.msra.mxu0 %v1121
  %1313 = vmatprep.subr.mxu0 %v1126
  %1314 = vmatpush1.msra.mxu0 %v1125
  %1315 = vmatprep.subr.mxu0 %v1130
  %1316 = vmatpush1.msra.mxu0 %v1129
  %1317 = vmatprep.subr.mxu0 %v1134
  %1318 = vmatpush1.msra.mxu0 %v1133
  %1319 = vmatprep.subr.mxu0 %v1138
  %1320 = vmatpush1.msra.mxu0 %v1137
  %1321 = vmatprep.subr.mxu0 %v1142
  %1322 = vmatpush1.msra.mxu0 %v1141
  %1323 = vmatprep.subr.mxu0 %v1146
  %1324 = vmatpush1.msra.mxu0 %v1145
  %1325 = vmatprep.subr.mxu0 %v1150
  %1326 = vmatpush1.msra.mxu0 %v1149
  %1327 = vmatprep.subr.mxu0 %v1154
  %1328 = vmatpush1.msra.mxu0 %v1153
  %1329 = vmatprep.subr.mxu0 %v1158
  %1330 = vmatpush1.msra.mxu0 %v1157
  %1331 = vmatprep.subr.mxu0 %v1162
  %1332 = vmatpush1.msra.mxu0 %v1161
  %1333 = vmatprep.subr.mxu0 %v1166
  %1334 = vmatpush1.msra.mxu0 %v1165
  %1335 = vmatprep.subr.mxu0 %v1170
  %1336 = vmatpush1.msra.mxu0 %v1169
  %1337 = vmatprep.subr.mxu0 %v1174
  %1338 = vmatpush1.msra.mxu0 %v1173
  %1339 = vmatprep.subr.mxu0 %v1178
  %1340 = vmatpush1.msra.mxu0 %v1177
  %1341 = vmatprep.subr.mxu0 %v1182
  %1342 = vmatpush1.msra.mxu0 %v1181
  %1343 = vmatprep.subr.mxu0 %v1186
  %1344 = vmatpush1.msra.mxu0 %v1185
  %1345 = vmatprep.subr.mxu0 %v1190
  %1346 = vmatpush1.msra.mxu0 %v1189
  %1347 = vmatprep.subr.mxu0 %v1194
  %1348 = vmatpush1.msra.mxu0 %v1193
  %1349 = vmatprep.subr.mxu0 %v1198
  %1350 = vmatpush1.msra.mxu0 %v1197
  %1351 = vmatprep.subr.mxu0 %v1202
  %1352 = vmatpush1.msra.mxu0 %v1201
  %1353 = vmatprep.subr.mxu0 %v1206
  %1354 = vmatpush1.msra.mxu0 %v1205
  %1355 = vmatprep.subr.mxu0 %v1210
  %1356 = vmatpush1.msra.mxu0 %v1209
  %1357 = vmatprep.subr.mxu0 %v1214
  %1358 = vmatpush1.msra.mxu0 %v1213
  %1359 = vmatprep.subr.mxu0 %v1218
  %1360 = vmatpush1.msra.mxu0 %v1217
  %1361 = vmatprep.subr.mxu0 %v1222
  %1362 = vmatpush1.msra.mxu0 %v1221
  %1363 = vmatprep.mubr.f32.mxu0 0.0
  %1364 = vmatmul.mubr.f32.gmra.mrb[0].mxu0 %v770
  %v1365 = vpop.f32.mrb[0].mxu0
  %v1366 = vadd.f32 %v1226, %v1365
  %v1367 = vpop.f32.mrb[0].mxu0
  %v1368 = vadd.f32 %v1227, %v1367
  %1369 = vdwg.mxu0
  %v1370 = vxor.u32 %v1295, 2147483648
  %v1371 = vmul.f32 %v1370, 1.442695
  %v1372 = vpow.pop %v1371
  %v1373 = vadd.f32 %v1372, 1.0
  %v1374 = vrcp.pop %v1373
  %v1375 = vmul.f32 1.0, %v1374
  %v1376 = vxor.u32 %v1297, 2147483648
  %v1377 = vmul.f32 %v1376, 1.442695
  %v1378 = vpow.pop %v1377
  %v1379 = vadd.f32 %v1378, 1.0
  %v1380 = vrcp.pop %v1379
  %v1381 = vmul.f32 1.0, %v1380
  %v1382 = vmul.f32 %v1375, %v1368
  %v1383 = vadd.f32 %v1366, %v1382
  %v1384 = vtanh.pop %v1383
  %v1385 = vsub.f32 1.0, %v1381
  %v1386 = vmul.f32 %v1385, %v1384
  %v1387 = vmul.f32 %v1381, 0.0
  %v1388 = vadd.f32 %v1386, %v1387
  %v1389 = vld [vmem:[%s0 + $0x18] sm:$0xff]
  %1390 = vmatprep.subr.mxu0 %v22
  %1391 = vmatpush1.msra.mxu0 %v21
  %1392 = vmatprep.subr.mxu0 %v26
  %1393 = vmatpush1.msra.mxu0 %v25
  %1394 = vmatprep.subr.mxu0 %v30
  %1395 = vmatpush1.msra.mxu0 %v29
  %1396 = vmatprep.subr.mxu0 %v34
  %1397 = vmatpush1.msra.mxu0 %v33
  %1398 = vmatprep.subr.mxu0 %v38
  %1399 = vmatpush1.msra.mxu0 %v37
  %1400 = vmatprep.subr.mxu0 %v42
  %1401 = vmatpush1.msra.mxu0 %v41
  %1402 = vmatprep.subr.mxu0 %v46
  %1403 = vmatpush1.msra.mxu0 %v45
  %1404 = vmatprep.subr.mxu0 %v50
  %1405 = vmatpush1.msra.mxu0 %v49
  %1406 = vmatprep.subr.mxu0 %v54
  %1407 = vmatpush1.msra.mxu0 %v53
  %1408 = vmatprep.subr.mxu0 %v58
  %1409 = vmatpush1.msra.mxu0 %v57
  %1410 = vmatprep.subr.mxu0 %v62
  %1411 = vmatpush1.msra.mxu0 %v61
  %1412 = vmatprep.subr.mxu0 %v66
  %1413 = vmatpush1.msra.mxu0 %v65
  %1414 = vmatprep.subr.mxu0 %v70
  %1415 = vmatpush1.msra.mxu0 %v69
  %1416 = vmatprep.subr.mxu0 %v74
  %1417 = vmatpush1.msra.mxu0 %v73
  %1418 = vmatprep.subr.mxu0 %v78
  %1419 = vmatpush1.msra.mxu0 %v77
  %1420 = vmatprep.subr.mxu0 %v82
  %1421 = vmatpush1.msra.mxu0 %v81
  %1422 = vmatprep.subr.mxu0 %v86
  %1423 = vmatpush1.msra.mxu0 %v85
  %1424 = vmatprep.subr.mxu0 %v90
  %1425 = vmatpush1.msra.mxu0 %v89
  %1426 = vmatprep.subr.mxu0 %v94
  %1427 = vmatpush1.msra.mxu0 %v93
  %1428 = vmatprep.subr.mxu0 %v98
  %1429 = vmatpush1.msra.mxu0 %v97
  %1430 = vmatprep.subr.mxu0 %v102
  %1431 = vmatpush1.msra.mxu0 %v101
  %1432 = vmatprep.subr.mxu0 %v106
  %1433 = vmatpush1.msra.mxu0 %v105
  %1434 = vmatprep.subr.mxu0 %v110
  %1435 = vmatpush1.msra.mxu0 %v109
  %1436 = vmatprep.subr.mxu0 %v114
  %1437 = vmatpush1.msra.mxu0 %v113
  %1438 = vmatprep.subr.mxu0 %v118
  %1439 = vmatpush1.msra.mxu0 %v117
  %1440 = vmatprep.subr.mxu0 %v122
  %1441 = vmatpush1.msra.mxu0 %v121
  %1442 = vmatprep.subr.mxu0 %v126
  %1443 = vmatpush1.msra.mxu0 %v125
  %1444 = vmatprep.subr.mxu0 %v130
  %1445 = vmatpush1.msra.mxu0 %v129
  %1446 = vmatprep.subr.mxu0 %v134
  %1447 = vmatpush1.msra.mxu0 %v133
  %1448 = vmatprep.subr.mxu0 %v138
  %1449 = vmatpush1.msra.mxu0 %v137
  %1450 = vmatprep.subr.mxu0 %v142
  %1451 = vmatpush1.msra.mxu0 %v141
  %1452 = vmatprep.subr.mxu0 %v146
  %1453 = vmatpush1.msra.mxu0 %v145
  %1454 = vmatprep.mubr.f32.mxu0 %v932
  %1455 = vmatmul.mubr.f32.gmra.mrb[0].mxu0 %v1389
  %v1456 = vpop.f32.mrb[0].mxu0
  %v1457 = vadd.f32 %v149, %v1456
  %v1458 = vpop.f32.mrb[0].mxu0
  %v1459 = vadd.f32 %v150, %v1458
  %1460 = vdwg.mxu0
  %1461 = vmatprep.subr.mxu0 %v24
  %1462 = vmatpush1.msra.mxu0 %v23
  %1463 = vmatprep.subr.mxu0 %v28
  %1464 = vmatpush1.msra.mxu0 %v27
  %1465 = vmatprep.subr.mxu0 %v32
  %1466 = vmatpush1.msra.mxu0 %v31
  %1467 = vmatprep.subr.mxu0 %v36
  %1468 = vmatpush1.msra.mxu0 %v35
  %1469 = vmatprep.subr.mxu0 %v40
  %1470 = vmatpush1.msra.mxu0 %v39
  %1471 = vmatprep.subr.mxu0 %v44
  %1472 = vmatpush1.msra.mxu0 %v43
  %1473 = vmatprep.subr.mxu0 %v48
  %1474 = vmatpush1.msra.mxu0 %v47
  %1475 = vmatprep.subr.mxu0 %v52
  %1476 = vmatpush1.msra.mxu0 %v51
  %1477 = vmatprep.subr.mxu0 %v56
  %1478 = vmatpush1.msra.mxu0 %v55
  %1479 = vmatprep.subr.mxu0 %v60
  %1480 = vmatpush1.msra.mxu0 %v59
  %1481 = vmatprep.subr.mxu0 %v64
  %1482 = vmatpush1.msra.mxu0 %v63
  %1483 = vmatprep.subr.mxu0 %v68
  %1484 = vmatpush1.msra.mxu0 %v67
  %1485 = vmatprep.subr.mxu0 %v72
  %1486 = vmatpush1.msra.mxu0 %v71
  %1487 = vmatprep.subr.mxu0 %v76
  %1488 = vmatpush1.msra.mxu0 %v75
  %1489 = vmatprep.subr.mxu0 %v80
  %1490 = vmatpush1.msra.mxu0 %v79
  %1491 = vmatprep.subr.mxu0 %v84
  %1492 = vmatpush1.msra.mxu0 %v83
  %1493 = vmatprep.subr.mxu0 %v88
  %1494 = vmatpush1.msra.mxu0 %v87
  %1495 = vmatprep.subr.mxu0 %v92
  %1496 = vmatpush1.msra.mxu0 %v91
  %1497 = vmatprep.subr.mxu0 %v96
  %1498 = vmatpush1.msra.mxu0 %v95
  %1499 = vmatprep.subr.mxu0 %v100
  %1500 = vmatpush1.msra.mxu0 %v99
  %1501 = vmatprep.subr.mxu0 %v104
  %1502 = vmatpush1.msra.mxu0 %v103
  %1503 = vmatprep.subr.mxu0 %v108
  %1504 = vmatpush1.msra.mxu0 %v107
  %1505 = vmatprep.subr.mxu0 %v112
  %1506 = vmatpush1.msra.mxu0 %v111
  %1507 = vmatprep.subr.mxu0 %v116
  %1508 = vmatpush1.msra.mxu0 %v115
  %1509 = vmatprep.subr.mxu0 %v120
  %1510 = vmatpush1.msra.mxu0 %v119
  %1511 = vmatprep.subr.mxu0 %v124
  %1512 = vmatpush1.msra.mxu0 %v123
  %1513 = vmatprep.subr.mxu0 %v128
  %1514 = vmatpush1.msra.mxu0 %v127
  %1515 = vmatprep.subr.mxu0 %v132
  %1516 = vmatpush1.msra.mxu0 %v131
  %1517 = vmatprep.subr.mxu0 %v136
  %1518 = vmatpush1.msra.mxu0 %v135
  %1519 = vmatprep.subr.mxu0 %v140
  %1520 = vmatpush1.msra.mxu0 %v139
  %1521 = vmatprep.subr.mxu0 %v144
  %1522 = vmatpush1.msra.mxu0 %v143
  %1523 = vmatprep.subr.mxu0 %v148
  %1524 = vmatpush1.msra.mxu0 %v147
  %1525 = vmatprep.mubr.f32.mxu0 %v932
  %1526 = vmatmul.mubr.f32.gmra.mrb[0].mxu0 %v1389
  %v1527 = vpop.f32.mrb[0].mxu0
  %v1528 = vadd.f32 %v151, %v1527
  %v1529 = vpop.f32.mrb[0].mxu0
  %v1530 = vadd.f32 %v152, %v1529
  %1531 = vdwg.mxu0
  %v1532 = vxor.u32 %v1457, 2147483648
  %v1533 = vmul.f32 %v1532, 1.442695
  %v1534 = vpow.pop %v1533
  %v1535 = vadd.f32 %v1534, 1.0
  %v1536 = vrcp.pop %v1535
  %v1537 = vmul.f32 1.0, %v1536
  %v1538 = vxor.u32 %v1459, 2147483648
  %v1539 = vmul.f32 %v1538, 1.442695
  %v1540 = vpow.pop %v1539
  %v1541 = vadd.f32 %v1540, 1.0
  %v1542 = vrcp.pop %v1541
  %v1543 = vmul.f32 1.0, %v1542
  %v1544 = vmul.f32 %v1537, %v1530
  %v1545 = vadd.f32 %v1528, %v1544
  %v1546 = vtanh.pop %v1545
  %v1547 = vsub.f32 1.0, %v1543
  %v1548 = vmul.f32 %v1547, %v1546
  %v1549 = vmul.f32 %v1543, %v932
  %v1550 = vadd.f32 %v1548, %v1549
  %1551 = vmatprep.subr.mxu0 %v478
  %1552 = vmatpush1.msra.mxu0 %v477
  %1553 = vmatprep.subr.mxu0 %v482
  %1554 = vmatpush1.msra.mxu0 %v481
  %1555 = vmatprep.subr.mxu0 %v486
  %1556 = vmatpush1.msra.mxu0 %v485
  %1557 = vmatprep.subr.mxu0 %v490
  %1558 = vmatpush1.msra.mxu0 %v489
  %1559 = vmatprep.subr.mxu0 %v494
  %1560 = vmatpush1.msra.mxu0 %v493
  %1561 = vmatprep.subr.mxu0 %v498
  %1562 = vmatpush1.msra.mxu0 %v497
  %1563 = vmatprep.subr.mxu0 %v502
  %1564 = vmatpush1.msra.mxu0 %v501
  %1565 = vmatprep.subr.mxu0 %v506
  %1566 = vmatpush1.msra.mxu0 %v505
  %1567 = vmatprep.subr.mxu0 %v510
  %1568 = vmatpush1.msra.mxu0 %v509
  %1569 = vmatprep.subr.mxu0 %v514
  %1570 = vmatpush1.msra.mxu0 %v513
  %1571 = vmatprep.subr.mxu0 %v518
  %1572 = vmatpush1.msra.mxu0 %v517
  %1573 = vmatprep.subr.mxu0 %v522
  %1574 = vmatpush1.msra.mxu0 %v521
  %1575 = vmatprep.subr.mxu0 %v526
  %1576 = vmatpush1.msra.mxu0 %v525
  %1577 = vmatprep.subr.mxu0 %v530
  %1578 = vmatpush1.msra.mxu0 %v529
  %1579 = vmatprep.subr.mxu0 %v534
  %1580 = vmatpush1.msra.mxu0 %v533
  %1581 = vmatprep.subr.mxu0 %v538
  %1582 = vmatpush1.msra.mxu0 %v537
  %1583 = vmatprep.subr.mxu0 %v542
  %1584 = vmatpush1.msra.mxu0 %v541
  %1585 = vmatprep.subr.mxu0 %v546
  %1586 = vmatpush1.msra.mxu0 %v545
  %1587 = vmatprep.subr.mxu0 %v550
  %1588 = vmatpush1.msra.mxu0 %v549
  %1589 = vmatprep.subr.mxu0 %v554
  %1590 = vmatpush1.msra.mxu0 %v553
  %1591 = vmatprep.subr.mxu0 %v558
  %1592 = vmatpush1.msra.mxu0 %v557
  %1593 = vmatprep.subr.mxu0 %v562
  %1594 = vmatpush1.msra.mxu0 %v561
  %1595 = vmatprep.subr.mxu0 %v566
  %1596 = vmatpush1.msra.mxu0 %v565
  %1597 = vmatprep.subr.mxu0 %v570
  %1598 = vmatpush1.msra.mxu0 %v569
  %1599 = vmatprep.subr.mxu0 %v574
  %1600 = vmatpush1.msra.mxu0 %v573
  %1601 = vmatprep.subr.mxu0 %v578
  %1602 = vmatpush1.msra.mxu0 %v577
  %1603 = vmatprep.subr.mxu0 %v582
  %1604 = vmatpush1.msra.mxu0 %v581
  %1605 = vmatprep.subr.mxu0 %v586
  %1606 = vmatpush1.msra.mxu0 %v585
  %1607 = vmatprep.subr.mxu0 %v590
  %1608 = vmatpush1.msra.mxu0 %v589
  %1609 = vmatprep.subr.mxu0 %v594
  %1610 = vmatpush1.msra.mxu0 %v593
  %1611 = vmatprep.subr.mxu0 %v598
  %1612 = vmatpush1.msra.mxu0 %v597
  %1613 = vmatprep.subr.mxu0 %v602
  %1614 = vmatpush1.msra.mxu0 %v601
  %1615 = vmatprep.mubr.f32.mxu0 %v1093
  %1616 = vmatmul.mubr.f32.gmra.mrb[0].mxu0 %v932
  %v1617 = vpop.f32.mrb[0].mxu0
  %v1618 = vadd.f32 %v606, %v1617
  %v1619 = vpop.f32.mrb[0].mxu0
  %v1620 = vadd.f32 %v607, %v1619
  %1621 = vdwg.mxu0
  %1622 = vmatprep.subr.mxu0 %v480
  %1623 = vmatpush1.msra.mxu0 %v479
  %1624 = vmatprep.subr.mxu0 %v484
  %1625 = vmatpush1.msra.mxu0 %v483
  %1626 = vmatprep.subr.mxu0 %v488
  %1627 = vmatpush1.msra.mxu0 %v487
  %1628 = vmatprep.subr.mxu0 %v492
  %1629 = vmatpush1.msra.mxu0 %v491
  %1630 = vmatprep.subr.mxu0 %v496
  %1631 = vmatpush1.msra.mxu0 %v495
  %1632 = vmatprep.subr.mxu0 %v500
  %1633 = vmatpush1.msra.mxu0 %v499
  %1634 = vmatprep.subr.mxu0 %v504
  %1635 = vmatpush1.msra.mxu0 %v503
  %1636 = vmatprep.subr.mxu0 %v508
  %1637 = vmatpush1.msra.mxu0 %v507
  %1638 = vmatprep.subr.mxu0 %v512
  %1639 = vmatpush1.msra.mxu0 %v511
  %1640 = vmatprep.subr.mxu0 %v516
  %1641 = vmatpush1.msra.mxu0 %v515
  %1642 = vmatprep.subr.mxu0 %v520
  %1643 = vmatpush1.msra.mxu0 %v519
  %1644 = vmatprep.subr.mxu0 %v524
  %1645 = vmatpush1.msra.mxu0 %v523
  %1646 = vmatprep.subr.mxu0 %v528
  %1647 = vmatpush1.msra.mxu0 %v527
  %1648 = vmatprep.subr.mxu0 %v532
  %1649 = vmatpush1.msra.mxu0 %v531
  %1650 = vmatprep.subr.mxu0 %v536
  %1651 = vmatpush1.msra.mxu0 %v535
  %1652 = vmatprep.subr.mxu0 %v540
  %1653 = vmatpush1.msra.mxu0 %v539
  %1654 = vmatprep.subr.mxu0 %v544
  %1655 = vmatpush1.msra.mxu0 %v543
  %1656 = vmatprep.subr.mxu0 %v548
  %1657 = vmatpush1.msra.mxu0 %v547
  %1658 = vmatprep.subr.mxu0 %v552
  %1659 = vmatpush1.msra.mxu0 %v551
  %1660 = vmatprep.subr.mxu0 %v556
  %1661 = vmatpush1.msra.mxu0 %v555
  %1662 = vmatprep.subr.mxu0 %v560
  %1663 = vmatpush1.msra.mxu0 %v559
  %1664 = vmatprep.subr.mxu0 %v564
  %1665 = vmatpush1.msra.mxu0 %v563
  %1666 = vmatprep.subr.mxu0 %v568
  %1667 = vmatpush1.msra.mxu0 %v567
  %1668 = vmatprep.subr.mxu0 %v572
  %1669 = vmatpush1.msra.mxu0 %v571
  %1670 = vmatprep.subr.mxu0 %v576
  %1671 = vmatpush1.msra.mxu0 %v575
  %1672 = vmatprep.subr.mxu0 %v580
  %1673 = vmatpush1.msra.mxu0 %v579
  %1674 = vmatprep.subr.mxu0 %v584
  %1675 = vmatpush1.msra.mxu0 %v583
  %1676 = vmatprep.subr.mxu0 %v588
  %1677 = vmatpush1.msra.mxu0 %v587
  %1678 = vmatprep.subr.mxu0 %v592
  %1679 = vmatpush1.msra.mxu0 %v591
  %1680 = vmatprep.subr.mxu0 %v596
  %1681 = vmatpush1.msra.mxu0 %v595
  %1682 = vmatprep.subr.mxu0 %v600
  %1683 = vmatpush1.msra.mxu0 %v599
  %1684 = vmatprep.subr.mxu0 %v604
  %1685 = vmatpush1.msra.mxu0 %v603
  %1686 = vmatprep.mubr.f32.mxu0 %v1093
  %1687 = vmatmul.mubr.f32.gmra.mrb[0].mxu0 %v932
  %v1688 = vpop.f32.mrb[0].mxu0
  %v1689 = vadd.f32 %v608, %v1688
  %v1690 = vpop.f32.mrb[0].mxu0
  %v1691 = vadd.f32 %v609, %v1690
  %1692 = vdwg.mxu0
  %v1693 = vxor.u32 %v1618, 2147483648
  %v1694 = vmul.f32 %v1693, 1.442695
  %v1695 = vpow.pop %v1694
  %v1696 = vadd.f32 %v1695, 1.0
  %v1697 = vrcp.pop %v1696
  %v1698 = vmul.f32 1.0, %v1697
  %v1699 = vxor.u32 %v1620, 2147483648
  %v1700 = vmul.f32 %v1699, 1.442695
  %v1701 = vpow.pop %v1700
  %v1702 = vadd.f32 %v1701, 1.0
  %v1703 = vrcp.pop %v1702
  %v1704 = vmul.f32 1.0, %v1703
  %v1705 = vmul.f32 %v1698, %v1691
  %v1706 = vadd.f32 %v1689, %v1705
  %v1707 = vtanh.pop %v1706
  %v1708 = vsub.f32 1.0, %v1704
  %v1709 = vmul.f32 %v1708, %v1707
  %v1710 = vmul.f32 %v1704, %v1093
  %v1711 = vadd.f32 %v1709, %v1710
  %1712 = vmatprep.subr.mxu0 %v1096
  %1713 = vmatpush1.msra.mxu0 %v1095
  %1714 = vmatprep.subr.mxu0 %v1100
  %1715 = vmatpush1.msra.mxu0 %v1099
  %1716 = vmatprep.subr.mxu0 %v1104
  %1717 = vmatpush1.msra.mxu0 %v1103
  %1718 = vmatprep.subr.mxu0 %v1108
  %1719 = vmatpush1.msra.mxu0 %v1107
  %1720 = vmatprep.subr.mxu0 %v1112
  %1721 = vmatpush1.msra.mxu0 %v1111
  %1722 = vmatprep.subr.mxu0 %v1116
  %1723 = vmatpush1.msra.mxu0 %v1115
  %1724 = vmatprep.subr.mxu0 %v1120
  %1725 = vmatpush1.msra.mxu0 %v1119
  %1726 = vmatprep.subr.mxu0 %v1124
  %1727 = vmatpush1.msra.mxu0 %v1123
  %1728 = vmatprep.subr.mxu0 %v1128
  %1729 = vmatpush1.msra.mxu0 %v1127
  %1730 = vmatprep.subr.mxu0 %v1132
  %1731 = vmatpush1.msra.mxu0 %v1131
  %1732 = vmatprep.subr.mxu0 %v1136
  %1733 = vmatpush1.msra.mxu0 %v1135
  %1734 = vmatprep.subr.mxu0 %v1140
  %1735 = vmatpush1.msra.mxu0 %v1139
  %1736 = vmatprep.subr.mxu0 %v1144
  %1737 = vmatpush1.msra.mxu0 %v1143
  %1738 = vmatprep.subr.mxu0 %v1148
  %1739 = vmatpush1.msra.mxu0 %v1147
  %1740 = vmatprep.subr.mxu0 %v1152
  %1741 = vmatpush1.msra.mxu0 %v1151
  %1742 = vmatprep.subr.mxu0 %v1156
  %1743 = vmatpush1.msra.mxu0 %v1155
  %1744 = vmatprep.subr.mxu0 %v1160
  %1745 = vmatpush1.msra.mxu0 %v1159
  %1746 = vmatprep.subr.mxu0 %v1164
  %1747 = vmatpush1.msra.mxu0 %v1163
  %1748 = vmatprep.subr.mxu0 %v1168
  %1749 = vmatpush1.msra.mxu0 %v1167
  %1750 = vmatprep.subr.mxu0 %v1172
  %1751 = vmatpush1.msra.mxu0 %v1171
  %1752 = vmatprep.subr.mxu0 %v1176
  %1753 = vmatpush1.msra.mxu0 %v1175
  %1754 = vmatprep.subr.mxu0 %v1180
  %1755 = vmatpush1.msra.mxu0 %v1179
  %1756 = vmatprep.subr.mxu0 %v1184
  %1757 = vmatpush1.msra.mxu0 %v1183
  %1758 = vmatprep.subr.mxu0 %v1188
  %1759 = vmatpush1.msra.mxu0 %v1187
  %1760 = vmatprep.subr.mxu0 %v1192
  %1761 = vmatpush1.msra.mxu0 %v1191
  %1762 = vmatprep.subr.mxu0 %v1196
  %1763 = vmatpush1.msra.mxu0 %v1195
  %1764 = vmatprep.subr.mxu0 %v1200
  %1765 = vmatpush1.msra.mxu0 %v1199
  %1766 = vmatprep.subr.mxu0 %v1204
  %1767 = vmatpush1.msra.mxu0 %v1203
  %1768 = vmatprep.subr.mxu0 %v1208
  %1769 = vmatpush1.msra.mxu0 %v1207
  %1770 = vmatprep.subr.mxu0 %v1212
  %1771 = vmatpush1.msra.mxu0 %v1211
  %1772 = vmatprep.subr.mxu0 %v1216
  %1773 = vmatpush1.msra.mxu0 %v1215
  %1774 = vmatprep.subr.mxu0 %v1220
  %1775 = vmatpush1.msra.mxu0 %v1219
  %1776 = vmatprep.mubr.f32.mxu0 %v1388
  %1777 = vmatmul.mubr.f32.gmra.mrb[0].mxu0 %v1093
  %v1778 = vpop.f32.mrb[0].mxu0
  %v1779 = vadd.f32 %v1224, %v1778
  %v1780 = vpop.f32.mrb[0].mxu0
  %v1781 = vadd.f32 %v1225, %v1780
  %1782 = vdwg.mxu0
  %1783 = vmatprep.subr.mxu0 %v1098
  %1784 = vmatpush1.msra.mxu0 %v1097
  %1785 = vmatprep.subr.mxu0 %v1102
  %1786 = vmatpush1.msra.mxu0 %v1101
  %1787 = vmatprep.subr.mxu0 %v1106
  %1788 = vmatpush1.msra.mxu0 %v1105
  %1789 = vmatprep.subr.mxu0 %v1110
  %1790 = vmatpush1.msra.mxu0 %v1109
  %1791 = vmatprep.subr.mxu0 %v1114
  %1792 = vmatpush1.msra.mxu0 %v1113
  %1793 = vmatprep.subr.mxu0 %v1118
  %1794 = vmatpush1.msra.mxu0 %v1117
  %1795 = vmatprep.subr.mxu0 %v1122
  %1796 = vmatpush1.msra.mxu0 %v1121
  %1797 = vmatprep.subr.mxu0 %v1126
  %1798 = vmatpush1.msra.mxu0 %v1125
  %1799 = vmatprep.subr.mxu0 %v1130
  %1800 = vmatpush1.msra.mxu0 %v1129
  %1801 = vmatprep.subr.mxu0 %v1134
  %1802 = vmatpush1.msra.mxu0 %v1133
  %1803 = vmatprep.subr.mxu0 %v1138
  %1804 = vmatpush1.msra.mxu0 %v1137
  %1805 = vmatprep.subr.mxu0 %v1142
  %1806 = vmatpush1.msra.mxu0 %v1141
  %1807 = vmatprep.subr.mxu0 %v1146
  %1808 = vmatpush1.msra.mxu0 %v1145
  %1809 = vmatprep.subr.mxu0 %v1150
  %1810 = vmatpush1.msra.mxu0 %v1149
  %1811 = vmatprep.subr.mxu0 %v1154
  %1812 = vmatpush1.msra.mxu0 %v1153
  %1813 = vmatprep.subr.mxu0 %v1158
  %1814 = vmatpush1.msra.mxu0 %v1157
  %1815 = vmatprep.subr.mxu0 %v1162
  %1816 = vmatpush1.msra.mxu0 %v1161
  %1817 = vmatprep.subr.mxu0 %v1166
  %1818 = vmatpush1.msra.mxu0 %v1165
  %1819 = vmatprep.subr.mxu0 %v1170
  %1820 = vmatpush1.msra.mxu0 %v1169
  %1821 = vmatprep.subr.mxu0 %v1174
  %1822 = vmatpush1.msra.mxu0 %v1173
  %1823 = vmatprep.subr.mxu0 %v1178
  %1824 = vmatpush1.msra.mxu0 %v1177
  %1825 = vmatprep.subr.mxu0 %v1182
  %1826 = vmatpush1.msra.mxu0 %v1181
  %1827 = vmatprep.subr.mxu0 %v1186
  %1828 = vmatpush1.msra.mxu0 %v1185
  %1829 = vmatprep.subr.mxu0 %v1190
  %1830 = vmatpush1.msra.mxu0 %v1189
  %1831 = vmatprep.subr.mxu0 %v1194
  %1832 = vmatpush1.msra.mxu0 %v1193
  %1833 = vmatprep.subr.mxu0 %v1198
  %1834 = vmatpush1.msra.mxu0 %v1197
  %1835 = vmatprep.subr.mxu0 %v1202
  %1836 = vmatpush1.msra.mxu0 %v1201
  %1837 = vmatprep.subr.mxu0 %v1206
  %1838 = vmatpush1.msra.mxu0 %v1205
  %1839 = vmatprep.subr.mxu0 %v1210
  %1840 = vmatpush1.msra.mxu0 %v1209
  %1841 = vmatprep.subr.mxu0 %v1214
  %1842 = vmatpush1.msra.mxu0 %v1213
  %1843 = vmatprep.subr.mxu0 %v1218
  %1844 = vmatpush1.msra.mxu0 %v1217
  %1845 = vmatprep.subr.mxu0 %v1222
  %1846 = vmatpush1.msra.mxu0 %v1221
  %1847 = vmatprep.mubr.f32.mxu0 %v1388
  %1848 = vmatmul.mubr.f32.gmra.mrb[0].mxu0 %v1093
  %v1849 = vpop.f32.mrb[0].mxu0
  %v1850 = vadd.f32 %v1226, %v1849
  %v1851 = vpop.f32.mrb[0].mxu0
  %v1852 = vadd.f32 %v1227, %v1851
  %1853 = vdwg.mxu0
  %v1854 = vxor.u32 %v1779, 2147483648
  %v1855 = vmul.f32 %v1854, 1.442695
  %v1856 = vpow.pop %v1855
  %v1857 = vadd.f32 %v1856, 1.0
  %v1858 = vrcp.pop %v1857
  %v1859 = vmul.f32 1.0, %v1858
  %v1860 = vxor.u32 %v1781, 2147483648
  %v1861 = vmul.f32 %v1860, 1.442695
  %v1862 = vpow.pop %v1861
  %v1863 = vadd.f32 %v1862, 1.0
  %v1864 = vrcp.pop %v1863
  %v1865 = vmul.f32 1.0, %v1864
  %v1866 = vmul.f32 %v1859, %v1852
  %v1867 = vadd.f32 %v1850, %v1866
  %v1868 = vtanh.pop %v1867
  %v1869 = vsub.f32 1.0, %v1865
  %v1870 = vmul.f32 %v1869, %v1868
  %v1871 = vmul.f32 %v1865, %v1388
  %v1872 = vadd.f32 %v1870, %v1871
  %s1873 = scalar_lea.vmem %s1, 3072
  %v1874 = vld [vmem:[%s1873] sm:$0xff]
  %v1875 = vld [vmem:[%s1873 + $0x8] sm:$0xff]
  %v1876 = vld [vmem:[%s1873 + $0x10] sm:$0xff]
  %v1877 = vld [vmem:[%s1873 + $0x18] sm:$0xff]
  %v1878 = vld [vmem:[%s1873 + $0x20] sm:$0xff]
  %v1879 = vld [vmem:[%s1873 + $0x28] sm:$0xff]
  %v1880 = vld [vmem:[%s1873 + $0x30] sm:$0xff]
  %v1881 = vld [vmem:[%s1873 + $0x38] sm:$0xff]
  %v1882 = vld [vmem:[%s1873 + $0x40] sm:$0xff]
  %v1883 = vld [vmem:[%s1873 + $0x48] sm:$0xff]
  %v1884 = vld [vmem:[%s1873 + $0x50] sm:$0xff]
  %v1885 = vld [vmem:[%s1873 + $0x58] sm:$0xff]
  %v1886 = vld [vmem:[%s1873 + $0x60] sm:$0xff]
  %v1887 = vld [vmem:[%s1873 + $0x68] sm:$0xff]
  %v1888 = vld [vmem:[%s1873 + $0x70] sm:$0xff]
  %v1889 = vld [vmem:[%s1873 + $0x78] sm:$0xff]
  %v1890 = vld [vmem:[%s1873 + $0x80] sm:$0xff]
  %v1891 = vld [vmem:[%s1873 + $0x88] sm:$0xff]
  %v1892 = vld [vmem:[%s1873 + $0x90] sm:$0xff]
  %v1893 = vld [vmem:[%s1873 + $0x98] sm:$0xff]
  %v1894 = vld [vmem:[%s1873 + $0xa0] sm:$0xff]
  %v1895 = vld [vmem:[%s1873 + $0xa8] sm:$0xff]
  %v1896 = vld [vmem:[%s1873 + $0xb0] sm:$0xff]
  %v1897 = vld [vmem:[%s1873 + $0xb8] sm:$0xff]
  %v1898 = vld [vmem:[%s1873 + $0xc0] sm:$0xff]
  %v1899 = vld [vmem:[%s1873 + $0xc8] sm:$0xff]
  %v1900 = vld [vmem:[%s1873 + $0xd0] sm:$0xff]
  %v1901 = vld [vmem:[%s1873 + $0xd8] sm:$0xff]
  %v1902 = vld [vmem:[%s1873 + $0xe0] sm:$0xff]
  %v1903 = vld [vmem:[%s1873 + $0xe8] sm:$0xff]
  %v1904 = vld [vmem:[%s1873 + $0xf0] sm:$0xff]
  %v1905 = vld [vmem:[%s1873 + $0xf8] sm:$0xff]
  %v1906 = vld [vmem:[%s1873 + $0x100] sm:$0xff]
  %v1907 = vld [vmem:[%s1873 + $0x108] sm:$0xff]
  %v1908 = vld [vmem:[%s1873 + $0x110] sm:$0xff]
  %v1909 = vld [vmem:[%s1873 + $0x118] sm:$0xff]
  %v1910 = vld [vmem:[%s1873 + $0x120] sm:$0xff]
  %v1911 = vld [vmem:[%s1873 + $0x128] sm:$0xff]
  %v1912 = vld [vmem:[%s1873 + $0x130] sm:$0xff]
  %v1913 = vld [vmem:[%s1873 + $0x138] sm:$0xff]
  %v1914 = vld [vmem:[%s1873 + $0x140] sm:$0xff]
  %v1915 = vld [vmem:[%s1873 + $0x148] sm:$0xff]
  %v1916 = vld [vmem:[%s1873 + $0x150] sm:$0xff]
  %v1917 = vld [vmem:[%s1873 + $0x158] sm:$0xff]
  %v1918 = vld [vmem:[%s1873 + $0x160] sm:$0xff]
  %v1919 = vld [vmem:[%s1873 + $0x168] sm:$0xff]
  %v1920 = vld [vmem:[%s1873 + $0x170] sm:$0xff]
  %v1921 = vld [vmem:[%s1873 + $0x178] sm:$0xff]
  %v1922 = vld [vmem:[%s1873 + $0x180] sm:$0xff]
  %v1923 = vld [vmem:[%s1873 + $0x188] sm:$0xff]
  %v1924 = vld [vmem:[%s1873 + $0x190] sm:$0xff]
  %v1925 = vld [vmem:[%s1873 + $0x198] sm:$0xff]
  %v1926 = vld [vmem:[%s1873 + $0x1a0] sm:$0xff]
  %v1927 = vld [vmem:[%s1873 + $0x1a8] sm:$0xff]
  %v1928 = vld [vmem:[%s1873 + $0x1b0] sm:$0xff]
  %v1929 = vld [vmem:[%s1873 + $0x1b8] sm:$0xff]
  %v1930 = vld [vmem:[%s1873 + $0x1c0] sm:$0xff]
  %v1931 = vld [vmem:[%s1873 + $0x1c8] sm:$0xff]
  %v1932 = vld [vmem:[%s1873 + $0x1d0] sm:$0xff]
  %v1933 = vld [vmem:[%s1873 + $0x1d8] sm:$0xff]
  %v1934 = vld [vmem:[%s1873 + $0x1e0] sm:$0xff]
  %v1935 = vld [vmem:[%s1873 + $0x1e8] sm:$0xff]
  %v1936 = vld [vmem:[%s1873 + $0x1f0] sm:$0xff]
  %v1937 = vld [vmem:[%s1873 + $0x1f8] sm:$0xff]
  %v1938 = vld [vmem:[%s1873 + $0x200] sm:$0xff]
  %v1939 = vld [vmem:[%s1873 + $0x208] sm:$0xff]
  %v1940 = vld [vmem:[%s1873 + $0x210] sm:$0xff]
  %v1941 = vld [vmem:[%s1873 + $0x218] sm:$0xff]
  %v1942 = vld [vmem:[%s1873 + $0x220] sm:$0xff]
  %v1943 = vld [vmem:[%s1873 + $0x228] sm:$0xff]
  %v1944 = vld [vmem:[%s1873 + $0x230] sm:$0xff]
  %v1945 = vld [vmem:[%s1873 + $0x238] sm:$0xff]
  %v1946 = vld [vmem:[%s1873 + $0x240] sm:$0xff]
  %v1947 = vld [vmem:[%s1873 + $0x248] sm:$0xff]
  %v1948 = vld [vmem:[%s1873 + $0x250] sm:$0xff]
  %v1949 = vld [vmem:[%s1873 + $0x258] sm:$0xff]
  %v1950 = vld [vmem:[%s1873 + $0x260] sm:$0xff]
  %v1951 = vld [vmem:[%s1873 + $0x268] sm:$0xff]
  %v1952 = vld [vmem:[%s1873 + $0x270] sm:$0xff]
  %v1953 = vld [vmem:[%s1873 + $0x278] sm:$0xff]
  %v1954 = vld [vmem:[%s1873 + $0x280] sm:$0xff]
  %v1955 = vld [vmem:[%s1873 + $0x288] sm:$0xff]
  %v1956 = vld [vmem:[%s1873 + $0x290] sm:$0xff]
  %v1957 = vld [vmem:[%s1873 + $0x298] sm:$0xff]
  %v1958 = vld [vmem:[%s1873 + $0x2a0] sm:$0xff]
  %v1959 = vld [vmem:[%s1873 + $0x2a8] sm:$0xff]
  %v1960 = vld [vmem:[%s1873 + $0x2b0] sm:$0xff]
  %v1961 = vld [vmem:[%s1873 + $0x2b8] sm:$0xff]
  %v1962 = vld [vmem:[%s1873 + $0x2c0] sm:$0xff]
  %v1963 = vld [vmem:[%s1873 + $0x2c8] sm:$0xff]
  %v1964 = vld [vmem:[%s1873 + $0x2d0] sm:$0xff]
  %v1965 = vld [vmem:[%s1873 + $0x2d8] sm:$0xff]
  %v1966 = vld [vmem:[%s1873 + $0x2e0] sm:$0xff]
  %v1967 = vld [vmem:[%s1873 + $0x2e8] sm:$0xff]
  %v1968 = vld [vmem:[%s1873 + $0x2f0] sm:$0xff]
  %v1969 = vld [vmem:[%s1873 + $0x2f8] sm:$0xff]
  %v1970 = vld [vmem:[%s1873 + $0x300] sm:$0xff]
  %v1971 = vld [vmem:[%s1873 + $0x308] sm:$0xff]
  %v1972 = vld [vmem:[%s1873 + $0x310] sm:$0xff]
  %v1973 = vld [vmem:[%s1873 + $0x318] sm:$0xff]
  %v1974 = vld [vmem:[%s1873 + $0x320] sm:$0xff]
  %v1975 = vld [vmem:[%s1873 + $0x328] sm:$0xff]
  %v1976 = vld [vmem:[%s1873 + $0x330] sm:$0xff]
  %v1977 = vld [vmem:[%s1873 + $0x338] sm:$0xff]
  %v1978 = vld [vmem:[%s1873 + $0x340] sm:$0xff]
  %v1979 = vld [vmem:[%s1873 + $0x348] sm:$0xff]
  %v1980 = vld [vmem:[%s1873 + $0x350] sm:$0xff]
  %v1981 = vld [vmem:[%s1873 + $0x358] sm:$0xff]
  %v1982 = vld [vmem:[%s1873 + $0x360] sm:$0xff]
  %v1983 = vld [vmem:[%s1873 + $0x368] sm:$0xff]
  %v1984 = vld [vmem:[%s1873 + $0x370] sm:$0xff]
  %v1985 = vld [vmem:[%s1873 + $0x378] sm:$0xff]
  %v1986 = vld [vmem:[%s1873 + $0x380] sm:$0xff]
  %v1987 = vld [vmem:[%s1873 + $0x388] sm:$0xff]
  %v1988 = vld [vmem:[%s1873 + $0x390] sm:$0xff]
  %v1989 = vld [vmem:[%s1873 + $0x398] sm:$0xff]
  %v1990 = vld [vmem:[%s1873 + $0x3a0] sm:$0xff]
  %v1991 = vld [vmem:[%s1873 + $0x3a8] sm:$0xff]
  %v1992 = vld [vmem:[%s1873 + $0x3b0] sm:$0xff]
  %v1993 = vld [vmem:[%s1873 + $0x3b8] sm:$0xff]
  %v1994 = vld [vmem:[%s1873 + $0x3c0] sm:$0xff]
  %v1995 = vld [vmem:[%s1873 + $0x3c8] sm:$0xff]
  %v1996 = vld [vmem:[%s1873 + $0x3d0] sm:$0xff]
  %v1997 = vld [vmem:[%s1873 + $0x3d8] sm:$0xff]
  %v1998 = vld [vmem:[%s1873 + $0x3e0] sm:$0xff]
  %v1999 = vld [vmem:[%s1873 + $0x3e8] sm:$0xff]
  %v2000 = vld [vmem:[%s1873 + $0x3f0] sm:$0xff]
  %v2001 = vld [vmem:[%s1873 + $0x3f8] sm:$0xff]
  %s2002 = scalar_lea.vmem %s2, 96
  %v2003 = vld [vmem:[%s2002] sm:$0xff]
  %v2004 = vld [vmem:[%s2002 + $0x8] sm:$0xff]
  %v2005 = vld [vmem:[%s2002 + $0x10] sm:$0xff]
  %v2006 = vld [vmem:[%s2002 + $0x18] sm:$0xff]
  %2007 = vmatprep.subr.mxu0 %v1875
  %2008 = vmatpush1.msra.mxu0 %v1874
  %2009 = vmatprep.subr.mxu0 %v1879
  %2010 = vmatpush1.msra.mxu0 %v1878
  %2011 = vmatprep.subr.mxu0 %v1883
  %2012 = vmatpush1.msra.mxu0 %v1882
  %2013 = vmatprep.subr.mxu0 %v1887
  %2014 = vmatpush1.msra.mxu0 %v1886
  %2015 = vmatprep.subr.mxu0 %v1891
  %2016 = vmatpush1.msra.mxu0 %v1890
  %2017 = vmatprep.subr.mxu0 %v1895
  %2018 = vmatpush1.msra.mxu0 %v1894
  %2019 = vmatprep.subr.mxu0 %v1899
  %2020 = vmatpush1.msra.mxu0 %v1898
  %2021 = vmatprep.subr.mxu0 %v1903
  %2022 = vmatpush1.msra.mxu0 %v1902
  %2023 = vmatprep.subr.mxu0 %v1907
  %2024 = vmatpush1.msra.mxu0 %v1906
  %2025 = vmatprep.subr.mxu0 %v1911
  %2026 = vmatpush1.msra.mxu0 %v1910
  %2027 = vmatprep.subr.mxu0 %v1915
  %2028 = vmatpush1.msra.mxu0 %v1914
  %2029 = vmatprep.subr.mxu0 %v1919
  %2030 = vmatpush1.msra.mxu0 %v1918
  %2031 = vmatprep.subr.mxu0 %v1923
  %2032 = vmatpush1.msra.mxu0 %v1922
  %2033 = vmatprep.subr.mxu0 %v1927
  %2034 = vmatpush1.msra.mxu0 %v1926
  %2035 = vmatprep.subr.mxu0 %v1931
  %2036 = vmatpush1.msra.mxu0 %v1930
  %2037 = vmatprep.subr.mxu0 %v1935
  %2038 = vmatpush1.msra.mxu0 %v1934
  %2039 = vmatprep.subr.mxu0 %v1939
  %2040 = vmatpush1.msra.mxu0 %v1938
  %2041 = vmatprep.subr.mxu0 %v1943
  %2042 = vmatpush1.msra.mxu0 %v1942
  %2043 = vmatprep.subr.mxu0 %v1947
  %2044 = vmatpush1.msra.mxu0 %v1946
  %2045 = vmatprep.subr.mxu0 %v1951
  %2046 = vmatpush1.msra.mxu0 %v1950
  %2047 = vmatprep.subr.mxu0 %v1955
  %2048 = vmatpush1.msra.mxu0 %v1954
  %2049 = vmatprep.subr.mxu0 %v1959
  %2050 = vmatpush1.msra.mxu0 %v1958
  %2051 = vmatprep.subr.mxu0 %v1963
  %2052 = vmatpush1.msra.mxu0 %v1962
  %2053 = vmatprep.subr.mxu0 %v1967
  %2054 = vmatpush1.msra.mxu0 %v1966
  %2055 = vmatprep.subr.mxu0 %v1971
  %2056 = vmatpush1.msra.mxu0 %v1970
  %2057 = vmatprep.subr.mxu0 %v1975
  %2058 = vmatpush1.msra.mxu0 %v1974
  %2059 = vmatprep.subr.mxu0 %v1979
  %2060 = vmatpush1.msra.mxu0 %v1978
  %2061 = vmatprep.subr.mxu0 %v1983
  %2062 = vmatpush1.msra.mxu0 %v1982
  %2063 = vmatprep.subr.mxu0 %v1987
  %2064 = vmatpush1.msra.mxu0 %v1986
  %2065 = vmatprep.subr.mxu0 %v1991
  %2066 = vmatpush1.msra.mxu0 %v1990
  %2067 = vmatprep.subr.mxu0 %v1995
  %2068 = vmatpush1.msra.mxu0 %v1994
  %2069 = vmatprep.subr.mxu0 %v1999
  %2070 = vmatpush1.msra.mxu0 %v1998
  %2071 = vmatprep.mubr.f32.mxu0 0.0
  %2072 = vmatmul.mubr.f32.gmra.mrb[0].mxu0 %v1388
  %v2073 = vpop.f32.mrb[0].mxu0
  %v2074 = vadd.f32 %v2003, %v2073
  %v2075 = vpop.f32.mrb[0].mxu0
  %v2076 = vadd.f32 %v2004, %v2075
  %2077 = vdwg.mxu0
  %2078 = vmatprep.subr.mxu0 %v1877
  %2079 = vmatpush1.msra.mxu0 %v1876
  %2080 = vmatprep.subr.mxu0 %v1881
  %2081 = vmatpush1.msra.mxu0 %v1880
  %2082 = vmatprep.subr.mxu0 %v1885
  %2083 = vmatpush1.msra.mxu0 %v1884
  %2084 = vmatprep.subr.mxu0 %v1889
  %2085 = vmatpush1.msra.mxu0 %v1888
  %2086 = vmatprep.subr.mxu0 %v1893
  %2087 = vmatpush1.msra.mxu0 %v1892
  %2088 = vmatprep.subr.mxu0 %v1897
  %2089 = vmatpush1.msra.mxu0 %v1896
  %2090 = vmatprep.subr.mxu0 %v1901
  %2091 = vmatpush1.msra.mxu0 %v1900
  %2092 = vmatprep.subr.mxu0 %v1905
  %2093 = vmatpush1.msra.mxu0 %v1904
  %2094 = vmatprep.subr.mxu0 %v1909
  %2095 = vmatpush1.msra.mxu0 %v1908
  %2096 = vmatprep.subr.mxu0 %v1913
  %2097 = vmatpush1.msra.mxu0 %v1912
  %2098 = vmatprep.subr.mxu0 %v1917
  %2099 = vmatpush1.msra.mxu0 %v1916
  %2100 = vmatprep.subr.mxu0 %v1921
  %2101 = vmatpush1.msra.mxu0 %v1920
  %2102 = vmatprep.subr.mxu0 %v1925
  %2103 = vmatpush1.msra.mxu0 %v1924
  %2104 = vmatprep.subr.mxu0 %v1929
  %2105 = vmatpush1.msra.mxu0 %v1928
  %2106 = vmatprep.subr.mxu0 %v1933
  %2107 = vmatpush1.msra.mxu0 %v1932
  %2108 = vmatprep.subr.mxu0 %v1937
  %2109 = vmatpush1.msra.mxu0 %v1936
  %2110 = vmatprep.subr.mxu0 %v1941
  %2111 = vmatpush1.msra.mxu0 %v1940
  %2112 = vmatprep.subr.mxu0 %v1945
  %2113 = vmatpush1.msra.mxu0 %v1944
  %2114 = vmatprep.subr.mxu0 %v1949
  %2115 = vmatpush1.msra.mxu0 %v1948
  %2116 = vmatprep.subr.mxu0 %v1953
  %2117 = vmatpush1.msra.mxu0 %v1952
  %2118 = vmatprep.subr.mxu0 %v1957
  %2119 = vmatpush1.msra.mxu0 %v1956
  %2120 = vmatprep.subr.mxu0 %v1961
  %2121 = vmatpush1.msra.mxu0 %v1960
  %2122 = vmatprep.subr.mxu0 %v1965
  %2123 = vmatpush1.msra.mxu0 %v1964
  %2124 = vmatprep.subr.mxu0 %v1969
  %2125 = vmatpush1.msra.mxu0 %v1968
  %2126 = vmatprep.subr.mxu0 %v1973
  %2127 = vmatpush1.msra.mxu0 %v1972
  %2128 = vmatprep.subr.mxu0 %v1977
  %2129 = vmatpush1.msra.mxu0 %v1976
  %2130 = vmatprep.subr.mxu0 %v1981
  %2131 = vmatpush1.msra.mxu0 %v1980
  %2132 = vmatprep.subr.mxu0 %v1985
  %2133 = vmatpush1.msra.mxu0 %v1984
  %2134 = vmatprep.subr.mxu0 %v1989
  %2135 = vmatpush1.msra.mxu0 %v1988
  %2136 = vmatprep.subr.mxu0 %v1993
  %2137 = vmatpush1.msra.mxu0 %v1992
  %2138 = vmatprep.subr.mxu0 %v1997
  %2139 = vmatpush1.msra.mxu0 %v1996
  %2140 = vmatprep.subr.mxu0 %v2001
  %2141 = vmatpush1.msra.mxu0 %v2000
  %2142 = vmatprep.mubr.f32.mxu0 0.0
  %2143 = vmatmul.mubr.f32.gmra.mrb[0].mxu0 %v1388
  %v2144 = vpop.f32.mrb[0].mxu0
  %v2145 = vadd.f32 %v2005, %v2144
  %v2146 = vpop.f32.mrb[0].mxu0
  %v2147 = vadd.f32 %v2006, %v2146
  %2148 = vdwg.mxu0
  %v2149 = vxor.u32 %v2074, 2147483648
  %v2150 = vmul.f32 %v2149, 1.442695
  %v2151 = vpow.pop %v2150
  %v2152 = vadd.f32 %v2151, 1.0
  %v2153 = vrcp.pop %v2152
  %v2154 = vmul.f32 1.0, %v2153
  %v2155 = vxor.u32 %v2076, 2147483648
  %v2156 = vmul.f32 %v2155, 1.442695
  %v2157 = vpow.pop %v2156
  %v2158 = vadd.f32 %v2157, 1.0
  %v2159 = vrcp.pop %v2158
  %v2160 = vmul.f32 1.0, %v2159
  %v2161 = vmul.f32 %v2154, %v2147
  %v2162 = vadd.f32 %v2145, %v2161
  %v2163 = vtanh.pop %v2162
  %v2164 = vsub.f32 1.0, %v2160
  %v2165 = vmul.f32 %v2164, %v2163
  %v2166 = vmul.f32 %v2160, 0.0
  %v2167 = vadd.f32 %v2165, %v2166
  %2168 = vst [vmem:[#allocation2] sm:$0xff] %v2167
  %v2169 = vld [vmem:[%s0 + $0x20] sm:$0xff]
  %v2170 = vld [vmem:[%s1] sm:$0xff]
  %v2171 = vld [vmem:[%s1 + $0x8] sm:$0xff]
  %v2172 = vld [vmem:[%s1 + $0x10] sm:$0xff]
  %v2173 = vld [vmem:[%s1 + $0x18] sm:$0xff]
  %v2174 = vld [vmem:[%s1 + $0x20] sm:$0xff]
  %v2175 = vld [vmem:[%s1 + $0x28] sm:$0xff]
  %v2176 = vld [vmem:[%s1 + $0x30] sm:$0xff]
  %v2177 = vld [vmem:[%s1 + $0x38] sm:$0xff]
  %v2178 = vld [vmem:[%s1 + $0x40] sm:$0xff]
  %v2179 = vld [vmem:[%s1 + $0x48] sm:$0xff]
  %v2180 = vld [vmem:[%s1 + $0x50] sm:$0xff]
  %v2181 = vld [vmem:[%s1 + $0x58] sm:$0xff]
  %v2182 = vld [vmem:[%s1 + $0x60] sm:$0xff]
  %v2183 = vld [vmem:[%s1 + $0x68] sm:$0xff]
  %v2184 = vld [vmem:[%s1 + $0x70] sm:$0xff]
  %v2185 = vld [vmem:[%s1 + $0x78] sm:$0xff]
  %v2186 = vld [vmem:[%s1 + $0x80] sm:$0xff]
  %v2187 = vld [vmem:[%s1 + $0x88] sm:$0xff]
  %v2188 = vld [vmem:[%s1 + $0x90] sm:$0xff]
  %v2189 = vld [vmem:[%s1 + $0x98] sm:$0xff]
  %v2190 = vld [vmem:[%s1 + $0xa0] sm:$0xff]
  %v2191 = vld [vmem:[%s1 + $0xa8] sm:$0xff]
  %v2192 = vld [vmem:[%s1 + $0xb0] sm:$0xff]
  %v2193 = vld [vmem:[%s1 + $0xb8] sm:$0xff]
  %v2194 = vld [vmem:[%s1 + $0xc0] sm:$0xff]
  %v2195 = vld [vmem:[%s1 + $0xc8] sm:$0xff]
  %v2196 = vld [vmem:[%s1 + $0xd0] sm:$0xff]
  %v2197 = vld [vmem:[%s1 + $0xd8] sm:$0xff]
  %v2198 = vld [vmem:[%s1 + $0xe0] sm:$0xff]
  %v2199 = vld [vmem:[%s1 + $0xe8] sm:$0xff]
  %v2200 = vld [vmem:[%s1 + $0xf0] sm:$0xff]
  %v2201 = vld [vmem:[%s1 + $0xf8] sm:$0xff]
  %v2202 = vld [vmem:[%s1 + $0x100] sm:$0xff]
  %v2203 = vld [vmem:[%s1 + $0x108] sm:$0xff]
  %v2204 = vld [vmem:[%s1 + $0x110] sm:$0xff]
  %v2205 = vld [vmem:[%s1 + $0x118] sm:$0xff]
  %v2206 = vld [vmem:[%s1 + $0x120] sm:$0xff]
  %v2207 = vld [vmem:[%s1 + $0x128] sm:$0xff]
  %v2208 = vld [vmem:[%s1 + $0x130] sm:$0xff]
  %v2209 = vld [vmem:[%s1 + $0x138] sm:$0xff]
  %v2210 = vld [vmem:[%s1 + $0x140] sm:$0xff]
  %v2211 = vld [vmem:[%s1 + $0x148] sm:$0xff]
  %v2212 = vld [vmem:[%s1 + $0x150] sm:$0xff]
  %v2213 = vld [vmem:[%s1 + $0x158] sm:$0xff]
  %v2214 = vld [vmem:[%s1 + $0x160] sm:$0xff]
  %v2215 = vld [vmem:[%s1 + $0x168] sm:$0xff]
  %v2216 = vld [vmem:[%s1 + $0x170] sm:$0xff]
  %v2217 = vld [vmem:[%s1 + $0x178] sm:$0xff]
  %v2218 = vld [vmem:[%s1 + $0x180] sm:$0xff]
  %v2219 = vld [vmem:[%s1 + $0x188] sm:$0xff]
  %v2220 = vld [vmem:[%s1 + $0x190] sm:$0xff]
  %v2221 = vld [vmem:[%s1 + $0x198] sm:$0xff]
  %v2222 = vld [vmem:[%s1 + $0x1a0] sm:$0xff]
  %v2223 = vld [vmem:[%s1 + $0x1a8] sm:$0xff]
  %v2224 = vld [vmem:[%s1 + $0x1b0] sm:$0xff]
  %v2225 = vld [vmem:[%s1 + $0x1b8] sm:$0xff]
  %v2226 = vld [vmem:[%s1 + $0x1c0] sm:$0xff]
  %v2227 = vld [vmem:[%s1 + $0x1c8] sm:$0xff]
  %v2228 = vld [vmem:[%s1 + $0x1d0] sm:$0xff]
  %v2229 = vld [vmem:[%s1 + $0x1d8] sm:$0xff]
  %v2230 = vld [vmem:[%s1 + $0x1e0] sm:$0xff]
  %v2231 = vld [vmem:[%s1 + $0x1e8] sm:$0xff]
  %v2232 = vld [vmem:[%s1 + $0x1f0] sm:$0xff]
  %v2233 = vld [vmem:[%s1 + $0x1f8] sm:$0xff]
  %v2234 = vld [vmem:[%s1 + $0x200] sm:$0xff]
  %v2235 = vld [vmem:[%s1 + $0x208] sm:$0xff]
  %v2236 = vld [vmem:[%s1 + $0x210] sm:$0xff]
  %v2237 = vld [vmem:[%s1 + $0x218] sm:$0xff]
  %v2238 = vld [vmem:[%s1 + $0x220] sm:$0xff]
  %v2239 = vld [vmem:[%s1 + $0x228] sm:$0xff]
  %v2240 = vld [vmem:[%s1 + $0x230] sm:$0xff]
  %v2241 = vld [vmem:[%s1 + $0x238] sm:$0xff]
  %v2242 = vld [vmem:[%s1 + $0x240] sm:$0xff]
  %v2243 = vld [vmem:[%s1 + $0x248] sm:$0xff]
  %v2244 = vld [vmem:[%s1 + $0x250] sm:$0xff]
  %v2245 = vld [vmem:[%s1 + $0x258] sm:$0xff]
  %v2246 = vld [vmem:[%s1 + $0x260] sm:$0xff]
  %v2247 = vld [vmem:[%s1 + $0x268] sm:$0xff]
  %v2248 = vld [vmem:[%s1 + $0x270] sm:$0xff]
  %v2249 = vld [vmem:[%s1 + $0x278] sm:$0xff]
  %v2250 = vld [vmem:[%s1 + $0x280] sm:$0xff]
  %v2251 = vld [vmem:[%s1 + $0x288] sm:$0xff]
  %v2252 = vld [vmem:[%s1 + $0x290] sm:$0xff]
  %v2253 = vld [vmem:[%s1 + $0x298] sm:$0xff]
  %v2254 = vld [vmem:[%s1 + $0x2a0] sm:$0xff]
  %v2255 = vld [vmem:[%s1 + $0x2a8] sm:$0xff]
  %v2256 = vld [vmem:[%s1 + $0x2b0] sm:$0xff]
  %v2257 = vld [vmem:[%s1 + $0x2b8] sm:$0xff]
  %v2258 = vld [vmem:[%s1 + $0x2c0] sm:$0xff]
  %v2259 = vld [vmem:[%s1 + $0x2c8] sm:$0xff]
  %v2260 = vld [vmem:[%s1 + $0x2d0] sm:$0xff]
  %v2261 = vld [vmem:[%s1 + $0x2d8] sm:$0xff]
  %v2262 = vld [vmem:[%s1 + $0x2e0] sm:$0xff]
  %v2263 = vld [vmem:[%s1 + $0x2e8] sm:$0xff]
  %v2264 = vld [vmem:[%s1 + $0x2f0] sm:$0xff]
  %v2265 = vld [vmem:[%s1 + $0x2f8] sm:$0xff]
  %v2266 = vld [vmem:[%s1 + $0x300] sm:$0xff]
  %v2267 = vld [vmem:[%s1 + $0x308] sm:$0xff]
  %v2268 = vld [vmem:[%s1 + $0x310] sm:$0xff]
  %v2269 = vld [vmem:[%s1 + $0x318] sm:$0xff]
  %v2270 = vld [vmem:[%s1 + $0x320] sm:$0xff]
  %v2271 = vld [vmem:[%s1 + $0x328] sm:$0xff]
  %v2272 = vld [vmem:[%s1 + $0x330] sm:$0xff]
  %v2273 = vld [vmem:[%s1 + $0x338] sm:$0xff]
  %v2274 = vld [vmem:[%s1 + $0x340] sm:$0xff]
  %v2275 = vld [vmem:[%s1 + $0x348] sm:$0xff]
  %v2276 = vld [vmem:[%s1 + $0x350] sm:$0xff]
  %v2277 = vld [vmem:[%s1 + $0x358] sm:$0xff]
  %v2278 = vld [vmem:[%s1 + $0x360] sm:$0xff]
  %v2279 = vld [vmem:[%s1 + $0x368] sm:$0xff]
  %v2280 = vld [vmem:[%s1 + $0x370] sm:$0xff]
  %v2281 = vld [vmem:[%s1 + $0x378] sm:$0xff]
  %v2282 = vld [vmem:[%s1 + $0x380] sm:$0xff]
  %v2283 = vld [vmem:[%s1 + $0x388] sm:$0xff]
  %v2284 = vld [vmem:[%s1 + $0x390] sm:$0xff]
  %v2285 = vld [vmem:[%s1 + $0x398] sm:$0xff]
  %v2286 = vld [vmem:[%s1 + $0x3a0] sm:$0xff]
  %v2287 = vld [vmem:[%s1 + $0x3a8] sm:$0xff]
  %v2288 = vld [vmem:[%s1 + $0x3b0] sm:$0xff]
  %v2289 = vld [vmem:[%s1 + $0x3b8] sm:$0xff]
  %v2290 = vld [vmem:[%s1 + $0x3c0] sm:$0xff]
  %v2291 = vld [vmem:[%s1 + $0x3c8] sm:$0xff]
  %v2292 = vld [vmem:[%s1 + $0x3d0] sm:$0xff]
  %v2293 = vld [vmem:[%s1 + $0x3d8] sm:$0xff]
  %v2294 = vld [vmem:[%s1 + $0x3e0] sm:$0xff]
  %v2295 = vld [vmem:[%s1 + $0x3e8] sm:$0xff]
  %v2296 = vld [vmem:[%s1 + $0x3f0] sm:$0xff]
  %v2297 = vld [vmem:[%s1 + $0x3f8] sm:$0xff]
  %v2298 = vld [vmem:[%s2] sm:$0xff]
  %v2299 = vld [vmem:[%s2 + $0x8] sm:$0xff]
  %v2300 = vld [vmem:[%s2 + $0x10] sm:$0xff]
  %v2301 = vld [vmem:[%s2 + $0x18] sm:$0xff]
  %2302 = vmatprep.subr.mxu0 %v2171
  %2303 = vmatpush1.msra.mxu0 %v2170
  %2304 = vmatprep.subr.mxu0 %v2175
  %2305 = vmatpush1.msra.mxu0 %v2174
  %2306 = vmatprep.subr.mxu0 %v2179
  %2307 = vmatpush1.msra.mxu0 %v2178
  %2308 = vmatprep.subr.mxu0 %v2183
  %2309 = vmatpush1.msra.mxu0 %v2182
  %2310 = vmatprep.subr.mxu0 %v2187
  %2311 = vmatpush1.msra.mxu0 %v2186
  %2312 = vmatprep.subr.mxu0 %v2191
  %2313 = vmatpush1.msra.mxu0 %v2190
  %2314 = vmatprep.subr.mxu0 %v2195
  %2315 = vmatpush1.msra.mxu0 %v2194
  %2316 = vmatprep.subr.mxu0 %v2199
  %2317 = vmatpush1.msra.mxu0 %v2198
  %2318 = vmatprep.subr.mxu0 %v2203
  %2319 = vmatpush1.msra.mxu0 %v2202
  %2320 = vmatprep.subr.mxu0 %v2207
  %2321 = vmatpush1.msra.mxu0 %v2206
  %2322 = vmatprep.subr.mxu0 %v2211
  %2323 = vmatpush1.msra.mxu0 %v2210
  %2324 = vmatprep.subr.mxu0 %v2215
  %2325 = vmatpush1.msra.mxu0 %v2214
  %2326 = vmatprep.subr.mxu0 %v2219
  %2327 = vmatpush1.msra.mxu0 %v2218
  %2328 = vmatprep.subr.mxu0 %v2223
  %2329 = vmatpush1.msra.mxu0 %v2222
  %2330 = vmatprep.subr.mxu0 %v2227
  %2331 = vmatpush1.msra.mxu0 %v2226
  %2332 = vmatprep.subr.mxu0 %v2231
  %2333 = vmatpush1.msra.mxu0 %v2230
  %2334 = vmatprep.subr.mxu0 %v2235
  %2335 = vmatpush1.msra.mxu0 %v2234
  %2336 = vmatprep.subr.mxu0 %v2239
  %2337 = vmatpush1.msra.mxu0 %v2238
  %2338 = vmatprep.subr.mxu0 %v2243
  %2339 = vmatpush1.msra.mxu0 %v2242
  %2340 = vmatprep.subr.mxu0 %v2247
  %2341 = vmatpush1.msra.mxu0 %v2246
  %2342 = vmatprep.subr.mxu0 %v2251
  %2343 = vmatpush1.msra.mxu0 %v2250
  %2344 = vmatprep.subr.mxu0 %v2255
  %2345 = vmatpush1.msra.mxu0 %v2254
  %2346 = vmatprep.subr.mxu0 %v2259
  %2347 = vmatpush1.msra.mxu0 %v2258
  %2348 = vmatprep.subr.mxu0 %v2263
  %2349 = vmatpush1.msra.mxu0 %v2262
  %2350 = vmatprep.subr.mxu0 %v2267
  %2351 = vmatpush1.msra.mxu0 %v2266
  %2352 = vmatprep.subr.mxu0 %v2271
  %2353 = vmatpush1.msra.mxu0 %v2270
  %2354 = vmatprep.subr.mxu0 %v2275
  %2355 = vmatpush1.msra.mxu0 %v2274
  %2356 = vmatprep.subr.mxu0 %v2279
  %2357 = vmatpush1.msra.mxu0 %v2278
  %2358 = vmatprep.subr.mxu0 %v2283
  %2359 = vmatpush1.msra.mxu0 %v2282
  %2360 = vmatprep.subr.mxu0 %v2287
  %2361 = vmatpush1.msra.mxu0 %v2286
  %2362 = vmatprep.subr.mxu0 %v2291
  %2363 = vmatpush1.msra.mxu0 %v2290
  %2364 = vmatprep.subr.mxu0 %v2295
  %2365 = vmatpush1.msra.mxu0 %v2294
  %2366 = vmatprep.mubr.f32.mxu0 %v1550
  %2367 = vmatmul.mubr.f32.gmra.mrb[0].mxu0 %v2169
  %v2368 = vpop.f32.mrb[0].mxu0
  %v2369 = vadd.f32 %v2298, %v2368
  %v2370 = vpop.f32.mrb[0].mxu0
  %v2371 = vadd.f32 %v2299, %v2370
  %2372 = vdwg.mxu0
  %2373 = vmatprep.subr.mxu0 %v2173
  %2374 = vmatpush1.msra.mxu0 %v2172
  %2375 = vmatprep.subr.mxu0 %v2177
  %2376 = vmatpush1.msra.mxu0 %v2176
  %2377 = vmatprep.subr.mxu0 %v2181
  %2378 = vmatpush1.msra.mxu0 %v2180
  %2379 = vmatprep.subr.mxu0 %v2185
  %2380 = vmatpush1.msra.mxu0 %v2184
  %2381 = vmatprep.subr.mxu0 %v2189
  %2382 = vmatpush1.msra.mxu0 %v2188
  %2383 = vmatprep.subr.mxu0 %v2193
  %2384 = vmatpush1.msra.mxu0 %v2192
  %2385 = vmatprep.subr.mxu0 %v2197
  %2386 = vmatpush1.msra.mxu0 %v2196
  %2387 = vmatprep.subr.mxu0 %v2201
  %2388 = vmatpush1.msra.mxu0 %v2200
  %2389 = vmatprep.subr.mxu0 %v2205
  %2390 = vmatpush1.msra.mxu0 %v2204
  %2391 = vmatprep.subr.mxu0 %v2209
  %2392 = vmatpush1.msra.mxu0 %v2208
  %2393 = vmatprep.subr.mxu0 %v2213
  %2394 = vmatpush1.msra.mxu0 %v2212
  %2395 = vmatprep.subr.mxu0 %v2217
  %2396 = vmatpush1.msra.mxu0 %v2216
  %2397 = vmatprep.subr.mxu0 %v2221
  %2398 = vmatpush1.msra.mxu0 %v2220
  %2399 = vmatprep.subr.mxu0 %v2225
  %2400 = vmatpush1.msra.mxu0 %v2224
  %2401 = vmatprep.subr.mxu0 %v2229
  %2402 = vmatpush1.msra.mxu0 %v2228
  %2403 = vmatprep.subr.mxu0 %v2233
  %2404 = vmatpush1.msra.mxu0 %v2232
  %2405 = vmatprep.subr.mxu0 %v2237
  %2406 = vmatpush1.msra.mxu0 %v2236
  %2407 = vmatprep.subr.mxu0 %v2241
  %2408 = vmatpush1.msra.mxu0 %v2240
  %2409 = vmatprep.subr.mxu0 %v2245
  %2410 = vmatpush1.msra.mxu0 %v2244
  %2411 = vmatprep.subr.mxu0 %v2249
  %2412 = vmatpush1.msra.mxu0 %v2248
  %2413 = vmatprep.subr.mxu0 %v2253
  %2414 = vmatpush1.msra.mxu0 %v2252
  %2415 = vmatprep.subr.mxu0 %v2257
  %2416 = vmatpush1.msra.mxu0 %v2256
  %2417 = vmatprep.subr.mxu0 %v2261
  %2418 = vmatpush1.msra.mxu0 %v2260
  %2419 = vmatprep.subr.mxu0 %v2265
  %2420 = vmatpush1.msra.mxu0 %v2264
  %2421 = vmatprep.subr.mxu0 %v2269
  %2422 = vmatpush1.msra.mxu0 %v2268
  %2423 = vmatprep.subr.mxu0 %v2273
  %2424 = vmatpush1.msra.mxu0 %v2272
  %2425 = vmatprep.subr.mxu0 %v2277
  %2426 = vmatpush1.msra.mxu0 %v2276
  %2427 = vmatprep.subr.mxu0 %v2281
  %2428 = vmatpush1.msra.mxu0 %v2280
  %2429 = vmatprep.subr.mxu0 %v2285
  %2430 = vmatpush1.msra.mxu0 %v2284
  %2431 = vmatprep.subr.mxu0 %v2289
  %2432 = vmatpush1.msra.mxu0 %v2288
  %2433 = vmatprep.subr.mxu0 %v2293
  %2434 = vmatpush1.msra.mxu0 %v2292
  %2435 = vmatprep.subr.mxu0 %v2297
  %2436 = vmatpush1.msra.mxu0 %v2296
  %2437 = vmatprep.mubr.f32.mxu0 %v1550
  %2438 = vmatmul.mubr.f32.gmra.mrb[0].mxu0 %v2169
  %v2439 = vpop.f32.mrb[0].mxu0
  %v2440 = vadd.f32 %v2300, %v2439
  %v2441 = vpop.f32.mrb[0].mxu0
  %v2442 = vadd.f32 %v2301, %v2441
  %2443 = vdwg.mxu0
  %v2444 = vxor.u32 %v2369, 2147483648
  %v2445 = vmul.f32 %v2444, 1.442695
  %v2446 = vpow.pop %v2445
  %v2447 = vadd.f32 %v2446, 1.0
  %v2448 = vrcp.pop %v2447
  %v2449 = vmul.f32 1.0, %v2448
  %v2450 = vxor.u32 %v2371, 2147483648
  %v2451 = vmul.f32 %v2450, 1.442695
  %v2452 = vpow.pop %v2451
  %v2453 = vadd.f32 %v2452, 1.0
  %v2454 = vrcp.pop %v2453
  %v2455 = vmul.f32 1.0, %v2454
  %v2456 = vmul.f32 %v2449, %v2442
  %v2457 = vadd.f32 %v2440, %v2456
  %v2458 = vtanh.pop %v2457
  %v2459 = vsub.f32 1.0, %v2455
  %v2460 = vmul.f32 %v2459, %v2458
  %v2461 = vmul.f32 %v2455, %v1550
  %v2462 = vadd.f32 %v2460, %v2461
  %v2463 = vld [vmem:[%s476] sm:$0xff]
  %v2464 = vld [vmem:[%s476 + $0x8] sm:$0xff]
  %v2465 = vld [vmem:[%s476 + $0x10] sm:$0xff]
  %v2466 = vld [vmem:[%s476 + $0x18] sm:$0xff]
  %v2467 = vld [vmem:[%s476 + $0x20] sm:$0xff]
  %v2468 = vld [vmem:[%s476 + $0x28] sm:$0xff]
  %v2469 = vld [vmem:[%s476 + $0x30] sm:$0xff]
  %v2470 = vld [vmem:[%s476 + $0x38] sm:$0xff]
  %v2471 = vld [vmem:[%s476 + $0x40] sm:$0xff]
  %v2472 = vld [vmem:[%s476 + $0x48] sm:$0xff]
  %v2473 = vld [vmem:[%s476 + $0x50] sm:$0xff]
  %v2474 = vld [vmem:[%s476 + $0x58] sm:$0xff]
  %v2475 = vld [vmem:[%s476 + $0x60] sm:$0xff]
  %v2476 = vld [vmem:[%s476 + $0x68] sm:$0xff]
  %v2477 = vld [vmem:[%s476 + $0x70] sm:$0xff]
  %v2478 = vld [vmem:[%s476 + $0x78] sm:$0xff]
  %v2479 = vld [vmem:[%s476 + $0x80] sm:$0xff]
  %v2480 = vld [vmem:[%s476 + $0x88] sm:$0xff]
  %v2481 = vld [vmem:[%s476 + $0x90] sm:$0xff]
  %v2482 = vld [vmem:[%s476 + $0x98] sm:$0xff]
  %v2483 = vld [vmem:[%s476 + $0xa0] sm:$0xff]
  %v2484 = vld [vmem:[%s476 + $0xa8] sm:$0xff]
  %v2485 = vld [vmem:[%s476 + $0xb0] sm:$0xff]
  %v2486 = vld [vmem:[%s476 + $0xb8] sm:$0xff]
  %v2487 = vld [vmem:[%s476 + $0xc0] sm:$0xff]
  %v2488 = vld [vmem:[%s476 + $0xc8] sm:$0xff]
  %v2489 = vld [vmem:[%s476 + $0xd0] sm:$0xff]
  %v2490 = vld [vmem:[%s476 + $0xd8] sm:$0xff]
  %v2491 = vld [vmem:[%s476 + $0xe0] sm:$0xff]
  %v2492 = vld [vmem:[%s476 + $0xe8] sm:$0xff]
  %v2493 = vld [vmem:[%s476 + $0xf0] sm:$0xff]
  %v2494 = vld [vmem:[%s476 + $0xf8] sm:$0xff]
  %v2495 = vld [vmem:[%s476 + $0x100] sm:$0xff]
  %v2496 = vld [vmem:[%s476 + $0x108] sm:$0xff]
  %v2497 = vld [vmem:[%s476 + $0x110] sm:$0xff]
  %v2498 = vld [vmem:[%s476 + $0x118] sm:$0xff]
  %v2499 = vld [vmem:[%s476 + $0x120] sm:$0xff]
  %v2500 = vld [vmem:[%s476 + $0x128] sm:$0xff]
  %v2501 = vld [vmem:[%s476 + $0x130] sm:$0xff]
  %v2502 = vld [vmem:[%s476 + $0x138] sm:$0xff]
  %v2503 = vld [vmem:[%s476 + $0x140] sm:$0xff]
  %v2504 = vld [vmem:[%s476 + $0x148] sm:$0xff]
  %v2505 = vld [vmem:[%s476 + $0x150] sm:$0xff]
  %v2506 = vld [vmem:[%s476 + $0x158] sm:$0xff]
  %v2507 = vld [vmem:[%s476 + $0x160] sm:$0xff]
  %v2508 = vld [vmem:[%s476 + $0x168] sm:$0xff]
  %v2509 = vld [vmem:[%s476 + $0x170] sm:$0xff]
  %v2510 = vld [vmem:[%s476 + $0x178] sm:$0xff]
  %v2511 = vld [vmem:[%s476 + $0x180] sm:$0xff]
  %v2512 = vld [vmem:[%s476 + $0x188] sm:$0xff]
  %v2513 = vld [vmem:[%s476 + $0x190] sm:$0xff]
  %v2514 = vld [vmem:[%s476 + $0x198] sm:$0xff]
  %v2515 = vld [vmem:[%s476 + $0x1a0] sm:$0xff]
  %v2516 = vld [vmem:[%s476 + $0x1a8] sm:$0xff]
  %v2517 = vld [vmem:[%s476 + $0x1b0] sm:$0xff]
  %v2518 = vld [vmem:[%s476 + $0x1b8] sm:$0xff]
  %v2519 = vld [vmem:[%s476 + $0x1c0] sm:$0xff]
  %v2520 = vld [vmem:[%s476 + $0x1c8] sm:$0xff]
  %v2521 = vld [vmem:[%s476 + $0x1d0] sm:$0xff]
  %v2522 = vld [vmem:[%s476 + $0x1d8] sm:$0xff]
  %v2523 = vld [vmem:[%s476 + $0x1e0] sm:$0xff]
  %v2524 = vld [vmem:[%s476 + $0x1e8] sm:$0xff]
  %v2525 = vld [vmem:[%s476 + $0x1f0] sm:$0xff]
  %v2526 = vld [vmem:[%s476 + $0x1f8] sm:$0xff]
  %v2527 = vld [vmem:[%s476 + $0x200] sm:$0xff]
  %v2528 = vld [vmem:[%s476 + $0x208] sm:$0xff]
  %v2529 = vld [vmem:[%s476 + $0x210] sm:$0xff]
  %v2530 = vld [vmem:[%s476 + $0x218] sm:$0xff]
  %v2531 = vld [vmem:[%s476 + $0x220] sm:$0xff]
  %v2532 = vld [vmem:[%s476 + $0x228] sm:$0xff]
  %v2533 = vld [vmem:[%s476 + $0x230] sm:$0xff]
  %v2534 = vld [vmem:[%s476 + $0x238] sm:$0xff]
  %v2535 = vld [vmem:[%s476 + $0x240] sm:$0xff]
  %v2536 = vld [vmem:[%s476 + $0x248] sm:$0xff]
  %v2537 = vld [vmem:[%s476 + $0x250] sm:$0xff]
  %v2538 = vld [vmem:[%s476 + $0x258] sm:$0xff]
  %v2539 = vld [vmem:[%s476 + $0x260] sm:$0xff]
  %v2540 = vld [vmem:[%s476 + $0x268] sm:$0xff]
  %v2541 = vld [vmem:[%s476 + $0x270] sm:$0xff]
  %v2542 = vld [vmem:[%s476 + $0x278] sm:$0xff]
  %v2543 = vld [vmem:[%s476 + $0x280] sm:$0xff]
  %v2544 = vld [vmem:[%s476 + $0x288] sm:$0xff]
  %v2545 = vld [vmem:[%s476 + $0x290] sm:$0xff]
  %v2546 = vld [vmem:[%s476 + $0x298] sm:$0xff]
  %v2547 = vld [vmem:[%s476 + $0x2a0] sm:$0xff]
  %v2548 = vld [vmem:[%s476 + $0x2a8] sm:$0xff]
  %v2549 = vld [vmem:[%s476 + $0x2b0] sm:$0xff]
  %v2550 = vld [vmem:[%s476 + $0x2b8] sm:$0xff]
  %v2551 = vld [vmem:[%s476 + $0x2c0] sm:$0xff]
  %v2552 = vld [vmem:[%s476 + $0x2c8] sm:$0xff]
  %v2553 = vld [vmem:[%s476 + $0x2d0] sm:$0xff]
  %v2554 = vld [vmem:[%s476 + $0x2d8] sm:$0xff]
  %v2555 = vld [vmem:[%s476 + $0x2e0] sm:$0xff]
  %v2556 = vld [vmem:[%s476 + $0x2e8] sm:$0xff]
  %v2557 = vld [vmem:[%s476 + $0x2f0] sm:$0xff]
  %v2558 = vld [vmem:[%s476 + $0x2f8] sm:$0xff]
  %v2559 = vld [vmem:[%s476 + $0x300] sm:$0xff]
  %v2560 = vld [vmem:[%s476 + $0x308] sm:$0xff]
  %v2561 = vld [vmem:[%s476 + $0x310] sm:$0xff]
  %v2562 = vld [vmem:[%s476 + $0x318] sm:$0xff]
  %v2563 = vld [vmem:[%s476 + $0x320] sm:$0xff]
  %v2564 = vld [vmem:[%s476 + $0x328] sm:$0xff]
  %v2565 = vld [vmem:[%s476 + $0x330] sm:$0xff]
  %v2566 = vld [vmem:[%s476 + $0x338] sm:$0xff]
  %v2567 = vld [vmem:[%s476 + $0x340] sm:$0xff]
  %v2568 = vld [vmem:[%s476 + $0x348] sm:$0xff]
  %v2569 = vld [vmem:[%s476 + $0x350] sm:$0xff]
  %v2570 = vld [vmem:[%s476 + $0x358] sm:$0xff]
  %v2571 = vld [vmem:[%s476 + $0x360] sm:$0xff]
  %v2572 = vld [vmem:[%s476 + $0x368] sm:$0xff]
  %v2573 = vld [vmem:[%s476 + $0x370] sm:$0xff]
  %v2574 = vld [vmem:[%s476 + $0x378] sm:$0xff]
  %v2575 = vld [vmem:[%s476 + $0x380] sm:$0xff]
  %v2576 = vld [vmem:[%s476 + $0x388] sm:$0xff]
  %v2577 = vld [vmem:[%s476 + $0x390] sm:$0xff]
  %v2578 = vld [vmem:[%s476 + $0x398] sm:$0xff]
  %v2579 = vld [vmem:[%s476 + $0x3a0] sm:$0xff]
  %v2580 = vld [vmem:[%s476 + $0x3a8] sm:$0xff]
  %v2581 = vld [vmem:[%s476 + $0x3b0] sm:$0xff]
  %v2582 = vld [vmem:[%s476 + $0x3b8] sm:$0xff]
  %v2583 = vld [vmem:[%s476 + $0x3c0] sm:$0xff]
  %v2584 = vld [vmem:[%s476 + $0x3c8] sm:$0xff]
  %v2585 = vld [vmem:[%s476 + $0x3d0] sm:$0xff]
  %v2586 = vld [vmem:[%s476 + $0x3d8] sm:$0xff]
  %v2587 = vld [vmem:[%s476 + $0x3e0] sm:$0xff]
  %v2588 = vld [vmem:[%s476 + $0x3e8] sm:$0xff]
  %v2589 = vld [vmem:[%s476 + $0x3f0] sm:$0xff]
  %v2590 = vld [vmem:[%s476 + $0x3f8] sm:$0xff]
  %v2591 = vld [vmem:[%s605] sm:$0xff]
  %v2592 = vld [vmem:[%s605 + $0x8] sm:$0xff]
  %v2593 = vld [vmem:[%s605 + $0x10] sm:$0xff]
  %v2594 = vld [vmem:[%s605 + $0x18] sm:$0xff]
  %2595 = vmatprep.subr.mxu0 %v2464
  %2596 = vmatpush1.msra.mxu0 %v2463
  %2597 = vmatprep.subr.mxu0 %v2468
  %2598 = vmatpush1.msra.mxu0 %v2467
  %2599 = vmatprep.subr.mxu0 %v2472
  %2600 = vmatpush1.msra.mxu0 %v2471
  %2601 = vmatprep.subr.mxu0 %v2476
  %2602 = vmatpush1.msra.mxu0 %v2475
  %2603 = vmatprep.subr.mxu0 %v2480
  %2604 = vmatpush1.msra.mxu0 %v2479
  %2605 = vmatprep.subr.mxu0 %v2484
  %2606 = vmatpush1.msra.mxu0 %v2483
  %2607 = vmatprep.subr.mxu0 %v2488
  %2608 = vmatpush1.msra.mxu0 %v2487
  %2609 = vmatprep.subr.mxu0 %v2492
  %2610 = vmatpush1.msra.mxu0 %v2491
  %2611 = vmatprep.subr.mxu0 %v2496
  %2612 = vmatpush1.msra.mxu0 %v2495
  %2613 = vmatprep.subr.mxu0 %v2500
  %2614 = vmatpush1.msra.mxu0 %v2499
  %2615 = vmatprep.subr.mxu0 %v2504
  %2616 = vmatpush1.msra.mxu0 %v2503
  %2617 = vmatprep.subr.mxu0 %v2508
  %2618 = vmatpush1.msra.mxu0 %v2507
  %2619 = vmatprep.subr.mxu0 %v2512
  %2620 = vmatpush1.msra.mxu0 %v2511
  %2621 = vmatprep.subr.mxu0 %v2516
  %2622 = vmatpush1.msra.mxu0 %v2515
  %2623 = vmatprep.subr.mxu0 %v2520
  %2624 = vmatpush1.msra.mxu0 %v2519
  %2625 = vmatprep.subr.mxu0 %v2524
  %2626 = vmatpush1.msra.mxu0 %v2523
  %2627 = vmatprep.subr.mxu0 %v2528
  %2628 = vmatpush1.msra.mxu0 %v2527
  %2629 = vmatprep.subr.mxu0 %v2532
  %2630 = vmatpush1.msra.mxu0 %v2531
  %2631 = vmatprep.subr.mxu0 %v2536
  %2632 = vmatpush1.msra.mxu0 %v2535
  %2633 = vmatprep.subr.mxu0 %v2540
  %2634 = vmatpush1.msra.mxu0 %v2539
  %2635 = vmatprep.subr.mxu0 %v2544
  %2636 = vmatpush1.msra.mxu0 %v2543
  %2637 = vmatprep.subr.mxu0 %v2548
  %2638 = vmatpush1.msra.mxu0 %v2547
  %2639 = vmatprep.subr.mxu0 %v2552
  %2640 = vmatpush1.msra.mxu0 %v2551
  %2641 = vmatprep.subr.mxu0 %v2556
  %2642 = vmatpush1.msra.mxu0 %v2555
  %2643 = vmatprep.subr.mxu0 %v2560
  %2644 = vmatpush1.msra.mxu0 %v2559
  %2645 = vmatprep.subr.mxu0 %v2564
  %2646 = vmatpush1.msra.mxu0 %v2563
  %2647 = vmatprep.subr.mxu0 %v2568
  %2648 = vmatpush1.msra.mxu0 %v2567
  %2649 = vmatprep.subr.mxu0 %v2572
  %2650 = vmatpush1.msra.mxu0 %v2571
  %2651 = vmatprep.subr.mxu0 %v2576
  %2652 = vmatpush1.msra.mxu0 %v2575
  %2653 = vmatprep.subr.mxu0 %v2580
  %2654 = vmatpush1.msra.mxu0 %v2579
  %2655 = vmatprep.subr.mxu0 %v2584
  %2656 = vmatpush1.msra.mxu0 %v2583
  %2657 = vmatprep.subr.mxu0 %v2588
  %2658 = vmatpush1.msra.mxu0 %v2587
  %2659 = vmatprep.mubr.f32.mxu0 %v1711
  %2660 = vmatmul.mubr.f32.gmra.mrb[0].mxu0 %v1550
  %v2661 = vpop.f32.mrb[0].mxu0
  %v2662 = vadd.f32 %v2591, %v2661
  %v2663 = vpop.f32.mrb[0].mxu0
  %v2664 = vadd.f32 %v2592, %v2663
  %2665 = vdwg.mxu0
  %2666 = vmatprep.subr.mxu0 %v2466
  %2667 = vmatpush1.msra.mxu0 %v2465
  %2668 = vmatprep.subr.mxu0 %v2470
  %2669 = vmatpush1.msra.mxu0 %v2469
  %2670 = vmatprep.subr.mxu0 %v2474
  %2671 = vmatpush1.msra.mxu0 %v2473
  %2672 = vmatprep.subr.mxu0 %v2478
  %2673 = vmatpush1.msra.mxu0 %v2477
  %2674 = vmatprep.subr.mxu0 %v2482
  %2675 = vmatpush1.msra.mxu0 %v2481
  %2676 = vmatprep.subr.mxu0 %v2486
  %2677 = vmatpush1.msra.mxu0 %v2485
  %2678 = vmatprep.subr.mxu0 %v2490
  %2679 = vmatpush1.msra.mxu0 %v2489
  %2680 = vmatprep.subr.mxu0 %v2494
  %2681 = vmatpush1.msra.mxu0 %v2493
  %2682 = vmatprep.subr.mxu0 %v2498
  %2683 = vmatpush1.msra.mxu0 %v2497
  %2684 = vmatprep.subr.mxu0 %v2502
  %2685 = vmatpush1.msra.mxu0 %v2501
  %2686 = vmatprep.subr.mxu0 %v2506
  %2687 = vmatpush1.msra.mxu0 %v2505
  %2688 = vmatprep.subr.mxu0 %v2510
  %2689 = vmatpush1.msra.mxu0 %v2509
  %2690 = vmatprep.subr.mxu0 %v2514
  %2691 = vmatpush1.msra.mxu0 %v2513
  %2692 = vmatprep.subr.mxu0 %v2518
  %2693 = vmatpush1.msra.mxu0 %v2517
  %2694 = vmatprep.subr.mxu0 %v2522
  %2695 = vmatpush1.msra.mxu0 %v2521
  %2696 = vmatprep.subr.mxu0 %v2526
  %2697 = vmatpush1.msra.mxu0 %v2525
  %2698 = vmatprep.subr.mxu0 %v2530
  %2699 = vmatpush1.msra.mxu0 %v2529
  %2700 = vmatprep.subr.mxu0 %v2534
  %2701 = vmatpush1.msra.mxu0 %v2533
  %2702 = vmatprep.subr.mxu0 %v2538
  %2703 = vmatpush1.msra.mxu0 %v2537
  %2704 = vmatprep.subr.mxu0 %v2542
  %2705 = vmatpush1.msra.mxu0 %v2541
  %2706 = vmatprep.subr.mxu0 %v2546
  %2707 = vmatpush1.msra.mxu0 %v2545
  %2708 = vmatprep.subr.mxu0 %v2550
  %2709 = vmatpush1.msra.mxu0 %v2549
  %2710 = vmatprep.subr.mxu0 %v2554
  %2711 = vmatpush1.msra.mxu0 %v2553
  %2712 = vmatprep.subr.mxu0 %v2558
  %2713 = vmatpush1.msra.mxu0 %v2557
  %2714 = vmatprep.subr.mxu0 %v2562
  %2715 = vmatpush1.msra.mxu0 %v2561
  %2716 = vmatprep.subr.mxu0 %v2566
  %2717 = vmatpush1.msra.mxu0 %v2565
  %2718 = vmatprep.subr.mxu0 %v2570
  %2719 = vmatpush1.msra.mxu0 %v2569
  %2720 = vmatprep.subr.mxu0 %v2574
  %2721 = vmatpush1.msra.mxu0 %v2573
  %2722 = vmatprep.subr.mxu0 %v2578
  %2723 = vmatpush1.msra.mxu0 %v2577
  %2724 = vmatprep.subr.mxu0 %v2582
  %2725 = vmatpush1.msra.mxu0 %v2581
  %2726 = vmatprep.subr.mxu0 %v2586
  %2727 = vmatpush1.msra.mxu0 %v2585
  %2728 = vmatprep.subr.mxu0 %v2590
  %2729 = vmatpush1.msra.mxu0 %v2589
  %2730 = vmatprep.mubr.f32.mxu0 %v1711
  %2731 = vmatmul.mubr.f32.gmra.mrb[0].mxu0 %v1550
  %v2732 = vpop.f32.mrb[0].mxu0
  %v2733 = vadd.f32 %v2593, %v2732
  %v2734 = vpop.f32.mrb[0].mxu0
  %v2735 = vadd.f32 %v2594, %v2734
  %2736 = vdwg.mxu0
  %v2737 = vxor.u32 %v2662, 2147483648
  %v2738 = vmul.f32 %v2737, 1.442695
  %v2739 = vpow.pop %v2738
  %v2740 = vadd.f32 %v2739, 1.0
  %v2741 = vrcp.pop %v2740
  %v2742 = vmul.f32 1.0, %v2741
  %v2743 = vxor.u32 %v2664, 2147483648
  %v2744 = vmul.f32 %v2743, 1.442695
  %v2745 = vpow.pop %v2744
  %v2746 = vadd.f32 %v2745, 1.0
  %v2747 = vrcp.pop %v2746
  %v2748 = vmul.f32 1.0, %v2747
  %v2749 = vmul.f32 %v2742, %v2735
  %v2750 = vadd.f32 %v2733, %v2749
  %v2751 = vtanh.pop %v2750
  %v2752 = vsub.f32 1.0, %v2748
  %v2753 = vmul.f32 %v2752, %v2751
  %v2754 = vmul.f32 %v2748, %v1711
  %v2755 = vadd.f32 %v2753, %v2754
  %v2756 = vld [vmem:[%s1094] sm:$0xff]
  %v2757 = vld [vmem:[%s1094 + $0x8] sm:$0xff]
  %v2758 = vld [vmem:[%s1094 + $0x10] sm:$0xff]
  %v2759 = vld [vmem:[%s1094 + $0x18] sm:$0xff]
  %v2760 = vld [vmem:[%s1094 + $0x20] sm:$0xff]
  %v2761 = vld [vmem:[%s1094 + $0x28] sm:$0xff]
  %v2762 = vld [vmem:[%s1094 + $0x30] sm:$0xff]
  %v2763 = vld [vmem:[%s1094 + $0x38] sm:$0xff]
  %v2764 = vld [vmem:[%s1094 + $0x40] sm:$0xff]
  %v2765 = vld [vmem:[%s1094 + $0x48] sm:$0xff]
  %v2766 = vld [vmem:[%s1094 + $0x50] sm:$0xff]
  %v2767 = vld [vmem:[%s1094 + $0x58] sm:$0xff]
  %v2768 = vld [vmem:[%s1094 + $0x60] sm:$0xff]
  %v2769 = vld [vmem:[%s1094 + $0x68] sm:$0xff]
  %v2770 = vld [vmem:[%s1094 + $0x70] sm:$0xff]
  %v2771 = vld [vmem:[%s1094 + $0x78] sm:$0xff]
  %v2772 = vld [vmem:[%s1094 + $0x80] sm:$0xff]
  %v2773 = vld [vmem:[%s1094 + $0x88] sm:$0xff]
  %v2774 = vld [vmem:[%s1094 + $0x90] sm:$0xff]
  %v2775 = vld [vmem:[%s1094 + $0x98] sm:$0xff]
  %v2776 = vld [vmem:[%s1094 + $0xa0] sm:$0xff]
  %v2777 = vld [vmem:[%s1094 + $0xa8] sm:$0xff]
  %v2778 = vld [vmem:[%s1094 + $0xb0] sm:$0xff]
  %v2779 = vld [vmem:[%s1094 + $0xb8] sm:$0xff]
  %v2780 = vld [vmem:[%s1094 + $0xc0] sm:$0xff]
  %v2781 = vld [vmem:[%s1094 + $0xc8] sm:$0xff]
  %v2782 = vld [vmem:[%s1094 + $0xd0] sm:$0xff]
  %v2783 = vld [vmem:[%s1094 + $0xd8] sm:$0xff]
  %v2784 = vld [vmem:[%s1094 + $0xe0] sm:$0xff]
  %v2785 = vld [vmem:[%s1094 + $0xe8] sm:$0xff]
  %v2786 = vld [vmem:[%s1094 + $0xf0] sm:$0xff]
  %v2787 = vld [vmem:[%s1094 + $0xf8] sm:$0xff]
  %v2788 = vld [vmem:[%s1094 + $0x100] sm:$0xff]
  %v2789 = vld [vmem:[%s1094 + $0x108] sm:$0xff]
  %v2790 = vld [vmem:[%s1094 + $0x110] sm:$0xff]
  %v2791 = vld [vmem:[%s1094 + $0x118] sm:$0xff]
  %v2792 = vld [vmem:[%s1094 + $0x120] sm:$0xff]
  %v2793 = vld [vmem:[%s1094 + $0x128] sm:$0xff]
  %v2794 = vld [vmem:[%s1094 + $0x130] sm:$0xff]
  %v2795 = vld [vmem:[%s1094 + $0x138] sm:$0xff]
  %v2796 = vld [vmem:[%s1094 + $0x140] sm:$0xff]
  %v2797 = vld [vmem:[%s1094 + $0x148] sm:$0xff]
  %v2798 = vld [vmem:[%s1094 + $0x150] sm:$0xff]
  %v2799 = vld [vmem:[%s1094 + $0x158] sm:$0xff]
  %v2800 = vld [vmem:[%s1094 + $0x160] sm:$0xff]
  %v2801 = vld [vmem:[%s1094 + $0x168] sm:$0xff]
  %v2802 = vld [vmem:[%s1094 + $0x170] sm:$0xff]
  %v2803 = vld [vmem:[%s1094 + $0x178] sm:$0xff]
  %v2804 = vld [vmem:[%s1094 + $0x180] sm:$0xff]
  %v2805 = vld [vmem:[%s1094 + $0x188] sm:$0xff]
  %v2806 = vld [vmem:[%s1094 + $0x190] sm:$0xff]
  %v2807 = vld [vmem:[%s1094 + $0x198] sm:$0xff]
  %v2808 = vld [vmem:[%s1094 + $0x1a0] sm:$0xff]
  %v2809 = vld [vmem:[%s1094 + $0x1a8] sm:$0xff]
  %v2810 = vld [vmem:[%s1094 + $0x1b0] sm:$0xff]
  %v2811 = vld [vmem:[%s1094 + $0x1b8] sm:$0xff]
  %v2812 = vld [vmem:[%s1094 + $0x1c0] sm:$0xff]
  %v2813 = vld [vmem:[%s1094 + $0x1c8] sm:$0xff]
  %v2814 = vld [vmem:[%s1094 + $0x1d0] sm:$0xff]
  %v2815 = vld [vmem:[%s1094 + $0x1d8] sm:$0xff]
  %v2816 = vld [vmem:[%s1094 + $0x1e0] sm:$0xff]
  %v2817 = vld [vmem:[%s1094 + $0x1e8] sm:$0xff]
  %v2818 = vld [vmem:[%s1094 + $0x1f0] sm:$0xff]
  %v2819 = vld [vmem:[%s1094 + $0x1f8] sm:$0xff]
  %v2820 = vld [vmem:[%s1094 + $0x200] sm:$0xff]
  %v2821 = vld [vmem:[%s1094 + $0x208] sm:$0xff]
  %v2822 = vld [vmem:[%s1094 + $0x210] sm:$0xff]
  %v2823 = vld [vmem:[%s1094 + $0x218] sm:$0xff]
  %v2824 = vld [vmem:[%s1094 + $0x220] sm:$0xff]
  %v2825 = vld [vmem:[%s1094 + $0x228] sm:$0xff]
  %v2826 = vld [vmem:[%s1094 + $0x230] sm:$0xff]
  %v2827 = vld [vmem:[%s1094 + $0x238] sm:$0xff]
  %v2828 = vld [vmem:[%s1094 + $0x240] sm:$0xff]
  %v2829 = vld [vmem:[%s1094 + $0x248] sm:$0xff]
  %v2830 = vld [vmem:[%s1094 + $0x250] sm:$0xff]
  %v2831 = vld [vmem:[%s1094 + $0x258] sm:$0xff]
  %v2832 = vld [vmem:[%s1094 + $0x260] sm:$0xff]
  %v2833 = vld [vmem:[%s1094 + $0x268] sm:$0xff]
  %v2834 = vld [vmem:[%s1094 + $0x270] sm:$0xff]
  %v2835 = vld [vmem:[%s1094 + $0x278] sm:$0xff]
  %v2836 = vld [vmem:[%s1094 + $0x280] sm:$0xff]
  %v2837 = vld [vmem:[%s1094 + $0x288] sm:$0xff]
  %v2838 = vld [vmem:[%s1094 + $0x290] sm:$0xff]
  %v2839 = vld [vmem:[%s1094 + $0x298] sm:$0xff]
  %v2840 = vld [vmem:[%s1094 + $0x2a0] sm:$0xff]
  %v2841 = vld [vmem:[%s1094 + $0x2a8] sm:$0xff]
  %v2842 = vld [vmem:[%s1094 + $0x2b0] sm:$0xff]
  %v2843 = vld [vmem:[%s1094 + $0x2b8] sm:$0xff]
  %v2844 = vld [vmem:[%s1094 + $0x2c0] sm:$0xff]
  %v2845 = vld [vmem:[%s1094 + $0x2c8] sm:$0xff]
  %v2846 = vld [vmem:[%s1094 + $0x2d0] sm:$0xff]
  %v2847 = vld [vmem:[%s1094 + $0x2d8] sm:$0xff]
  %v2848 = vld [vmem:[%s1094 + $0x2e0] sm:$0xff]
  %v2849 = vld [vmem:[%s1094 + $0x2e8] sm:$0xff]
  %v2850 = vld [vmem:[%s1094 + $0x2f0] sm:$0xff]
  %v2851 = vld [vmem:[%s1094 + $0x2f8] sm:$0xff]
  %v2852 = vld [vmem:[%s1094 + $0x300] sm:$0xff]
  %v2853 = vld [vmem:[%s1094 + $0x308] sm:$0xff]
  %v2854 = vld [vmem:[%s1094 + $0x310] sm:$0xff]
  %v2855 = vld [vmem:[%s1094 + $0x318] sm:$0xff]
  %v2856 = vld [vmem:[%s1094 + $0x320] sm:$0xff]
  %v2857 = vld [vmem:[%s1094 + $0x328] sm:$0xff]
  %v2858 = vld [vmem:[%s1094 + $0x330] sm:$0xff]
  %v2859 = vld [vmem:[%s1094 + $0x338] sm:$0xff]
  %v2860 = vld [vmem:[%s1094 + $0x340] sm:$0xff]
  %v2861 = vld [vmem:[%s1094 + $0x348] sm:$0xff]
  %v2862 = vld [vmem:[%s1094 + $0x350] sm:$0xff]
  %v2863 = vld [vmem:[%s1094 + $0x358] sm:$0xff]
  %v2864 = vld [vmem:[%s1094 + $0x360] sm:$0xff]
  %v2865 = vld [vmem:[%s1094 + $0x368] sm:$0xff]
  %v2866 = vld [vmem:[%s1094 + $0x370] sm:$0xff]
  %v2867 = vld [vmem:[%s1094 + $0x378] sm:$0xff]
  %v2868 = vld [vmem:[%s1094 + $0x380] sm:$0xff]
  %v2869 = vld [vmem:[%s1094 + $0x388] sm:$0xff]
  %v2870 = vld [vmem:[%s1094 + $0x390] sm:$0xff]
  %v2871 = vld [vmem:[%s1094 + $0x398] sm:$0xff]
  %v2872 = vld [vmem:[%s1094 + $0x3a0] sm:$0xff]
  %v2873 = vld [vmem:[%s1094 + $0x3a8] sm:$0xff]
  %v2874 = vld [vmem:[%s1094 + $0x3b0] sm:$0xff]
  %v2875 = vld [vmem:[%s1094 + $0x3b8] sm:$0xff]
  %v2876 = vld [vmem:[%s1094 + $0x3c0] sm:$0xff]
  %v2877 = vld [vmem:[%s1094 + $0x3c8] sm:$0xff]
  %v2878 = vld [vmem:[%s1094 + $0x3d0] sm:$0xff]
  %v2879 = vld [vmem:[%s1094 + $0x3d8] sm:$0xff]
  %v2880 = vld [vmem:[%s1094 + $0x3e0] sm:$0xff]
  %v2881 = vld [vmem:[%s1094 + $0x3e8] sm:$0xff]
  %v2882 = vld [vmem:[%s1094 + $0x3f0] sm:$0xff]
  %v2883 = vld [vmem:[%s1094 + $0x3f8] sm:$0xff]
  %v2884 = vld [vmem:[%s1223] sm:$0xff]
  %v2885 = vld [vmem:[%s1223 + $0x8] sm:$0xff]
  %v2886 = vld [vmem:[%s1223 + $0x10] sm:$0xff]
  %v2887 = vld [vmem:[%s1223 + $0x18] sm:$0xff]
  %2888 = vmatprep.subr.mxu0 %v2757
  %2889 = vmatpush1.msra.mxu0 %v2756
  %2890 = vmatprep.subr.mxu0 %v2761
  %2891 = vmatpush1.msra.mxu0 %v2760
  %2892 = vmatprep.subr.mxu0 %v2765
  %2893 = vmatpush1.msra.mxu0 %v2764
  %2894 = vmatprep.subr.mxu0 %v2769
  %2895 = vmatpush1.msra.mxu0 %v2768
  %2896 = vmatprep.subr.mxu0 %v2773
  %2897 = vmatpush1.msra.mxu0 %v2772
  %2898 = vmatprep.subr.mxu0 %v2777
  %2899 = vmatpush1.msra.mxu0 %v2776
  %2900 = vmatprep.subr.mxu0 %v2781
  %2901 = vmatpush1.msra.mxu0 %v2780
  %2902 = vmatprep.subr.mxu0 %v2785
  %2903 = vmatpush1.msra.mxu0 %v2784
  %2904 = vmatprep.subr.mxu0 %v2789
  %2905 = vmatpush1.msra.mxu0 %v2788
  %2906 = vmatprep.subr.mxu0 %v2793
  %2907 = vmatpush1.msra.mxu0 %v2792
  %2908 = vmatprep.subr.mxu0 %v2797
  %2909 = vmatpush1.msra.mxu0 %v2796
  %2910 = vmatprep.subr.mxu0 %v2801
  %2911 = vmatpush1.msra.mxu0 %v2800
  %2912 = vmatprep.subr.mxu0 %v2805
  %2913 = vmatpush1.msra.mxu0 %v2804
  %2914 = vmatprep.subr.mxu0 %v2809
  %2915 = vmatpush1.msra.mxu0 %v2808
  %2916 = vmatprep.subr.mxu0 %v2813
  %2917 = vmatpush1.msra.mxu0 %v2812
  %2918 = vmatprep.subr.mxu0 %v2817
  %2919 = vmatpush1.msra.mxu0 %v2816
  %2920 = vmatprep.subr.mxu0 %v2821
  %2921 = vmatpush1.msra.mxu0 %v2820
  %2922 = vmatprep.subr.mxu0 %v2825
  %2923 = vmatpush1.msra.mxu0 %v2824
  %2924 = vmatprep.subr.mxu0 %v2829
  %2925 = vmatpush1.msra.mxu0 %v2828
  %2926 = vmatprep.subr.mxu0 %v2833
  %2927 = vmatpush1.msra.mxu0 %v2832
  %2928 = vmatprep.subr.mxu0 %v2837
  %2929 = vmatpush1.msra.mxu0 %v2836
  %2930 = vmatprep.subr.mxu0 %v2841
  %2931 = vmatpush1.msra.mxu0 %v2840
  %2932 = vmatprep.subr.mxu0 %v2845
  %2933 = vmatpush1.msra.mxu0 %v2844
  %2934 = vmatprep.subr.mxu0 %v2849
  %2935 = vmatpush1.msra.mxu0 %v2848
  %2936 = vmatprep.subr.mxu0 %v2853
  %2937 = vmatpush1.msra.mxu0 %v2852
  %2938 = vmatprep.subr.mxu0 %v2857
  %2939 = vmatpush1.msra.mxu0 %v2856
  %2940 = vmatprep.subr.mxu0 %v2861
  %2941 = vmatpush1.msra.mxu0 %v2860
  %2942 = vmatprep.subr.mxu0 %v2865
  %2943 = vmatpush1.msra.mxu0 %v2864
  %2944 = vmatprep.subr.mxu0 %v2869
  %2945 = vmatpush1.msra.mxu0 %v2868
  %2946 = vmatprep.subr.mxu0 %v2873
  %2947 = vmatpush1.msra.mxu0 %v2872
  %2948 = vmatprep.subr.mxu0 %v2877
  %2949 = vmatpush1.msra.mxu0 %v2876
  %2950 = vmatprep.subr.mxu0 %v2881
  %2951 = vmatpush1.msra.mxu0 %v2880
  %2952 = vmatprep.mubr.f32.mxu0 %v1872
  %2953 = vmatmul.mubr.f32.gmra.mrb[0].mxu0 %v1711
  %v2954 = vpop.f32.mrb[0].mxu0
  %v2955 = vadd.f32 %v2884, %v2954
  %v2956 = vpop.f32.mrb[0].mxu0
  %v2957 = vadd.f32 %v2885, %v2956
  %2958 = vdwg.mxu0
  %2959 = vmatprep.subr.mxu0 %v2759
  %2960 = vmatpush1.msra.mxu0 %v2758
  %2961 = vmatprep.subr.mxu0 %v2763
  %2962 = vmatpush1.msra.mxu0 %v2762
  %2963 = vmatprep.subr.mxu0 %v2767
  %2964 = vmatpush1.msra.mxu0 %v2766
  %2965 = vmatprep.subr.mxu0 %v2771
  %2966 = vmatpush1.msra.mxu0 %v2770
  %2967 = vmatprep.subr.mxu0 %v2775
  %2968 = vmatpush1.msra.mxu0 %v2774
  %2969 = vmatprep.subr.mxu0 %v2779
  %2970 = vmatpush1.msra.mxu0 %v2778
  %2971 = vmatprep.subr.mxu0 %v2783
  %2972 = vmatpush1.msra.mxu0 %v2782
  %2973 = vmatprep.subr.mxu0 %v2787
  %2974 = vmatpush1.msra.mxu0 %v2786
  %2975 = vmatprep.subr.mxu0 %v2791
  %2976 = vmatpush1.msra.mxu0 %v2790
  %2977 = vmatprep.subr.mxu0 %v2795
  %2978 = vmatpush1.msra.mxu0 %v2794
  %2979 = vmatprep.subr.mxu0 %v2799
  %2980 = vmatpush1.msra.mxu0 %v2798
  %2981 = vmatprep.subr.mxu0 %v2803
  %2982 = vmatpush1.msra.mxu0 %v2802
  %2983 = vmatprep.subr.mxu0 %v2807
  %2984 = vmatpush1.msra.mxu0 %v2806
  %2985 = vmatprep.subr.mxu0 %v2811
  %2986 = vmatpush1.msra.mxu0 %v2810
  %2987 = vmatprep.subr.mxu0 %v2815
  %2988 = vmatpush1.msra.mxu0 %v2814
  %2989 = vmatprep.subr.mxu0 %v2819
  %2990 = vmatpush1.msra.mxu0 %v2818
  %2991 = vmatprep.subr.mxu0 %v2823
  %2992 = vmatpush1.msra.mxu0 %v2822
  %2993 = vmatprep.subr.mxu0 %v2827
  %2994 = vmatpush1.msra.mxu0 %v2826
  %2995 = vmatprep.subr.mxu0 %v2831
  %2996 = vmatpush1.msra.mxu0 %v2830
  %2997 = vmatprep.subr.mxu0 %v2835
  %2998 = vmatpush1.msra.mxu0 %v2834
  %2999 = vmatprep.subr.mxu0 %v2839
  %3000 = vmatpush1.msra.mxu0 %v2838
  %3001 = vmatprep.subr.mxu0 %v2843
  %3002 = vmatpush1.msra.mxu0 %v2842
  %3003 = vmatprep.subr.mxu0 %v2847
  %3004 = vmatpush1.msra.mxu0 %v2846
  %3005 = vmatprep.subr.mxu0 %v2851
  %3006 = vmatpush1.msra.mxu0 %v2850
  %3007 = vmatprep.subr.mxu0 %v2855
  %3008 = vmatpush1.msra.mxu0 %v2854
  %3009 = vmatprep.subr.mxu0 %v2859
  %3010 = vmatpush1.msra.mxu0 %v2858
  %3011 = vmatprep.subr.mxu0 %v2863
  %3012 = vmatpush1.msra.mxu0 %v2862
  %3013 = vmatprep.subr.mxu0 %v2867
  %3014 = vmatpush1.msra.mxu0 %v2866
  %3015 = vmatprep.subr.mxu0 %v2871
  %3016 = vmatpush1.msra.mxu0 %v2870
  %3017 = vmatprep.subr.mxu0 %v2875
  %3018 = vmatpush1.msra.mxu0 %v2874
  %3019 = vmatprep.subr.mxu0 %v2879
  %3020 = vmatpush1.msra.mxu0 %v2878
  %3021 = vmatprep.subr.mxu0 %v2883
  %3022 = vmatpush1.msra.mxu0 %v2882
  %3023 = vmatprep.mubr.f32.mxu0 %v1872
  %3024 = vmatmul.mubr.f32.gmra.mrb[0].mxu0 %v1711
  %v3025 = vpop.f32.mrb[0].mxu0
  %v3026 = vadd.f32 %v2886, %v3025
  %v3027 = vpop.f32.mrb[0].mxu0
  %v3028 = vadd.f32 %v2887, %v3027
  %3029 = vdwg.mxu0
  %v3030 = vxor.u32 %v2955, 2147483648
  %v3031 = vmul.f32 %v3030, 1.442695
  %v3032 = vpow.pop %v3031
  %v3033 = vadd.f32 %v3032, 1.0
  %v3034 = vrcp.pop %v3033
  %v3035 = vmul.f32 1.0, %v3034
  %v3036 = vxor.u32 %v2957, 2147483648
  %v3037 = vmul.f32 %v3036, 1.442695
  %v3038 = vpow.pop %v3037
  %v3039 = vadd.f32 %v3038, 1.0
  %v3040 = vrcp.pop %v3039
  %v3041 = vmul.f32 1.0, %v3040
  %v3042 = vmul.f32 %v3035, %v3028
  %v3043 = vadd.f32 %v3026, %v3042
  %v3044 = vtanh.pop %v3043
  %v3045 = vsub.f32 1.0, %v3041
  %v3046 = vmul.f32 %v3045, %v3044
  %v3047 = vmul.f32 %v3041, %v1872
  %v3048 = vadd.f32 %v3046, %v3047
  %v3049 = vld [vmem:[%s1873] sm:$0xff]
  %v3050 = vld [vmem:[%s1873 + $0x8] sm:$0xff]
  %v3051 = vld [vmem:[%s1873 + $0x10] sm:$0xff]
  %v3052 = vld [vmem:[%s1873 + $0x18] sm:$0xff]
  %v3053 = vld [vmem:[%s1873 + $0x20] sm:$0xff]
  %v3054 = vld [vmem:[%s1873 + $0x28] sm:$0xff]
  %v3055 = vld [vmem:[%s1873 + $0x30] sm:$0xff]
  %v3056 = vld [vmem:[%s1873 + $0x38] sm:$0xff]
  %v3057 = vld [vmem:[%s1873 + $0x40] sm:$0xff]
  %v3058 = vld [vmem:[%s1873 + $0x48] sm:$0xff]
  %v3059 = vld [vmem:[%s1873 + $0x50] sm:$0xff]
  %v3060 = vld [vmem:[%s1873 + $0x58] sm:$0xff]
  %v3061 = vld [vmem:[%s1873 + $0x60] sm:$0xff]
  %v3062 = vld [vmem:[%s1873 + $0x68] sm:$0xff]
  %v3063 = vld [vmem:[%s1873 + $0x70] sm:$0xff]
  %v3064 = vld [vmem:[%s1873 + $0x78] sm:$0xff]
  %v3065 = vld [vmem:[%s1873 + $0x80] sm:$0xff]
  %v3066 = vld [vmem:[%s1873 + $0x88] sm:$0xff]
  %v3067 = vld [vmem:[%s1873 + $0x90] sm:$0xff]
  %v3068 = vld [vmem:[%s1873 + $0x98] sm:$0xff]
  %v3069 = vld [vmem:[%s1873 + $0xa0] sm:$0xff]
  %v3070 = vld [vmem:[%s1873 + $0xa8] sm:$0xff]
  %v3071 = vld [vmem:[%s1873 + $0xb0] sm:$0xff]
  %v3072 = vld [vmem:[%s1873 + $0xb8] sm:$0xff]
  %v3073 = vld [vmem:[%s1873 + $0xc0] sm:$0xff]
  %v3074 = vld [vmem:[%s1873 + $0xc8] sm:$0xff]
  %v3075 = vld [vmem:[%s1873 + $0xd0] sm:$0xff]
  %v3076 = vld [vmem:[%s1873 + $0xd8] sm:$0xff]
  %v3077 = vld [vmem:[%s1873 + $0xe0] sm:$0xff]
  %v3078 = vld [vmem:[%s1873 + $0xe8] sm:$0xff]
  %v3079 = vld [vmem:[%s1873 + $0xf0] sm:$0xff]
  %v3080 = vld [vmem:[%s1873 + $0xf8] sm:$0xff]
  %v3081 = vld [vmem:[%s1873 + $0x100] sm:$0xff]
  %v3082 = vld [vmem:[%s1873 + $0x108] sm:$0xff]
  %v3083 = vld [vmem:[%s1873 + $0x110] sm:$0xff]
  %v3084 = vld [vmem:[%s1873 + $0x118] sm:$0xff]
  %v3085 = vld [vmem:[%s1873 + $0x120] sm:$0xff]
  %v3086 = vld [vmem:[%s1873 + $0x128] sm:$0xff]
  %v3087 = vld [vmem:[%s1873 + $0x130] sm:$0xff]
  %v3088 = vld [vmem:[%s1873 + $0x138] sm:$0xff]
  %v3089 = vld [vmem:[%s1873 + $0x140] sm:$0xff]
  %v3090 = vld [vmem:[%s1873 + $0x148] sm:$0xff]
  %v3091 = vld [vmem:[%s1873 + $0x150] sm:$0xff]
  %v3092 = vld [vmem:[%s1873 + $0x158] sm:$0xff]
  %v3093 = vld [vmem:[%s1873 + $0x160] sm:$0xff]
  %v3094 = vld [vmem:[%s1873 + $0x168] sm:$0xff]
  %v3095 = vld [vmem:[%s1873 + $0x170] sm:$0xff]
  %v3096 = vld [vmem:[%s1873 + $0x178] sm:$0xff]
  %v3097 = vld [vmem:[%s1873 + $0x180] sm:$0xff]
  %v3098 = vld [vmem:[%s1873 + $0x188] sm:$0xff]
  %v3099 = vld [vmem:[%s1873 + $0x190] sm:$0xff]
  %v3100 = vld [vmem:[%s1873 + $0x198] sm:$0xff]
  %v3101 = vld [vmem:[%s1873 + $0x1a0] sm:$0xff]
  %v3102 = vld [vmem:[%s1873 + $0x1a8] sm:$0xff]
  %v3103 = vld [vmem:[%s1873 + $0x1b0] sm:$0xff]
  %v3104 = vld [vmem:[%s1873 + $0x1b8] sm:$0xff]
  %v3105 = vld [vmem:[%s1873 + $0x1c0] sm:$0xff]
  %v3106 = vld [vmem:[%s1873 + $0x1c8] sm:$0xff]
  %v3107 = vld [vmem:[%s1873 + $0x1d0] sm:$0xff]
  %v3108 = vld [vmem:[%s1873 + $0x1d8] sm:$0xff]
  %v3109 = vld [vmem:[%s1873 + $0x1e0] sm:$0xff]
  %v3110 = vld [vmem:[%s1873 + $0x1e8] sm:$0xff]
  %v3111 = vld [vmem:[%s1873 + $0x1f0] sm:$0xff]
  %v3112 = vld [vmem:[%s1873 + $0x1f8] sm:$0xff]
  %v3113 = vld [vmem:[%s1873 + $0x200] sm:$0xff]
  %v3114 = vld [vmem:[%s1873 + $0x208] sm:$0xff]
  %v3115 = vld [vmem:[%s1873 + $0x210] sm:$0xff]
  %v3116 = vld [vmem:[%s1873 + $0x218] sm:$0xff]
  %v3117 = vld [vmem:[%s1873 + $0x220] sm:$0xff]
  %v3118 = vld [vmem:[%s1873 + $0x228] sm:$0xff]
  %v3119 = vld [vmem:[%s1873 + $0x230] sm:$0xff]
  %v3120 = vld [vmem:[%s1873 + $0x238] sm:$0xff]
  %v3121 = vld [vmem:[%s1873 + $0x240] sm:$0xff]
  %v3122 = vld [vmem:[%s1873 + $0x248] sm:$0xff]
  %v3123 = vld [vmem:[%s1873 + $0x250] sm:$0xff]
  %v3124 = vld [vmem:[%s1873 + $0x258] sm:$0xff]
  %v3125 = vld [vmem:[%s1873 + $0x260] sm:$0xff]
  %v3126 = vld [vmem:[%s1873 + $0x268] sm:$0xff]
  %v3127 = vld [vmem:[%s1873 + $0x270] sm:$0xff]
  %v3128 = vld [vmem:[%s1873 + $0x278] sm:$0xff]
  %v3129 = vld [vmem:[%s1873 + $0x280] sm:$0xff]
  %v3130 = vld [vmem:[%s1873 + $0x288] sm:$0xff]
  %v3131 = vld [vmem:[%s1873 + $0x290] sm:$0xff]
  %v3132 = vld [vmem:[%s1873 + $0x298] sm:$0xff]
  %v3133 = vld [vmem:[%s1873 + $0x2a0] sm:$0xff]
  %v3134 = vld [vmem:[%s1873 + $0x2a8] sm:$0xff]
  %v3135 = vld [vmem:[%s1873 + $0x2b0] sm:$0xff]
  %v3136 = vld [vmem:[%s1873 + $0x2b8] sm:$0xff]
  %v3137 = vld [vmem:[%s1873 + $0x2c0] sm:$0xff]
  %v3138 = vld [vmem:[%s1873 + $0x2c8] sm:$0xff]
  %v3139 = vld [vmem:[%s1873 + $0x2d0] sm:$0xff]
  %v3140 = vld [vmem:[%s1873 + $0x2d8] sm:$0xff]
  %v3141 = vld [vmem:[%s1873 + $0x2e0] sm:$0xff]
  %v3142 = vld [vmem:[%s1873 + $0x2e8] sm:$0xff]
  %v3143 = vld [vmem:[%s1873 + $0x2f0] sm:$0xff]
  %v3144 = vld [vmem:[%s1873 + $0x2f8] sm:$0xff]
  %v3145 = vld [vmem:[%s1873 + $0x300] sm:$0xff]
  %v3146 = vld [vmem:[%s1873 + $0x308] sm:$0xff]
  %v3147 = vld [vmem:[%s1873 + $0x310] sm:$0xff]
  %v3148 = vld [vmem:[%s1873 + $0x318] sm:$0xff]
  %v3149 = vld [vmem:[%s1873 + $0x320] sm:$0xff]
  %v3150 = vld [vmem:[%s1873 + $0x328] sm:$0xff]
  %v3151 = vld [vmem:[%s1873 + $0x330] sm:$0xff]
  %v3152 = vld [vmem:[%s1873 + $0x338] sm:$0xff]
  %v3153 = vld [vmem:[%s1873 + $0x340] sm:$0xff]
  %v3154 = vld [vmem:[%s1873 + $0x348] sm:$0xff]
  %v3155 = vld [vmem:[%s1873 + $0x350] sm:$0xff]
  %v3156 = vld [vmem:[%s1873 + $0x358] sm:$0xff]
  %v3157 = vld [vmem:[%s1873 + $0x360] sm:$0xff]
  %v3158 = vld [vmem:[%s1873 + $0x368] sm:$0xff]
  %v3159 = vld [vmem:[%s1873 + $0x370] sm:$0xff]
  %v3160 = vld [vmem:[%s1873 + $0x378] sm:$0xff]
  %v3161 = vld [vmem:[%s1873 + $0x380] sm:$0xff]
  %v3162 = vld [vmem:[%s1873 + $0x388] sm:$0xff]
  %v3163 = vld [vmem:[%s1873 + $0x390] sm:$0xff]
  %v3164 = vld [vmem:[%s1873 + $0x398] sm:$0xff]
  %v3165 = vld [vmem:[%s1873 + $0x3a0] sm:$0xff]
  %v3166 = vld [vmem:[%s1873 + $0x3a8] sm:$0xff]
  %v3167 = vld [vmem:[%s1873 + $0x3b0] sm:$0xff]
  %v3168 = vld [vmem:[%s1873 + $0x3b8] sm:$0xff]
  %v3169 = vld [vmem:[%s1873 + $0x3c0] sm:$0xff]
  %v3170 = vld [vmem:[%s1873 + $0x3c8] sm:$0xff]
  %v3171 = vld [vmem:[%s1873 + $0x3d0] sm:$0xff]
  %v3172 = vld [vmem:[%s1873 + $0x3d8] sm:$0xff]
  %v3173 = vld [vmem:[%s1873 + $0x3e0] sm:$0xff]
  %v3174 = vld [vmem:[%s1873 + $0x3e8] sm:$0xff]
  %v3175 = vld [vmem:[%s1873 + $0x3f0] sm:$0xff]
  %v3176 = vld [vmem:[%s1873 + $0x3f8] sm:$0xff]
  %v3177 = vld [vmem:[%s2002] sm:$0xff]
  %v3178 = vld [vmem:[%s2002 + $0x8] sm:$0xff]
  %v3179 = vld [vmem:[%s2002 + $0x10] sm:$0xff]
  %v3180 = vld [vmem:[%s2002 + $0x18] sm:$0xff]
  %3181 = vmatprep.subr.mxu0 %v3050
  %3182 = vmatpush1.msra.mxu0 %v3049
  %3183 = vmatprep.subr.mxu0 %v3054
  %3184 = vmatpush1.msra.mxu0 %v3053
  %3185 = vmatprep.subr.mxu0 %v3058
  %3186 = vmatpush1.msra.mxu0 %v3057
  %3187 = vmatprep.subr.mxu0 %v3062
  %3188 = vmatpush1.msra.mxu0 %v3061
  %3189 = vmatprep.subr.mxu0 %v3066
  %3190 = vmatpush1.msra.mxu0 %v3065
  %3191 = vmatprep.subr.mxu0 %v3070
  %3192 = vmatpush1.msra.mxu0 %v3069
  %3193 = vmatprep.subr.mxu0 %v3074
  %3194 = vmatpush1.msra.mxu0 %v3073
  %3195 = vmatprep.subr.mxu0 %v3078
  %3196 = vmatpush1.msra.mxu0 %v3077
  %3197 = vmatprep.subr.mxu0 %v3082
  %3198 = vmatpush1.msra.mxu0 %v3081
  %3199 = vmatprep.subr.mxu0 %v3086
  %3200 = vmatpush1.msra.mxu0 %v3085
  %3201 = vmatprep.subr.mxu0 %v3090
  %3202 = vmatpush1.msra.mxu0 %v3089
  %3203 = vmatprep.subr.mxu0 %v3094
  %3204 = vmatpush1.msra.mxu0 %v3093
  %3205 = vmatprep.subr.mxu0 %v3098
  %3206 = vmatpush1.msra.mxu0 %v3097
  %3207 = vmatprep.subr.mxu0 %v3102
  %3208 = vmatpush1.msra.mxu0 %v3101
  %3209 = vmatprep.subr.mxu0 %v3106
  %3210 = vmatpush1.msra.mxu0 %v3105
  %3211 = vmatprep.subr.mxu0 %v3110
  %3212 = vmatpush1.msra.mxu0 %v3109
  %3213 = vmatprep.subr.mxu0 %v3114
  %3214 = vmatpush1.msra.mxu0 %v3113
  %3215 = vmatprep.subr.mxu0 %v3118
  %3216 = vmatpush1.msra.mxu0 %v3117
  %3217 = vmatprep.subr.mxu0 %v3122
  %3218 = vmatpush1.msra.mxu0 %v3121
  %3219 = vmatprep.subr.mxu0 %v3126
  %3220 = vmatpush1.msra.mxu0 %v3125
  %3221 = vmatprep.subr.mxu0 %v3130
  %3222 = vmatpush1.msra.mxu0 %v3129
  %3223 = vmatprep.subr.mxu0 %v3134
  %3224 = vmatpush1.msra.mxu0 %v3133
  %3225 = vmatprep.subr.mxu0 %v3138
  %3226 = vmatpush1.msra.mxu0 %v3137
  %3227 = vmatprep.subr.mxu0 %v3142
  %3228 = vmatpush1.msra.mxu0 %v3141
  %3229 = vmatprep.subr.mxu0 %v3146
  %3230 = vmatpush1.msra.mxu0 %v3145
  %3231 = vmatprep.subr.mxu0 %v3150
  %3232 = vmatpush1.msra.mxu0 %v3149
  %3233 = vmatprep.subr.mxu0 %v3154
  %3234 = vmatpush1.msra.mxu0 %v3153
  %3235 = vmatprep.subr.mxu0 %v3158
  %3236 = vmatpush1.msra.mxu0 %v3157
  %3237 = vmatprep.subr.mxu0 %v3162
  %3238 = vmatpush1.msra.mxu0 %v3161
  %3239 = vmatprep.subr.mxu0 %v3166
  %3240 = vmatpush1.msra.mxu0 %v3165
  %3241 = vmatprep.subr.mxu0 %v3170
  %3242 = vmatpush1.msra.mxu0 %v3169
  %3243 = vmatprep.subr.mxu0 %v3174
  %3244 = vmatpush1.msra.mxu0 %v3173
  %3245 = vmatprep.mubr.f32.mxu0 %v2167
  %3246 = vmatmul.mubr.f32.gmra.mrb[0].mxu0 %v1872
  %v3247 = vpop.f32.mrb[0].mxu0
  %v3248 = vadd.f32 %v3177, %v3247
  %v3249 = vpop.f32.mrb[0].mxu0
  %v3250 = vadd.f32 %v3178, %v3249
  %3251 = vdwg.mxu0
  %3252 = vmatprep.subr.mxu0 %v3052
  %3253 = vmatpush1.msra.mxu0 %v3051
  %3254 = vmatprep.subr.mxu0 %v3056
  %3255 = vmatpush1.msra.mxu0 %v3055
  %3256 = vmatprep.subr.mxu0 %v3060
  %3257 = vmatpush1.msra.mxu0 %v3059
  %3258 = vmatprep.subr.mxu0 %v3064
  %3259 = vmatpush1.msra.mxu0 %v3063
  %3260 = vmatprep.subr.mxu0 %v3068
  %3261 = vmatpush1.msra.mxu0 %v3067
  %3262 = vmatprep.subr.mxu0 %v3072
  %3263 = vmatpush1.msra.mxu0 %v3071
  %3264 = vmatprep.subr.mxu0 %v3076
  %3265 = vmatpush1.msra.mxu0 %v3075
  %3266 = vmatprep.subr.mxu0 %v3080
  %3267 = vmatpush1.msra.mxu0 %v3079
  %3268 = vmatprep.subr.mxu0 %v3084
  %3269 = vmatpush1.msra.mxu0 %v3083
  %3270 = vmatprep.subr.mxu0 %v3088
  %3271 = vmatpush1.msra.mxu0 %v3087
  %3272 = vmatprep.subr.mxu0 %v3092
  %3273 = vmatpush1.msra.mxu0 %v3091
  %3274 = vmatprep.subr.mxu0 %v3096
  %3275 = vmatpush1.msra.mxu0 %v3095
  %3276 = vmatprep.subr.mxu0 %v3100
  %3277 = vmatpush1.msra.mxu0 %v3099
  %3278 = vmatprep.subr.mxu0 %v3104
  %3279 = vmatpush1.msra.mxu0 %v3103
  %3280 = vmatprep.subr.mxu0 %v3108
  %3281 = vmatpush1.msra.mxu0 %v3107
  %3282 = vmatprep.subr.mxu0 %v3112
  %3283 = vmatpush1.msra.mxu0 %v3111
  %3284 = vmatprep.subr.mxu0 %v3116
  %3285 = vmatpush1.msra.mxu0 %v3115
  %3286 = vmatprep.subr.mxu0 %v3120
  %3287 = vmatpush1.msra.mxu0 %v3119
  %3288 = vmatprep.subr.mxu0 %v3124
  %3289 = vmatpush1.msra.mxu0 %v3123
  %3290 = vmatprep.subr.mxu0 %v3128
  %3291 = vmatpush1.msra.mxu0 %v3127
  %3292 = vmatprep.subr.mxu0 %v3132
  %3293 = vmatpush1.msra.mxu0 %v3131
  %3294 = vmatprep.subr.mxu0 %v3136
  %3295 = vmatpush1.msra.mxu0 %v3135
  %3296 = vmatprep.subr.mxu0 %v3140
  %3297 = vmatpush1.msra.mxu0 %v3139
  %3298 = vmatprep.subr.mxu0 %v3144
  %3299 = vmatpush1.msra.mxu0 %v3143
  %3300 = vmatprep.subr.mxu0 %v3148
  %3301 = vmatpush1.msra.mxu0 %v3147
  %3302 = vmatprep.subr.mxu0 %v3152
  %3303 = vmatpush1.msra.mxu0 %v3151
  %3304 = vmatprep.subr.mxu0 %v3156
  %3305 = vmatpush1.msra.mxu0 %v3155
  %3306 = vmatprep.subr.mxu0 %v3160
  %3307 = vmatpush1.msra.mxu0 %v3159
  %3308 = vmatprep.subr.mxu0 %v3164
  %3309 = vmatpush1.msra.mxu0 %v3163
  %3310 = vmatprep.subr.mxu0 %v3168
  %3311 = vmatpush1.msra.mxu0 %v3167
  %3312 = vmatprep.subr.mxu0 %v3172
  %3313 = vmatpush1.msra.mxu0 %v3171
  %3314 = vmatprep.subr.mxu0 %v3176
  %3315 = vmatpush1.msra.mxu0 %v3175
  %3316 = vmatprep.mubr.f32.mxu0 %v2167
  %3317 = vmatmul.mubr.f32.gmra.mrb[0].mxu0 %v1872
  %v3318 = vpop.f32.mrb[0].mxu0
  %v3319 = vadd.f32 %v3179, %v3318
  %v3320 = vpop.f32.mrb[0].mxu0
  %v3321 = vadd.f32 %v3180, %v3320
  %3322 = vdwg.mxu0
  %v3323 = vxor.u32 %v3248, 2147483648
  %v3324 = vmul.f32 %v3323, 1.442695
  %v3325 = vpow.pop %v3324
  %v3326 = vadd.f32 %v3325, 1.0
  %v3327 = vrcp.pop %v3326
  %v3328 = vmul.f32 1.0, %v3327
  %v3329 = vxor.u32 %v3250, 2147483648
  %v3330 = vmul.f32 %v3329, 1.442695
  %v3331 = vpow.pop %v3330
  %v3332 = vadd.f32 %v3331, 1.0
  %v3333 = vrcp.pop %v3332
  %v3334 = vmul.f32 1.0, %v3333
  %v3335 = vmul.f32 %v3328, %v3321
  %v3336 = vadd.f32 %v3319, %v3335
  %v3337 = vtanh.pop %v3336
  %v3338 = vsub.f32 1.0, %v3334
  %v3339 = vmul.f32 %v3338, %v3337
  %v3340 = vmul.f32 %v3334, %v2167
  %v3341 = vadd.f32 %v3339, %v3340
  %3342 = vst [vmem:[#allocation2 + $0x8] sm:$0xff] %v3341
  %v3343 = vld [vmem:[%s0 + $0x28] sm:$0xff]
  %v3344 = vld [vmem:[%s1] sm:$0xff]
  %v3345 = vld [vmem:[%s1 + $0x8] sm:$0xff]
  %v3346 = vld [vmem:[%s1 + $0x10] sm:$0xff]
  %v3347 = vld [vmem:[%s1 + $0x18] sm:$0xff]
  %v3348 = vld [vmem:[%s1 + $0x20] sm:$0xff]
  %v3349 = vld [vmem:[%s1 + $0x28] sm:$0xff]
  %v3350 = vld [vmem:[%s1 + $0x30] sm:$0xff]
  %v3351 = vld [vmem:[%s1 + $0x38] sm:$0xff]
  %v3352 = vld [vmem:[%s1 + $0x40] sm:$0xff]
  %v3353 = vld [vmem:[%s1 + $0x48] sm:$0xff]
  %v3354 = vld [vmem:[%s1 + $0x50] sm:$0xff]
  %v3355 = vld [vmem:[%s1 + $0x58] sm:$0xff]
  %v3356 = vld [vmem:[%s1 + $0x60] sm:$0xff]
  %v3357 = vld [vmem:[%s1 + $0x68] sm:$0xff]
  %v3358 = vld [vmem:[%s1 + $0x70] sm:$0xff]
  %v3359 = vld [vmem:[%s1 + $0x78] sm:$0xff]
  %v3360 = vld [vmem:[%s1 + $0x80] sm:$0xff]
  %v3361 = vld [vmem:[%s1 + $0x88] sm:$0xff]
  %v3362 = vld [vmem:[%s1 + $0x90] sm:$0xff]
  %v3363 = vld [vmem:[%s1 + $0x98] sm:$0xff]
  %v3364 = vld [vmem:[%s1 + $0xa0] sm:$0xff]
  %v3365 = vld [vmem:[%s1 + $0xa8] sm:$0xff]
  %v3366 = vld [vmem:[%s1 + $0xb0] sm:$0xff]
  %v3367 = vld [vmem:[%s1 + $0xb8] sm:$0xff]
  %v3368 = vld [vmem:[%s1 + $0xc0] sm:$0xff]
  %v3369 = vld [vmem:[%s1 + $0xc8] sm:$0xff]
  %v3370 = vld [vmem:[%s1 + $0xd0] sm:$0xff]
  %v3371 = vld [vmem:[%s1 + $0xd8] sm:$0xff]
  %v3372 = vld [vmem:[%s1 + $0xe0] sm:$0xff]
  %v3373 = vld [vmem:[%s1 + $0xe8] sm:$0xff]
  %v3374 = vld [vmem:[%s1 + $0xf0] sm:$0xff]
  %v3375 = vld [vmem:[%s1 + $0xf8] sm:$0xff]
  %v3376 = vld [vmem:[%s1 + $0x100] sm:$0xff]
  %v3377 = vld [vmem:[%s1 + $0x108] sm:$0xff]
  %v3378 = vld [vmem:[%s1 + $0x110] sm:$0xff]
  %v3379 = vld [vmem:[%s1 + $0x118] sm:$0xff]
  %v3380 = vld [vmem:[%s1 + $0x120] sm:$0xff]
  %v3381 = vld [vmem:[%s1 + $0x128] sm:$0xff]
  %v3382 = vld [vmem:[%s1 + $0x130] sm:$0xff]
  %v3383 = vld [vmem:[%s1 + $0x138] sm:$0xff]
  %v3384 = vld [vmem:[%s1 + $0x140] sm:$0xff]
  %v3385 = vld [vmem:[%s1 + $0x148] sm:$0xff]
  %v3386 = vld [vmem:[%s1 + $0x150] sm:$0xff]
  %v3387 = vld [vmem:[%s1 + $0x158] sm:$0xff]
  %v3388 = vld [vmem:[%s1 + $0x160] sm:$0xff]
  %v3389 = vld [vmem:[%s1 + $0x168] sm:$0xff]
  %v3390 = vld [vmem:[%s1 + $0x170] sm:$0xff]
  %v3391 = vld [vmem:[%s1 + $0x178] sm:$0xff]
  %v3392 = vld [vmem:[%s1 + $0x180] sm:$0xff]
  %v3393 = vld [vmem:[%s1 + $0x188] sm:$0xff]
  %v3394 = vld [vmem:[%s1 + $0x190] sm:$0xff]
  %v3395 = vld [vmem:[%s1 + $0x198] sm:$0xff]
  %v3396 = vld [vmem:[%s1 + $0x1a0] sm:$0xff]
  %v3397 = vld [vmem:[%s1 + $0x1a8] sm:$0xff]
  %v3398 = vld [vmem:[%s1 + $0x1b0] sm:$0xff]
  %v3399 = vld [vmem:[%s1 + $0x1b8] sm:$0xff]
  %v3400 = vld [vmem:[%s1 + $0x1c0] sm:$0xff]
  %v3401 = vld [vmem:[%s1 + $0x1c8] sm:$0xff]
  %v3402 = vld [vmem:[%s1 + $0x1d0] sm:$0xff]
  %v3403 = vld [vmem:[%s1 + $0x1d8] sm:$0xff]
  %v3404 = vld [vmem:[%s1 + $0x1e0] sm:$0xff]
  %v3405 = vld [vmem:[%s1 + $0x1e8] sm:$0xff]
  %v3406 = vld [vmem:[%s1 + $0x1f0] sm:$0xff]
  %v3407 = vld [vmem:[%s1 + $0x1f8] sm:$0xff]
  %v3408 = vld [vmem:[%s1 + $0x200] sm:$0xff]
  %v3409 = vld [vmem:[%s1 + $0x208] sm:$0xff]
  %v3410 = vld [vmem:[%s1 + $0x210] sm:$0xff]
  %v3411 = vld [vmem:[%s1 + $0x218] sm:$0xff]
  %v3412 = vld [vmem:[%s1 + $0x220] sm:$0xff]
  %v3413 = vld [vmem:[%s1 + $0x228] sm:$0xff]
  %v3414 = vld [vmem:[%s1 + $0x230] sm:$0xff]
  %v3415 = vld [vmem:[%s1 + $0x238] sm:$0xff]
  %v3416 = vld [vmem:[%s1 + $0x240] sm:$0xff]
  %v3417 = vld [vmem:[%s1 + $0x248] sm:$0xff]
  %v3418 = vld [vmem:[%s1 + $0x250] sm:$0xff]
  %v3419 = vld [vmem:[%s1 + $0x258] sm:$0xff]
  %v3420 = vld [vmem:[%s1 + $0x260] sm:$0xff]
  %v3421 = vld [vmem:[%s1 + $0x268] sm:$0xff]
  %v3422 = vld [vmem:[%s1 + $0x270] sm:$0xff]
  %v3423 = vld [vmem:[%s1 + $0x278] sm:$0xff]
  %v3424 = vld [vmem:[%s1 + $0x280] sm:$0xff]
  %v3425 = vld [vmem:[%s1 + $0x288] sm:$0xff]
  %v3426 = vld [vmem:[%s1 + $0x290] sm:$0xff]
  %v3427 = vld [vmem:[%s1 + $0x298] sm:$0xff]
  %v3428 = vld [vmem:[%s1 + $0x2a0] sm:$0xff]
  %v3429 = vld [vmem:[%s1 + $0x2a8] sm:$0xff]
  %v3430 = vld [vmem:[%s1 + $0x2b0] sm:$0xff]
  %v3431 = vld [vmem:[%s1 + $0x2b8] sm:$0xff]
  %v3432 = vld [vmem:[%s1 + $0x2c0] sm:$0xff]
  %v3433 = vld [vmem:[%s1 + $0x2c8] sm:$0xff]
  %v3434 = vld [vmem:[%s1 + $0x2d0] sm:$0xff]
  %v3435 = vld [vmem:[%s1 + $0x2d8] sm:$0xff]
  %v3436 = vld [vmem:[%s1 + $0x2e0] sm:$0xff]
  %v3437 = vld [vmem:[%s1 + $0x2e8] sm:$0xff]
  %v3438 = vld [vmem:[%s1 + $0x2f0] sm:$0xff]
  %v3439 = vld [vmem:[%s1 + $0x2f8] sm:$0xff]
  %v3440 = vld [vmem:[%s1 + $0x300] sm:$0xff]
  %v3441 = vld [vmem:[%s1 + $0x308] sm:$0xff]
  %v3442 = vld [vmem:[%s1 + $0x310] sm:$0xff]
  %v3443 = vld [vmem:[%s1 + $0x318] sm:$0xff]
  %v3444 = vld [vmem:[%s1 + $0x320] sm:$0xff]
  %v3445 = vld [vmem:[%s1 + $0x328] sm:$0xff]
  %v3446 = vld [vmem:[%s1 + $0x330] sm:$0xff]
  %v3447 = vld [vmem:[%s1 + $0x338] sm:$0xff]
  %v3448 = vld [vmem:[%s1 + $0x340] sm:$0xff]
  %v3449 = vld [vmem:[%s1 + $0x348] sm:$0xff]
  %v3450 = vld [vmem:[%s1 + $0x350] sm:$0xff]
  %v3451 = vld [vmem:[%s1 + $0x358] sm:$0xff]
  %v3452 = vld [vmem:[%s1 + $0x360] sm:$0xff]
  %v3453 = vld [vmem:[%s1 + $0x368] sm:$0xff]
  %v3454 = vld [vmem:[%s1 + $0x370] sm:$0xff]
  %v3455 = vld [vmem:[%s1 + $0x378] sm:$0xff]
  %v3456 = vld [vmem:[%s1 + $0x380] sm:$0xff]
  %v3457 = vld [vmem:[%s1 + $0x388] sm:$0xff]
  %v3458 = vld [vmem:[%s1 + $0x390] sm:$0xff]
  %v3459 = vld [vmem:[%s1 + $0x398] sm:$0xff]
  %v3460 = vld [vmem:[%s1 + $0x3a0] sm:$0xff]
  %v3461 = vld [vmem:[%s1 + $0x3a8] sm:$0xff]
  %v3462 = vld [vmem:[%s1 + $0x3b0] sm:$0xff]
  %v3463 = vld [vmem:[%s1 + $0x3b8] sm:$0xff]
  %v3464 = vld [vmem:[%s1 + $0x3c0] sm:$0xff]
  %v3465 = vld [vmem:[%s1 + $0x3c8] sm:$0xff]
  %v3466 = vld [vmem:[%s1 + $0x3d0] sm:$0xff]
  %v3467 = vld [vmem:[%s1 + $0x3d8] sm:$0xff]
  %v3468 = vld [vmem:[%s1 + $0x3e0] sm:$0xff]
  %v3469 = vld [vmem:[%s1 + $0x3e8] sm:$0xff]
  %v3470 = vld [vmem:[%s1 + $0x3f0] sm:$0xff]
  %v3471 = vld [vmem:[%s1 + $0x3f8] sm:$0xff]
  %v3472 = vld [vmem:[%s2] sm:$0xff]
  %v3473 = vld [vmem:[%s2 + $0x8] sm:$0xff]
  %v3474 = vld [vmem:[%s2 + $0x10] sm:$0xff]
  %v3475 = vld [vmem:[%s2 + $0x18] sm:$0xff]
  %3476 = vmatprep.subr.mxu0 %v3345
  %3477 = vmatpush1.msra.mxu0 %v3344
  %3478 = vmatprep.subr.mxu0 %v3349
  %3479 = vmatpush1.msra.mxu0 %v3348
  %3480 = vmatprep.subr.mxu0 %v3353
  %3481 = vmatpush1.msra.mxu0 %v3352
  %3482 = vmatprep.subr.mxu0 %v3357
  %3483 = vmatpush1.msra.mxu0 %v3356
  %3484 = vmatprep.subr.mxu0 %v3361
  %3485 = vmatpush1.msra.mxu0 %v3360
  %3486 = vmatprep.subr.mxu0 %v3365
  %3487 = vmatpush1.msra.mxu0 %v3364
  %3488 = vmatprep.subr.mxu0 %v3369
  %3489 = vmatpush1.msra.mxu0 %v3368
  %3490 = vmatprep.subr.mxu0 %v3373
  %3491 = vmatpush1.msra.mxu0 %v3372
  %3492 = vmatprep.subr.mxu0 %v3377
  %3493 = vmatpush1.msra.mxu0 %v3376
  %3494 = vmatprep.subr.mxu0 %v3381
  %3495 = vmatpush1.msra.mxu0 %v3380
  %3496 = vmatprep.subr.mxu0 %v3385
  %3497 = vmatpush1.msra.mxu0 %v3384
  %3498 = vmatprep.subr.mxu0 %v3389
  %3499 = vmatpush1.msra.mxu0 %v3388
  %3500 = vmatprep.subr.mxu0 %v3393
  %3501 = vmatpush1.msra.mxu0 %v3392
  %3502 = vmatprep.subr.mxu0 %v3397
  %3503 = vmatpush1.msra.mxu0 %v3396
  %3504 = vmatprep.subr.mxu0 %v3401
  %3505 = vmatpush1.msra.mxu0 %v3400
  %3506 = vmatprep.subr.mxu0 %v3405
  %3507 = vmatpush1.msra.mxu0 %v3404
  %3508 = vmatprep.subr.mxu0 %v3409
  %3509 = vmatpush1.msra.mxu0 %v3408
  %3510 = vmatprep.subr.mxu0 %v3413
  %3511 = vmatpush1.msra.mxu0 %v3412
  %3512 = vmatprep.subr.mxu0 %v3417
  %3513 = vmatpush1.msra.mxu0 %v3416
  %3514 = vmatprep.subr.mxu0 %v3421
  %3515 = vmatpush1.msra.mxu0 %v3420
  %3516 = vmatprep.subr.mxu0 %v3425
  %3517 = vmatpush1.msra.mxu0 %v3424
  %3518 = vmatprep.subr.mxu0 %v3429
  %3519 = vmatpush1.msra.mxu0 %v3428
  %3520 = vmatprep.subr.mxu0 %v3433
  %3521 = vmatpush1.msra.mxu0 %v3432
  %3522 = vmatprep.subr.mxu0 %v3437
  %3523 = vmatpush1.msra.mxu0 %v3436
  %3524 = vmatprep.subr.mxu0 %v3441
  %3525 = vmatpush1.msra.mxu0 %v3440
  %3526 = vmatprep.subr.mxu0 %v3445
  %3527 = vmatpush1.msra.mxu0 %v3444
  %3528 = vmatprep.subr.mxu0 %v3449
  %3529 = vmatpush1.msra.mxu0 %v3448
  %3530 = vmatprep.subr.mxu0 %v3453
  %3531 = vmatpush1.msra.mxu0 %v3452
  %3532 = vmatprep.subr.mxu0 %v3457
  %3533 = vmatpush1.msra.mxu0 %v3456
  %3534 = vmatprep.subr.mxu0 %v3461
  %3535 = vmatpush1.msra.mxu0 %v3460
  %3536 = vmatprep.subr.mxu0 %v3465
  %3537 = vmatpush1.msra.mxu0 %v3464
  %3538 = vmatprep.subr.mxu0 %v3469
  %3539 = vmatpush1.msra.mxu0 %v3468
  %3540 = vmatprep.mubr.f32.mxu0 %v2462
  %3541 = vmatmul.mubr.f32.gmra.mrb[0].mxu0 %v3343
  %v3542 = vpop.f32.mrb[0].mxu0
  %v3543 = vadd.f32 %v3472, %v3542
  %v3544 = vpop.f32.mrb[0].mxu0
  %v3545 = vadd.f32 %v3473, %v3544
  %3546 = vdwg.mxu0
  %3547 = vmatprep.subr.mxu0 %v3347
  %3548 = vmatpush1.msra.mxu0 %v3346
  %3549 = vmatprep.subr.mxu0 %v3351
  %3550 = vmatpush1.msra.mxu0 %v3350
  %3551 = vmatprep.subr.mxu0 %v3355
  %3552 = vmatpush1.msra.mxu0 %v3354
  %3553 = vmatprep.subr.mxu0 %v3359
  %3554 = vmatpush1.msra.mxu0 %v3358
  %3555 = vmatprep.subr.mxu0 %v3363
  %3556 = vmatpush1.msra.mxu0 %v3362
  %3557 = vmatprep.subr.mxu0 %v3367
  %3558 = vmatpush1.msra.mxu0 %v3366
  %3559 = vmatprep.subr.mxu0 %v3371
  %3560 = vmatpush1.msra.mxu0 %v3370
  %3561 = vmatprep.subr.mxu0 %v3375
  %3562 = vmatpush1.msra.mxu0 %v3374
  %3563 = vmatprep.subr.mxu0 %v3379
  %3564 = vmatpush1.msra.mxu0 %v3378
  %3565 = vmatprep.subr.mxu0 %v3383
  %3566 = vmatpush1.msra.mxu0 %v3382
  %3567 = vmatprep.subr.mxu0 %v3387
  %3568 = vmatpush1.msra.mxu0 %v3386
  %3569 = vmatprep.subr.mxu0 %v3391
  %3570 = vmatpush1.msra.mxu0 %v3390
  %3571 = vmatprep.subr.mxu0 %v3395
  %3572 = vmatpush1.msra.mxu0 %v3394
  %3573 = vmatprep.subr.mxu0 %v3399
  %3574 = vmatpush1.msra.mxu0 %v3398
  %3575 = vmatprep.subr.mxu0 %v3403
  %3576 = vmatpush1.msra.mxu0 %v3402
  %3577 = vmatprep.subr.mxu0 %v3407
  %3578 = vmatpush1.msra.mxu0 %v3406
  %3579 = vmatprep.subr.mxu0 %v3411
  %3580 = vmatpush1.msra.mxu0 %v3410
  %3581 = vmatprep.subr.mxu0 %v3415
  %3582 = vmatpush1.msra.mxu0 %v3414
  %3583 = vmatprep.subr.mxu0 %v3419
  %3584 = vmatpush1.msra.mxu0 %v3418
  %3585 = vmatprep.subr.mxu0 %v3423
  %3586 = vmatpush1.msra.mxu0 %v3422
  %3587 = vmatprep.subr.mxu0 %v3427
  %3588 = vmatpush1.msra.mxu0 %v3426
  %3589 = vmatprep.subr.mxu0 %v3431
  %3590 = vmatpush1.msra.mxu0 %v3430
  %3591 = vmatprep.subr.mxu0 %v3435
  %3592 = vmatpush1.msra.mxu0 %v3434
  %3593 = vmatprep.subr.mxu0 %v3439
  %3594 = vmatpush1.msra.mxu0 %v3438
  %3595 = vmatprep.subr.mxu0 %v3443
  %3596 = vmatpush1.msra.mxu0 %v3442
  %3597 = vmatprep.subr.mxu0 %v3447
  %3598 = vmatpush1.msra.mxu0 %v3446
  %3599 = vmatprep.subr.mxu0 %v3451
  %3600 = vmatpush1.msra.mxu0 %v3450
  %3601 = vmatprep.subr.mxu0 %v3455
  %3602 = vmatpush1.msra.mxu0 %v3454
  %3603 = vmatprep.subr.mxu0 %v3459
  %3604 = vmatpush1.msra.mxu0 %v3458
  %3605 = vmatprep.subr.mxu0 %v3463
  %3606 = vmatpush1.msra.mxu0 %v3462
  %3607 = vmatprep.subr.mxu0 %v3467
  %3608 = vmatpush1.msra.mxu0 %v3466
  %3609 = vmatprep.subr.mxu0 %v3471
  %3610 = vmatpush1.msra.mxu0 %v3470
  %3611 = vmatprep.mubr.f32.mxu0 %v2462
  %3612 = vmatmul.mubr.f32.gmra.mrb[0].mxu0 %v3343
  %v3613 = vpop.f32.mrb[0].mxu0
  %v3614 = vadd.f32 %v3474, %v3613
  %v3615 = vpop.f32.mrb[0].mxu0
  %v3616 = vadd.f32 %v3475, %v3615
  %3617 = vdwg.mxu0
  %v3618 = vxor.u32 %v3543, 2147483648
  %v3619 = vmul.f32 %v3618, 1.442695
  %v3620 = vpow.pop %v3619
  %v3621 = vadd.f32 %v3620, 1.0
  %v3622 = vrcp.pop %v3621
  %v3623 = vmul.f32 1.0, %v3622
  %v3624 = vxor.u32 %v3545, 2147483648
  %v3625 = vmul.f32 %v3624, 1.442695
  %v3626 = vpow.pop %v3625
  %v3627 = vadd.f32 %v3626, 1.0
  %v3628 = vrcp.pop %v3627
  %v3629 = vmul.f32 1.0, %v3628
  %v3630 = vmul.f32 %v3623, %v3616
  %v3631 = vadd.f32 %v3614, %v3630
  %v3632 = vtanh.pop %v3631
  %v3633 = vsub.f32 1.0, %v3629
  %v3634 = vmul.f32 %v3633, %v3632
  %v3635 = vmul.f32 %v3629, %v2462
  %v3636 = vadd.f32 %v3634, %v3635
  %v3637 = vld [vmem:[%s476] sm:$0xff]
  %v3638 = vld [vmem:[%s476 + $0x8] sm:$0xff]
  %v3639 = vld [vmem:[%s476 + $0x10] sm:$0xff]
  %v3640 = vld [vmem:[%s476 + $0x18] sm:$0xff]
  %v3641 = vld [vmem:[%s476 + $0x20] sm:$0xff]
  %v3642 = vld [vmem:[%s476 + $0x28] sm:$0xff]
  %v3643 = vld [vmem:[%s476 + $0x30] sm:$0xff]
  %v3644 = vld [vmem:[%s476 + $0x38] sm:$0xff]
  %v3645 = vld [vmem:[%s476 + $0x40] sm:$0xff]
  %v3646 = vld [vmem:[%s476 + $0x48] sm:$0xff]
  %v3647 = vld [vmem:[%s476 + $0x50] sm:$0xff]
  %v3648 = vld [vmem:[%s476 + $0x58] sm:$0xff]
  %v3649 = vld [vmem:[%s476 + $0x60] sm:$0xff]
  %v3650 = vld [vmem:[%s476 + $0x68] sm:$0xff]
  %v3651 = vld [vmem:[%s476 + $0x70] sm:$0xff]
  %v3652 = vld [vmem:[%s476 + $0x78] sm:$0xff]
  %v3653 = vld [vmem:[%s476 + $0x80] sm:$0xff]
  %v3654 = vld [vmem:[%s476 + $0x88] sm:$0xff]
  %v3655 = vld [vmem:[%s476 + $0x90] sm:$0xff]
  %v3656 = vld [vmem:[%s476 + $0x98] sm:$0xff]
  %v3657 = vld [vmem:[%s476 + $0xa0] sm:$0xff]
  %v3658 = vld [vmem:[%s476 + $0xa8] sm:$0xff]
  %v3659 = vld [vmem:[%s476 + $0xb0] sm:$0xff]
  %v3660 = vld [vmem:[%s476 + $0xb8] sm:$0xff]
  %v3661 = vld [vmem:[%s476 + $0xc0] sm:$0xff]
  %v3662 = vld [vmem:[%s476 + $0xc8] sm:$0xff]
  %v3663 = vld [vmem:[%s476 + $0xd0] sm:$0xff]
  %v3664 = vld [vmem:[%s476 + $0xd8] sm:$0xff]
  %v3665 = vld [vmem:[%s476 + $0xe0] sm:$0xff]
  %v3666 = vld [vmem:[%s476 + $0xe8] sm:$0xff]
  %v3667 = vld [vmem:[%s476 + $0xf0] sm:$0xff]
  %v3668 = vld [vmem:[%s476 + $0xf8] sm:$0xff]
  %v3669 = vld [vmem:[%s476 + $0x100] sm:$0xff]
  %v3670 = vld [vmem:[%s476 + $0x108] sm:$0xff]
  %v3671 = vld [vmem:[%s476 + $0x110] sm:$0xff]
  %v3672 = vld [vmem:[%s476 + $0x118] sm:$0xff]
  %v3673 = vld [vmem:[%s476 + $0x120] sm:$0xff]
  %v3674 = vld [vmem:[%s476 + $0x128] sm:$0xff]
  %v3675 = vld [vmem:[%s476 + $0x130] sm:$0xff]
  %v3676 = vld [vmem:[%s476 + $0x138] sm:$0xff]
  %v3677 = vld [vmem:[%s476 + $0x140] sm:$0xff]
  %v3678 = vld [vmem:[%s476 + $0x148] sm:$0xff]
  %v3679 = vld [vmem:[%s476 + $0x150] sm:$0xff]
  %v3680 = vld [vmem:[%s476 + $0x158] sm:$0xff]
  %v3681 = vld [vmem:[%s476 + $0x160] sm:$0xff]
  %v3682 = vld [vmem:[%s476 + $0x168] sm:$0xff]
  %v3683 = vld [vmem:[%s476 + $0x170] sm:$0xff]
  %v3684 = vld [vmem:[%s476 + $0x178] sm:$0xff]
  %v3685 = vld [vmem:[%s476 + $0x180] sm:$0xff]
  %v3686 = vld [vmem:[%s476 + $0x188] sm:$0xff]
  %v3687 = vld [vmem:[%s476 + $0x190] sm:$0xff]
  %v3688 = vld [vmem:[%s476 + $0x198] sm:$0xff]
  %v3689 = vld [vmem:[%s476 + $0x1a0] sm:$0xff]
  %v3690 = vld [vmem:[%s476 + $0x1a8] sm:$0xff]
  %v3691 = vld [vmem:[%s476 + $0x1b0] sm:$0xff]
  %v3692 = vld [vmem:[%s476 + $0x1b8] sm:$0xff]
  %v3693 = vld [vmem:[%s476 + $0x1c0] sm:$0xff]
  %v3694 = vld [vmem:[%s476 + $0x1c8] sm:$0xff]
  %v3695 = vld [vmem:[%s476 + $0x1d0] sm:$0xff]
  %v3696 = vld [vmem:[%s476 + $0x1d8] sm:$0xff]
  %v3697 = vld [vmem:[%s476 + $0x1e0] sm:$0xff]
  %v3698 = vld [vmem:[%s476 + $0x1e8] sm:$0xff]
  %v3699 = vld [vmem:[%s476 + $0x1f0] sm:$0xff]
  %v3700 = vld [vmem:[%s476 + $0x1f8] sm:$0xff]
  %v3701 = vld [vmem:[%s476 + $0x200] sm:$0xff]
  %v3702 = vld [vmem:[%s476 + $0x208] sm:$0xff]
  %v3703 = vld [vmem:[%s476 + $0x210] sm:$0xff]
  %v3704 = vld [vmem:[%s476 + $0x218] sm:$0xff]
  %v3705 = vld [vmem:[%s476 + $0x220] sm:$0xff]
  %v3706 = vld [vmem:[%s476 + $0x228] sm:$0xff]
  %v3707 = vld [vmem:[%s476 + $0x230] sm:$0xff]
  %v3708 = vld [vmem:[%s476 + $0x238] sm:$0xff]
  %v3709 = vld [vmem:[%s476 + $0x240] sm:$0xff]
  %v3710 = vld [vmem:[%s476 + $0x248] sm:$0xff]
  %v3711 = vld [vmem:[%s476 + $0x250] sm:$0xff]
  %v3712 = vld [vmem:[%s476 + $0x258] sm:$0xff]
  %v3713 = vld [vmem:[%s476 + $0x260] sm:$0xff]
  %v3714 = vld [vmem:[%s476 + $0x268] sm:$0xff]
  %v3715 = vld [vmem:[%s476 + $0x270] sm:$0xff]
  %v3716 = vld [vmem:[%s476 + $0x278] sm:$0xff]
  %v3717 = vld [vmem:[%s476 + $0x280] sm:$0xff]
  %v3718 = vld [vmem:[%s476 + $0x288] sm:$0xff]
  %v3719 = vld [vmem:[%s476 + $0x290] sm:$0xff]
  %v3720 = vld [vmem:[%s476 + $0x298] sm:$0xff]
  %v3721 = vld [vmem:[%s476 + $0x2a0] sm:$0xff]
  %v3722 = vld [vmem:[%s476 + $0x2a8] sm:$0xff]
  %v3723 = vld [vmem:[%s476 + $0x2b0] sm:$0xff]
  %v3724 = vld [vmem:[%s476 + $0x2b8] sm:$0xff]
  %v3725 = vld [vmem:[%s476 + $0x2c0] sm:$0xff]
  %v3726 = vld [vmem:[%s476 + $0x2c8] sm:$0xff]
  %v3727 = vld [vmem:[%s476 + $0x2d0] sm:$0xff]
  %v3728 = vld [vmem:[%s476 + $0x2d8] sm:$0xff]
  %v3729 = vld [vmem:[%s476 + $0x2e0] sm:$0xff]
  %v3730 = vld [vmem:[%s476 + $0x2e8] sm:$0xff]
  %v3731 = vld [vmem:[%s476 + $0x2f0] sm:$0xff]
  %v3732 = vld [vmem:[%s476 + $0x2f8] sm:$0xff]
  %v3733 = vld [vmem:[%s476 + $0x300] sm:$0xff]
  %v3734 = vld [vmem:[%s476 + $0x308] sm:$0xff]
  %v3735 = vld [vmem:[%s476 + $0x310] sm:$0xff]
  %v3736 = vld [vmem:[%s476 + $0x318] sm:$0xff]
  %v3737 = vld [vmem:[%s476 + $0x320] sm:$0xff]
  %v3738 = vld [vmem:[%s476 + $0x328] sm:$0xff]
  %v3739 = vld [vmem:[%s476 + $0x330] sm:$0xff]
  %v3740 = vld [vmem:[%s476 + $0x338] sm:$0xff]
  %v3741 = vld [vmem:[%s476 + $0x340] sm:$0xff]
  %v3742 = vld [vmem:[%s476 + $0x348] sm:$0xff]
  %v3743 = vld [vmem:[%s476 + $0x350] sm:$0xff]
  %v3744 = vld [vmem:[%s476 + $0x358] sm:$0xff]
  %v3745 = vld [vmem:[%s476 + $0x360] sm:$0xff]
  %v3746 = vld [vmem:[%s476 + $0x368] sm:$0xff]
  %v3747 = vld [vmem:[%s476 + $0x370] sm:$0xff]
  %v3748 = vld [vmem:[%s476 + $0x378] sm:$0xff]
  %v3749 = vld [vmem:[%s476 + $0x380] sm:$0xff]
  %v3750 = vld [vmem:[%s476 + $0x388] sm:$0xff]
  %v3751 = vld [vmem:[%s476 + $0x390] sm:$0xff]
  %v3752 = vld [vmem:[%s476 + $0x398] sm:$0xff]
  %v3753 = vld [vmem:[%s476 + $0x3a0] sm:$0xff]
  %v3754 = vld [vmem:[%s476 + $0x3a8] sm:$0xff]
  %v3755 = vld [vmem:[%s476 + $0x3b0] sm:$0xff]
  %v3756 = vld [vmem:[%s476 + $0x3b8] sm:$0xff]
  %v3757 = vld [vmem:[%s476 + $0x3c0] sm:$0xff]
  %v3758 = vld [vmem:[%s476 + $0x3c8] sm:$0xff]
  %v3759 = vld [vmem:[%s476 + $0x3d0] sm:$0xff]
  %v3760 = vld [vmem:[%s476 + $0x3d8] sm:$0xff]
  %v3761 = vld [vmem:[%s476 + $0x3e0] sm:$0xff]
  %v3762 = vld [vmem:[%s476 + $0x3e8] sm:$0xff]
  %v3763 = vld [vmem:[%s476 + $0x3f0] sm:$0xff]
  %v3764 = vld [vmem:[%s476 + $0x3f8] sm:$0xff]
  %v3765 = vld [vmem:[%s605] sm:$0xff]
  %v3766 = vld [vmem:[%s605 + $0x8] sm:$0xff]
  %v3767 = vld [vmem:[%s605 + $0x10] sm:$0xff]
  %v3768 = vld [vmem:[%s605 + $0x18] sm:$0xff]
  %3769 = vmatprep.subr.mxu0 %v3638
  %3770 = vmatpush1.msra.mxu0 %v3637
  %3771 = vmatprep.subr.mxu0 %v3642
  %3772 = vmatpush1.msra.mxu0 %v3641
  %3773 = vmatprep.subr.mxu0 %v3646
  %3774 = vmatpush1.msra.mxu0 %v3645
  %3775 = vmatprep.subr.mxu0 %v3650
  %3776 = vmatpush1.msra.mxu0 %v3649
  %3777 = vmatprep.subr.mxu0 %v3654
  %3778 = vmatpush1.msra.mxu0 %v3653
  %3779 = vmatprep.subr.mxu0 %v3658
  %3780 = vmatpush1.msra.mxu0 %v3657
  %3781 = vmatprep.subr.mxu0 %v3662
  %3782 = vmatpush1.msra.mxu0 %v3661
  %3783 = vmatprep.subr.mxu0 %v3666
  %3784 = vmatpush1.msra.mxu0 %v3665
  %3785 = vmatprep.subr.mxu0 %v3670
  %3786 = vmatpush1.msra.mxu0 %v3669
  %3787 = vmatprep.subr.mxu0 %v3674
  %3788 = vmatpush1.msra.mxu0 %v3673
  %3789 = vmatprep.subr.mxu0 %v3678
  %3790 = vmatpush1.msra.mxu0 %v3677
  %3791 = vmatprep.subr.mxu0 %v3682
  %3792 = vmatpush1.msra.mxu0 %v3681
  %3793 = vmatprep.subr.mxu0 %v3686
  %3794 = vmatpush1.msra.mxu0 %v3685
  %3795 = vmatprep.subr.mxu0 %v3690
  %3796 = vmatpush1.msra.mxu0 %v3689
  %3797 = vmatprep.subr.mxu0 %v3694
  %3798 = vmatpush1.msra.mxu0 %v3693
  %3799 = vmatprep.subr.mxu0 %v3698
  %3800 = vmatpush1.msra.mxu0 %v3697
  %3801 = vmatprep.subr.mxu0 %v3702
  %3802 = vmatpush1.msra.mxu0 %v3701
  %3803 = vmatprep.subr.mxu0 %v3706
  %3804 = vmatpush1.msra.mxu0 %v3705
  %3805 = vmatprep.subr.mxu0 %v3710
  %3806 = vmatpush1.msra.mxu0 %v3709
  %3807 = vmatprep.subr.mxu0 %v3714
  %3808 = vmatpush1.msra.mxu0 %v3713
  %3809 = vmatprep.subr.mxu0 %v3718
  %3810 = vmatpush1.msra.mxu0 %v3717
  %3811 = vmatprep.subr.mxu0 %v3722
  %3812 = vmatpush1.msra.mxu0 %v3721
  %3813 = vmatprep.subr.mxu0 %v3726
  %3814 = vmatpush1.msra.mxu0 %v3725
  %3815 = vmatprep.subr.mxu0 %v3730
  %3816 = vmatpush1.msra.mxu0 %v3729
  %3817 = vmatprep.subr.mxu0 %v3734
  %3818 = vmatpush1.msra.mxu0 %v3733
  %3819 = vmatprep.subr.mxu0 %v3738
  %3820 = vmatpush1.msra.mxu0 %v3737
  %3821 = vmatprep.subr.mxu0 %v3742
  %3822 = vmatpush1.msra.mxu0 %v3741
  %3823 = vmatprep.subr.mxu0 %v3746
  %3824 = vmatpush1.msra.mxu0 %v3745
  %3825 = vmatprep.subr.mxu0 %v3750
  %3826 = vmatpush1.msra.mxu0 %v3749
  %3827 = vmatprep.subr.mxu0 %v3754
  %3828 = vmatpush1.msra.mxu0 %v3753
  %3829 = vmatprep.subr.mxu0 %v3758
  %3830 = vmatpush1.msra.mxu0 %v3757
  %3831 = vmatprep.subr.mxu0 %v3762
  %3832 = vmatpush1.msra.mxu0 %v3761
  %3833 = vmatprep.mubr.f32.mxu0 %v2755
  %3834 = vmatmul.mubr.f32.gmra.mrb[0].mxu0 %v2462
  %v3835 = vpop.f32.mrb[0].mxu0
  %v3836 = vadd.f32 %v3765, %v3835
  %v3837 = vpop.f32.mrb[0].mxu0
  %v3838 = vadd.f32 %v3766, %v3837
  %3839 = vdwg.mxu0
  %3840 = vmatprep.subr.mxu0 %v3640
  %3841 = vmatpush1.msra.mxu0 %v3639
  %3842 = vmatprep.subr.mxu0 %v3644
  %3843 = vmatpush1.msra.mxu0 %v3643
  %3844 = vmatprep.subr.mxu0 %v3648
  %3845 = vmatpush1.msra.mxu0 %v3647
  %3846 = vmatprep.subr.mxu0 %v3652
  %3847 = vmatpush1.msra.mxu0 %v3651
  %3848 = vmatprep.subr.mxu0 %v3656
  %3849 = vmatpush1.msra.mxu0 %v3655
  %3850 = vmatprep.subr.mxu0 %v3660
  %3851 = vmatpush1.msra.mxu0 %v3659
  %3852 = vmatprep.subr.mxu0 %v3664
  %3853 = vmatpush1.msra.mxu0 %v3663
  %3854 = vmatprep.subr.mxu0 %v3668
  %3855 = vmatpush1.msra.mxu0 %v3667
  %3856 = vmatprep.subr.mxu0 %v3672
  %3857 = vmatpush1.msra.mxu0 %v3671
  %3858 = vmatprep.subr.mxu0 %v3676
  %3859 = vmatpush1.msra.mxu0 %v3675
  %3860 = vmatprep.subr.mxu0 %v3680
  %3861 = vmatpush1.msra.mxu0 %v3679
  %3862 = vmatprep.subr.mxu0 %v3684
  %3863 = vmatpush1.msra.mxu0 %v3683
  %3864 = vmatprep.subr.mxu0 %v3688
  %3865 = vmatpush1.msra.mxu0 %v3687
  %3866 = vmatprep.subr.mxu0 %v3692
  %3867 = vmatpush1.msra.mxu0 %v3691
  %3868 = vmatprep.subr.mxu0 %v3696
  %3869 = vmatpush1.msra.mxu0 %v3695
  %3870 = vmatprep.subr.mxu0 %v3700
  %3871 = vmatpush1.msra.mxu0 %v3699
  %3872 = vmatprep.subr.mxu0 %v3704
  %3873 = vmatpush1.msra.mxu0 %v3703
  %3874 = vmatprep.subr.mxu0 %v3708
  %3875 = vmatpush1.msra.mxu0 %v3707
  %3876 = vmatprep.subr.mxu0 %v3712
  %3877 = vmatpush1.msra.mxu0 %v3711
  %3878 = vmatprep.subr.mxu0 %v3716
  %3879 = vmatpush1.msra.mxu0 %v3715
  %3880 = vmatprep.subr.mxu0 %v3720
  %3881 = vmatpush1.msra.mxu0 %v3719
  %3882 = vmatprep.subr.mxu0 %v3724
  %3883 = vmatpush1.msra.mxu0 %v3723
  %3884 = vmatprep.subr.mxu0 %v3728
  %3885 = vmatpush1.msra.mxu0 %v3727
  %3886 = vmatprep.subr.mxu0 %v3732
  %3887 = vmatpush1.msra.mxu0 %v3731
  %3888 = vmatprep.subr.mxu0 %v3736
  %3889 = vmatpush1.msra.mxu0 %v3735
  %3890 = vmatprep.subr.mxu0 %v3740
  %3891 = vmatpush1.msra.mxu0 %v3739
  %3892 = vmatprep.subr.mxu0 %v3744
  %3893 = vmatpush1.msra.mxu0 %v3743
  %3894 = vmatprep.subr.mxu0 %v3748
  %3895 = vmatpush1.msra.mxu0 %v3747
  %3896 = vmatprep.subr.mxu0 %v3752
  %3897 = vmatpush1.msra.mxu0 %v3751
  %3898 = vmatprep.subr.mxu0 %v3756
  %3899 = vmatpush1.msra.mxu0 %v3755
  %3900 = vmatprep.subr.mxu0 %v3760
  %3901 = vmatpush1.msra.mxu0 %v3759
  %3902 = vmatprep.subr.mxu0 %v3764
  %3903 = vmatpush1.msra.mxu0 %v3763
  %3904 = vmatprep.mubr.f32.mxu0 %v2755
  %3905 = vmatmul.mubr.f32.gmra.mrb[0].mxu0 %v2462
  %v3906 = vpop.f32.mrb[0].mxu0
  %v3907 = vadd.f32 %v3767, %v3906
  %v3908 = vpop.f32.mrb[0].mxu0
  %v3909 = vadd.f32 %v3768, %v3908
  %3910 = vdwg.mxu0
  %v3911 = vxor.u32 %v3836, 2147483648
  %v3912 = vmul.f32 %v3911, 1.442695
  %v3913 = vpow.pop %v3912
  %v3914 = vadd.f32 %v3913, 1.0
  %v3915 = vrcp.pop %v3914
  %v3916 = vmul.f32 1.0, %v3915
  %v3917 = vxor.u32 %v3838, 2147483648
  %v3918 = vmul.f32 %v3917, 1.442695
  %v3919 = vpow.pop %v3918
  %v3920 = vadd.f32 %v3919, 1.0
  %v3921 = vrcp.pop %v3920
  %v3922 = vmul.f32 1.0, %v3921
  %v3923 = vmul.f32 %v3916, %v3909
  %v3924 = vadd.f32 %v3907, %v3923
  %v3925 = vtanh.pop %v3924
  %v3926 = vsub.f32 1.0, %v3922
  %v3927 = vmul.f32 %v3926, %v3925
  %v3928 = vmul.f32 %v3922, %v2755
  %v3929 = vadd.f32 %v3927, %v3928
  %v3930 = vld [vmem:[%s1094] sm:$0xff]
  %v3931 = vld [vmem:[%s1094 + $0x8] sm:$0xff]
  %v3932 = vld [vmem:[%s1094 + $0x10] sm:$0xff]
  %v3933 = vld [vmem:[%s1094 + $0x18] sm:$0xff]
  %v3934 = vld [vmem:[%s1094 + $0x20] sm:$0xff]
  %v3935 = vld [vmem:[%s1094 + $0x28] sm:$0xff]
  %v3936 = vld [vmem:[%s1094 + $0x30] sm:$0xff]
  %v3937 = vld [vmem:[%s1094 + $0x38] sm:$0xff]
  %v3938 = vld [vmem:[%s1094 + $0x40] sm:$0xff]
  %v3939 = vld [vmem:[%s1094 + $0x48] sm:$0xff]
  %v3940 = vld [vmem:[%s1094 + $0x50] sm:$0xff]
  %v3941 = vld [vmem:[%s1094 + $0x58] sm:$0xff]
  %v3942 = vld [vmem:[%s1094 + $0x60] sm:$0xff]
  %v3943 = vld [vmem:[%s1094 + $0x68] sm:$0xff]
  %v3944 = vld [vmem:[%s1094 + $0x70] sm:$0xff]
  %v3945 = vld [vmem:[%s1094 + $0x78] sm:$0xff]
  %v3946 = vld [vmem:[%s1094 + $0x80] sm:$0xff]
  %v3947 = vld [vmem:[%s1094 + $0x88] sm:$0xff]
  %v3948 = vld [vmem:[%s1094 + $0x90] sm:$0xff]
  %v3949 = vld [vmem:[%s1094 + $0x98] sm:$0xff]
  %v3950 = vld [vmem:[%s1094 + $0xa0] sm:$0xff]
  %v3951 = vld [vmem:[%s1094 + $0xa8] sm:$0xff]
  %v3952 = vld [vmem:[%s1094 + $0xb0] sm:$0xff]
  %v3953 = vld [vmem:[%s1094 + $0xb8] sm:$0xff]
  %v3954 = vld [vmem:[%s1094 + $0xc0] sm:$0xff]
  %v3955 = vld [vmem:[%s1094 + $0xc8] sm:$0xff]
  %v3956 = vld [vmem:[%s1094 + $0xd0] sm:$0xff]
  %v3957 = vld [vmem:[%s1094 + $0xd8] sm:$0xff]
  %v3958 = vld [vmem:[%s1094 + $0xe0] sm:$0xff]
  %v3959 = vld [vmem:[%s1094 + $0xe8] sm:$0xff]
  %v3960 = vld [vmem:[%s1094 + $0xf0] sm:$0xff]
  %v3961 = vld [vmem:[%s1094 + $0xf8] sm:$0xff]
  %v3962 = vld [vmem:[%s1094 + $0x100] sm:$0xff]
  %v3963 = vld [vmem:[%s1094 + $0x108] sm:$0xff]
  %v3964 = vld [vmem:[%s1094 + $0x110] sm:$0xff]
  %v3965 = vld [vmem:[%s1094 + $0x118] sm:$0xff]
  %v3966 = vld [vmem:[%s1094 + $0x120] sm:$0xff]
  %v3967 = vld [vmem:[%s1094 + $0x128] sm:$0xff]
  %v3968 = vld [vmem:[%s1094 + $0x130] sm:$0xff]
  %v3969 = vld [vmem:[%s1094 + $0x138] sm:$0xff]
  %v3970 = vld [vmem:[%s1094 + $0x140] sm:$0xff]
  %v3971 = vld [vmem:[%s1094 + $0x148] sm:$0xff]
  %v3972 = vld [vmem:[%s1094 + $0x150] sm:$0xff]
  %v3973 = vld [vmem:[%s1094 + $0x158] sm:$0xff]
  %v3974 = vld [vmem:[%s1094 + $0x160] sm:$0xff]
  %v3975 = vld [vmem:[%s1094 + $0x168] sm:$0xff]
  %v3976 = vld [vmem:[%s1094 + $0x170] sm:$0xff]
  %v3977 = vld [vmem:[%s1094 + $0x178] sm:$0xff]
  %v3978 = vld [vmem:[%s1094 + $0x180] sm:$0xff]
  %v3979 = vld [vmem:[%s1094 + $0x188] sm:$0xff]
  %v3980 = vld [vmem:[%s1094 + $0x190] sm:$0xff]
  %v3981 = vld [vmem:[%s1094 + $0x198] sm:$0xff]
  %v3982 = vld [vmem:[%s1094 + $0x1a0] sm:$0xff]
  %v3983 = vld [vmem:[%s1094 + $0x1a8] sm:$0xff]
  %v3984 = vld [vmem:[%s1094 + $0x1b0] sm:$0xff]
  %v3985 = vld [vmem:[%s1094 + $0x1b8] sm:$0xff]
  %v3986 = vld [vmem:[%s1094 + $0x1c0] sm:$0xff]
  %v3987 = vld [vmem:[%s1094 + $0x1c8] sm:$0xff]
  %v3988 = vld [vmem:[%s1094 + $0x1d0] sm:$0xff]
  %v3989 = vld [vmem:[%s1094 + $0x1d8] sm:$0xff]
  %v3990 = vld [vmem:[%s1094 + $0x1e0] sm:$0xff]
  %v3991 = vld [vmem:[%s1094 + $0x1e8] sm:$0xff]
  %v3992 = vld [vmem:[%s1094 + $0x1f0] sm:$0xff]
  %v3993 = vld [vmem:[%s1094 + $0x1f8] sm:$0xff]
  %v3994 = vld [vmem:[%s1094 + $0x200] sm:$0xff]
  %v3995 = vld [vmem:[%s1094 + $0x208] sm:$0xff]
  %v3996 = vld [vmem:[%s1094 + $0x210] sm:$0xff]
  %v3997 = vld [vmem:[%s1094 + $0x218] sm:$0xff]
  %v3998 = vld [vmem:[%s1094 + $0x220] sm:$0xff]
  %v3999 = vld [vmem:[%s1094 + $0x228] sm:$0xff]
  %v4000 = vld [vmem:[%s1094 + $0x230] sm:$0xff]
  %v4001 = vld [vmem:[%s1094 + $0x238] sm:$0xff]
  %v4002 = vld [vmem:[%s1094 + $0x240] sm:$0xff]
  %v4003 = vld [vmem:[%s1094 + $0x248] sm:$0xff]
  %v4004 = vld [vmem:[%s1094 + $0x250] sm:$0xff]
  %v4005 = vld [vmem:[%s1094 + $0x258] sm:$0xff]
  %v4006 = vld [vmem:[%s1094 + $0x260] sm:$0xff]
  %v4007 = vld [vmem:[%s1094 + $0x268] sm:$0xff]
  %v4008 = vld [vmem:[%s1094 + $0x270] sm:$0xff]
  %v4009 = vld [vmem:[%s1094 + $0x278] sm:$0xff]
  %v4010 = vld [vmem:[%s1094 + $0x280] sm:$0xff]
  %v4011 = vld [vmem:[%s1094 + $0x288] sm:$0xff]
  %v4012 = vld [vmem:[%s1094 + $0x290] sm:$0xff]
  %v4013 = vld [vmem:[%s1094 + $0x298] sm:$0xff]
  %v4014 = vld [vmem:[%s1094 + $0x2a0] sm:$0xff]
  %v4015 = vld [vmem:[%s1094 + $0x2a8] sm:$0xff]
  %v4016 = vld [vmem:[%s1094 + $0x2b0] sm:$0xff]
  %v4017 = vld [vmem:[%s1094 + $0x2b8] sm:$0xff]
  %v4018 = vld [vmem:[%s1094 + $0x2c0] sm:$0xff]
  %v4019 = vld [vmem:[%s1094 + $0x2c8] sm:$0xff]
  %v4020 = vld [vmem:[%s1094 + $0x2d0] sm:$0xff]
  %v4021 = vld [vmem:[%s1094 + $0x2d8] sm:$0xff]
  %v4022 = vld [vmem:[%s1094 + $0x2e0] sm:$0xff]
  %v4023 = vld [vmem:[%s1094 + $0x2e8] sm:$0xff]
  %v4024 = vld [vmem:[%s1094 + $0x2f0] sm:$0xff]
  %v4025 = vld [vmem:[%s1094 + $0x2f8] sm:$0xff]
  %v4026 = vld [vmem:[%s1094 + $0x300] sm:$0xff]
  %v4027 = vld [vmem:[%s1094 + $0x308] sm:$0xff]
  %v4028 = vld [vmem:[%s1094 + $0x310] sm:$0xff]
  %v4029 = vld [vmem:[%s1094 + $0x318] sm:$0xff]
  %v4030 = vld [vmem:[%s1094 + $0x320] sm:$0xff]
  %v4031 = vld [vmem:[%s1094 + $0x328] sm:$0xff]
  %v4032 = vld [vmem:[%s1094 + $0x330] sm:$0xff]
  %v4033 = vld [vmem:[%s1094 + $0x338] sm:$0xff]
  %v4034 = vld [vmem:[%s1094 + $0x340] sm:$0xff]
  %v4035 = vld [vmem:[%s1094 + $0x348] sm:$0xff]
  %v4036 = vld [vmem:[%s1094 + $0x350] sm:$0xff]
  %v4037 = vld [vmem:[%s1094 + $0x358] sm:$0xff]
  %v4038 = vld [vmem:[%s1094 + $0x360] sm:$0xff]
  %v4039 = vld [vmem:[%s1094 + $0x368] sm:$0xff]
  %v4040 = vld [vmem:[%s1094 + $0x370] sm:$0xff]
  %v4041 = vld [vmem:[%s1094 + $0x378] sm:$0xff]
  %v4042 = vld [vmem:[%s1094 + $0x380] sm:$0xff]
  %v4043 = vld [vmem:[%s1094 + $0x388] sm:$0xff]
  %v4044 = vld [vmem:[%s1094 + $0x390] sm:$0xff]
  %v4045 = vld [vmem:[%s1094 + $0x398] sm:$0xff]
  %v4046 = vld [vmem:[%s1094 + $0x3a0] sm:$0xff]
  %v4047 = vld [vmem:[%s1094 + $0x3a8] sm:$0xff]
  %v4048 = vld [vmem:[%s1094 + $0x3b0] sm:$0xff]
  %v4049 = vld [vmem:[%s1094 + $0x3b8] sm:$0xff]
  %v4050 = vld [vmem:[%s1094 + $0x3c0] sm:$0xff]
  %v4051 = vld [vmem:[%s1094 + $0x3c8] sm:$0xff]
  %v4052 = vld [vmem:[%s1094 + $0x3d0] sm:$0xff]
  %v4053 = vld [vmem:[%s1094 + $0x3d8] sm:$0xff]
  %v4054 = vld [vmem:[%s1094 + $0x3e0] sm:$0xff]
  %v4055 = vld [vmem:[%s1094 + $0x3e8] sm:$0xff]
  %v4056 = vld [vmem:[%s1094 + $0x3f0] sm:$0xff]
  %v4057 = vld [vmem:[%s1094 + $0x3f8] sm:$0xff]
  %v4058 = vld [vmem:[%s1223] sm:$0xff]
  %v4059 = vld [vmem:[%s1223 + $0x8] sm:$0xff]
  %v4060 = vld [vmem:[%s1223 + $0x10] sm:$0xff]
  %v4061 = vld [vmem:[%s1223 + $0x18] sm:$0xff]
  %4062 = vmatprep.subr.mxu0 %v3931
  %4063 = vmatpush1.msra.mxu0 %v3930
  %4064 = vmatprep.subr.mxu0 %v3935
  %4065 = vmatpush1.msra.mxu0 %v3934
  %4066 = vmatprep.subr.mxu0 %v3939
  %4067 = vmatpush1.msra.mxu0 %v3938
  %4068 = vmatprep.subr.mxu0 %v3943
  %4069 = vmatpush1.msra.mxu0 %v3942
  %4070 = vmatprep.subr.mxu0 %v3947
  %4071 = vmatpush1.msra.mxu0 %v3946
  %4072 = vmatprep.subr.mxu0 %v3951
  %4073 = vmatpush1.msra.mxu0 %v3950
  %4074 = vmatprep.subr.mxu0 %v3955
  %4075 = vmatpush1.msra.mxu0 %v3954
  %4076 = vmatprep.subr.mxu0 %v3959
  %4077 = vmatpush1.msra.mxu0 %v3958
  %4078 = vmatprep.subr.mxu0 %v3963
  %4079 = vmatpush1.msra.mxu0 %v3962
  %4080 = vmatprep.subr.mxu0 %v3967
  %4081 = vmatpush1.msra.mxu0 %v3966
  %4082 = vmatprep.subr.mxu0 %v3971
  %4083 = vmatpush1.msra.mxu0 %v3970
  %4084 = vmatprep.subr.mxu0 %v3975
  %4085 = vmatpush1.msra.mxu0 %v3974
  %4086 = vmatprep.subr.mxu0 %v3979
  %4087 = vmatpush1.msra.mxu0 %v3978
  %4088 = vmatprep.subr.mxu0 %v3983
  %4089 = vmatpush1.msra.mxu0 %v3982
  %4090 = vmatprep.subr.mxu0 %v3987
  %4091 = vmatpush1.msra.mxu0 %v3986
  %4092 = vmatprep.subr.mxu0 %v3991
  %4093 = vmatpush1.msra.mxu0 %v3990
  %4094 = vmatprep.subr.mxu0 %v3995
  %4095 = vmatpush1.msra.mxu0 %v3994
  %4096 = vmatprep.subr.mxu0 %v3999
  %4097 = vmatpush1.msra.mxu0 %v3998
  %4098 = vmatprep.subr.mxu0 %v4003
  %4099 = vmatpush1.msra.mxu0 %v4002
  %4100 = vmatprep.subr.mxu0 %v4007
  %4101 = vmatpush1.msra.mxu0 %v4006
  %4102 = vmatprep.subr.mxu0 %v4011
  %4103 = vmatpush1.msra.mxu0 %v4010
  %4104 = vmatprep.subr.mxu0 %v4015
  %4105 = vmatpush1.msra.mxu0 %v4014
  %4106 = vmatprep.subr.mxu0 %v4019
  %4107 = vmatpush1.msra.mxu0 %v4018
  %4108 = vmatprep.subr.mxu0 %v4023
  %4109 = vmatpush1.msra.mxu0 %v4022
  %4110 = vmatprep.subr.mxu0 %v4027
  %4111 = vmatpush1.msra.mxu0 %v4026
  %4112 = vmatprep.subr.mxu0 %v4031
  %4113 = vmatpush1.msra.mxu0 %v4030
  %4114 = vmatprep.subr.mxu0 %v4035
  %4115 = vmatpush1.msra.mxu0 %v4034
  %4116 = vmatprep.subr.mxu0 %v4039
  %4117 = vmatpush1.msra.mxu0 %v4038
  %4118 = vmatprep.subr.mxu0 %v4043
  %4119 = vmatpush1.msra.mxu0 %v4042
  %4120 = vmatprep.subr.mxu0 %v4047
  %4121 = vmatpush1.msra.mxu0 %v4046
  %4122 = vmatprep.subr.mxu0 %v4051
  %4123 = vmatpush1.msra.mxu0 %v4050
  %4124 = vmatprep.subr.mxu0 %v4055
  %4125 = vmatpush1.msra.mxu0 %v4054
  %4126 = vmatprep.mubr.f32.mxu0 %v3048
  %4127 = vmatmul.mubr.f32.gmra.mrb[0].mxu0 %v2755
  %v4128 = vpop.f32.mrb[0].mxu0
  %v4129 = vadd.f32 %v4058, %v4128
  %v4130 = vpop.f32.mrb[0].mxu0
  %v4131 = vadd.f32 %v4059, %v4130
  %4132 = vdwg.mxu0
  %4133 = vmatprep.subr.mxu0 %v3933
  %4134 = vmatpush1.msra.mxu0 %v3932
  %4135 = vmatprep.subr.mxu0 %v3937
  %4136 = vmatpush1.msra.mxu0 %v3936
  %4137 = vmatprep.subr.mxu0 %v3941
  %4138 = vmatpush1.msra.mxu0 %v3940
  %4139 = vmatprep.subr.mxu0 %v3945
  %4140 = vmatpush1.msra.mxu0 %v3944
  %4141 = vmatprep.subr.mxu0 %v3949
  %4142 = vmatpush1.msra.mxu0 %v3948
  %4143 = vmatprep.subr.mxu0 %v3953
  %4144 = vmatpush1.msra.mxu0 %v3952
  %4145 = vmatprep.subr.mxu0 %v3957
  %4146 = vmatpush1.msra.mxu0 %v3956
  %4147 = vmatprep.subr.mxu0 %v3961
  %4148 = vmatpush1.msra.mxu0 %v3960
  %4149 = vmatprep.subr.mxu0 %v3965
  %4150 = vmatpush1.msra.mxu0 %v3964
  %4151 = vmatprep.subr.mxu0 %v3969
  %4152 = vmatpush1.msra.mxu0 %v3968
  %4153 = vmatprep.subr.mxu0 %v3973
  %4154 = vmatpush1.msra.mxu0 %v3972
  %4155 = vmatprep.subr.mxu0 %v3977
  %4156 = vmatpush1.msra.mxu0 %v3976
  %4157 = vmatprep.subr.mxu0 %v3981
  %4158 = vmatpush1.msra.mxu0 %v3980
  %4159 = vmatprep.subr.mxu0 %v3985
  %4160 = vmatpush1.msra.mxu0 %v3984
  %4161 = vmatprep.subr.mxu0 %v3989
  %4162 = vmatpush1.msra.mxu0 %v3988
  %4163 = vmatprep.subr.mxu0 %v3993
  %4164 = vmatpush1.msra.mxu0 %v3992
  %4165 = vmatprep.subr.mxu0 %v3997
  %4166 = vmatpush1.msra.mxu0 %v3996
  %4167 = vmatprep.subr.mxu0 %v4001
  %4168 = vmatpush1.msra.mxu0 %v4000
  %4169 = vmatprep.subr.mxu0 %v4005
  %4170 = vmatpush1.msra.mxu0 %v4004
  %4171 = vmatprep.subr.mxu0 %v4009
  %4172 = vmatpush1.msra.mxu0 %v4008
  %4173 = vmatprep.subr.mxu0 %v4013
  %4174 = vmatpush1.msra.mxu0 %v4012
  %4175 = vmatprep.subr.mxu0 %v4017
  %4176 = vmatpush1.msra.mxu0 %v4016
  %4177 = vmatprep.subr.mxu0 %v4021
  %4178 = vmatpush1.msra.mxu0 %v4020
  %4179 = vmatprep.subr.mxu0 %v4025
  %4180 = vmatpush1.msra.mxu0 %v4024
  %4181 = vmatprep.subr.mxu0 %v4029
  %4182 = vmatpush1.msra.mxu0 %v4028
  %4183 = vmatprep.subr.mxu0 %v4033
  %4184 = vmatpush1.msra.mxu0 %v4032
  %4185 = vmatprep.subr.mxu0 %v4037
  %4186 = vmatpush1.msra.mxu0 %v4036
  %4187 = vmatprep.subr.mxu0 %v4041
  %4188 = vmatpush1.msra.mxu0 %v4040
  %4189 = vmatprep.subr.mxu0 %v4045
  %4190 = vmatpush1.msra.mxu0 %v4044
  %4191 = vmatprep.subr.mxu0 %v4049
  %4192 = vmatpush1.msra.mxu0 %v4048
  %4193 = vmatprep.subr.mxu0 %v4053
  %4194 = vmatpush1.msra.mxu0 %v4052
  %4195 = vmatprep.subr.mxu0 %v4057
  %4196 = vmatpush1.msra.mxu0 %v4056
  %4197 = vmatprep.mubr.f32.mxu0 %v3048
  %4198 = vmatmul.mubr.f32.gmra.mrb[0].mxu0 %v2755
  %v4199 = vpop.f32.mrb[0].mxu0
  %v4200 = vadd.f32 %v4060, %v4199
  %v4201 = vpop.f32.mrb[0].mxu0
  %v4202 = vadd.f32 %v4061, %v4201
  %4203 = vdwg.mxu0
  %v4204 = vxor.u32 %v4129, 2147483648
  %v4205 = vmul.f32 %v4204, 1.442695
  %v4206 = vpow.pop %v4205
  %v4207 = vadd.f32 %v4206, 1.0
  %v4208 = vrcp.pop %v4207
  %v4209 = vmul.f32 1.0, %v4208
  %v4210 = vxor.u32 %v4131, 2147483648
  %v4211 = vmul.f32 %v4210, 1.442695
  %v4212 = vpow.pop %v4211
  %v4213 = vadd.f32 %v4212, 1.0
  %v4214 = vrcp.pop %v4213
  %v4215 = vmul.f32 1.0, %v4214
  %v4216 = vmul.f32 %v4209, %v4202
  %v4217 = vadd.f32 %v4200, %v4216
  %v4218 = vtanh.pop %v4217
  %v4219 = vsub.f32 1.0, %v4215
  %v4220 = vmul.f32 %v4219, %v4218
  %v4221 = vmul.f32 %v4215, %v3048
  %v4222 = vadd.f32 %v4220, %v4221
  %v4223 = vld [vmem:[%s1873] sm:$0xff]
  %v4224 = vld [vmem:[%s1873 + $0x8] sm:$0xff]
  %v4225 = vld [vmem:[%s1873 + $0x10] sm:$0xff]
  %v4226 = vld [vmem:[%s1873 + $0x18] sm:$0xff]
  %v4227 = vld [vmem:[%s1873 + $0x20] sm:$0xff]
  %v4228 = vld [vmem:[%s1873 + $0x28] sm:$0xff]
  %v4229 = vld [vmem:[%s1873 + $0x30] sm:$0xff]
  %v4230 = vld [vmem:[%s1873 + $0x38] sm:$0xff]
  %v4231 = vld [vmem:[%s1873 + $0x40] sm:$0xff]
  %v4232 = vld [vmem:[%s1873 + $0x48] sm:$0xff]
  %v4233 = vld [vmem:[%s1873 + $0x50] sm:$0xff]
  %v4234 = vld [vmem:[%s1873 + $0x58] sm:$0xff]
  %v4235 = vld [vmem:[%s1873 + $0x60] sm:$0xff]
  %v4236 = vld [vmem:[%s1873 + $0x68] sm:$0xff]
  %v4237 = vld [vmem:[%s1873 + $0x70] sm:$0xff]
  %v4238 = vld [vmem:[%s1873 + $0x78] sm:$0xff]
  %v4239 = vld [vmem:[%s1873 + $0x80] sm:$0xff]
  %v4240 = vld [vmem:[%s1873 + $0x88] sm:$0xff]
  %v4241 = vld [vmem:[%s1873 + $0x90] sm:$0xff]
  %v4242 = vld [vmem:[%s1873 + $0x98] sm:$0xff]
  %v4243 = vld [vmem:[%s1873 + $0xa0] sm:$0xff]
  %v4244 = vld [vmem:[%s1873 + $0xa8] sm:$0xff]
  %v4245 = vld [vmem:[%s1873 + $0xb0] sm:$0xff]
  %v4246 = vld [vmem:[%s1873 + $0xb8] sm:$0xff]
  %v4247 = vld [vmem:[%s1873 + $0xc0] sm:$0xff]
  %v4248 = vld [vmem:[%s1873 + $0xc8] sm:$0xff]
  %v4249 = vld [vmem:[%s1873 + $0xd0] sm:$0xff]
  %v4250 = vld [vmem:[%s1873 + $0xd8] sm:$0xff]
  %v4251 = vld [vmem:[%s1873 + $0xe0] sm:$0xff]
  %v4252 = vld [vmem:[%s1873 + $0xe8] sm:$0xff]
  %v4253 = vld [vmem:[%s1873 + $0xf0] sm:$0xff]
  %v4254 = vld [vmem:[%s1873 + $0xf8] sm:$0xff]
  %v4255 = vld [vmem:[%s1873 + $0x100] sm:$0xff]
  %v4256 = vld [vmem:[%s1873 + $0x108] sm:$0xff]
  %v4257 = vld [vmem:[%s1873 + $0x110] sm:$0xff]
  %v4258 = vld [vmem:[%s1873 + $0x118] sm:$0xff]
  %v4259 = vld [vmem:[%s1873 + $0x120] sm:$0xff]
  %v4260 = vld [vmem:[%s1873 + $0x128] sm:$0xff]
  %v4261 = vld [vmem:[%s1873 + $0x130] sm:$0xff]
  %v4262 = vld [vmem:[%s1873 + $0x138] sm:$0xff]
  %v4263 = vld [vmem:[%s1873 + $0x140] sm:$0xff]
  %v4264 = vld [vmem:[%s1873 + $0x148] sm:$0xff]
  %v4265 = vld [vmem:[%s1873 + $0x150] sm:$0xff]
  %v4266 = vld [vmem:[%s1873 + $0x158] sm:$0xff]
  %v4267 = vld [vmem:[%s1873 + $0x160] sm:$0xff]
  %v4268 = vld [vmem:[%s1873 + $0x168] sm:$0xff]
  %v4269 = vld [vmem:[%s1873 + $0x170] sm:$0xff]
  %v4270 = vld [vmem:[%s1873 + $0x178] sm:$0xff]
  %v4271 = vld [vmem:[%s1873 + $0x180] sm:$0xff]
  %v4272 = vld [vmem:[%s1873 + $0x188] sm:$0xff]
  %v4273 = vld [vmem:[%s1873 + $0x190] sm:$0xff]
  %v4274 = vld [vmem:[%s1873 + $0x198] sm:$0xff]
  %v4275 = vld [vmem:[%s1873 + $0x1a0] sm:$0xff]
  %v4276 = vld [vmem:[%s1873 + $0x1a8] sm:$0xff]
  %v4277 = vld [vmem:[%s1873 + $0x1b0] sm:$0xff]
  %v4278 = vld [vmem:[%s1873 + $0x1b8] sm:$0xff]
  %v4279 = vld [vmem:[%s1873 + $0x1c0] sm:$0xff]
  %v4280 = vld [vmem:[%s1873 + $0x1c8] sm:$0xff]
  %v4281 = vld [vmem:[%s1873 + $0x1d0] sm:$0xff]
  %v4282 = vld [vmem:[%s1873 + $0x1d8] sm:$0xff]
  %v4283 = vld [vmem:[%s1873 + $0x1e0] sm:$0xff]
  %v4284 = vld [vmem:[%s1873 + $0x1e8] sm:$0xff]
  %v4285 = vld [vmem:[%s1873 + $0x1f0] sm:$0xff]
  %v4286 = vld [vmem:[%s1873 + $0x1f8] sm:$0xff]
  %v4287 = vld [vmem:[%s1873 + $0x200] sm:$0xff]
  %v4288 = vld [vmem:[%s1873 + $0x208] sm:$0xff]
  %v4289 = vld [vmem:[%s1873 + $0x210] sm:$0xff]
  %v4290 = vld [vmem:[%s1873 + $0x218] sm:$0xff]
  %v4291 = vld [vmem:[%s1873 + $0x220] sm:$0xff]
  %v4292 = vld [vmem:[%s1873 + $0x228] sm:$0xff]
  %v4293 = vld [vmem:[%s1873 + $0x230] sm:$0xff]
  %v4294 = vld [vmem:[%s1873 + $0x238] sm:$0xff]
  %v4295 = vld [vmem:[%s1873 + $0x240] sm:$0xff]
  %v4296 = vld [vmem:[%s1873 + $0x248] sm:$0xff]
  %v4297 = vld [vmem:[%s1873 + $0x250] sm:$0xff]
  %v4298 = vld [vmem:[%s1873 + $0x258] sm:$0xff]
  %v4299 = vld [vmem:[%s1873 + $0x260] sm:$0xff]
  %v4300 = vld [vmem:[%s1873 + $0x268] sm:$0xff]
  %v4301 = vld [vmem:[%s1873 + $0x270] sm:$0xff]
  %v4302 = vld [vmem:[%s1873 + $0x278] sm:$0xff]
  %v4303 = vld [vmem:[%s1873 + $0x280] sm:$0xff]
  %v4304 = vld [vmem:[%s1873 + $0x288] sm:$0xff]
  %v4305 = vld [vmem:[%s1873 + $0x290] sm:$0xff]
  %v4306 = vld [vmem:[%s1873 + $0x298] sm:$0xff]
  %v4307 = vld [vmem:[%s1873 + $0x2a0] sm:$0xff]
  %v4308 = vld [vmem:[%s1873 + $0x2a8] sm:$0xff]
  %v4309 = vld [vmem:[%s1873 + $0x2b0] sm:$0xff]
  %v4310 = vld [vmem:[%s1873 + $0x2b8] sm:$0xff]
  %v4311 = vld [vmem:[%s1873 + $0x2c0] sm:$0xff]
  %v4312 = vld [vmem:[%s1873 + $0x2c8] sm:$0xff]
  %v4313 = vld [vmem:[%s1873 + $0x2d0] sm:$0xff]
  %v4314 = vld [vmem:[%s1873 + $0x2d8] sm:$0xff]
  %v4315 = vld [vmem:[%s1873 + $0x2e0] sm:$0xff]
  %v4316 = vld [vmem:[%s1873 + $0x2e8] sm:$0xff]
  %v4317 = vld [vmem:[%s1873 + $0x2f0] sm:$0xff]
  %v4318 = vld [vmem:[%s1873 + $0x2f8] sm:$0xff]
  %v4319 = vld [vmem:[%s1873 + $0x300] sm:$0xff]
  %v4320 = vld [vmem:[%s1873 + $0x308] sm:$0xff]
  %v4321 = vld [vmem:[%s1873 + $0x310] sm:$0xff]
  %v4322 = vld [vmem:[%s1873 + $0x318] sm:$0xff]
  %v4323 = vld [vmem:[%s1873 + $0x320] sm:$0xff]
  %v4324 = vld [vmem:[%s1873 + $0x328] sm:$0xff]
  %v4325 = vld [vmem:[%s1873 + $0x330] sm:$0xff]
  %v4326 = vld [vmem:[%s1873 + $0x338] sm:$0xff]
  %v4327 = vld [vmem:[%s1873 + $0x340] sm:$0xff]
  %v4328 = vld [vmem:[%s1873 + $0x348] sm:$0xff]
  %v4329 = vld [vmem:[%s1873 + $0x350] sm:$0xff]
  %v4330 = vld [vmem:[%s1873 + $0x358] sm:$0xff]
  %v4331 = vld [vmem:[%s1873 + $0x360] sm:$0xff]
  %v4332 = vld [vmem:[%s1873 + $0x368] sm:$0xff]
  %v4333 = vld [vmem:[%s1873 + $0x370] sm:$0xff]
  %v4334 = vld [vmem:[%s1873 + $0x378] sm:$0xff]
  %v4335 = vld [vmem:[%s1873 + $0x380] sm:$0xff]
  %v4336 = vld [vmem:[%s1873 + $0x388] sm:$0xff]
  %v4337 = vld [vmem:[%s1873 + $0x390] sm:$0xff]
  %v4338 = vld [vmem:[%s1873 + $0x398] sm:$0xff]
  %v4339 = vld [vmem:[%s1873 + $0x3a0] sm:$0xff]
  %v4340 = vld [vmem:[%s1873 + $0x3a8] sm:$0xff]
  %v4341 = vld [vmem:[%s1873 + $0x3b0] sm:$0xff]
  %v4342 = vld [vmem:[%s1873 + $0x3b8] sm:$0xff]
  %v4343 = vld [vmem:[%s1873 + $0x3c0] sm:$0xff]
  %v4344 = vld [vmem:[%s1873 + $0x3c8] sm:$0xff]
  %v4345 = vld [vmem:[%s1873 + $0x3d0] sm:$0xff]
  %v4346 = vld [vmem:[%s1873 + $0x3d8] sm:$0xff]
  %v4347 = vld [vmem:[%s1873 + $0x3e0] sm:$0xff]
  %v4348 = vld [vmem:[%s1873 + $0x3e8] sm:$0xff]
  %v4349 = vld [vmem:[%s1873 + $0x3f0] sm:$0xff]
  %v4350 = vld [vmem:[%s1873 + $0x3f8] sm:$0xff]
  %v4351 = vld [vmem:[%s2002] sm:$0xff]
  %v4352 = vld [vmem:[%s2002 + $0x8] sm:$0xff]
  %v4353 = vld [vmem:[%s2002 + $0x10] sm:$0xff]
  %v4354 = vld [vmem:[%s2002 + $0x18] sm:$0xff]
  %4355 = vmatprep.subr.mxu0 %v4224
  %4356 = vmatpush1.msra.mxu0 %v4223
  %4357 = vmatprep.subr.mxu0 %v4228
  %4358 = vmatpush1.msra.mxu0 %v4227
  %4359 = vmatprep.subr.mxu0 %v4232
  %4360 = vmatpush1.msra.mxu0 %v4231
  %4361 = vmatprep.subr.mxu0 %v4236
  %4362 = vmatpush1.msra.mxu0 %v4235
  %4363 = vmatprep.subr.mxu0 %v4240
  %4364 = vmatpush1.msra.mxu0 %v4239
  %4365 = vmatprep.subr.mxu0 %v4244
  %4366 = vmatpush1.msra.mxu0 %v4243
  %4367 = vmatprep.subr.mxu0 %v4248
  %4368 = vmatpush1.msra.mxu0 %v4247
  %4369 = vmatprep.subr.mxu0 %v4252
  %4370 = vmatpush1.msra.mxu0 %v4251
  %4371 = vmatprep.subr.mxu0 %v4256
  %4372 = vmatpush1.msra.mxu0 %v4255
  %4373 = vmatprep.subr.mxu0 %v4260
  %4374 = vmatpush1.msra.mxu0 %v4259
  %4375 = vmatprep.subr.mxu0 %v4264
  %4376 = vmatpush1.msra.mxu0 %v4263
  %4377 = vmatprep.subr.mxu0 %v4268
  %4378 = vmatpush1.msra.mxu0 %v4267
  %4379 = vmatprep.subr.mxu0 %v4272
  %4380 = vmatpush1.msra.mxu0 %v4271
  %4381 = vmatprep.subr.mxu0 %v4276
  %4382 = vmatpush1.msra.mxu0 %v4275
  %4383 = vmatprep.subr.mxu0 %v4280
  %4384 = vmatpush1.msra.mxu0 %v4279
  %4385 = vmatprep.subr.mxu0 %v4284
  %4386 = vmatpush1.msra.mxu0 %v4283
  %4387 = vmatprep.subr.mxu0 %v4288
  %4388 = vmatpush1.msra.mxu0 %v4287
  %4389 = vmatprep.subr.mxu0 %v4292
  %4390 = vmatpush1.msra.mxu0 %v4291
  %4391 = vmatprep.subr.mxu0 %v4296
  %4392 = vmatpush1.msra.mxu0 %v4295
  %4393 = vmatprep.subr.mxu0 %v4300
  %4394 = vmatpush1.msra.mxu0 %v4299
  %4395 = vmatprep.subr.mxu0 %v4304
  %4396 = vmatpush1.msra.mxu0 %v4303
  %4397 = vmatprep.subr.mxu0 %v4308
  %4398 = vmatpush1.msra.mxu0 %v4307
  %4399 = vmatprep.subr.mxu0 %v4312
  %4400 = vmatpush1.msra.mxu0 %v4311
  %4401 = vmatprep.subr.mxu0 %v4316
  %4402 = vmatpush1.msra.mxu0 %v4315
  %4403 = vmatprep.subr.mxu0 %v4320
  %4404 = vmatpush1.msra.mxu0 %v4319
  %4405 = vmatprep.subr.mxu0 %v4324
  %4406 = vmatpush1.msra.mxu0 %v4323
  %4407 = vmatprep.subr.mxu0 %v4328
  %4408 = vmatpush1.msra.mxu0 %v4327
  %4409 = vmatprep.subr.mxu0 %v4332
  %4410 = vmatpush1.msra.mxu0 %v4331
  %4411 = vmatprep.subr.mxu0 %v4336
  %4412 = vmatpush1.msra.mxu0 %v4335
  %4413 = vmatprep.subr.mxu0 %v4340
  %4414 = vmatpush1.msra.mxu0 %v4339
  %4415 = vmatprep.subr.mxu0 %v4344
  %4416 = vmatpush1.msra.mxu0 %v4343
  %4417 = vmatprep.subr.mxu0 %v4348
  %4418 = vmatpush1.msra.mxu0 %v4347
  %4419 = vmatprep.mubr.f32.mxu0 %v3341
  %4420 = vmatmul.mubr.f32.gmra.mrb[0].mxu0 %v3048
  %v4421 = vpop.f32.mrb[0].mxu0
  %v4422 = vadd.f32 %v4351, %v4421
  %v4423 = vpop.f32.mrb[0].mxu0
  %v4424 = vadd.f32 %v4352, %v4423
  %4425 = vdwg.mxu0
  %4426 = vmatprep.subr.mxu0 %v4226
  %4427 = vmatpush1.msra.mxu0 %v4225
  %4428 = vmatprep.subr.mxu0 %v4230
  %4429 = vmatpush1.msra.mxu0 %v4229
  %4430 = vmatprep.subr.mxu0 %v4234
  %4431 = vmatpush1.msra.mxu0 %v4233
  %4432 = vmatprep.subr.mxu0 %v4238
  %4433 = vmatpush1.msra.mxu0 %v4237
  %4434 = vmatprep.subr.mxu0 %v4242
  %4435 = vmatpush1.msra.mxu0 %v4241
  %4436 = vmatprep.subr.mxu0 %v4246
  %4437 = vmatpush1.msra.mxu0 %v4245
  %4438 = vmatprep.subr.mxu0 %v4250
  %4439 = vmatpush1.msra.mxu0 %v4249
  %4440 = vmatprep.subr.mxu0 %v4254
  %4441 = vmatpush1.msra.mxu0 %v4253
  %4442 = vmatprep.subr.mxu0 %v4258
  %4443 = vmatpush1.msra.mxu0 %v4257
  %4444 = vmatprep.subr.mxu0 %v4262
  %4445 = vmatpush1.msra.mxu0 %v4261
  %4446 = vmatprep.subr.mxu0 %v4266
  %4447 = vmatpush1.msra.mxu0 %v4265
  %4448 = vmatprep.subr.mxu0 %v4270
  %4449 = vmatpush1.msra.mxu0 %v4269
  %4450 = vmatprep.subr.mxu0 %v4274
  %4451 = vmatpush1.msra.mxu0 %v4273
  %4452 = vmatprep.subr.mxu0 %v4278
  %4453 = vmatpush1.msra.mxu0 %v4277
  %4454 = vmatprep.subr.mxu0 %v4282
  %4455 = vmatpush1.msra.mxu0 %v4281
  %4456 = vmatprep.subr.mxu0 %v4286
  %4457 = vmatpush1.msra.mxu0 %v4285
  %4458 = vmatprep.subr.mxu0 %v4290
  %4459 = vmatpush1.msra.mxu0 %v4289
  %4460 = vmatprep.subr.mxu0 %v4294
  %4461 = vmatpush1.msra.mxu0 %v4293
  %4462 = vmatprep.subr.mxu0 %v4298
  %4463 = vmatpush1.msra.mxu0 %v4297
  %4464 = vmatprep.subr.mxu0 %v4302
  %4465 = vmatpush1.msra.mxu0 %v4301
  %4466 = vmatprep.subr.mxu0 %v4306
  %4467 = vmatpush1.msra.mxu0 %v4305
  %4468 = vmatprep.subr.mxu0 %v4310
  %4469 = vmatpush1.msra.mxu0 %v4309
  %4470 = vmatprep.subr.mxu0 %v4314
  %4471 = vmatpush1.msra.mxu0 %v4313
  %4472 = vmatprep.subr.mxu0 %v4318
  %4473 = vmatpush1.msra.mxu0 %v4317
  %4474 = vmatprep.subr.mxu0 %v4322
  %4475 = vmatpush1.msra.mxu0 %v4321
  %4476 = vmatprep.subr.mxu0 %v4326
  %4477 = vmatpush1.msra.mxu0 %v4325
  %4478 = vmatprep.subr.mxu0 %v4330
  %4479 = vmatpush1.msra.mxu0 %v4329
  %4480 = vmatprep.subr.mxu0 %v4334
  %4481 = vmatpush1.msra.mxu0 %v4333
  %4482 = vmatprep.subr.mxu0 %v4338
  %4483 = vmatpush1.msra.mxu0 %v4337
  %4484 = vmatprep.subr.mxu0 %v4342
  %4485 = vmatpush1.msra.mxu0 %v4341
  %4486 = vmatprep.subr.mxu0 %v4346
  %4487 = vmatpush1.msra.mxu0 %v4345
  %4488 = vmatprep.subr.mxu0 %v4350
  %4489 = vmatpush1.msra.mxu0 %v4349
  %4490 = vmatprep.mubr.f32.mxu0 %v3341
  %4491 = vmatmul.mubr.f32.gmra.mrb[0].mxu0 %v3048
  %v4492 = vpop.f32.mrb[0].mxu0
  %v4493 = vadd.f32 %v4353, %v4492
  %v4494 = vpop.f32.mrb[0].mxu0
  %v4495 = vadd.f32 %v4354, %v4494
  %4496 = vdwg.mxu0
  %v4497 = vxor.u32 %v4422, 2147483648
  %v4498 = vmul.f32 %v4497, 1.442695
  %v4499 = vpow.pop %v4498
  %v4500 = vadd.f32 %v4499, 1.0
  %v4501 = vrcp.pop %v4500
  %v4502 = vmul.f32 1.0, %v4501
  %v4503 = vxor.u32 %v4424, 2147483648
  %v4504 = vmul.f32 %v4503, 1.442695
  %v4505 = vpow.pop %v4504
  %v4506 = vadd.f32 %v4505, 1.0
  %v4507 = vrcp.pop %v4506
  %v4508 = vmul.f32 1.0, %v4507
  %v4509 = vmul.f32 %v4502, %v4495
  %v4510 = vadd.f32 %v4493, %v4509
  %v4511 = vtanh.pop %v4510
  %v4512 = vsub.f32 1.0, %v4508
  %v4513 = vmul.f32 %v4512, %v4511
  %v4514 = vmul.f32 %v4508, %v3341
  %v4515 = vadd.f32 %v4513, %v4514
  %4516 = vst [vmem:[#allocation2 + $0x10] sm:$0xff] %v4515
  %v4517 = vld [vmem:[%s0 + $0x30] sm:$0xff]
  %v4518 = vld [vmem:[%s1] sm:$0xff]
  %v4519 = vld [vmem:[%s1 + $0x8] sm:$0xff]
  %v4520 = vld [vmem:[%s1 + $0x10] sm:$0xff]
  %v4521 = vld [vmem:[%s1 + $0x18] sm:$0xff]
  %v4522 = vld [vmem:[%s1 + $0x20] sm:$0xff]
  %v4523 = vld [vmem:[%s1 + $0x28] sm:$0xff]
  %v4524 = vld [vmem:[%s1 + $0x30] sm:$0xff]
  %v4525 = vld [vmem:[%s1 + $0x38] sm:$0xff]
  %v4526 = vld [vmem:[%s1 + $0x40] sm:$0xff]
  %v4527 = vld [vmem:[%s1 + $0x48] sm:$0xff]
  %v4528 = vld [vmem:[%s1 + $0x50] sm:$0xff]
  %v4529 = vld [vmem:[%s1 + $0x58] sm:$0xff]
  %v4530 = vld [vmem:[%s1 + $0x60] sm:$0xff]
  %v4531 = vld [vmem:[%s1 + $0x68] sm:$0xff]
  %v4532 = vld [vmem:[%s1 + $0x70] sm:$0xff]
  %v4533 = vld [vmem:[%s1 + $0x78] sm:$0xff]
  %v4534 = vld [vmem:[%s1 + $0x80] sm:$0xff]
  %v4535 = vld [vmem:[%s1 + $0x88] sm:$0xff]
  %v4536 = vld [vmem:[%s1 + $0x90] sm:$0xff]
  %v4537 = vld [vmem:[%s1 + $0x98] sm:$0xff]
  %v4538 = vld [vmem:[%s1 + $0xa0] sm:$0xff]
  %v4539 = vld [vmem:[%s1 + $0xa8] sm:$0xff]
  %v4540 = vld [vmem:[%s1 + $0xb0] sm:$0xff]
  %v4541 = vld [vmem:[%s1 + $0xb8] sm:$0xff]
  %v4542 = vld [vmem:[%s1 + $0xc0] sm:$0xff]
  %v4543 = vld [vmem:[%s1 + $0xc8] sm:$0xff]
  %v4544 = vld [vmem:[%s1 + $0xd0] sm:$0xff]
  %v4545 = vld [vmem:[%s1 + $0xd8] sm:$0xff]
  %v4546 = vld [vmem:[%s1 + $0xe0] sm:$0xff]
  %v4547 = vld [vmem:[%s1 + $0xe8] sm:$0xff]
  %v4548 = vld [vmem:[%s1 + $0xf0] sm:$0xff]
  %v4549 = vld [vmem:[%s1 + $0xf8] sm:$0xff]
  %v4550 = vld [vmem:[%s1 + $0x100] sm:$0xff]
  %v4551 = vld [vmem:[%s1 + $0x108] sm:$0xff]
  %v4552 = vld [vmem:[%s1 + $0x110] sm:$0xff]
  %v4553 = vld [vmem:[%s1 + $0x118] sm:$0xff]
  %v4554 = vld [vmem:[%s1 + $0x120] sm:$0xff]
  %v4555 = vld [vmem:[%s1 + $0x128] sm:$0xff]
  %v4556 = vld [vmem:[%s1 + $0x130] sm:$0xff]
  %v4557 = vld [vmem:[%s1 + $0x138] sm:$0xff]
  %v4558 = vld [vmem:[%s1 + $0x140] sm:$0xff]
  %v4559 = vld [vmem:[%s1 + $0x148] sm:$0xff]
  %v4560 = vld [vmem:[%s1 + $0x150] sm:$0xff]
  %v4561 = vld [vmem:[%s1 + $0x158] sm:$0xff]
  %v4562 = vld [vmem:[%s1 + $0x160] sm:$0xff]
  %v4563 = vld [vmem:[%s1 + $0x168] sm:$0xff]
  %v4564 = vld [vmem:[%s1 + $0x170] sm:$0xff]
  %v4565 = vld [vmem:[%s1 + $0x178] sm:$0xff]
  %v4566 = vld [vmem:[%s1 + $0x180] sm:$0xff]
  %v4567 = vld [vmem:[%s1 + $0x188] sm:$0xff]
  %v4568 = vld [vmem:[%s1 + $0x190] sm:$0xff]
  %v4569 = vld [vmem:[%s1 + $0x198] sm:$0xff]
  %v4570 = vld [vmem:[%s1 + $0x1a0] sm:$0xff]
  %v4571 = vld [vmem:[%s1 + $0x1a8] sm:$0xff]
  %v4572 = vld [vmem:[%s1 + $0x1b0] sm:$0xff]
  %v4573 = vld [vmem:[%s1 + $0x1b8] sm:$0xff]
  %v4574 = vld [vmem:[%s1 + $0x1c0] sm:$0xff]
  %v4575 = vld [vmem:[%s1 + $0x1c8] sm:$0xff]
  %v4576 = vld [vmem:[%s1 + $0x1d0] sm:$0xff]
  %v4577 = vld [vmem:[%s1 + $0x1d8] sm:$0xff]
  %v4578 = vld [vmem:[%s1 + $0x1e0] sm:$0xff]
  %v4579 = vld [vmem:[%s1 + $0x1e8] sm:$0xff]
  %v4580 = vld [vmem:[%s1 + $0x1f0] sm:$0xff]
  %v4581 = vld [vmem:[%s1 + $0x1f8] sm:$0xff]
  %v4582 = vld [vmem:[%s1 + $0x200] sm:$0xff]
  %v4583 = vld [vmem:[%s1 + $0x208] sm:$0xff]
  %v4584 = vld [vmem:[%s1 + $0x210] sm:$0xff]
  %v4585 = vld [vmem:[%s1 + $0x218] sm:$0xff]
  %v4586 = vld [vmem:[%s1 + $0x220] sm:$0xff]
  %v4587 = vld [vmem:[%s1 + $0x228] sm:$0xff]
  %v4588 = vld [vmem:[%s1 + $0x230] sm:$0xff]
  %v4589 = vld [vmem:[%s1 + $0x238] sm:$0xff]
  %v4590 = vld [vmem:[%s1 + $0x240] sm:$0xff]
  %v4591 = vld [vmem:[%s1 + $0x248] sm:$0xff]
  %v4592 = vld [vmem:[%s1 + $0x250] sm:$0xff]
  %v4593 = vld [vmem:[%s1 + $0x258] sm:$0xff]
  %v4594 = vld [vmem:[%s1 + $0x260] sm:$0xff]
  %v4595 = vld [vmem:[%s1 + $0x268] sm:$0xff]
  %v4596 = vld [vmem:[%s1 + $0x270] sm:$0xff]
  %v4597 = vld [vmem:[%s1 + $0x278] sm:$0xff]
  %v4598 = vld [vmem:[%s1 + $0x280] sm:$0xff]
  %v4599 = vld [vmem:[%s1 + $0x288] sm:$0xff]
  %v4600 = vld [vmem:[%s1 + $0x290] sm:$0xff]
  %v4601 = vld [vmem:[%s1 + $0x298] sm:$0xff]
  %v4602 = vld [vmem:[%s1 + $0x2a0] sm:$0xff]
  %v4603 = vld [vmem:[%s1 + $0x2a8] sm:$0xff]
  %v4604 = vld [vmem:[%s1 + $0x2b0] sm:$0xff]
  %v4605 = vld [vmem:[%s1 + $0x2b8] sm:$0xff]
  %v4606 = vld [vmem:[%s1 + $0x2c0] sm:$0xff]
  %v4607 = vld [vmem:[%s1 + $0x2c8] sm:$0xff]
  %v4608 = vld [vmem:[%s1 + $0x2d0] sm:$0xff]
  %v4609 = vld [vmem:[%s1 + $0x2d8] sm:$0xff]
  %v4610 = vld [vmem:[%s1 + $0x2e0] sm:$0xff]
  %v4611 = vld [vmem:[%s1 + $0x2e8] sm:$0xff]
  %v4612 = vld [vmem:[%s1 + $0x2f0] sm:$0xff]
  %v4613 = vld [vmem:[%s1 + $0x2f8] sm:$0xff]
  %v4614 = vld [vmem:[%s1 + $0x300] sm:$0xff]
  %v4615 = vld [vmem:[%s1 + $0x308] sm:$0xff]
  %v4616 = vld [vmem:[%s1 + $0x310] sm:$0xff]
  %v4617 = vld [vmem:[%s1 + $0x318] sm:$0xff]
  %v4618 = vld [vmem:[%s1 + $0x320] sm:$0xff]
  %v4619 = vld [vmem:[%s1 + $0x328] sm:$0xff]
  %v4620 = vld [vmem:[%s1 + $0x330] sm:$0xff]
  %v4621 = vld [vmem:[%s1 + $0x338] sm:$0xff]
  %v4622 = vld [vmem:[%s1 + $0x340] sm:$0xff]
  %v4623 = vld [vmem:[%s1 + $0x348] sm:$0xff]
  %v4624 = vld [vmem:[%s1 + $0x350] sm:$0xff]
  %v4625 = vld [vmem:[%s1 + $0x358] sm:$0xff]
  %v4626 = vld [vmem:[%s1 + $0x360] sm:$0xff]
  %v4627 = vld [vmem:[%s1 + $0x368] sm:$0xff]
  %v4628 = vld [vmem:[%s1 + $0x370] sm:$0xff]
  %v4629 = vld [vmem:[%s1 + $0x378] sm:$0xff]
  %v4630 = vld [vmem:[%s1 + $0x380] sm:$0xff]
  %v4631 = vld [vmem:[%s1 + $0x388] sm:$0xff]
  %v4632 = vld [vmem:[%s1 + $0x390] sm:$0xff]
  %v4633 = vld [vmem:[%s1 + $0x398] sm:$0xff]
  %v4634 = vld [vmem:[%s1 + $0x3a0] sm:$0xff]
  %v4635 = vld [vmem:[%s1 + $0x3a8] sm:$0xff]
  %v4636 = vld [vmem:[%s1 + $0x3b0] sm:$0xff]
  %v4637 = vld [vmem:[%s1 + $0x3b8] sm:$0xff]
  %v4638 = vld [vmem:[%s1 + $0x3c0] sm:$0xff]
  %v4639 = vld [vmem:[%s1 + $0x3c8] sm:$0xff]
  %v4640 = vld [vmem:[%s1 + $0x3d0] sm:$0xff]
  %v4641 = vld [vmem:[%s1 + $0x3d8] sm:$0xff]
  %v4642 = vld [vmem:[%s1 + $0x3e0] sm:$0xff]
  %v4643 = vld [vmem:[%s1 + $0x3e8] sm:$0xff]
  %v4644 = vld [vmem:[%s1 + $0x3f0] sm:$0xff]
  %v4645 = vld [vmem:[%s1 + $0x3f8] sm:$0xff]
  %v4646 = vld [vmem:[%s2] sm:$0xff]
  %v4647 = vld [vmem:[%s2 + $0x8] sm:$0xff]
  %v4648 = vld [vmem:[%s2 + $0x10] sm:$0xff]
  %v4649 = vld [vmem:[%s2 + $0x18] sm:$0xff]
  %4650 = vmatprep.subr.mxu0 %v4519
  %4651 = vmatpush1.msra.mxu0 %v4518
  %4652 = vmatprep.subr.mxu0 %v4523
  %4653 = vmatpush1.msra.mxu0 %v4522
  %4654 = vmatprep.subr.mxu0 %v4527
  %4655 = vmatpush1.msra.mxu0 %v4526
  %4656 = vmatprep.subr.mxu0 %v4531
  %4657 = vmatpush1.msra.mxu0 %v4530
  %4658 = vmatprep.subr.mxu0 %v4535
  %4659 = vmatpush1.msra.mxu0 %v4534
  %4660 = vmatprep.subr.mxu0 %v4539
  %4661 = vmatpush1.msra.mxu0 %v4538
  %4662 = vmatprep.subr.mxu0 %v4543
  %4663 = vmatpush1.msra.mxu0 %v4542
  %4664 = vmatprep.subr.mxu0 %v4547
  %4665 = vmatpush1.msra.mxu0 %v4546
  %4666 = vmatprep.subr.mxu0 %v4551
  %4667 = vmatpush1.msra.mxu0 %v4550
  %4668 = vmatprep.subr.mxu0 %v4555
  %4669 = vmatpush1.msra.mxu0 %v4554
  %4670 = vmatprep.subr.mxu0 %v4559
  %4671 = vmatpush1.msra.mxu0 %v4558
  %4672 = vmatprep.subr.mxu0 %v4563
  %4673 = vmatpush1.msra.mxu0 %v4562
  %4674 = vmatprep.subr.mxu0 %v4567
  %4675 = vmatpush1.msra.mxu0 %v4566
  %4676 = vmatprep.subr.mxu0 %v4571
  %4677 = vmatpush1.msra.mxu0 %v4570
  %4678 = vmatprep.subr.mxu0 %v4575
  %4679 = vmatpush1.msra.mxu0 %v4574
  %4680 = vmatprep.subr.mxu0 %v4579
  %4681 = vmatpush1.msra.mxu0 %v4578
  %4682 = vmatprep.subr.mxu0 %v4583
  %4683 = vmatpush1.msra.mxu0 %v4582
  %4684 = vmatprep.subr.mxu0 %v4587
  %4685 = vmatpush1.msra.mxu0 %v4586
  %4686 = vmatprep.subr.mxu0 %v4591
  %4687 = vmatpush1.msra.mxu0 %v4590
  %4688 = vmatprep.subr.mxu0 %v4595
  %4689 = vmatpush1.msra.mxu0 %v4594
  %4690 = vmatprep.subr.mxu0 %v4599
  %4691 = vmatpush1.msra.mxu0 %v4598
  %4692 = vmatprep.subr.mxu0 %v4603
  %4693 = vmatpush1.msra.mxu0 %v4602
  %4694 = vmatprep.subr.mxu0 %v4607
  %4695 = vmatpush1.msra.mxu0 %v4606
  %4696 = vmatprep.subr.mxu0 %v4611
  %4697 = vmatpush1.msra.mxu0 %v4610
  %4698 = vmatprep.subr.mxu0 %v4615
  %4699 = vmatpush1.msra.mxu0 %v4614
  %4700 = vmatprep.subr.mxu0 %v4619
  %4701 = vmatpush1.msra.mxu0 %v4618
  %4702 = vmatprep.subr.mxu0 %v4623
  %4703 = vmatpush1.msra.mxu0 %v4622
  %4704 = vmatprep.subr.mxu0 %v4627
  %4705 = vmatpush1.msra.mxu0 %v4626
  %4706 = vmatprep.subr.mxu0 %v4631
  %4707 = vmatpush1.msra.mxu0 %v4630
  %4708 = vmatprep.subr.mxu0 %v4635
  %4709 = vmatpush1.msra.mxu0 %v4634
  %4710 = vmatprep.subr.mxu0 %v4639
  %4711 = vmatpush1.msra.mxu0 %v4638
  %4712 = vmatprep.subr.mxu0 %v4643
  %4713 = vmatpush1.msra.mxu0 %v4642
  %4714 = vmatprep.mubr.f32.mxu0 %v3636
  %4715 = vmatmul.mubr.f32.gmra.mrb[0].mxu0 %v4517
  %v4716 = vpop.f32.mrb[0].mxu0
  %v4717 = vadd.f32 %v4646, %v4716
  %v4718 = vpop.f32.mrb[0].mxu0
  %v4719 = vadd.f32 %v4647, %v4718
  %4720 = vdwg.mxu0
  %4721 = vmatprep.subr.mxu0 %v4521
  %4722 = vmatpush1.msra.mxu0 %v4520
  %4723 = vmatprep.subr.mxu0 %v4525
  %4724 = vmatpush1.msra.mxu0 %v4524
  %4725 = vmatprep.subr.mxu0 %v4529
  %4726 = vmatpush1.msra.mxu0 %v4528
  %4727 = vmatprep.subr.mxu0 %v4533
  %4728 = vmatpush1.msra.mxu0 %v4532
  %4729 = vmatprep.subr.mxu0 %v4537
  %4730 = vmatpush1.msra.mxu0 %v4536
  %4731 = vmatprep.subr.mxu0 %v4541
  %4732 = vmatpush1.msra.mxu0 %v4540
  %4733 = vmatprep.subr.mxu0 %v4545
  %4734 = vmatpush1.msra.mxu0 %v4544
  %4735 = vmatprep.subr.mxu0 %v4549
  %4736 = vmatpush1.msra.mxu0 %v4548
  %4737 = vmatprep.subr.mxu0 %v4553
  %4738 = vmatpush1.msra.mxu0 %v4552
  %4739 = vmatprep.subr.mxu0 %v4557
  %4740 = vmatpush1.msra.mxu0 %v4556
  %4741 = vmatprep.subr.mxu0 %v4561
  %4742 = vmatpush1.msra.mxu0 %v4560
  %4743 = vmatprep.subr.mxu0 %v4565
  %4744 = vmatpush1.msra.mxu0 %v4564
  %4745 = vmatprep.subr.mxu0 %v4569
  %4746 = vmatpush1.msra.mxu0 %v4568
  %4747 = vmatprep.subr.mxu0 %v4573
  %4748 = vmatpush1.msra.mxu0 %v4572
  %4749 = vmatprep.subr.mxu0 %v4577
  %4750 = vmatpush1.msra.mxu0 %v4576
  %4751 = vmatprep.subr.mxu0 %v4581
  %4752 = vmatpush1.msra.mxu0 %v4580
  %4753 = vmatprep.subr.mxu0 %v4585
  %4754 = vmatpush1.msra.mxu0 %v4584
  %4755 = vmatprep.subr.mxu0 %v4589
  %4756 = vmatpush1.msra.mxu0 %v4588
  %4757 = vmatprep.subr.mxu0 %v4593
  %4758 = vmatpush1.msra.mxu0 %v4592
  %4759 = vmatprep.subr.mxu0 %v4597
  %4760 = vmatpush1.msra.mxu0 %v4596
  %4761 = vmatprep.subr.mxu0 %v4601
  %4762 = vmatpush1.msra.mxu0 %v4600
  %4763 = vmatprep.subr.mxu0 %v4605
  %4764 = vmatpush1.msra.mxu0 %v4604
  %4765 = vmatprep.subr.mxu0 %v4609
  %4766 = vmatpush1.msra.mxu0 %v4608
  %4767 = vmatprep.subr.mxu0 %v4613
  %4768 = vmatpush1.msra.mxu0 %v4612
  %4769 = vmatprep.subr.mxu0 %v4617
  %4770 = vmatpush1.msra.mxu0 %v4616
  %4771 = vmatprep.subr.mxu0 %v4621
  %4772 = vmatpush1.msra.mxu0 %v4620
  %4773 = vmatprep.subr.mxu0 %v4625
  %4774 = vmatpush1.msra.mxu0 %v4624
  %4775 = vmatprep.subr.mxu0 %v4629
  %4776 = vmatpush1.msra.mxu0 %v4628
  %4777 = vmatprep.subr.mxu0 %v4633
  %4778 = vmatpush1.msra.mxu0 %v4632
  %4779 = vmatprep.subr.mxu0 %v4637
  %4780 = vmatpush1.msra.mxu0 %v4636
  %4781 = vmatprep.subr.mxu0 %v4641
  %4782 = vmatpush1.msra.mxu0 %v4640
  %4783 = vmatprep.subr.mxu0 %v4645
  %4784 = vmatpush1.msra.mxu0 %v4644
  %4785 = vmatprep.mubr.f32.mxu0 %v3636
  %4786 = vmatmul.mubr.f32.gmra.mrb[0].mxu0 %v4517
  %v4787 = vpop.f32.mrb[0].mxu0
  %v4788 = vadd.f32 %v4648, %v4787
  %v4789 = vpop.f32.mrb[0].mxu0
  %v4790 = vadd.f32 %v4649, %v4789
  %4791 = vdwg.mxu0
  %v4792 = vxor.u32 %v4717, 2147483648
  %v4793 = vmul.f32 %v4792, 1.442695
  %v4794 = vpow.pop %v4793
  %v4795 = vadd.f32 %v4794, 1.0
  %v4796 = vrcp.pop %v4795
  %v4797 = vmul.f32 1.0, %v4796
  %v4798 = vxor.u32 %v4719, 2147483648
  %v4799 = vmul.f32 %v4798, 1.442695
  %v4800 = vpow.pop %v4799
  %v4801 = vadd.f32 %v4800, 1.0
  %v4802 = vrcp.pop %v4801
  %v4803 = vmul.f32 1.0, %v4802
  %v4804 = vmul.f32 %v4797, %v4790
  %v4805 = vadd.f32 %v4788, %v4804
  %v4806 = vtanh.pop %v4805
  %v4807 = vsub.f32 1.0, %v4803
  %v4808 = vmul.f32 %v4807, %v4806
  %v4809 = vmul.f32 %v4803, %v3636
  %v4810 = vadd.f32 %v4808, %v4809
  %v4811 = vld [vmem:[%s476] sm:$0xff]
  %v4812 = vld [vmem:[%s476 + $0x8] sm:$0xff]
  %v4813 = vld [vmem:[%s476 + $0x10] sm:$0xff]
  %v4814 = vld [vmem:[%s476 + $0x18] sm:$0xff]
  %v4815 = vld [vmem:[%s476 + $0x20] sm:$0xff]
  %v4816 = vld [vmem:[%s476 + $0x28] sm:$0xff]
  %v4817 = vld [vmem:[%s476 + $0x30] sm:$0xff]
  %v4818 = vld [vmem:[%s476 + $0x38] sm:$0xff]
  %v4819 = vld [vmem:[%s476 + $0x40] sm:$0xff]
  %v4820 = vld [vmem:[%s476 + $0x48] sm:$0xff]
  %v4821 = vld [vmem:[%s476 + $0x50] sm:$0xff]
  %v4822 = vld [vmem:[%s476 + $0x58] sm:$0xff]
  %v4823 = vld [vmem:[%s476 + $0x60] sm:$0xff]
  %v4824 = vld [vmem:[%s476 + $0x68] sm:$0xff]
  %v4825 = vld [vmem:[%s476 + $0x70] sm:$0xff]
  %v4826 = vld [vmem:[%s476 + $0x78] sm:$0xff]
  %v4827 = vld [vmem:[%s476 + $0x80] sm:$0xff]
  %v4828 = vld [vmem:[%s476 + $0x88] sm:$0xff]
  %v4829 = vld [vmem:[%s476 + $0x90] sm:$0xff]
  %v4830 = vld [vmem:[%s476 + $0x98] sm:$0xff]
  %v4831 = vld [vmem:[%s476 + $0xa0] sm:$0xff]
  %v4832 = vld [vmem:[%s476 + $0xa8] sm:$0xff]
  %v4833 = vld [vmem:[%s476 + $0xb0] sm:$0xff]
  %v4834 = vld [vmem:[%s476 + $0xb8] sm:$0xff]
  %v4835 = vld [vmem:[%s476 + $0xc0] sm:$0xff]
  %v4836 = vld [vmem:[%s476 + $0xc8] sm:$0xff]
  %v4837 = vld [vmem:[%s476 + $0xd0] sm:$0xff]
  %v4838 = vld [vmem:[%s476 + $0xd8] sm:$0xff]
  %v4839 = vld [vmem:[%s476 + $0xe0] sm:$0xff]
  %v4840 = vld [vmem:[%s476 + $0xe8] sm:$0xff]
  %v4841 = vld [vmem:[%s476 + $0xf0] sm:$0xff]
  %v4842 = vld [vmem:[%s476 + $0xf8] sm:$0xff]
  %v4843 = vld [vmem:[%s476 + $0x100] sm:$0xff]
  %v4844 = vld [vmem:[%s476 + $0x108] sm:$0xff]
  %v4845 = vld [vmem:[%s476 + $0x110] sm:$0xff]
  %v4846 = vld [vmem:[%s476 + $0x118] sm:$0xff]
  %v4847 = vld [vmem:[%s476 + $0x120] sm:$0xff]
  %v4848 = vld [vmem:[%s476 + $0x128] sm:$0xff]
  %v4849 = vld [vmem:[%s476 + $0x130] sm:$0xff]
  %v4850 = vld [vmem:[%s476 + $0x138] sm:$0xff]
  %v4851 = vld [vmem:[%s476 + $0x140] sm:$0xff]
  %v4852 = vld [vmem:[%s476 + $0x148] sm:$0xff]
  %v4853 = vld [vmem:[%s476 + $0x150] sm:$0xff]
  %v4854 = vld [vmem:[%s476 + $0x158] sm:$0xff]
  %v4855 = vld [vmem:[%s476 + $0x160] sm:$0xff]
  %v4856 = vld [vmem:[%s476 + $0x168] sm:$0xff]
  %v4857 = vld [vmem:[%s476 + $0x170] sm:$0xff]
  %v4858 = vld [vmem:[%s476 + $0x178] sm:$0xff]
  %v4859 = vld [vmem:[%s476 + $0x180] sm:$0xff]
  %v4860 = vld [vmem:[%s476 + $0x188] sm:$0xff]
  %v4861 = vld [vmem:[%s476 + $0x190] sm:$0xff]
  %v4862 = vld [vmem:[%s476 + $0x198] sm:$0xff]
  %v4863 = vld [vmem:[%s476 + $0x1a0] sm:$0xff]
  %v4864 = vld [vmem:[%s476 + $0x1a8] sm:$0xff]
  %v4865 = vld [vmem:[%s476 + $0x1b0] sm:$0xff]
  %v4866 = vld [vmem:[%s476 + $0x1b8] sm:$0xff]
  %v4867 = vld [vmem:[%s476 + $0x1c0] sm:$0xff]
  %v4868 = vld [vmem:[%s476 + $0x1c8] sm:$0xff]
  %v4869 = vld [vmem:[%s476 + $0x1d0] sm:$0xff]
  %v4870 = vld [vmem:[%s476 + $0x1d8] sm:$0xff]
  %v4871 = vld [vmem:[%s476 + $0x1e0] sm:$0xff]
  %v4872 = vld [vmem:[%s476 + $0x1e8] sm:$0xff]
  %v4873 = vld [vmem:[%s476 + $0x1f0] sm:$0xff]
  %v4874 = vld [vmem:[%s476 + $0x1f8] sm:$0xff]
  %v4875 = vld [vmem:[%s476 + $0x200] sm:$0xff]
  %v4876 = vld [vmem:[%s476 + $0x208] sm:$0xff]
  %v4877 = vld [vmem:[%s476 + $0x210] sm:$0xff]
  %v4878 = vld [vmem:[%s476 + $0x218] sm:$0xff]
  %v4879 = vld [vmem:[%s476 + $0x220] sm:$0xff]
  %v4880 = vld [vmem:[%s476 + $0x228] sm:$0xff]
  %v4881 = vld [vmem:[%s476 + $0x230] sm:$0xff]
  %v4882 = vld [vmem:[%s476 + $0x238] sm:$0xff]
  %v4883 = vld [vmem:[%s476 + $0x240] sm:$0xff]
  %v4884 = vld [vmem:[%s476 + $0x248] sm:$0xff]
  %v4885 = vld [vmem:[%s476 + $0x250] sm:$0xff]
  %v4886 = vld [vmem:[%s476 + $0x258] sm:$0xff]
  %v4887 = vld [vmem:[%s476 + $0x260] sm:$0xff]
  %v4888 = vld [vmem:[%s476 + $0x268] sm:$0xff]
  %v4889 = vld [vmem:[%s476 + $0x270] sm:$0xff]
  %v4890 = vld [vmem:[%s476 + $0x278] sm:$0xff]
  %v4891 = vld [vmem:[%s476 + $0x280] sm:$0xff]
  %v4892 = vld [vmem:[%s476 + $0x288] sm:$0xff]
  %v4893 = vld [vmem:[%s476 + $0x290] sm:$0xff]
  %v4894 = vld [vmem:[%s476 + $0x298] sm:$0xff]
  %v4895 = vld [vmem:[%s476 + $0x2a0] sm:$0xff]
  %v4896 = vld [vmem:[%s476 + $0x2a8] sm:$0xff]
  %v4897 = vld [vmem:[%s476 + $0x2b0] sm:$0xff]
  %v4898 = vld [vmem:[%s476 + $0x2b8] sm:$0xff]
  %v4899 = vld [vmem:[%s476 + $0x2c0] sm:$0xff]
  %v4900 = vld [vmem:[%s476 + $0x2c8] sm:$0xff]
  %v4901 = vld [vmem:[%s476 + $0x2d0] sm:$0xff]
  %v4902 = vld [vmem:[%s476 + $0x2d8] sm:$0xff]
  %v4903 = vld [vmem:[%s476 + $0x2e0] sm:$0xff]
  %v4904 = vld [vmem:[%s476 + $0x2e8] sm:$0xff]
  %v4905 = vld [vmem:[%s476 + $0x2f0] sm:$0xff]
  %v4906 = vld [vmem:[%s476 + $0x2f8] sm:$0xff]
  %v4907 = vld [vmem:[%s476 + $0x300] sm:$0xff]
  %v4908 = vld [vmem:[%s476 + $0x308] sm:$0xff]
  %v4909 = vld [vmem:[%s476 + $0x310] sm:$0xff]
  %v4910 = vld [vmem:[%s476 + $0x318] sm:$0xff]
  %v4911 = vld [vmem:[%s476 + $0x320] sm:$0xff]
  %v4912 = vld [vmem:[%s476 + $0x328] sm:$0xff]
  %v4913 = vld [vmem:[%s476 + $0x330] sm:$0xff]
  %v4914 = vld [vmem:[%s476 + $0x338] sm:$0xff]
  %v4915 = vld [vmem:[%s476 + $0x340] sm:$0xff]
  %v4916 = vld [vmem:[%s476 + $0x348] sm:$0xff]
  %v4917 = vld [vmem:[%s476 + $0x350] sm:$0xff]
  %v4918 = vld [vmem:[%s476 + $0x358] sm:$0xff]
  %v4919 = vld [vmem:[%s476 + $0x360] sm:$0xff]
  %v4920 = vld [vmem:[%s476 + $0x368] sm:$0xff]
  %v4921 = vld [vmem:[%s476 + $0x370] sm:$0xff]
  %v4922 = vld [vmem:[%s476 + $0x378] sm:$0xff]
  %v4923 = vld [vmem:[%s476 + $0x380] sm:$0xff]
  %v4924 = vld [vmem:[%s476 + $0x388] sm:$0xff]
  %v4925 = vld [vmem:[%s476 + $0x390] sm:$0xff]
  %v4926 = vld [vmem:[%s476 + $0x398] sm:$0xff]
  %v4927 = vld [vmem:[%s476 + $0x3a0] sm:$0xff]
  %v4928 = vld [vmem:[%s476 + $0x3a8] sm:$0xff]
  %v4929 = vld [vmem:[%s476 + $0x3b0] sm:$0xff]
  %v4930 = vld [vmem:[%s476 + $0x3b8] sm:$0xff]
  %v4931 = vld [vmem:[%s476 + $0x3c0] sm:$0xff]
  %v4932 = vld [vmem:[%s476 + $0x3c8] sm:$0xff]
  %v4933 = vld [vmem:[%s476 + $0x3d0] sm:$0xff]
  %v4934 = vld [vmem:[%s476 + $0x3d8] sm:$0xff]
  %v4935 = vld [vmem:[%s476 + $0x3e0] sm:$0xff]
  %v4936 = vld [vmem:[%s476 + $0x3e8] sm:$0xff]
  %v4937 = vld [vmem:[%s476 + $0x3f0] sm:$0xff]
  %v4938 = vld [vmem:[%s476 + $0x3f8] sm:$0xff]
  %v4939 = vld [vmem:[%s605] sm:$0xff]
  %v4940 = vld [vmem:[%s605 + $0x8] sm:$0xff]
  %v4941 = vld [vmem:[%s605 + $0x10] sm:$0xff]
  %v4942 = vld [vmem:[%s605 + $0x18] sm:$0xff]
  %4943 = vmatprep.subr.mxu0 %v4812
  %4944 = vmatpush1.msra.mxu0 %v4811
  %4945 = vmatprep.subr.mxu0 %v4816
  %4946 = vmatpush1.msra.mxu0 %v4815
  %4947 = vmatprep.subr.mxu0 %v4820
  %4948 = vmatpush1.msra.mxu0 %v4819
  %4949 = vmatprep.subr.mxu0 %v4824
  %4950 = vmatpush1.msra.mxu0 %v4823
  %4951 = vmatprep.subr.mxu0 %v4828
  %4952 = vmatpush1.msra.mxu0 %v4827
  %4953 = vmatprep.subr.mxu0 %v4832
  %4954 = vmatpush1.msra.mxu0 %v4831
  %4955 = vmatprep.subr.mxu0 %v4836
  %4956 = vmatpush1.msra.mxu0 %v4835
  %4957 = vmatprep.subr.mxu0 %v4840
  %4958 = vmatpush1.msra.mxu0 %v4839
  %4959 = vmatprep.subr.mxu0 %v4844
  %4960 = vmatpush1.msra.mxu0 %v4843
  %4961 = vmatprep.subr.mxu0 %v4848
  %4962 = vmatpush1.msra.mxu0 %v4847
  %4963 = vmatprep.subr.mxu0 %v4852
  %4964 = vmatpush1.msra.mxu0 %v4851
  %4965 = vmatprep.subr.mxu0 %v4856
  %4966 = vmatpush1.msra.mxu0 %v4855
  %4967 = vmatprep.subr.mxu0 %v4860
  %4968 = vmatpush1.msra.mxu0 %v4859
  %4969 = vmatprep.subr.mxu0 %v4864
  %4970 = vmatpush1.msra.mxu0 %v4863
  %4971 = vmatprep.subr.mxu0 %v4868
  %4972 = vmatpush1.msra.mxu0 %v4867
  %4973 = vmatprep.subr.mxu0 %v4872
  %4974 = vmatpush1.msra.mxu0 %v4871
  %4975 = vmatprep.subr.mxu0 %v4876
  %4976 = vmatpush1.msra.mxu0 %v4875
  %4977 = vmatprep.subr.mxu0 %v4880
  %4978 = vmatpush1.msra.mxu0 %v4879
  %4979 = vmatprep.subr.mxu0 %v4884
  %4980 = vmatpush1.msra.mxu0 %v4883
  %4981 = vmatprep.subr.mxu0 %v4888
  %4982 = vmatpush1.msra.mxu0 %v4887
  %4983 = vmatprep.subr.mxu0 %v4892
  %4984 = vmatpush1.msra.mxu0 %v4891
  %4985 = vmatprep.subr.mxu0 %v4896
  %4986 = vmatpush1.msra.mxu0 %v4895
  %4987 = vmatprep.subr.mxu0 %v4900
  %4988 = vmatpush1.msra.mxu0 %v4899
  %4989 = vmatprep.subr.mxu0 %v4904
  %4990 = vmatpush1.msra.mxu0 %v4903
  %4991 = vmatprep.subr.mxu0 %v4908
  %4992 = vmatpush1.msra.mxu0 %v4907
  %4993 = vmatprep.subr.mxu0 %v4912
  %4994 = vmatpush1.msra.mxu0 %v4911
  %4995 = vmatprep.subr.mxu0 %v4916
  %4996 = vmatpush1.msra.mxu0 %v4915
  %4997 = vmatprep.subr.mxu0 %v4920
  %4998 = vmatpush1.msra.mxu0 %v4919
  %4999 = vmatprep.subr.mxu0 %v4924
  %5000 = vmatpush1.msra.mxu0 %v4923
  %5001 = vmatprep.subr.mxu0 %v4928
  %5002 = vmatpush1.msra.mxu0 %v4927
  %5003 = vmatprep.subr.mxu0 %v4932
  %5004 = vmatpush1.msra.mxu0 %v4931
  %5005 = vmatprep.subr.mxu0 %v4936
  %5006 = vmatpush1.msra.mxu0 %v4935
  %5007 = vmatprep.mubr.f32.mxu0 %v3929
  %5008 = vmatmul.mubr.f32.gmra.mrb[0].mxu0 %v3636
  %v5009 = vpop.f32.mrb[0].mxu0
  %v5010 = vadd.f32 %v4939, %v5009
  %v5011 = vpop.f32.mrb[0].mxu0
  %v5012 = vadd.f32 %v4940, %v5011
  %5013 = vdwg.mxu0
  %5014 = vmatprep.subr.mxu0 %v4814
  %5015 = vmatpush1.msra.mxu0 %v4813
  %5016 = vmatprep.subr.mxu0 %v4818
  %5017 = vmatpush1.msra.mxu0 %v4817
  %5018 = vmatprep.subr.mxu0 %v4822
  %5019 = vmatpush1.msra.mxu0 %v4821
  %5020 = vmatprep.subr.mxu0 %v4826
  %5021 = vmatpush1.msra.mxu0 %v4825
  %5022 = vmatprep.subr.mxu0 %v4830
  %5023 = vmatpush1.msra.mxu0 %v4829
  %5024 = vmatprep.subr.mxu0 %v4834
  %5025 = vmatpush1.msra.mxu0 %v4833
  %5026 = vmatprep.subr.mxu0 %v4838
  %5027 = vmatpush1.msra.mxu0 %v4837
  %5028 = vmatprep.subr.mxu0 %v4842
  %5029 = vmatpush1.msra.mxu0 %v4841
  %5030 = vmatprep.subr.mxu0 %v4846
  %5031 = vmatpush1.msra.mxu0 %v4845
  %5032 = vmatprep.subr.mxu0 %v4850
  %5033 = vmatpush1.msra.mxu0 %v4849
  %5034 = vmatprep.subr.mxu0 %v4854
  %5035 = vmatpush1.msra.mxu0 %v4853
  %5036 = vmatprep.subr.mxu0 %v4858
  %5037 = vmatpush1.msra.mxu0 %v4857
  %5038 = vmatprep.subr.mxu0 %v4862
  %5039 = vmatpush1.msra.mxu0 %v4861
  %5040 = vmatprep.subr.mxu0 %v4866
  %5041 = vmatpush1.msra.mxu0 %v4865
  %5042 = vmatprep.subr.mxu0 %v4870
  %5043 = vmatpush1.msra.mxu0 %v4869
  %5044 = vmatprep.subr.mxu0 %v4874
  %5045 = vmatpush1.msra.mxu0 %v4873
  %5046 = vmatprep.subr.mxu0 %v4878
  %5047 = vmatpush1.msra.mxu0 %v4877
  %5048 = vmatprep.subr.mxu0 %v4882
  %5049 = vmatpush1.msra.mxu0 %v4881
  %5050 = vmatprep.subr.mxu0 %v4886
  %5051 = vmatpush1.msra.mxu0 %v4885
  %5052 = vmatprep.subr.mxu0 %v4890
  %5053 = vmatpush1.msra.mxu0 %v4889
  %5054 = vmatprep.subr.mxu0 %v4894
  %5055 = vmatpush1.msra.mxu0 %v4893
  %5056 = vmatprep.subr.mxu0 %v4898
  %5057 = vmatpush1.msra.mxu0 %v4897
  %5058 = vmatprep.subr.mxu0 %v4902
  %5059 = vmatpush1.msra.mxu0 %v4901
  %5060 = vmatprep.subr.mxu0 %v4906
  %5061 = vmatpush1.msra.mxu0 %v4905
  %5062 = vmatprep.subr.mxu0 %v4910
  %5063 = vmatpush1.msra.mxu0 %v4909
  %5064 = vmatprep.subr.mxu0 %v4914
  %5065 = vmatpush1.msra.mxu0 %v4913
  %5066 = vmatprep.subr.mxu0 %v4918
  %5067 = vmatpush1.msra.mxu0 %v4917
  %5068 = vmatprep.subr.mxu0 %v4922
  %5069 = vmatpush1.msra.mxu0 %v4921
  %5070 = vmatprep.subr.mxu0 %v4926
  %5071 = vmatpush1.msra.mxu0 %v4925
  %5072 = vmatprep.subr.mxu0 %v4930
  %5073 = vmatpush1.msra.mxu0 %v4929
  %5074 = vmatprep.subr.mxu0 %v4934
  %5075 = vmatpush1.msra.mxu0 %v4933
  %5076 = vmatprep.subr.mxu0 %v4938
  %5077 = vmatpush1.msra.mxu0 %v4937
  %5078 = vmatprep.mubr.f32.mxu0 %v3929
  %5079 = vmatmul.mubr.f32.gmra.mrb[0].mxu0 %v3636
  %v5080 = vpop.f32.mrb[0].mxu0
  %v5081 = vadd.f32 %v4941, %v5080
  %v5082 = vpop.f32.mrb[0].mxu0
  %v5083 = vadd.f32 %v4942, %v5082
  %5084 = vdwg.mxu0
  %v5085 = vxor.u32 %v5010, 2147483648
  %v5086 = vmul.f32 %v5085, 1.442695
  %v5087 = vpow.pop %v5086
  %v5088 = vadd.f32 %v5087, 1.0
  %v5089 = vrcp.pop %v5088
  %v5090 = vmul.f32 1.0, %v5089
  %v5091 = vxor.u32 %v5012, 2147483648
  %v5092 = vmul.f32 %v5091, 1.442695
  %v5093 = vpow.pop %v5092
  %v5094 = vadd.f32 %v5093, 1.0
  %v5095 = vrcp.pop %v5094
  %v5096 = vmul.f32 1.0, %v5095
  %v5097 = vmul.f32 %v5090, %v5083
  %v5098 = vadd.f32 %v5081, %v5097
  %v5099 = vtanh.pop %v5098
  %v5100 = vsub.f32 1.0, %v5096
  %v5101 = vmul.f32 %v5100, %v5099
  %v5102 = vmul.f32 %v5096, %v3929
  %v5103 = vadd.f32 %v5101, %v5102
  %v5104 = vld [vmem:[%s1094] sm:$0xff]
  %v5105 = vld [vmem:[%s1094 + $0x8] sm:$0xff]
  %v5106 = vld [vmem:[%s1094 + $0x10] sm:$0xff]
  %v5107 = vld [vmem:[%s1094 + $0x18] sm:$0xff]
  %v5108 = vld [vmem:[%s1094 + $0x20] sm:$0xff]
  %v5109 = vld [vmem:[%s1094 + $0x28] sm:$0xff]
  %v5110 = vld [vmem:[%s1094 + $0x30] sm:$0xff]
  %v5111 = vld [vmem:[%s1094 + $0x38] sm:$0xff]
  %v5112 = vld [vmem:[%s1094 + $0x40] sm:$0xff]
  %v5113 = vld [vmem:[%s1094 + $0x48] sm:$0xff]
  %v5114 = vld [vmem:[%s1094 + $0x50] sm:$0xff]
  %v5115 = vld [vmem:[%s1094 + $0x58] sm:$0xff]
  %v5116 = vld [vmem:[%s1094 + $0x60] sm:$0xff]
  %v5117 = vld [vmem:[%s1094 + $0x68] sm:$0xff]
  %v5118 = vld [vmem:[%s1094 + $0x70] sm:$0xff]
  %v5119 = vld [vmem:[%s1094 + $0x78] sm:$0xff]
  %v5120 = vld [vmem:[%s1094 + $0x80] sm:$0xff]
  %v5121 = vld [vmem:[%s1094 + $0x88] sm:$0xff]
  %v5122 = vld [vmem:[%s1094 + $0x90] sm:$0xff]
  %v5123 = vld [vmem:[%s1094 + $0x98] sm:$0xff]
  %v5124 = vld [vmem:[%s1094 + $0xa0] sm:$0xff]
  %v5125 = vld [vmem:[%s1094 + $0xa8] sm:$0xff]
  %v5126 = vld [vmem:[%s1094 + $0xb0] sm:$0xff]
  %v5127 = vld [vmem:[%s1094 + $0xb8] sm:$0xff]
  %v5128 = vld [vmem:[%s1094 + $0xc0] sm:$0xff]
  %v5129 = vld [vmem:[%s1094 + $0xc8] sm:$0xff]
  %v5130 = vld [vmem:[%s1094 + $0xd0] sm:$0xff]
  %v5131 = vld [vmem:[%s1094 + $0xd8] sm:$0xff]
  %v5132 = vld [vmem:[%s1094 + $0xe0] sm:$0xff]
  %v5133 = vld [vmem:[%s1094 + $0xe8] sm:$0xff]
  %v5134 = vld [vmem:[%s1094 + $0xf0] sm:$0xff]
  %v5135 = vld [vmem:[%s1094 + $0xf8] sm:$0xff]
  %v5136 = vld [vmem:[%s1094 + $0x100] sm:$0xff]
  %v5137 = vld [vmem:[%s1094 + $0x108] sm:$0xff]
  %v5138 = vld [vmem:[%s1094 + $0x110] sm:$0xff]
  %v5139 = vld [vmem:[%s1094 + $0x118] sm:$0xff]
  %v5140 = vld [vmem:[%s1094 + $0x120] sm:$0xff]
  %v5141 = vld [vmem:[%s1094 + $0x128] sm:$0xff]
  %v5142 = vld [vmem:[%s1094 + $0x130] sm:$0xff]
  %v5143 = vld [vmem:[%s1094 + $0x138] sm:$0xff]
  %v5144 = vld [vmem:[%s1094 + $0x140] sm:$0xff]
  %v5145 = vld [vmem:[%s1094 + $0x148] sm:$0xff]
  %v5146 = vld [vmem:[%s1094 + $0x150] sm:$0xff]
  %v5147 = vld [vmem:[%s1094 + $0x158] sm:$0xff]
  %v5148 = vld [vmem:[%s1094 + $0x160] sm:$0xff]
  %v5149 = vld [vmem:[%s1094 + $0x168] sm:$0xff]
  %v5150 = vld [vmem:[%s1094 + $0x170] sm:$0xff]
  %v5151 = vld [vmem:[%s1094 + $0x178] sm:$0xff]
  %v5152 = vld [vmem:[%s1094 + $0x180] sm:$0xff]
  %v5153 = vld [vmem:[%s1094 + $0x188] sm:$0xff]
  %v5154 = vld [vmem:[%s1094 + $0x190] sm:$0xff]
  %v5155 = vld [vmem:[%s1094 + $0x198] sm:$0xff]
  %v5156 = vld [vmem:[%s1094 + $0x1a0] sm:$0xff]
  %v5157 = vld [vmem:[%s1094 + $0x1a8] sm:$0xff]
  %v5158 = vld [vmem:[%s1094 + $0x1b0] sm:$0xff]
  %v5159 = vld [vmem:[%s1094 + $0x1b8] sm:$0xff]
  %v5160 = vld [vmem:[%s1094 + $0x1c0] sm:$0xff]
  %v5161 = vld [vmem:[%s1094 + $0x1c8] sm:$0xff]
  %v5162 = vld [vmem:[%s1094 + $0x1d0] sm:$0xff]
  %v5163 = vld [vmem:[%s1094 + $0x1d8] sm:$0xff]
  %v5164 = vld [vmem:[%s1094 + $0x1e0] sm:$0xff]
  %v5165 = vld [vmem:[%s1094 + $0x1e8] sm:$0xff]
  %v5166 = vld [vmem:[%s1094 + $0x1f0] sm:$0xff]
  %v5167 = vld [vmem:[%s1094 + $0x1f8] sm:$0xff]
  %v5168 = vld [vmem:[%s1094 + $0x200] sm:$0xff]
  %v5169 = vld [vmem:[%s1094 + $0x208] sm:$0xff]
  %v5170 = vld [vmem:[%s1094 + $0x210] sm:$0xff]
  %v5171 = vld [vmem:[%s1094 + $0x218] sm:$0xff]
  %v5172 = vld [vmem:[%s1094 + $0x220] sm:$0xff]
  %v5173 = vld [vmem:[%s1094 + $0x228] sm:$0xff]
  %v5174 = vld [vmem:[%s1094 + $0x230] sm:$0xff]
  %v5175 = vld [vmem:[%s1094 + $0x238] sm:$0xff]
  %v5176 = vld [vmem:[%s1094 + $0x240] sm:$0xff]
  %v5177 = vld [vmem:[%s1094 + $0x248] sm:$0xff]
  %v5178 = vld [vmem:[%s1094 + $0x250] sm:$0xff]
  %v5179 = vld [vmem:[%s1094 + $0x258] sm:$0xff]
  %v5180 = vld [vmem:[%s1094 + $0x260] sm:$0xff]
  %v5181 = vld [vmem:[%s1094 + $0x268] sm:$0xff]
  %v5182 = vld [vmem:[%s1094 + $0x270] sm:$0xff]
  %v5183 = vld [vmem:[%s1094 + $0x278] sm:$0xff]
  %v5184 = vld [vmem:[%s1094 + $0x280] sm:$0xff]
  %v5185 = vld [vmem:[%s1094 + $0x288] sm:$0xff]
  %v5186 = vld [vmem:[%s1094 + $0x290] sm:$0xff]
  %v5187 = vld [vmem:[%s1094 + $0x298] sm:$0xff]
  %v5188 = vld [vmem:[%s1094 + $0x2a0] sm:$0xff]
  %v5189 = vld [vmem:[%s1094 + $0x2a8] sm:$0xff]
  %v5190 = vld [vmem:[%s1094 + $0x2b0] sm:$0xff]
  %v5191 = vld [vmem:[%s1094 + $0x2b8] sm:$0xff]
  %v5192 = vld [vmem:[%s1094 + $0x2c0] sm:$0xff]
  %v5193 = vld [vmem:[%s1094 + $0x2c8] sm:$0xff]
  %v5194 = vld [vmem:[%s1094 + $0x2d0] sm:$0xff]
  %v5195 = vld [vmem:[%s1094 + $0x2d8] sm:$0xff]
  %v5196 = vld [vmem:[%s1094 + $0x2e0] sm:$0xff]
  %v5197 = vld [vmem:[%s1094 + $0x2e8] sm:$0xff]
  %v5198 = vld [vmem:[%s1094 + $0x2f0] sm:$0xff]
  %v5199 = vld [vmem:[%s1094 + $0x2f8] sm:$0xff]
  %v5200 = vld [vmem:[%s1094 + $0x300] sm:$0xff]
  %v5201 = vld [vmem:[%s1094 + $0x308] sm:$0xff]
  %v5202 = vld [vmem:[%s1094 + $0x310] sm:$0xff]
  %v5203 = vld [vmem:[%s1094 + $0x318] sm:$0xff]
  %v5204 = vld [vmem:[%s1094 + $0x320] sm:$0xff]
  %v5205 = vld [vmem:[%s1094 + $0x328] sm:$0xff]
  %v5206 = vld [vmem:[%s1094 + $0x330] sm:$0xff]
  %v5207 = vld [vmem:[%s1094 + $0x338] sm:$0xff]
  %v5208 = vld [vmem:[%s1094 + $0x340] sm:$0xff]
  %v5209 = vld [vmem:[%s1094 + $0x348] sm:$0xff]
  %v5210 = vld [vmem:[%s1094 + $0x350] sm:$0xff]
  %v5211 = vld [vmem:[%s1094 + $0x358] sm:$0xff]
  %v5212 = vld [vmem:[%s1094 + $0x360] sm:$0xff]
  %v5213 = vld [vmem:[%s1094 + $0x368] sm:$0xff]
  %v5214 = vld [vmem:[%s1094 + $0x370] sm:$0xff]
  %v5215 = vld [vmem:[%s1094 + $0x378] sm:$0xff]
  %v5216 = vld [vmem:[%s1094 + $0x380] sm:$0xff]
  %v5217 = vld [vmem:[%s1094 + $0x388] sm:$0xff]
  %v5218 = vld [vmem:[%s1094 + $0x390] sm:$0xff]
  %v5219 = vld [vmem:[%s1094 + $0x398] sm:$0xff]
  %v5220 = vld [vmem:[%s1094 + $0x3a0] sm:$0xff]
  %v5221 = vld [vmem:[%s1094 + $0x3a8] sm:$0xff]
  %v5222 = vld [vmem:[%s1094 + $0x3b0] sm:$0xff]
  %v5223 = vld [vmem:[%s1094 + $0x3b8] sm:$0xff]
  %v5224 = vld [vmem:[%s1094 + $0x3c0] sm:$0xff]
  %v5225 = vld [vmem:[%s1094 + $0x3c8] sm:$0xff]
  %v5226 = vld [vmem:[%s1094 + $0x3d0] sm:$0xff]
  %v5227 = vld [vmem:[%s1094 + $0x3d8] sm:$0xff]
  %v5228 = vld [vmem:[%s1094 + $0x3e0] sm:$0xff]
  %v5229 = vld [vmem:[%s1094 + $0x3e8] sm:$0xff]
  %v5230 = vld [vmem:[%s1094 + $0x3f0] sm:$0xff]
  %v5231 = vld [vmem:[%s1094 + $0x3f8] sm:$0xff]
  %v5232 = vld [vmem:[%s1223] sm:$0xff]
  %v5233 = vld [vmem:[%s1223 + $0x8] sm:$0xff]
  %v5234 = vld [vmem:[%s1223 + $0x10] sm:$0xff]
  %v5235 = vld [vmem:[%s1223 + $0x18] sm:$0xff]
  %5236 = vmatprep.subr.mxu0 %v5105
  %5237 = vmatpush1.msra.mxu0 %v5104
  %5238 = vmatprep.subr.mxu0 %v5109
  %5239 = vmatpush1.msra.mxu0 %v5108
  %5240 = vmatprep.subr.mxu0 %v5113
  %5241 = vmatpush1.msra.mxu0 %v5112
  %5242 = vmatprep.subr.mxu0 %v5117
  %5243 = vmatpush1.msra.mxu0 %v5116
  %5244 = vmatprep.subr.mxu0 %v5121
  %5245 = vmatpush1.msra.mxu0 %v5120
  %5246 = vmatprep.subr.mxu0 %v5125
  %5247 = vmatpush1.msra.mxu0 %v5124
  %5248 = vmatprep.subr.mxu0 %v5129
  %5249 = vmatpush1.msra.mxu0 %v5128
  %5250 = vmatprep.subr.mxu0 %v5133
  %5251 = vmatpush1.msra.mxu0 %v5132
  %5252 = vmatprep.subr.mxu0 %v5137
  %5253 = vmatpush1.msra.mxu0 %v5136
  %5254 = vmatprep.subr.mxu0 %v5141
  %5255 = vmatpush1.msra.mxu0 %v5140
  %5256 = vmatprep.subr.mxu0 %v5145
  %5257 = vmatpush1.msra.mxu0 %v5144
  %5258 = vmatprep.subr.mxu0 %v5149
  %5259 = vmatpush1.msra.mxu0 %v5148
  %5260 = vmatprep.subr.mxu0 %v5153
  %5261 = vmatpush1.msra.mxu0 %v5152
  %5262 = vmatprep.subr.mxu0 %v5157
  %5263 = vmatpush1.msra.mxu0 %v5156
  %5264 = vmatprep.subr.mxu0 %v5161
  %5265 = vmatpush1.msra.mxu0 %v5160
  %5266 = vmatprep.subr.mxu0 %v5165
  %5267 = vmatpush1.msra.mxu0 %v5164
  %5268 = vmatprep.subr.mxu0 %v5169
  %5269 = vmatpush1.msra.mxu0 %v5168
  %5270 = vmatprep.subr.mxu0 %v5173
  %5271 = vmatpush1.msra.mxu0 %v5172
  %5272 = vmatprep.subr.mxu0 %v5177
  %5273 = vmatpush1.msra.mxu0 %v5176
  %5274 = vmatprep.subr.mxu0 %v5181
  %5275 = vmatpush1.msra.mxu0 %v5180
  %5276 = vmatprep.subr.mxu0 %v5185
  %5277 = vmatpush1.msra.mxu0 %v5184
  %5278 = vmatprep.subr.mxu0 %v5189
  %5279 = vmatpush1.msra.mxu0 %v5188
  %5280 = vmatprep.subr.mxu0 %v5193
  %5281 = vmatpush1.msra.mxu0 %v5192
  %5282 = vmatprep.subr.mxu0 %v5197
  %5283 = vmatpush1.msra.mxu0 %v5196
  %5284 = vmatprep.subr.mxu0 %v5201
  %5285 = vmatpush1.msra.mxu0 %v5200
  %5286 = vmatprep.subr.mxu0 %v5205
  %5287 = vmatpush1.msra.mxu0 %v5204
  %5288 = vmatprep.subr.mxu0 %v5209
  %5289 = vmatpush1.msra.mxu0 %v5208
  %5290 = vmatprep.subr.mxu0 %v5213
  %5291 = vmatpush1.msra.mxu0 %v5212
  %5292 = vmatprep.subr.mxu0 %v5217
  %5293 = vmatpush1.msra.mxu0 %v5216
  %5294 = vmatprep.subr.mxu0 %v5221
  %5295 = vmatpush1.msra.mxu0 %v5220
  %5296 = vmatprep.subr.mxu0 %v5225
  %5297 = vmatpush1.msra.mxu0 %v5224
  %5298 = vmatprep.subr.mxu0 %v5229
  %5299 = vmatpush1.msra.mxu0 %v5228
  %5300 = vmatprep.mubr.f32.mxu0 %v4222
  %5301 = vmatmul.mubr.f32.gmra.mrb[0].mxu0 %v3929
  %v5302 = vpop.f32.mrb[0].mxu0
  %v5303 = vadd.f32 %v5232, %v5302
  %v5304 = vpop.f32.mrb[0].mxu0
  %v5305 = vadd.f32 %v5233, %v5304
  %5306 = vdwg.mxu0
  %5307 = vmatprep.subr.mxu0 %v5107
  %5308 = vmatpush1.msra.mxu0 %v5106
  %5309 = vmatprep.subr.mxu0 %v5111
  %5310 = vmatpush1.msra.mxu0 %v5110
  %5311 = vmatprep.subr.mxu0 %v5115
  %5312 = vmatpush1.msra.mxu0 %v5114
  %5313 = vmatprep.subr.mxu0 %v5119
  %5314 = vmatpush1.msra.mxu0 %v5118
  %5315 = vmatprep.subr.mxu0 %v5123
  %5316 = vmatpush1.msra.mxu0 %v5122
  %5317 = vmatprep.subr.mxu0 %v5127
  %5318 = vmatpush1.msra.mxu0 %v5126
  %5319 = vmatprep.subr.mxu0 %v5131
  %5320 = vmatpush1.msra.mxu0 %v5130
  %5321 = vmatprep.subr.mxu0 %v5135
  %5322 = vmatpush1.msra.mxu0 %v5134
  %5323 = vmatprep.subr.mxu0 %v5139
  %5324 = vmatpush1.msra.mxu0 %v5138
  %5325 = vmatprep.subr.mxu0 %v5143
  %5326 = vmatpush1.msra.mxu0 %v5142
  %5327 = vmatprep.subr.mxu0 %v5147
  %5328 = vmatpush1.msra.mxu0 %v5146
  %5329 = vmatprep.subr.mxu0 %v5151
  %5330 = vmatpush1.msra.mxu0 %v5150
  %5331 = vmatprep.subr.mxu0 %v5155
  %5332 = vmatpush1.msra.mxu0 %v5154
  %5333 = vmatprep.subr.mxu0 %v5159
  %5334 = vmatpush1.msra.mxu0 %v5158
  %5335 = vmatprep.subr.mxu0 %v5163
  %5336 = vmatpush1.msra.mxu0 %v5162
  %5337 = vmatprep.subr.mxu0 %v5167
  %5338 = vmatpush1.msra.mxu0 %v5166
  %5339 = vmatprep.subr.mxu0 %v5171
  %5340 = vmatpush1.msra.mxu0 %v5170
  %5341 = vmatprep.subr.mxu0 %v5175
  %5342 = vmatpush1.msra.mxu0 %v5174
  %5343 = vmatprep.subr.mxu0 %v5179
  %5344 = vmatpush1.msra.mxu0 %v5178
  %5345 = vmatprep.subr.mxu0 %v5183
  %5346 = vmatpush1.msra.mxu0 %v5182
  %5347 = vmatprep.subr.mxu0 %v5187
  %5348 = vmatpush1.msra.mxu0 %v5186
  %5349 = vmatprep.subr.mxu0 %v5191
  %5350 = vmatpush1.msra.mxu0 %v5190
  %5351 = vmatprep.subr.mxu0 %v5195
  %5352 = vmatpush1.msra.mxu0 %v5194
  %5353 = vmatprep.subr.mxu0 %v5199
  %5354 = vmatpush1.msra.mxu0 %v5198
  %5355 = vmatprep.subr.mxu0 %v5203
  %5356 = vmatpush1.msra.mxu0 %v5202
  %5357 = vmatprep.subr.mxu0 %v5207
  %5358 = vmatpush1.msra.mxu0 %v5206
  %5359 = vmatprep.subr.mxu0 %v5211
  %5360 = vmatpush1.msra.mxu0 %v5210
  %5361 = vmatprep.subr.mxu0 %v5215
  %5362 = vmatpush1.msra.mxu0 %v5214
  %5363 = vmatprep.subr.mxu0 %v5219
  %5364 = vmatpush1.msra.mxu0 %v5218
  %5365 = vmatprep.subr.mxu0 %v5223
  %5366 = vmatpush1.msra.mxu0 %v5222
  %5367 = vmatprep.subr.mxu0 %v5227
  %5368 = vmatpush1.msra.mxu0 %v5226
  %5369 = vmatprep.subr.mxu0 %v5231
  %5370 = vmatpush1.msra.mxu0 %v5230
  %5371 = vmatprep.mubr.f32.mxu0 %v4222
  %5372 = vmatmul.mubr.f32.gmra.mrb[0].mxu0 %v3929
  %v5373 = vpop.f32.mrb[0].mxu0
  %v5374 = vadd.f32 %v5234, %v5373
  %v5375 = vpop.f32.mrb[0].mxu0
  %v5376 = vadd.f32 %v5235, %v5375
  %5377 = vdwg.mxu0
  %v5378 = vxor.u32 %v5303, 2147483648
  %v5379 = vmul.f32 %v5378, 1.442695
  %v5380 = vpow.pop %v5379
  %v5381 = vadd.f32 %v5380, 1.0
  %v5382 = vrcp.pop %v5381
  %v5383 = vmul.f32 1.0, %v5382
  %v5384 = vxor.u32 %v5305, 2147483648
  %v5385 = vmul.f32 %v5384, 1.442695
  %v5386 = vpow.pop %v5385
  %v5387 = vadd.f32 %v5386, 1.0
  %v5388 = vrcp.pop %v5387
  %v5389 = vmul.f32 1.0, %v5388
  %v5390 = vmul.f32 %v5383, %v5376
  %v5391 = vadd.f32 %v5374, %v5390
  %v5392 = vtanh.pop %v5391
  %v5393 = vsub.f32 1.0, %v5389
  %v5394 = vmul.f32 %v5393, %v5392
  %v5395 = vmul.f32 %v5389, %v4222
  %v5396 = vadd.f32 %v5394, %v5395
  %v5397 = vld [vmem:[%s1873] sm:$0xff]
  %v5398 = vld [vmem:[%s1873 + $0x8] sm:$0xff]
  %v5399 = vld [vmem:[%s1873 + $0x10] sm:$0xff]
  %v5400 = vld [vmem:[%s1873 + $0x18] sm:$0xff]
  %v5401 = vld [vmem:[%s1873 + $0x20] sm:$0xff]
  %v5402 = vld [vmem:[%s1873 + $0x28] sm:$0xff]
  %v5403 = vld [vmem:[%s1873 + $0x30] sm:$0xff]
  %v5404 = vld [vmem:[%s1873 + $0x38] sm:$0xff]
  %v5405 = vld [vmem:[%s1873 + $0x40] sm:$0xff]
  %v5406 = vld [vmem:[%s1873 + $0x48] sm:$0xff]
  %v5407 = vld [vmem:[%s1873 + $0x50] sm:$0xff]
  %v5408 = vld [vmem:[%s1873 + $0x58] sm:$0xff]
  %v5409 = vld [vmem:[%s1873 + $0x60] sm:$0xff]
  %v5410 = vld [vmem:[%s1873 + $0x68] sm:$0xff]
  %v5411 = vld [vmem:[%s1873 + $0x70] sm:$0xff]
  %v5412 = vld [vmem:[%s1873 + $0x78] sm:$0xff]
  %v5413 = vld [vmem:[%s1873 + $0x80] sm:$0xff]
  %v5414 = vld [vmem:[%s1873 + $0x88] sm:$0xff]
  %v5415 = vld [vmem:[%s1873 + $0x90] sm:$0xff]
  %v5416 = vld [vmem:[%s1873 + $0x98] sm:$0xff]
  %v5417 = vld [vmem:[%s1873 + $0xa0] sm:$0xff]
  %v5418 = vld [vmem:[%s1873 + $0xa8] sm:$0xff]
  %v5419 = vld [vmem:[%s1873 + $0xb0] sm:$0xff]
  %v5420 = vld [vmem:[%s1873 + $0xb8] sm:$0xff]
  %v5421 = vld [vmem:[%s1873 + $0xc0] sm:$0xff]
  %v5422 = vld [vmem:[%s1873 + $0xc8] sm:$0xff]
  %v5423 = vld [vmem:[%s1873 + $0xd0] sm:$0xff]
  %v5424 = vld [vmem:[%s1873 + $0xd8] sm:$0xff]
  %v5425 = vld [vmem:[%s1873 + $0xe0] sm:$0xff]
  %v5426 = vld [vmem:[%s1873 + $0xe8] sm:$0xff]
  %v5427 = vld [vmem:[%s1873 + $0xf0] sm:$0xff]
  %v5428 = vld [vmem:[%s1873 + $0xf8] sm:$0xff]
  %v5429 = vld [vmem:[%s1873 + $0x100] sm:$0xff]
  %v5430 = vld [vmem:[%s1873 + $0x108] sm:$0xff]
  %v5431 = vld [vmem:[%s1873 + $0x110] sm:$0xff]
  %v5432 = vld [vmem:[%s1873 + $0x118] sm:$0xff]
  %v5433 = vld [vmem:[%s1873 + $0x120] sm:$0xff]
  %v5434 = vld [vmem:[%s1873 + $0x128] sm:$0xff]
  %v5435 = vld [vmem:[%s1873 + $0x130] sm:$0xff]
  %v5436 = vld [vmem:[%s1873 + $0x138] sm:$0xff]
  %v5437 = vld [vmem:[%s1873 + $0x140] sm:$0xff]
  %v5438 = vld [vmem:[%s1873 + $0x148] sm:$0xff]
  %v5439 = vld [vmem:[%s1873 + $0x150] sm:$0xff]
  %v5440 = vld [vmem:[%s1873 + $0x158] sm:$0xff]
  %v5441 = vld [vmem:[%s1873 + $0x160] sm:$0xff]
  %v5442 = vld [vmem:[%s1873 + $0x168] sm:$0xff]
  %v5443 = vld [vmem:[%s1873 + $0x170] sm:$0xff]
  %v5444 = vld [vmem:[%s1873 + $0x178] sm:$0xff]
  %v5445 = vld [vmem:[%s1873 + $0x180] sm:$0xff]
  %v5446 = vld [vmem:[%s1873 + $0x188] sm:$0xff]
  %v5447 = vld [vmem:[%s1873 + $0x190] sm:$0xff]
  %v5448 = vld [vmem:[%s1873 + $0x198] sm:$0xff]
  %v5449 = vld [vmem:[%s1873 + $0x1a0] sm:$0xff]
  %v5450 = vld [vmem:[%s1873 + $0x1a8] sm:$0xff]
  %v5451 = vld [vmem:[%s1873 + $0x1b0] sm:$0xff]
  %v5452 = vld [vmem:[%s1873 + $0x1b8] sm:$0xff]
  %v5453 = vld [vmem:[%s1873 + $0x1c0] sm:$0xff]
  %v5454 = vld [vmem:[%s1873 + $0x1c8] sm:$0xff]
  %v5455 = vld [vmem:[%s1873 + $0x1d0] sm:$0xff]
  %v5456 = vld [vmem:[%s1873 + $0x1d8] sm:$0xff]
  %v5457 = vld [vmem:[%s1873 + $0x1e0] sm:$0xff]
  %v5458 = vld [vmem:[%s1873 + $0x1e8] sm:$0xff]
  %v5459 = vld [vmem:[%s1873 + $0x1f0] sm:$0xff]
  %v5460 = vld [vmem:[%s1873 + $0x1f8] sm:$0xff]
  %v5461 = vld [vmem:[%s1873 + $0x200] sm:$0xff]
  %v5462 = vld [vmem:[%s1873 + $0x208] sm:$0xff]
  %v5463 = vld [vmem:[%s1873 + $0x210] sm:$0xff]
  %v5464 = vld [vmem:[%s1873 + $0x218] sm:$0xff]
  %v5465 = vld [vmem:[%s1873 + $0x220] sm:$0xff]
  %v5466 = vld [vmem:[%s1873 + $0x228] sm:$0xff]
  %v5467 = vld [vmem:[%s1873 + $0x230] sm:$0xff]
  %v5468 = vld [vmem:[%s1873 + $0x238] sm:$0xff]
  %v5469 = vld [vmem:[%s1873 + $0x240] sm:$0xff]
  %v5470 = vld [vmem:[%s1873 + $0x248] sm:$0xff]
  %v5471 = vld [vmem:[%s1873 + $0x250] sm:$0xff]
  %v5472 = vld [vmem:[%s1873 + $0x258] sm:$0xff]
  %v5473 = vld [vmem:[%s1873 + $0x260] sm:$0xff]
  %v5474 = vld [vmem:[%s1873 + $0x268] sm:$0xff]
  %v5475 = vld [vmem:[%s1873 + $0x270] sm:$0xff]
  %v5476 = vld [vmem:[%s1873 + $0x278] sm:$0xff]
  %v5477 = vld [vmem:[%s1873 + $0x280] sm:$0xff]
  %v5478 = vld [vmem:[%s1873 + $0x288] sm:$0xff]
  %v5479 = vld [vmem:[%s1873 + $0x290] sm:$0xff]
  %v5480 = vld [vmem:[%s1873 + $0x298] sm:$0xff]
  %v5481 = vld [vmem:[%s1873 + $0x2a0] sm:$0xff]
  %v5482 = vld [vmem:[%s1873 + $0x2a8] sm:$0xff]
  %v5483 = vld [vmem:[%s1873 + $0x2b0] sm:$0xff]
  %v5484 = vld [vmem:[%s1873 + $0x2b8] sm:$0xff]
  %v5485 = vld [vmem:[%s1873 + $0x2c0] sm:$0xff]
  %v5486 = vld [vmem:[%s1873 + $0x2c8] sm:$0xff]
  %v5487 = vld [vmem:[%s1873 + $0x2d0] sm:$0xff]
  %v5488 = vld [vmem:[%s1873 + $0x2d8] sm:$0xff]
  %v5489 = vld [vmem:[%s1873 + $0x2e0] sm:$0xff]
  %v5490 = vld [vmem:[%s1873 + $0x2e8] sm:$0xff]
  %v5491 = vld [vmem:[%s1873 + $0x2f0] sm:$0xff]
  %v5492 = vld [vmem:[%s1873 + $0x2f8] sm:$0xff]
  %v5493 = vld [vmem:[%s1873 + $0x300] sm:$0xff]
  %v5494 = vld [vmem:[%s1873 + $0x308] sm:$0xff]
  %v5495 = vld [vmem:[%s1873 + $0x310] sm:$0xff]
  %v5496 = vld [vmem:[%s1873 + $0x318] sm:$0xff]
  %v5497 = vld [vmem:[%s1873 + $0x320] sm:$0xff]
  %v5498 = vld [vmem:[%s1873 + $0x328] sm:$0xff]
  %v5499 = vld [vmem:[%s1873 + $0x330] sm:$0xff]
  %v5500 = vld [vmem:[%s1873 + $0x338] sm:$0xff]
  %v5501 = vld [vmem:[%s1873 + $0x340] sm:$0xff]
  %v5502 = vld [vmem:[%s1873 + $0x348] sm:$0xff]
  %v5503 = vld [vmem:[%s1873 + $0x350] sm:$0xff]
  %v5504 = vld [vmem:[%s1873 + $0x358] sm:$0xff]
  %v5505 = vld [vmem:[%s1873 + $0x360] sm:$0xff]
  %v5506 = vld [vmem:[%s1873 + $0x368] sm:$0xff]
  %v5507 = vld [vmem:[%s1873 + $0x370] sm:$0xff]
  %v5508 = vld [vmem:[%s1873 + $0x378] sm:$0xff]
  %v5509 = vld [vmem:[%s1873 + $0x380] sm:$0xff]
  %v5510 = vld [vmem:[%s1873 + $0x388] sm:$0xff]
  %v5511 = vld [vmem:[%s1873 + $0x390] sm:$0xff]
  %v5512 = vld [vmem:[%s1873 + $0x398] sm:$0xff]
  %v5513 = vld [vmem:[%s1873 + $0x3a0] sm:$0xff]
  %v5514 = vld [vmem:[%s1873 + $0x3a8] sm:$0xff]
  %v5515 = vld [vmem:[%s1873 + $0x3b0] sm:$0xff]
  %v5516 = vld [vmem:[%s1873 + $0x3b8] sm:$0xff]
  %v5517 = vld [vmem:[%s1873 + $0x3c0] sm:$0xff]
  %v5518 = vld [vmem:[%s1873 + $0x3c8] sm:$0xff]
  %v5519 = vld [vmem:[%s1873 + $0x3d0] sm:$0xff]
  %v5520 = vld [vmem:[%s1873 + $0x3d8] sm:$0xff]
  %v5521 = vld [vmem:[%s1873 + $0x3e0] sm:$0xff]
  %v5522 = vld [vmem:[%s1873 + $0x3e8] sm:$0xff]
  %v5523 = vld [vmem:[%s1873 + $0x3f0] sm:$0xff]
  %v5524 = vld [vmem:[%s1873 + $0x3f8] sm:$0xff]
  %v5525 = vld [vmem:[%s2002] sm:$0xff]
  %v5526 = vld [vmem:[%s2002 + $0x8] sm:$0xff]
  %v5527 = vld [vmem:[%s2002 + $0x10] sm:$0xff]
  %v5528 = vld [vmem:[%s2002 + $0x18] sm:$0xff]
  %5529 = vmatprep.subr.mxu0 %v5398
  %5530 = vmatpush1.msra.mxu0 %v5397
  %5531 = vmatprep.subr.mxu0 %v5402
  %5532 = vmatpush1.msra.mxu0 %v5401
  %5533 = vmatprep.subr.mxu0 %v5406
  %5534 = vmatpush1.msra.mxu0 %v5405
  %5535 = vmatprep.subr.mxu0 %v5410
  %5536 = vmatpush1.msra.mxu0 %v5409
  %5537 = vmatprep.subr.mxu0 %v5414
  %5538 = vmatpush1.msra.mxu0 %v5413
  %5539 = vmatprep.subr.mxu0 %v5418
  %5540 = vmatpush1.msra.mxu0 %v5417
  %5541 = vmatprep.subr.mxu0 %v5422
  %5542 = vmatpush1.msra.mxu0 %v5421
  %5543 = vmatprep.subr.mxu0 %v5426
  %5544 = vmatpush1.msra.mxu0 %v5425
  %5545 = vmatprep.subr.mxu0 %v5430
  %5546 = vmatpush1.msra.mxu0 %v5429
  %5547 = vmatprep.subr.mxu0 %v5434
  %5548 = vmatpush1.msra.mxu0 %v5433
  %5549 = vmatprep.subr.mxu0 %v5438
  %5550 = vmatpush1.msra.mxu0 %v5437
  %5551 = vmatprep.subr.mxu0 %v5442
  %5552 = vmatpush1.msra.mxu0 %v5441
  %5553 = vmatprep.subr.mxu0 %v5446
  %5554 = vmatpush1.msra.mxu0 %v5445
  %5555 = vmatprep.subr.mxu0 %v5450
  %5556 = vmatpush1.msra.mxu0 %v5449
  %5557 = vmatprep.subr.mxu0 %v5454
  %5558 = vmatpush1.msra.mxu0 %v5453
  %5559 = vmatprep.subr.mxu0 %v5458
  %5560 = vmatpush1.msra.mxu0 %v5457
  %5561 = vmatprep.subr.mxu0 %v5462
  %5562 = vmatpush1.msra.mxu0 %v5461
  %5563 = vmatprep.subr.mxu0 %v5466
  %5564 = vmatpush1.msra.mxu0 %v5465
  %5565 = vmatprep.subr.mxu0 %v5470
  %5566 = vmatpush1.msra.mxu0 %v5469
  %5567 = vmatprep.subr.mxu0 %v5474
  %5568 = vmatpush1.msra.mxu0 %v5473
  %5569 = vmatprep.subr.mxu0 %v5478
  %5570 = vmatpush1.msra.mxu0 %v5477
  %5571 = vmatprep.subr.mxu0 %v5482
  %5572 = vmatpush1.msra.mxu0 %v5481
  %5573 = vmatprep.subr.mxu0 %v5486
  %5574 = vmatpush1.msra.mxu0 %v5485
  %5575 = vmatprep.subr.mxu0 %v5490
  %5576 = vmatpush1.msra.mxu0 %v5489
  %5577 = vmatprep.subr.mxu0 %v5494
  %5578 = vmatpush1.msra.mxu0 %v5493
  %5579 = vmatprep.subr.mxu0 %v5498
  %5580 = vmatpush1.msra.mxu0 %v5497
  %5581 = vmatprep.subr.mxu0 %v5502
  %5582 = vmatpush1.msra.mxu0 %v5501
  %5583 = vmatprep.subr.mxu0 %v5506
  %5584 = vmatpush1.msra.mxu0 %v5505
  %5585 = vmatprep.subr.mxu0 %v5510
  %5586 = vmatpush1.msra.mxu0 %v5509
  %5587 = vmatprep.subr.mxu0 %v5514
  %5588 = vmatpush1.msra.mxu0 %v5513
  %5589 = vmatprep.subr.mxu0 %v5518
  %5590 = vmatpush1.msra.mxu0 %v5517
  %5591 = vmatprep.subr.mxu0 %v5522
  %5592 = vmatpush1.msra.mxu0 %v5521
  %5593 = vmatprep.mubr.f32.mxu0 %v4515
  %5594 = vmatmul.mubr.f32.gmra.mrb[0].mxu0 %v4222
  %v5595 = vpop.f32.mrb[0].mxu0
  %v5596 = vadd.f32 %v5525, %v5595
  %v5597 = vpop.f32.mrb[0].mxu0
  %v5598 = vadd.f32 %v5526, %v5597
  %5599 = vdwg.mxu0
  %5600 = vmatprep.subr.mxu0 %v5400
  %5601 = vmatpush1.msra.mxu0 %v5399
  %5602 = vmatprep.subr.mxu0 %v5404
  %5603 = vmatpush1.msra.mxu0 %v5403
  %5604 = vmatprep.subr.mxu0 %v5408
  %5605 = vmatpush1.msra.mxu0 %v5407
  %5606 = vmatprep.subr.mxu0 %v5412
  %5607 = vmatpush1.msra.mxu0 %v5411
  %5608 = vmatprep.subr.mxu0 %v5416
  %5609 = vmatpush1.msra.mxu0 %v5415
  %5610 = vmatprep.subr.mxu0 %v5420
  %5611 = vmatpush1.msra.mxu0 %v5419
  %5612 = vmatprep.subr.mxu0 %v5424
  %5613 = vmatpush1.msra.mxu0 %v5423
  %5614 = vmatprep.subr.mxu0 %v5428
  %5615 = vmatpush1.msra.mxu0 %v5427
  %5616 = vmatprep.subr.mxu0 %v5432
  %5617 = vmatpush1.msra.mxu0 %v5431
  %5618 = vmatprep.subr.mxu0 %v5436
  %5619 = vmatpush1.msra.mxu0 %v5435
  %5620 = vmatprep.subr.mxu0 %v5440
  %5621 = vmatpush1.msra.mxu0 %v5439
  %5622 = vmatprep.subr.mxu0 %v5444
  %5623 = vmatpush1.msra.mxu0 %v5443
  %5624 = vmatprep.subr.mxu0 %v5448
  %5625 = vmatpush1.msra.mxu0 %v5447
  %5626 = vmatprep.subr.mxu0 %v5452
  %5627 = vmatpush1.msra.mxu0 %v5451
  %5628 = vmatprep.subr.mxu0 %v5456
  %5629 = vmatpush1.msra.mxu0 %v5455
  %5630 = vmatprep.subr.mxu0 %v5460
  %5631 = vmatpush1.msra.mxu0 %v5459
  %5632 = vmatprep.subr.mxu0 %v5464
  %5633 = vmatpush1.msra.mxu0 %v5463
  %5634 = vmatprep.subr.mxu0 %v5468
  %5635 = vmatpush1.msra.mxu0 %v5467
  %5636 = vmatprep.subr.mxu0 %v5472
  %5637 = vmatpush1.msra.mxu0 %v5471
  %5638 = vmatprep.subr.mxu0 %v5476
  %5639 = vmatpush1.msra.mxu0 %v5475
  %5640 = vmatprep.subr.mxu0 %v5480
  %5641 = vmatpush1.msra.mxu0 %v5479
  %5642 = vmatprep.subr.mxu0 %v5484
  %5643 = vmatpush1.msra.mxu0 %v5483
  %5644 = vmatprep.subr.mxu0 %v5488
  %5645 = vmatpush1.msra.mxu0 %v5487
  %5646 = vmatprep.subr.mxu0 %v5492
  %5647 = vmatpush1.msra.mxu0 %v5491
  %5648 = vmatprep.subr.mxu0 %v5496
  %5649 = vmatpush1.msra.mxu0 %v5495
  %5650 = vmatprep.subr.mxu0 %v5500
  %5651 = vmatpush1.msra.mxu0 %v5499
  %5652 = vmatprep.subr.mxu0 %v5504
  %5653 = vmatpush1.msra.mxu0 %v5503
  %5654 = vmatprep.subr.mxu0 %v5508
  %5655 = vmatpush1.msra.mxu0 %v5507
  %5656 = vmatprep.subr.mxu0 %v5512
  %5657 = vmatpush1.msra.mxu0 %v5511
  %5658 = vmatprep.subr.mxu0 %v5516
  %5659 = vmatpush1.msra.mxu0 %v5515
  %5660 = vmatprep.subr.mxu0 %v5520
  %5661 = vmatpush1.msra.mxu0 %v5519
  %5662 = vmatprep.subr.mxu0 %v5524
  %5663 = vmatpush1.msra.mxu0 %v5523
  %5664 = vmatprep.mubr.f32.mxu0 %v4515
  %5665 = vmatmul.mubr.f32.gmra.mrb[0].mxu0 %v4222
  %v5666 = vpop.f32.mrb[0].mxu0
  %v5667 = vadd.f32 %v5527, %v5666
  %v5668 = vpop.f32.mrb[0].mxu0
  %v5669 = vadd.f32 %v5528, %v5668
  %5670 = vdwg.mxu0
  %v5671 = vxor.u32 %v5596, 2147483648
  %v5672 = vmul.f32 %v5671, 1.442695
  %v5673 = vpow.pop %v5672
  %v5674 = vadd.f32 %v5673, 1.0
  %v5675 = vrcp.pop %v5674
  %v5676 = vmul.f32 1.0, %v5675
  %v5677 = vxor.u32 %v5598, 2147483648
  %v5678 = vmul.f32 %v5677, 1.442695
  %v5679 = vpow.pop %v5678
  %v5680 = vadd.f32 %v5679, 1.0
  %v5681 = vrcp.pop %v5680
  %v5682 = vmul.f32 1.0, %v5681
  %v5683 = vmul.f32 %v5676, %v5669
  %v5684 = vadd.f32 %v5667, %v5683
  %v5685 = vtanh.pop %v5684
  %v5686 = vsub.f32 1.0, %v5682
  %v5687 = vmul.f32 %v5686, %v5685
  %v5688 = vmul.f32 %v5682, %v4515
  %v5689 = vadd.f32 %v5687, %v5688
  %5690 = vst [vmem:[#allocation2 + $0x18] sm:$0xff] %v5689
  %v5691 = vld [vmem:[%s0 + $0x38] sm:$0xff]
  %v5692 = vld [vmem:[%s1] sm:$0xff]
  %v5693 = vld [vmem:[%s1 + $0x8] sm:$0xff]
  %v5694 = vld [vmem:[%s1 + $0x10] sm:$0xff]
  %v5695 = vld [vmem:[%s1 + $0x18] sm:$0xff]
  %v5696 = vld [vmem:[%s1 + $0x20] sm:$0xff]
  %v5697 = vld [vmem:[%s1 + $0x28] sm:$0xff]
  %v5698 = vld [vmem:[%s1 + $0x30] sm:$0xff]
  %v5699 = vld [vmem:[%s1 + $0x38] sm:$0xff]
  %v5700 = vld [vmem:[%s1 + $0x40] sm:$0xff]
  %v5701 = vld [vmem:[%s1 + $0x48] sm:$0xff]
  %v5702 = vld [vmem:[%s1 + $0x50] sm:$0xff]
  %v5703 = vld [vmem:[%s1 + $0x58] sm:$0xff]
  %v5704 = vld [vmem:[%s1 + $0x60] sm:$0xff]
  %v5705 = vld [vmem:[%s1 + $0x68] sm:$0xff]
  %v5706 = vld [vmem:[%s1 + $0x70] sm:$0xff]
  %v5707 = vld [vmem:[%s1 + $0x78] sm:$0xff]
  %v5708 = vld [vmem:[%s1 + $0x80] sm:$0xff]
  %v5709 = vld [vmem:[%s1 + $0x88] sm:$0xff]
  %v5710 = vld [vmem:[%s1 + $0x90] sm:$0xff]
  %v5711 = vld [vmem:[%s1 + $0x98] sm:$0xff]
  %v5712 = vld [vmem:[%s1 + $0xa0] sm:$0xff]
  %v5713 = vld [vmem:[%s1 + $0xa8] sm:$0xff]
  %v5714 = vld [vmem:[%s1 + $0xb0] sm:$0xff]
  %v5715 = vld [vmem:[%s1 + $0xb8] sm:$0xff]
  %v5716 = vld [vmem:[%s1 + $0xc0] sm:$0xff]
  %v5717 = vld [vmem:[%s1 + $0xc8] sm:$0xff]
  %v5718 = vld [vmem:[%s1 + $0xd0] sm:$0xff]
  %v5719 = vld [vmem:[%s1 + $0xd8] sm:$0xff]
  %v5720 = vld [vmem:[%s1 + $0xe0] sm:$0xff]
  %v5721 = vld [vmem:[%s1 + $0xe8] sm:$0xff]
  %v5722 = vld [vmem:[%s1 + $0xf0] sm:$0xff]
  %v5723 = vld [vmem:[%s1 + $0xf8] sm:$0xff]
  %v5724 = vld [vmem:[%s1 + $0x100] sm:$0xff]
  %v5725 = vld [vmem:[%s1 + $0x108] sm:$0xff]
  %v5726 = vld [vmem:[%s1 + $0x110] sm:$0xff]
  %v5727 = vld [vmem:[%s1 + $0x118] sm:$0xff]
  %v5728 = vld [vmem:[%s1 + $0x120] sm:$0xff]
  %v5729 = vld [vmem:[%s1 + $0x128] sm:$0xff]
  %v5730 = vld [vmem:[%s1 + $0x130] sm:$0xff]
  %v5731 = vld [vmem:[%s1 + $0x138] sm:$0xff]
  %v5732 = vld [vmem:[%s1 + $0x140] sm:$0xff]
  %v5733 = vld [vmem:[%s1 + $0x148] sm:$0xff]
  %v5734 = vld [vmem:[%s1 + $0x150] sm:$0xff]
  %v5735 = vld [vmem:[%s1 + $0x158] sm:$0xff]
  %v5736 = vld [vmem:[%s1 + $0x160] sm:$0xff]
  %v5737 = vld [vmem:[%s1 + $0x168] sm:$0xff]
  %v5738 = vld [vmem:[%s1 + $0x170] sm:$0xff]
  %v5739 = vld [vmem:[%s1 + $0x178] sm:$0xff]
  %v5740 = vld [vmem:[%s1 + $0x180] sm:$0xff]
  %v5741 = vld [vmem:[%s1 + $0x188] sm:$0xff]
  %v5742 = vld [vmem:[%s1 + $0x190] sm:$0xff]
  %v5743 = vld [vmem:[%s1 + $0x198] sm:$0xff]
  %v5744 = vld [vmem:[%s1 + $0x1a0] sm:$0xff]
  %v5745 = vld [vmem:[%s1 + $0x1a8] sm:$0xff]
  %v5746 = vld [vmem:[%s1 + $0x1b0] sm:$0xff]
  %v5747 = vld [vmem:[%s1 + $0x1b8] sm:$0xff]
  %v5748 = vld [vmem:[%s1 + $0x1c0] sm:$0xff]
  %v5749 = vld [vmem:[%s1 + $0x1c8] sm:$0xff]
  %v5750 = vld [vmem:[%s1 + $0x1d0] sm:$0xff]
  %v5751 = vld [vmem:[%s1 + $0x1d8] sm:$0xff]
  %v5752 = vld [vmem:[%s1 + $0x1e0] sm:$0xff]
  %v5753 = vld [vmem:[%s1 + $0x1e8] sm:$0xff]
  %v5754 = vld [vmem:[%s1 + $0x1f0] sm:$0xff]
  %v5755 = vld [vmem:[%s1 + $0x1f8] sm:$0xff]
  %v5756 = vld [vmem:[%s1 + $0x200] sm:$0xff]
  %v5757 = vld [vmem:[%s1 + $0x208] sm:$0xff]
  %v5758 = vld [vmem:[%s1 + $0x210] sm:$0xff]
  %v5759 = vld [vmem:[%s1 + $0x218] sm:$0xff]
  %v5760 = vld [vmem:[%s1 + $0x220] sm:$0xff]
  %v5761 = vld [vmem:[%s1 + $0x228] sm:$0xff]
  %v5762 = vld [vmem:[%s1 + $0x230] sm:$0xff]
  %v5763 = vld [vmem:[%s1 + $0x238] sm:$0xff]
  %v5764 = vld [vmem:[%s1 + $0x240] sm:$0xff]
  %v5765 = vld [vmem:[%s1 + $0x248] sm:$0xff]
  %v5766 = vld [vmem:[%s1 + $0x250] sm:$0xff]
  %v5767 = vld [vmem:[%s1 + $0x258] sm:$0xff]
  %v5768 = vld [vmem:[%s1 + $0x260] sm:$0xff]
  %v5769 = vld [vmem:[%s1 + $0x268] sm:$0xff]
  %v5770 = vld [vmem:[%s1 + $0x270] sm:$0xff]
  %v5771 = vld [vmem:[%s1 + $0x278] sm:$0xff]
  %v5772 = vld [vmem:[%s1 + $0x280] sm:$0xff]
  %v5773 = vld [vmem:[%s1 + $0x288] sm:$0xff]
  %v5774 = vld [vmem:[%s1 + $0x290] sm:$0xff]
  %v5775 = vld [vmem:[%s1 + $0x298] sm:$0xff]
  %v5776 = vld [vmem:[%s1 + $0x2a0] sm:$0xff]
  %v5777 = vld [vmem:[%s1 + $0x2a8] sm:$0xff]
  %v5778 = vld [vmem:[%s1 + $0x2b0] sm:$0xff]
  %v5779 = vld [vmem:[%s1 + $0x2b8] sm:$0xff]
  %v5780 = vld [vmem:[%s1 + $0x2c0] sm:$0xff]
  %v5781 = vld [vmem:[%s1 + $0x2c8] sm:$0xff]
  %v5782 = vld [vmem:[%s1 + $0x2d0] sm:$0xff]
  %v5783 = vld [vmem:[%s1 + $0x2d8] sm:$0xff]
  %v5784 = vld [vmem:[%s1 + $0x2e0] sm:$0xff]
  %v5785 = vld [vmem:[%s1 + $0x2e8] sm:$0xff]
  %v5786 = vld [vmem:[%s1 + $0x2f0] sm:$0xff]
  %v5787 = vld [vmem:[%s1 + $0x2f8] sm:$0xff]
  %v5788 = vld [vmem:[%s1 + $0x300] sm:$0xff]
  %v5789 = vld [vmem:[%s1 + $0x308] sm:$0xff]
  %v5790 = vld [vmem:[%s1 + $0x310] sm:$0xff]
  %v5791 = vld [vmem:[%s1 + $0x318] sm:$0xff]
  %v5792 = vld [vmem:[%s1 + $0x320] sm:$0xff]
  %v5793 = vld [vmem:[%s1 + $0x328] sm:$0xff]
  %v5794 = vld [vmem:[%s1 + $0x330] sm:$0xff]
  %v5795 = vld [vmem:[%s1 + $0x338] sm:$0xff]
  %v5796 = vld [vmem:[%s1 + $0x340] sm:$0xff]
  %v5797 = vld [vmem:[%s1 + $0x348] sm:$0xff]
  %v5798 = vld [vmem:[%s1 + $0x350] sm:$0xff]
  %v5799 = vld [vmem:[%s1 + $0x358] sm:$0xff]
  %v5800 = vld [vmem:[%s1 + $0x360] sm:$0xff]
  %v5801 = vld [vmem:[%s1 + $0x368] sm:$0xff]
  %v5802 = vld [vmem:[%s1 + $0x370] sm:$0xff]
  %v5803 = vld [vmem:[%s1 + $0x378] sm:$0xff]
  %v5804 = vld [vmem:[%s1 + $0x380] sm:$0xff]
  %v5805 = vld [vmem:[%s1 + $0x388] sm:$0xff]
  %v5806 = vld [vmem:[%s1 + $0x390] sm:$0xff]
  %v5807 = vld [vmem:[%s1 + $0x398] sm:$0xff]
  %v5808 = vld [vmem:[%s1 + $0x3a0] sm:$0xff]
  %v5809 = vld [vmem:[%s1 + $0x3a8] sm:$0xff]
  %v5810 = vld [vmem:[%s1 + $0x3b0] sm:$0xff]
  %v5811 = vld [vmem:[%s1 + $0x3b8] sm:$0xff]
  %v5812 = vld [vmem:[%s1 + $0x3c0] sm:$0xff]
  %v5813 = vld [vmem:[%s1 + $0x3c8] sm:$0xff]
  %v5814 = vld [vmem:[%s1 + $0x3d0] sm:$0xff]
  %v5815 = vld [vmem:[%s1 + $0x3d8] sm:$0xff]
  %v5816 = vld [vmem:[%s1 + $0x3e0] sm:$0xff]
  %v5817 = vld [vmem:[%s1 + $0x3e8] sm:$0xff]
  %v5818 = vld [vmem:[%s1 + $0x3f0] sm:$0xff]
  %v5819 = vld [vmem:[%s1 + $0x3f8] sm:$0xff]
  %v5820 = vld [vmem:[%s2] sm:$0xff]
  %v5821 = vld [vmem:[%s2 + $0x8] sm:$0xff]
  %v5822 = vld [vmem:[%s2 + $0x10] sm:$0xff]
  %v5823 = vld [vmem:[%s2 + $0x18] sm:$0xff]
  %5824 = vmatprep.subr.mxu0 %v5693
  %5825 = vmatpush1.msra.mxu0 %v5692
  %5826 = vmatprep.subr.mxu0 %v5697
  %5827 = vmatpush1.msra.mxu0 %v5696
  %5828 = vmatprep.subr.mxu0 %v5701
  %5829 = vmatpush1.msra.mxu0 %v5700
  %5830 = vmatprep.subr.mxu0 %v5705
  %5831 = vmatpush1.msra.mxu0 %v5704
  %5832 = vmatprep.subr.mxu0 %v5709
  %5833 = vmatpush1.msra.mxu0 %v5708
  %5834 = vmatprep.subr.mxu0 %v5713
  %5835 = vmatpush1.msra.mxu0 %v5712
  %5836 = vmatprep.subr.mxu0 %v5717
  %5837 = vmatpush1.msra.mxu0 %v5716
  %5838 = vmatprep.subr.mxu0 %v5721
  %5839 = vmatpush1.msra.mxu0 %v5720
  %5840 = vmatprep.subr.mxu0 %v5725
  %5841 = vmatpush1.msra.mxu0 %v5724
  %5842 = vmatprep.subr.mxu0 %v5729
  %5843 = vmatpush1.msra.mxu0 %v5728
  %5844 = vmatprep.subr.mxu0 %v5733
  %5845 = vmatpush1.msra.mxu0 %v5732
  %5846 = vmatprep.subr.mxu0 %v5737
  %5847 = vmatpush1.msra.mxu0 %v5736
  %5848 = vmatprep.subr.mxu0 %v5741
  %5849 = vmatpush1.msra.mxu0 %v5740
  %5850 = vmatprep.subr.mxu0 %v5745
  %5851 = vmatpush1.msra.mxu0 %v5744
  %5852 = vmatprep.subr.mxu0 %v5749
  %5853 = vmatpush1.msra.mxu0 %v5748
  %5854 = vmatprep.subr.mxu0 %v5753
  %5855 = vmatpush1.msra.mxu0 %v5752
  %5856 = vmatprep.subr.mxu0 %v5757
  %5857 = vmatpush1.msra.mxu0 %v5756
  %5858 = vmatprep.subr.mxu0 %v5761
  %5859 = vmatpush1.msra.mxu0 %v5760
  %5860 = vmatprep.subr.mxu0 %v5765
  %5861 = vmatpush1.msra.mxu0 %v5764
  %5862 = vmatprep.subr.mxu0 %v5769
  %5863 = vmatpush1.msra.mxu0 %v5768
  %5864 = vmatprep.subr.mxu0 %v5773
  %5865 = vmatpush1.msra.mxu0 %v5772
  %5866 = vmatprep.subr.mxu0 %v5777
  %5867 = vmatpush1.msra.mxu0 %v5776
  %5868 = vmatprep.subr.mxu0 %v5781
  %5869 = vmatpush1.msra.mxu0 %v5780
  %5870 = vmatprep.subr.mxu0 %v5785
  %5871 = vmatpush1.msra.mxu0 %v5784
  %5872 = vmatprep.subr.mxu0 %v5789
  %5873 = vmatpush1.msra.mxu0 %v5788
  %5874 = vmatprep.subr.mxu0 %v5793
  %5875 = vmatpush1.msra.mxu0 %v5792
  %5876 = vmatprep.subr.mxu0 %v5797
  %5877 = vmatpush1.msra.mxu0 %v5796
  %5878 = vmatprep.subr.mxu0 %v5801
  %5879 = vmatpush1.msra.mxu0 %v5800
  %5880 = vmatprep.subr.mxu0 %v5805
  %5881 = vmatpush1.msra.mxu0 %v5804
  %5882 = vmatprep.subr.mxu0 %v5809
  %5883 = vmatpush1.msra.mxu0 %v5808
  %5884 = vmatprep.subr.mxu0 %v5813
  %5885 = vmatpush1.msra.mxu0 %v5812
  %5886 = vmatprep.subr.mxu0 %v5817
  %5887 = vmatpush1.msra.mxu0 %v5816
  %5888 = vmatprep.mubr.f32.mxu0 %v4810
  %5889 = vmatmul.mubr.f32.gmra.mrb[0].mxu0 %v5691
  %v5890 = vpop.f32.mrb[0].mxu0
  %v5891 = vadd.f32 %v5820, %v5890
  %v5892 = vpop.f32.mrb[0].mxu0
  %v5893 = vadd.f32 %v5821, %v5892
  %5894 = vdwg.mxu0
  %5895 = vmatprep.subr.mxu0 %v5695
  %5896 = vmatpush1.msra.mxu0 %v5694
  %5897 = vmatprep.subr.mxu0 %v5699
  %5898 = vmatpush1.msra.mxu0 %v5698
  %5899 = vmatprep.subr.mxu0 %v5703
  %5900 = vmatpush1.msra.mxu0 %v5702
  %5901 = vmatprep.subr.mxu0 %v5707
  %5902 = vmatpush1.msra.mxu0 %v5706
  %5903 = vmatprep.subr.mxu0 %v5711
  %5904 = vmatpush1.msra.mxu0 %v5710
  %5905 = vmatprep.subr.mxu0 %v5715
  %5906 = vmatpush1.msra.mxu0 %v5714
  %5907 = vmatprep.subr.mxu0 %v5719
  %5908 = vmatpush1.msra.mxu0 %v5718
  %5909 = vmatprep.subr.mxu0 %v5723
  %5910 = vmatpush1.msra.mxu0 %v5722
  %5911 = vmatprep.subr.mxu0 %v5727
  %5912 = vmatpush1.msra.mxu0 %v5726
  %5913 = vmatprep.subr.mxu0 %v5731
  %5914 = vmatpush1.msra.mxu0 %v5730
  %5915 = vmatprep.subr.mxu0 %v5735
  %5916 = vmatpush1.msra.mxu0 %v5734
  %5917 = vmatprep.subr.mxu0 %v5739
  %5918 = vmatpush1.msra.mxu0 %v5738
  %5919 = vmatprep.subr.mxu0 %v5743
  %5920 = vmatpush1.msra.mxu0 %v5742
  %5921 = vmatprep.subr.mxu0 %v5747
  %5922 = vmatpush1.msra.mxu0 %v5746
  %5923 = vmatprep.subr.mxu0 %v5751
  %5924 = vmatpush1.msra.mxu0 %v5750
  %5925 = vmatprep.subr.mxu0 %v5755
  %5926 = vmatpush1.msra.mxu0 %v5754
  %5927 = vmatprep.subr.mxu0 %v5759
  %5928 = vmatpush1.msra.mxu0 %v5758
  %5929 = vmatprep.subr.mxu0 %v5763
  %5930 = vmatpush1.msra.mxu0 %v5762
  %5931 = vmatprep.subr.mxu0 %v5767
  %5932 = vmatpush1.msra.mxu0 %v5766
  %5933 = vmatprep.subr.mxu0 %v5771
  %5934 = vmatpush1.msra.mxu0 %v5770
  %5935 = vmatprep.subr.mxu0 %v5775
  %5936 = vmatpush1.msra.mxu0 %v5774
  %5937 = vmatprep.subr.mxu0 %v5779
  %5938 = vmatpush1.msra.mxu0 %v5778
  %5939 = vmatprep.subr.mxu0 %v5783
  %5940 = vmatpush1.msra.mxu0 %v5782
  %5941 = vmatprep.subr.mxu0 %v5787
  %5942 = vmatpush1.msra.mxu0 %v5786
  %5943 = vmatprep.subr.mxu0 %v5791
  %5944 = vmatpush1.msra.mxu0 %v5790
  %5945 = vmatprep.subr.mxu0 %v5795
  %5946 = vmatpush1.msra.mxu0 %v5794
  %5947 = vmatprep.subr.mxu0 %v5799
  %5948 = vmatpush1.msra.mxu0 %v5798
  %5949 = vmatprep.subr.mxu0 %v5803
  %5950 = vmatpush1.msra.mxu0 %v5802
  %5951 = vmatprep.subr.mxu0 %v5807
  %5952 = vmatpush1.msra.mxu0 %v5806
  %5953 = vmatprep.subr.mxu0 %v5811
  %5954 = vmatpush1.msra.mxu0 %v5810
  %5955 = vmatprep.subr.mxu0 %v5815
  %5956 = vmatpush1.msra.mxu0 %v5814
  %5957 = vmatprep.subr.mxu0 %v5819
  %5958 = vmatpush1.msra.mxu0 %v5818
  %5959 = vmatprep.mubr.f32.mxu0 %v4810
  %5960 = vmatmul.mubr.f32.gmra.mrb[0].mxu0 %v5691
  %v5961 = vpop.f32.mrb[0].mxu0
  %v5962 = vadd.f32 %v5822, %v5961
  %v5963 = vpop.f32.mrb[0].mxu0
  %v5964 = vadd.f32 %v5823, %v5963
  %5965 = vdwg.mxu0
  %v5966 = vxor.u32 %v5891, 2147483648
  %v5967 = vmul.f32 %v5966, 1.442695
  %v5968 = vpow.pop %v5967
  %v5969 = vadd.f32 %v5968, 1.0
  %v5970 = vrcp.pop %v5969
  %v5971 = vmul.f32 1.0, %v5970
  %v5972 = vxor.u32 %v5893, 2147483648
  %v5973 = vmul.f32 %v5972, 1.442695
  %v5974 = vpow.pop %v5973
  %v5975 = vadd.f32 %v5974, 1.0
  %v5976 = vrcp.pop %v5975
  %v5977 = vmul.f32 1.0, %v5976
  %v5978 = vmul.f32 %v5971, %v5964
  %v5979 = vadd.f32 %v5962, %v5978
  %v5980 = vtanh.pop %v5979
  %v5981 = vsub.f32 1.0, %v5977
  %v5982 = vmul.f32 %v5981, %v5980
  %v5983 = vmul.f32 %v5977, %v4810
  %v5984 = vadd.f32 %v5982, %v5983
  %v5985 = vld [vmem:[%s476] sm:$0xff]
  %v5986 = vld [vmem:[%s476 + $0x8] sm:$0xff]
  %v5987 = vld [vmem:[%s476 + $0x10] sm:$0xff]
  %v5988 = vld [vmem:[%s476 + $0x18] sm:$0xff]
  %v5989 = vld [vmem:[%s476 + $0x20] sm:$0xff]
  %v5990 = vld [vmem:[%s476 + $0x28] sm:$0xff]
  %v5991 = vld [vmem:[%s476 + $0x30] sm:$0xff]
  %v5992 = vld [vmem:[%s476 + $0x38] sm:$0xff]
  %v5993 = vld [vmem:[%s476 + $0x40] sm:$0xff]
  %v5994 = vld [vmem:[%s476 + $0x48] sm:$0xff]
  %v5995 = vld [vmem:[%s476 + $0x50] sm:$0xff]
  %v5996 = vld [vmem:[%s476 + $0x58] sm:$0xff]
  %v5997 = vld [vmem:[%s476 + $0x60] sm:$0xff]
  %v5998 = vld [vmem:[%s476 + $0x68] sm:$0xff]
  %v5999 = vld [vmem:[%s476 + $0x70] sm:$0xff]
  %v6000 = vld [vmem:[%s476 + $0x78] sm:$0xff]
  %v6001 = vld [vmem:[%s476 + $0x80] sm:$0xff]
  %v6002 = vld [vmem:[%s476 + $0x88] sm:$0xff]
  %v6003 = vld [vmem:[%s476 + $0x90] sm:$0xff]
  %v6004 = vld [vmem:[%s476 + $0x98] sm:$0xff]
  %v6005 = vld [vmem:[%s476 + $0xa0] sm:$0xff]
  %v6006 = vld [vmem:[%s476 + $0xa8] sm:$0xff]
  %v6007 = vld [vmem:[%s476 + $0xb0] sm:$0xff]
  %v6008 = vld [vmem:[%s476 + $0xb8] sm:$0xff]
  %v6009 = vld [vmem:[%s476 + $0xc0] sm:$0xff]
  %v6010 = vld [vmem:[%s476 + $0xc8] sm:$0xff]
  %v6011 = vld [vmem:[%s476 + $0xd0] sm:$0xff]
  %v6012 = vld [vmem:[%s476 + $0xd8] sm:$0xff]
  %v6013 = vld [vmem:[%s476 + $0xe0] sm:$0xff]
  %v6014 = vld [vmem:[%s476 + $0xe8] sm:$0xff]
  %v6015 = vld [vmem:[%s476 + $0xf0] sm:$0xff]
  %v6016 = vld [vmem:[%s476 + $0xf8] sm:$0xff]
  %v6017 = vld [vmem:[%s476 + $0x100] sm:$0xff]
  %v6018 = vld [vmem:[%s476 + $0x108] sm:$0xff]
  %v6019 = vld [vmem:[%s476 + $0x110] sm:$0xff]
  %v6020 = vld [vmem:[%s476 + $0x118] sm:$0xff]
  %v6021 = vld [vmem:[%s476 + $0x120] sm:$0xff]
  %v6022 = vld [vmem:[%s476 + $0x128] sm:$0xff]
  %v6023 = vld [vmem:[%s476 + $0x130] sm:$0xff]
  %v6024 = vld [vmem:[%s476 + $0x138] sm:$0xff]
  %v6025 = vld [vmem:[%s476 + $0x140] sm:$0xff]
  %v6026 = vld [vmem:[%s476 + $0x148] sm:$0xff]
  %v6027 = vld [vmem:[%s476 + $0x150] sm:$0xff]
  %v6028 = vld [vmem:[%s476 + $0x158] sm:$0xff]
  %v6029 = vld [vmem:[%s476 + $0x160] sm:$0xff]
  %v6030 = vld [vmem:[%s476 + $0x168] sm:$0xff]
  %v6031 = vld [vmem:[%s476 + $0x170] sm:$0xff]
  %v6032 = vld [vmem:[%s476 + $0x178] sm:$0xff]
  %v6033 = vld [vmem:[%s476 + $0x180] sm:$0xff]
  %v6034 = vld [vmem:[%s476 + $0x188] sm:$0xff]
  %v6035 = vld [vmem:[%s476 + $0x190] sm:$0xff]
  %v6036 = vld [vmem:[%s476 + $0x198] sm:$0xff]
  %v6037 = vld [vmem:[%s476 + $0x1a0] sm:$0xff]
  %v6038 = vld [vmem:[%s476 + $0x1a8] sm:$0xff]
  %v6039 = vld [vmem:[%s476 + $0x1b0] sm:$0xff]
  %v6040 = vld [vmem:[%s476 + $0x1b8] sm:$0xff]
  %v6041 = vld [vmem:[%s476 + $0x1c0] sm:$0xff]
  %v6042 = vld [vmem:[%s476 + $0x1c8] sm:$0xff]
  %v6043 = vld [vmem:[%s476 + $0x1d0] sm:$0xff]
  %v6044 = vld [vmem:[%s476 + $0x1d8] sm:$0xff]
  %v6045 = vld [vmem:[%s476 + $0x1e0] sm:$0xff]
  %v6046 = vld [vmem:[%s476 + $0x1e8] sm:$0xff]
  %v6047 = vld [vmem:[%s476 + $0x1f0] sm:$0xff]
  %v6048 = vld [vmem:[%s476 + $0x1f8] sm:$0xff]
  %v6049 = vld [vmem:[%s476 + $0x200] sm:$0xff]
  %v6050 = vld [vmem:[%s476 + $0x208] sm:$0xff]
  %v6051 = vld [vmem:[%s476 + $0x210] sm:$0xff]
  %v6052 = vld [vmem:[%s476 + $0x218] sm:$0xff]
  %v6053 = vld [vmem:[%s476 + $0x220] sm:$0xff]
  %v6054 = vld [vmem:[%s476 + $0x228] sm:$0xff]
  %v6055 = vld [vmem:[%s476 + $0x230] sm:$0xff]
  %v6056 = vld [vmem:[%s476 + $0x238] sm:$0xff]
  %v6057 = vld [vmem:[%s476 + $0x240] sm:$0xff]
  %v6058 = vld [vmem:[%s476 + $0x248] sm:$0xff]
  %v6059 = vld [vmem:[%s476 + $0x250] sm:$0xff]
  %v6060 = vld [vmem:[%s476 + $0x258] sm:$0xff]
  %v6061 = vld [vmem:[%s476 + $0x260] sm:$0xff]
  %v6062 = vld [vmem:[%s476 + $0x268] sm:$0xff]
  %v6063 = vld [vmem:[%s476 + $0x270] sm:$0xff]
  %v6064 = vld [vmem:[%s476 + $0x278] sm:$0xff]
  %v6065 = vld [vmem:[%s476 + $0x280] sm:$0xff]
  %v6066 = vld [vmem:[%s476 + $0x288] sm:$0xff]
  %v6067 = vld [vmem:[%s476 + $0x290] sm:$0xff]
  %v6068 = vld [vmem:[%s476 + $0x298] sm:$0xff]
  %v6069 = vld [vmem:[%s476 + $0x2a0] sm:$0xff]
  %v6070 = vld [vmem:[%s476 + $0x2a8] sm:$0xff]
  %v6071 = vld [vmem:[%s476 + $0x2b0] sm:$0xff]
  %v6072 = vld [vmem:[%s476 + $0x2b8] sm:$0xff]
  %v6073 = vld [vmem:[%s476 + $0x2c0] sm:$0xff]
  %v6074 = vld [vmem:[%s476 + $0x2c8] sm:$0xff]
  %v6075 = vld [vmem:[%s476 + $0x2d0] sm:$0xff]
  %v6076 = vld [vmem:[%s476 + $0x2d8] sm:$0xff]
  %v6077 = vld [vmem:[%s476 + $0x2e0] sm:$0xff]
  %v6078 = vld [vmem:[%s476 + $0x2e8] sm:$0xff]
  %v6079 = vld [vmem:[%s476 + $0x2f0] sm:$0xff]
  %v6080 = vld [vmem:[%s476 + $0x2f8] sm:$0xff]
  %v6081 = vld [vmem:[%s476 + $0x300] sm:$0xff]
  %v6082 = vld [vmem:[%s476 + $0x308] sm:$0xff]
  %v6083 = vld [vmem:[%s476 + $0x310] sm:$0xff]
  %v6084 = vld [vmem:[%s476 + $0x318] sm:$0xff]
  %v6085 = vld [vmem:[%s476 + $0x320] sm:$0xff]
  %v6086 = vld [vmem:[%s476 + $0x328] sm:$0xff]
  %v6087 = vld [vmem:[%s476 + $0x330] sm:$0xff]
  %v6088 = vld [vmem:[%s476 + $0x338] sm:$0xff]
  %v6089 = vld [vmem:[%s476 + $0x340] sm:$0xff]
  %v6090 = vld [vmem:[%s476 + $0x348] sm:$0xff]
  %v6091 = vld [vmem:[%s476 + $0x350] sm:$0xff]
  %v6092 = vld [vmem:[%s476 + $0x358] sm:$0xff]
  %v6093 = vld [vmem:[%s476 + $0x360] sm:$0xff]
  %v6094 = vld [vmem:[%s476 + $0x368] sm:$0xff]
  %v6095 = vld [vmem:[%s476 + $0x370] sm:$0xff]
  %v6096 = vld [vmem:[%s476 + $0x378] sm:$0xff]
  %v6097 = vld [vmem:[%s476 + $0x380] sm:$0xff]
  %v6098 = vld [vmem:[%s476 + $0x388] sm:$0xff]
  %v6099 = vld [vmem:[%s476 + $0x390] sm:$0xff]
  %v6100 = vld [vmem:[%s476 + $0x398] sm:$0xff]
  %v6101 = vld [vmem:[%s476 + $0x3a0] sm:$0xff]
  %v6102 = vld [vmem:[%s476 + $0x3a8] sm:$0xff]
  %v6103 = vld [vmem:[%s476 + $0x3b0] sm:$0xff]
  %v6104 = vld [vmem:[%s476 + $0x3b8] sm:$0xff]
  %v6105 = vld [vmem:[%s476 + $0x3c0] sm:$0xff]
  %v6106 = vld [vmem:[%s476 + $0x3c8] sm:$0xff]
  %v6107 = vld [vmem:[%s476 + $0x3d0] sm:$0xff]
  %v6108 = vld [vmem:[%s476 + $0x3d8] sm:$0xff]
  %v6109 = vld [vmem:[%s476 + $0x3e0] sm:$0xff]
  %v6110 = vld [vmem:[%s476 + $0x3e8] sm:$0xff]
  %v6111 = vld [vmem:[%s476 + $0x3f0] sm:$0xff]
  %v6112 = vld [vmem:[%s476 + $0x3f8] sm:$0xff]
  %v6113 = vld [vmem:[%s605] sm:$0xff]
  %v6114 = vld [vmem:[%s605 + $0x8] sm:$0xff]
  %v6115 = vld [vmem:[%s605 + $0x10] sm:$0xff]
  %v6116 = vld [vmem:[%s605 + $0x18] sm:$0xff]
  %6117 = vmatprep.subr.mxu0 %v5986
  %6118 = vmatpush1.msra.mxu0 %v5985
  %6119 = vmatprep.subr.mxu0 %v5990
  %6120 = vmatpush1.msra.mxu0 %v5989
  %6121 = vmatprep.subr.mxu0 %v5994
  %6122 = vmatpush1.msra.mxu0 %v5993
  %6123 = vmatprep.subr.mxu0 %v5998
  %6124 = vmatpush1.msra.mxu0 %v5997
  %6125 = vmatprep.subr.mxu0 %v6002
  %6126 = vmatpush1.msra.mxu0 %v6001
  %6127 = vmatprep.subr.mxu0 %v6006
  %6128 = vmatpush1.msra.mxu0 %v6005
  %6129 = vmatprep.subr.mxu0 %v6010
  %6130 = vmatpush1.msra.mxu0 %v6009
  %6131 = vmatprep.subr.mxu0 %v6014
  %6132 = vmatpush1.msra.mxu0 %v6013
  %6133 = vmatprep.subr.mxu0 %v6018
  %6134 = vmatpush1.msra.mxu0 %v6017
  %6135 = vmatprep.subr.mxu0 %v6022
  %6136 = vmatpush1.msra.mxu0 %v6021
  %6137 = vmatprep.subr.mxu0 %v6026
  %6138 = vmatpush1.msra.mxu0 %v6025
  %6139 = vmatprep.subr.mxu0 %v6030
  %6140 = vmatpush1.msra.mxu0 %v6029
  %6141 = vmatprep.subr.mxu0 %v6034
  %6142 = vmatpush1.msra.mxu0 %v6033
  %6143 = vmatprep.subr.mxu0 %v6038
  %6144 = vmatpush1.msra.mxu0 %v6037
  %6145 = vmatprep.subr.mxu0 %v6042
  %6146 = vmatpush1.msra.mxu0 %v6041
  %6147 = vmatprep.subr.mxu0 %v6046
  %6148 = vmatpush1.msra.mxu0 %v6045
  %6149 = vmatprep.subr.mxu0 %v6050
  %6150 = vmatpush1.msra.mxu0 %v6049
  %6151 = vmatprep.subr.mxu0 %v6054
  %6152 = vmatpush1.msra.mxu0 %v6053
  %6153 = vmatprep.subr.mxu0 %v6058
  %6154 = vmatpush1.msra.mxu0 %v6057
  %6155 = vmatprep.subr.mxu0 %v6062
  %6156 = vmatpush1.msra.mxu0 %v6061
  %6157 = vmatprep.subr.mxu0 %v6066
  %6158 = vmatpush1.msra.mxu0 %v6065
  %6159 = vmatprep.subr.mxu0 %v6070
  %6160 = vmatpush1.msra.mxu0 %v6069
  %6161 = vmatprep.subr.mxu0 %v6074
  %6162 = vmatpush1.msra.mxu0 %v6073
  %6163 = vmatprep.subr.mxu0 %v6078
  %6164 = vmatpush1.msra.mxu0 %v6077
  %6165 = vmatprep.subr.mxu0 %v6082
  %6166 = vmatpush1.msra.mxu0 %v6081
  %6167 = vmatprep.subr.mxu0 %v6086
  %6168 = vmatpush1.msra.mxu0 %v6085
  %6169 = vmatprep.subr.mxu0 %v6090
  %6170 = vmatpush1.msra.mxu0 %v6089
  %6171 = vmatprep.subr.mxu0 %v6094
  %6172 = vmatpush1.msra.mxu0 %v6093
  %6173 = vmatprep.subr.mxu0 %v6098
  %6174 = vmatpush1.msra.mxu0 %v6097
  %6175 = vmatprep.subr.mxu0 %v6102
  %6176 = vmatpush1.msra.mxu0 %v6101
  %6177 = vmatprep.subr.mxu0 %v6106
  %6178 = vmatpush1.msra.mxu0 %v6105
  %6179 = vmatprep.subr.mxu0 %v6110
  %6180 = vmatpush1.msra.mxu0 %v6109
  %6181 = vmatprep.mubr.f32.mxu0 %v5103
  %6182 = vmatmul.mubr.f32.gmra.mrb[0].mxu0 %v4810
  %v6183 = vpop.f32.mrb[0].mxu0
  %v6184 = vadd.f32 %v6113, %v6183
  %v6185 = vpop.f32.mrb[0].mxu0
  %v6186 = vadd.f32 %v6114, %v6185
  %6187 = vdwg.mxu0
  %6188 = vmatprep.subr.mxu0 %v5988
  %6189 = vmatpush1.msra.mxu0 %v5987
  %6190 = vmatprep.subr.mxu0 %v5992
  %6191 = vmatpush1.msra.mxu0 %v5991
  %6192 = vmatprep.subr.mxu0 %v5996
  %6193 = vmatpush1.msra.mxu0 %v5995
  %6194 = vmatprep.subr.mxu0 %v6000
  %6195 = vmatpush1.msra.mxu0 %v5999
  %6196 = vmatprep.subr.mxu0 %v6004
  %6197 = vmatpush1.msra.mxu0 %v6003
  %6198 = vmatprep.subr.mxu0 %v6008
  %6199 = vmatpush1.msra.mxu0 %v6007
  %6200 = vmatprep.subr.mxu0 %v6012
  %6201 = vmatpush1.msra.mxu0 %v6011
  %6202 = vmatprep.subr.mxu0 %v6016
  %6203 = vmatpush1.msra.mxu0 %v6015
  %6204 = vmatprep.subr.mxu0 %v6020
  %6205 = vmatpush1.msra.mxu0 %v6019
  %6206 = vmatprep.subr.mxu0 %v6024
  %6207 = vmatpush1.msra.mxu0 %v6023
  %6208 = vmatprep.subr.mxu0 %v6028
  %6209 = vmatpush1.msra.mxu0 %v6027
  %6210 = vmatprep.subr.mxu0 %v6032
  %6211 = vmatpush1.msra.mxu0 %v6031
  %6212 = vmatprep.subr.mxu0 %v6036
  %6213 = vmatpush1.msra.mxu0 %v6035
  %6214 = vmatprep.subr.mxu0 %v6040
  %6215 = vmatpush1.msra.mxu0 %v6039
  %6216 = vmatprep.subr.mxu0 %v6044
  %6217 = vmatpush1.msra.mxu0 %v6043
  %6218 = vmatprep.subr.mxu0 %v6048
  %6219 = vmatpush1.msra.mxu0 %v6047
  %6220 = vmatprep.subr.mxu0 %v6052
  %6221 = vmatpush1.msra.mxu0 %v6051
  %6222 = vmatprep.subr.mxu0 %v6056
  %6223 = vmatpush1.msra.mxu0 %v6055
  %6224 = vmatprep.subr.mxu0 %v6060
  %6225 = vmatpush1.msra.mxu0 %v6059
  %6226 = vmatprep.subr.mxu0 %v6064
  %6227 = vmatpush1.msra.mxu0 %v6063
  %6228 = vmatprep.subr.mxu0 %v6068
  %6229 = vmatpush1.msra.mxu0 %v6067
  %6230 = vmatprep.subr.mxu0 %v6072
  %6231 = vmatpush1.msra.mxu0 %v6071
  %6232 = vmatprep.subr.mxu0 %v6076
  %6233 = vmatpush1.msra.mxu0 %v6075
  %6234 = vmatprep.subr.mxu0 %v6080
  %6235 = vmatpush1.msra.mxu0 %v6079
  %6236 = vmatprep.subr.mxu0 %v6084
  %6237 = vmatpush1.msra.mxu0 %v6083
  %6238 = vmatprep.subr.mxu0 %v6088
  %6239 = vmatpush1.msra.mxu0 %v6087
  %6240 = vmatprep.subr.mxu0 %v6092
  %6241 = vmatpush1.msra.mxu0 %v6091
  %6242 = vmatprep.subr.mxu0 %v6096
  %6243 = vmatpush1.msra.mxu0 %v6095
  %6244 = vmatprep.subr.mxu0 %v6100
  %6245 = vmatpush1.msra.mxu0 %v6099
  %6246 = vmatprep.subr.mxu0 %v6104
  %6247 = vmatpush1.msra.mxu0 %v6103
  %6248 = vmatprep.subr.mxu0 %v6108
  %6249 = vmatpush1.msra.mxu0 %v6107
  %6250 = vmatprep.subr.mxu0 %v6112
  %6251 = vmatpush1.msra.mxu0 %v6111
  %6252 = vmatprep.mubr.f32.mxu0 %v5103
  %6253 = vmatmul.mubr.f32.gmra.mrb[0].mxu0 %v4810
  %v6254 = vpop.f32.mrb[0].mxu0
  %v6255 = vadd.f32 %v6115, %v6254
  %v6256 = vpop.f32.mrb[0].mxu0
  %v6257 = vadd.f32 %v6116, %v6256
  %6258 = vdwg.mxu0
  %v6259 = vxor.u32 %v6184, 2147483648
  %v6260 = vmul.f32 %v6259, 1.442695
  %v6261 = vpow.pop %v6260
  %v6262 = vadd.f32 %v6261, 1.0
  %v6263 = vrcp.pop %v6262
  %v6264 = vmul.f32 1.0, %v6263
  %v6265 = vxor.u32 %v6186, 2147483648
  %v6266 = vmul.f32 %v6265, 1.442695
  %v6267 = vpow.pop %v6266
  %v6268 = vadd.f32 %v6267, 1.0
  %v6269 = vrcp.pop %v6268
  %v6270 = vmul.f32 1.0, %v6269
  %v6271 = vmul.f32 %v6264, %v6257
  %v6272 = vadd.f32 %v6255, %v6271
  %v6273 = vtanh.pop %v6272
  %v6274 = vsub.f32 1.0, %v6270
  %v6275 = vmul.f32 %v6274, %v6273
  %v6276 = vmul.f32 %v6270, %v5103
  %v6277 = vadd.f32 %v6275, %v6276
  %v6278 = vld [vmem:[%s1094] sm:$0xff]
  %v6279 = vld [vmem:[%s1094 + $0x8] sm:$0xff]
  %v6280 = vld [vmem:[%s1094 + $0x10] sm:$0xff]
  %v6281 = vld [vmem:[%s1094 + $0x18] sm:$0xff]
  %v6282 = vld [vmem:[%s1094 + $0x20] sm:$0xff]
  %v6283 = vld [vmem:[%s1094 + $0x28] sm:$0xff]
  %v6284 = vld [vmem:[%s1094 + $0x30] sm:$0xff]
  %v6285 = vld [vmem:[%s1094 + $0x38] sm:$0xff]
  %v6286 = vld [vmem:[%s1094 + $0x40] sm:$0xff]
  %v6287 = vld [vmem:[%s1094 + $0x48] sm:$0xff]
  %v6288 = vld [vmem:[%s1094 + $0x50] sm:$0xff]
  %v6289 = vld [vmem:[%s1094 + $0x58] sm:$0xff]
  %v6290 = vld [vmem:[%s1094 + $0x60] sm:$0xff]
  %v6291 = vld [vmem:[%s1094 + $0x68] sm:$0xff]
  %v6292 = vld [vmem:[%s1094 + $0x70] sm:$0xff]
  %v6293 = vld [vmem:[%s1094 + $0x78] sm:$0xff]
  %v6294 = vld [vmem:[%s1094 + $0x80] sm:$0xff]
  %v6295 = vld [vmem:[%s1094 + $0x88] sm:$0xff]
  %v6296 = vld [vmem:[%s1094 + $0x90] sm:$0xff]
  %v6297 = vld [vmem:[%s1094 + $0x98] sm:$0xff]
  %v6298 = vld [vmem:[%s1094 + $0xa0] sm:$0xff]
  %v6299 = vld [vmem:[%s1094 + $0xa8] sm:$0xff]
  %v6300 = vld [vmem:[%s1094 + $0xb0] sm:$0xff]
  %v6301 = vld [vmem:[%s1094 + $0xb8] sm:$0xff]
  %v6302 = vld [vmem:[%s1094 + $0xc0] sm:$0xff]
  %v6303 = vld [vmem:[%s1094 + $0xc8] sm:$0xff]
  %v6304 = vld [vmem:[%s1094 + $0xd0] sm:$0xff]
  %v6305 = vld [vmem:[%s1094 + $0xd8] sm:$0xff]
  %v6306 = vld [vmem:[%s1094 + $0xe0] sm:$0xff]
  %v6307 = vld [vmem:[%s1094 + $0xe8] sm:$0xff]
  %v6308 = vld [vmem:[%s1094 + $0xf0] sm:$0xff]
  %v6309 = vld [vmem:[%s1094 + $0xf8] sm:$0xff]
  %v6310 = vld [vmem:[%s1094 + $0x100] sm:$0xff]
  %v6311 = vld [vmem:[%s1094 + $0x108] sm:$0xff]
  %v6312 = vld [vmem:[%s1094 + $0x110] sm:$0xff]
  %v6313 = vld [vmem:[%s1094 + $0x118] sm:$0xff]
  %v6314 = vld [vmem:[%s1094 + $0x120] sm:$0xff]
  %v6315 = vld [vmem:[%s1094 + $0x128] sm:$0xff]
  %v6316 = vld [vmem:[%s1094 + $0x130] sm:$0xff]
  %v6317 = vld [vmem:[%s1094 + $0x138] sm:$0xff]
  %v6318 = vld [vmem:[%s1094 + $0x140] sm:$0xff]
  %v6319 = vld [vmem:[%s1094 + $0x148] sm:$0xff]
  %v6320 = vld [vmem:[%s1094 + $0x150] sm:$0xff]
  %v6321 = vld [vmem:[%s1094 + $0x158] sm:$0xff]
  %v6322 = vld [vmem:[%s1094 + $0x160] sm:$0xff]
  %v6323 = vld [vmem:[%s1094 + $0x168] sm:$0xff]
  %v6324 = vld [vmem:[%s1094 + $0x170] sm:$0xff]
  %v6325 = vld [vmem:[%s1094 + $0x178] sm:$0xff]
  %v6326 = vld [vmem:[%s1094 + $0x180] sm:$0xff]
  %v6327 = vld [vmem:[%s1094 + $0x188] sm:$0xff]
  %v6328 = vld [vmem:[%s1094 + $0x190] sm:$0xff]
  %v6329 = vld [vmem:[%s1094 + $0x198] sm:$0xff]
  %v6330 = vld [vmem:[%s1094 + $0x1a0] sm:$0xff]
  %v6331 = vld [vmem:[%s1094 + $0x1a8] sm:$0xff]
  %v6332 = vld [vmem:[%s1094 + $0x1b0] sm:$0xff]
  %v6333 = vld [vmem:[%s1094 + $0x1b8] sm:$0xff]
  %v6334 = vld [vmem:[%s1094 + $0x1c0] sm:$0xff]
  %v6335 = vld [vmem:[%s1094 + $0x1c8] sm:$0xff]
  %v6336 = vld [vmem:[%s1094 + $0x1d0] sm:$0xff]
  %v6337 = vld [vmem:[%s1094 + $0x1d8] sm:$0xff]
  %v6338 = vld [vmem:[%s1094 + $0x1e0] sm:$0xff]
  %v6339 = vld [vmem:[%s1094 + $0x1e8] sm:$0xff]
  %v6340 = vld [vmem:[%s1094 + $0x1f0] sm:$0xff]
  %v6341 = vld [vmem:[%s1094 + $0x1f8] sm:$0xff]
  %v6342 = vld [vmem:[%s1094 + $0x200] sm:$0xff]
  %v6343 = vld [vmem:[%s1094 + $0x208] sm:$0xff]
  %v6344 = vld [vmem:[%s1094 + $0x210] sm:$0xff]
  %v6345 = vld [vmem:[%s1094 + $0x218] sm:$0xff]
  %v6346 = vld [vmem:[%s1094 + $0x220] sm:$0xff]
  %v6347 = vld [vmem:[%s1094 + $0x228] sm:$0xff]
  %v6348 = vld [vmem:[%s1094 + $0x230] sm:$0xff]
  %v6349 = vld [vmem:[%s1094 + $0x238] sm:$0xff]
  %v6350 = vld [vmem:[%s1094 + $0x240] sm:$0xff]
  %v6351 = vld [vmem:[%s1094 + $0x248] sm:$0xff]
  %v6352 = vld [vmem:[%s1094 + $0x250] sm:$0xff]
  %v6353 = vld [vmem:[%s1094 + $0x258] sm:$0xff]
  %v6354 = vld [vmem:[%s1094 + $0x260] sm:$0xff]
  %v6355 = vld [vmem:[%s1094 + $0x268] sm:$0xff]
  %v6356 = vld [vmem:[%s1094 + $0x270] sm:$0xff]
  %v6357 = vld [vmem:[%s1094 + $0x278] sm:$0xff]
  %v6358 = vld [vmem:[%s1094 + $0x280] sm:$0xff]
  %v6359 = vld [vmem:[%s1094 + $0x288] sm:$0xff]
  %v6360 = vld [vmem:[%s1094 + $0x290] sm:$0xff]
  %v6361 = vld [vmem:[%s1094 + $0x298] sm:$0xff]
  %v6362 = vld [vmem:[%s1094 + $0x2a0] sm:$0xff]
  %v6363 = vld [vmem:[%s1094 + $0x2a8] sm:$0xff]
  %v6364 = vld [vmem:[%s1094 + $0x2b0] sm:$0xff]
  %v6365 = vld [vmem:[%s1094 + $0x2b8] sm:$0xff]
  %v6366 = vld [vmem:[%s1094 + $0x2c0] sm:$0xff]
  %v6367 = vld [vmem:[%s1094 + $0x2c8] sm:$0xff]
  %v6368 = vld [vmem:[%s1094 + $0x2d0] sm:$0xff]
  %v6369 = vld [vmem:[%s1094 + $0x2d8] sm:$0xff]
  %v6370 = vld [vmem:[%s1094 + $0x2e0] sm:$0xff]
  %v6371 = vld [vmem:[%s1094 + $0x2e8] sm:$0xff]
  %v6372 = vld [vmem:[%s1094 + $0x2f0] sm:$0xff]
  %v6373 = vld [vmem:[%s1094 + $0x2f8] sm:$0xff]
  %v6374 = vld [vmem:[%s1094 + $0x300] sm:$0xff]
  %v6375 = vld [vmem:[%s1094 + $0x308] sm:$0xff]
  %v6376 = vld [vmem:[%s1094 + $0x310] sm:$0xff]
  %v6377 = vld [vmem:[%s1094 + $0x318] sm:$0xff]
  %v6378 = vld [vmem:[%s1094 + $0x320] sm:$0xff]
  %v6379 = vld [vmem:[%s1094 + $0x328] sm:$0xff]
  %v6380 = vld [vmem:[%s1094 + $0x330] sm:$0xff]
  %v6381 = vld [vmem:[%s1094 + $0x338] sm:$0xff]
  %v6382 = vld [vmem:[%s1094 + $0x340] sm:$0xff]
  %v6383 = vld [vmem:[%s1094 + $0x348] sm:$0xff]
  %v6384 = vld [vmem:[%s1094 + $0x350] sm:$0xff]
  %v6385 = vld [vmem:[%s1094 + $0x358] sm:$0xff]
  %v6386 = vld [vmem:[%s1094 + $0x360] sm:$0xff]
  %v6387 = vld [vmem:[%s1094 + $0x368] sm:$0xff]
  %v6388 = vld [vmem:[%s1094 + $0x370] sm:$0xff]
  %v6389 = vld [vmem:[%s1094 + $0x378] sm:$0xff]
  %v6390 = vld [vmem:[%s1094 + $0x380] sm:$0xff]
  %v6391 = vld [vmem:[%s1094 + $0x388] sm:$0xff]
  %v6392 = vld [vmem:[%s1094 + $0x390] sm:$0xff]
  %v6393 = vld [vmem:[%s1094 + $0x398] sm:$0xff]
  %v6394 = vld [vmem:[%s1094 + $0x3a0] sm:$0xff]
  %v6395 = vld [vmem:[%s1094 + $0x3a8] sm:$0xff]
  %v6396 = vld [vmem:[%s1094 + $0x3b0] sm:$0xff]
  %v6397 = vld [vmem:[%s1094 + $0x3b8] sm:$0xff]
  %v6398 = vld [vmem:[%s1094 + $0x3c0] sm:$0xff]
  %v6399 = vld [vmem:[%s1094 + $0x3c8] sm:$0xff]
  %v6400 = vld [vmem:[%s1094 + $0x3d0] sm:$0xff]
  %v6401 = vld [vmem:[%s1094 + $0x3d8] sm:$0xff]
  %v6402 = vld [vmem:[%s1094 + $0x3e0] sm:$0xff]
  %v6403 = vld [vmem:[%s1094 + $0x3e8] sm:$0xff]
  %v6404 = vld [vmem:[%s1094 + $0x3f0] sm:$0xff]
  %v6405 = vld [vmem:[%s1094 + $0x3f8] sm:$0xff]
  %v6406 = vld [vmem:[%s1223] sm:$0xff]
  %v6407 = vld [vmem:[%s1223 + $0x8] sm:$0xff]
  %v6408 = vld [vmem:[%s1223 + $0x10] sm:$0xff]
  %v6409 = vld [vmem:[%s1223 + $0x18] sm:$0xff]
  %6410 = vmatprep.subr.mxu0 %v6279
  %6411 = vmatpush1.msra.mxu0 %v6278
  %6412 = vmatprep.subr.mxu0 %v6283
  %6413 = vmatpush1.msra.mxu0 %v6282
  %6414 = vmatprep.subr.mxu0 %v6287
  %6415 = vmatpush1.msra.mxu0 %v6286
  %6416 = vmatprep.subr.mxu0 %v6291
  %6417 = vmatpush1.msra.mxu0 %v6290
  %6418 = vmatprep.subr.mxu0 %v6295
  %6419 = vmatpush1.msra.mxu0 %v6294
  %6420 = vmatprep.subr.mxu0 %v6299
  %6421 = vmatpush1.msra.mxu0 %v6298
  %6422 = vmatprep.subr.mxu0 %v6303
  %6423 = vmatpush1.msra.mxu0 %v6302
  %6424 = vmatprep.subr.mxu0 %v6307
  %6425 = vmatpush1.msra.mxu0 %v6306
  %6426 = vmatprep.subr.mxu0 %v6311
  %6427 = vmatpush1.msra.mxu0 %v6310
  %6428 = vmatprep.subr.mxu0 %v6315
  %6429 = vmatpush1.msra.mxu0 %v6314
  %6430 = vmatprep.subr.mxu0 %v6319
  %6431 = vmatpush1.msra.mxu0 %v6318
  %6432 = vmatprep.subr.mxu0 %v6323
  %6433 = vmatpush1.msra.mxu0 %v6322
  %6434 = vmatprep.subr.mxu0 %v6327
  %6435 = vmatpush1.msra.mxu0 %v6326
  %6436 = vmatprep.subr.mxu0 %v6331
  %6437 = vmatpush1.msra.mxu0 %v6330
  %6438 = vmatprep.subr.mxu0 %v6335
  %6439 = vmatpush1.msra.mxu0 %v6334
  %6440 = vmatprep.subr.mxu0 %v6339
  %6441 = vmatpush1.msra.mxu0 %v6338
  %6442 = vmatprep.subr.mxu0 %v6343
  %6443 = vmatpush1.msra.mxu0 %v6342
  %6444 = vmatprep.subr.mxu0 %v6347
  %6445 = vmatpush1.msra.mxu0 %v6346
  %6446 = vmatprep.subr.mxu0 %v6351
  %6447 = vmatpush1.msra.mxu0 %v6350
  %6448 = vmatprep.subr.mxu0 %v6355
  %6449 = vmatpush1.msra.mxu0 %v6354
  %6450 = vmatprep.subr.mxu0 %v6359
  %6451 = vmatpush1.msra.mxu0 %v6358
  %6452 = vmatprep.subr.mxu0 %v6363
  %6453 = vmatpush1.msra.mxu0 %v6362
  %6454 = vmatprep.subr.mxu0 %v6367
  %6455 = vmatpush1.msra.mxu0 %v6366
  %6456 = vmatprep.subr.mxu0 %v6371
  %6457 = vmatpush1.msra.mxu0 %v6370
  %6458 = vmatprep.subr.mxu0 %v6375
  %6459 = vmatpush1.msra.mxu0 %v6374
  %6460 = vmatprep.subr.mxu0 %v6379
  %6461 = vmatpush1.msra.mxu0 %v6378
  %6462 = vmatprep.subr.mxu0 %v6383
  %6463 = vmatpush1.msra.mxu0 %v6382
  %6464 = vmatprep.subr.mxu0 %v6387
  %6465 = vmatpush1.msra.mxu0 %v6386
  %6466 = vmatprep.subr.mxu0 %v6391
  %6467 = vmatpush1.msra.mxu0 %v6390
  %6468 = vmatprep.subr.mxu0 %v6395
  %6469 = vmatpush1.msra.mxu0 %v6394
  %6470 = vmatprep.subr.mxu0 %v6399
  %6471 = vmatpush1.msra.mxu0 %v6398
  %6472 = vmatprep.subr.mxu0 %v6403
  %6473 = vmatpush1.msra.mxu0 %v6402
  %6474 = vmatprep.mubr.f32.mxu0 %v5396
  %6475 = vmatmul.mubr.f32.gmra.mrb[0].mxu0 %v5103
  %v6476 = vpop.f32.mrb[0].mxu0
  %v6477 = vadd.f32 %v6406, %v6476
  %v6478 = vpop.f32.mrb[0].mxu0
  %v6479 = vadd.f32 %v6407, %v6478
  %6480 = vdwg.mxu0
  %6481 = vmatprep.subr.mxu0 %v6281
  %6482 = vmatpush1.msra.mxu0 %v6280
  %6483 = vmatprep.subr.mxu0 %v6285
  %6484 = vmatpush1.msra.mxu0 %v6284
  %6485 = vmatprep.subr.mxu0 %v6289
  %6486 = vmatpush1.msra.mxu0 %v6288
  %6487 = vmatprep.subr.mxu0 %v6293
  %6488 = vmatpush1.msra.mxu0 %v6292
  %6489 = vmatprep.subr.mxu0 %v6297
  %6490 = vmatpush1.msra.mxu0 %v6296
  %6491 = vmatprep.subr.mxu0 %v6301
  %6492 = vmatpush1.msra.mxu0 %v6300
  %6493 = vmatprep.subr.mxu0 %v6305
  %6494 = vmatpush1.msra.mxu0 %v6304
  %6495 = vmatprep.subr.mxu0 %v6309
  %6496 = vmatpush1.msra.mxu0 %v6308
  %6497 = vmatprep.subr.mxu0 %v6313
  %6498 = vmatpush1.msra.mxu0 %v6312
  %6499 = vmatprep.subr.mxu0 %v6317
  %6500 = vmatpush1.msra.mxu0 %v6316
  %6501 = vmatprep.subr.mxu0 %v6321
  %6502 = vmatpush1.msra.mxu0 %v6320
  %6503 = vmatprep.subr.mxu0 %v6325
  %6504 = vmatpush1.msra.mxu0 %v6324
  %6505 = vmatprep.subr.mxu0 %v6329
  %6506 = vmatpush1.msra.mxu0 %v6328
  %6507 = vmatprep.subr.mxu0 %v6333
  %6508 = vmatpush1.msra.mxu0 %v6332
  %6509 = vmatprep.subr.mxu0 %v6337
  %6510 = vmatpush1.msra.mxu0 %v6336
  %6511 = vmatprep.subr.mxu0 %v6341
  %6512 = vmatpush1.msra.mxu0 %v6340
  %6513 = vmatprep.subr.mxu0 %v6345
  %6514 = vmatpush1.msra.mxu0 %v6344
  %6515 = vmatprep.subr.mxu0 %v6349
  %6516 = vmatpush1.msra.mxu0 %v6348
  %6517 = vmatprep.subr.mxu0 %v6353
  %6518 = vmatpush1.msra.mxu0 %v6352
  %6519 = vmatprep.subr.mxu0 %v6357
  %6520 = vmatpush1.msra.mxu0 %v6356
  %6521 = vmatprep.subr.mxu0 %v6361
  %6522 = vmatpush1.msra.mxu0 %v6360
  %6523 = vmatprep.subr.mxu0 %v6365
  %6524 = vmatpush1.msra.mxu0 %v6364
  %6525 = vmatprep.subr.mxu0 %v6369
  %6526 = vmatpush1.msra.mxu0 %v6368
  %6527 = vmatprep.subr.mxu0 %v6373
  %6528 = vmatpush1.msra.mxu0 %v6372
  %6529 = vmatprep.subr.mxu0 %v6377
  %6530 = vmatpush1.msra.mxu0 %v6376
  %6531 = vmatprep.subr.mxu0 %v6381
  %6532 = vmatpush1.msra.mxu0 %v6380
  %6533 = vmatprep.subr.mxu0 %v6385
  %6534 = vmatpush1.msra.mxu0 %v6384
  %6535 = vmatprep.subr.mxu0 %v6389
  %6536 = vmatpush1.msra.mxu0 %v6388
  %6537 = vmatprep.subr.mxu0 %v6393
  %6538 = vmatpush1.msra.mxu0 %v6392
  %6539 = vmatprep.subr.mxu0 %v6397
  %6540 = vmatpush1.msra.mxu0 %v6396
  %6541 = vmatprep.subr.mxu0 %v6401
  %6542 = vmatpush1.msra.mxu0 %v6400
  %6543 = vmatprep.subr.mxu0 %v6405
  %6544 = vmatpush1.msra.mxu0 %v6404
  %6545 = vmatprep.mubr.f32.mxu0 %v5396
  %6546 = vmatmul.mubr.f32.gmra.mrb[0].mxu0 %v5103
  %v6547 = vpop.f32.mrb[0].mxu0
  %v6548 = vadd.f32 %v6408, %v6547
  %v6549 = vpop.f32.mrb[0].mxu0
  %v6550 = vadd.f32 %v6409, %v6549
  %6551 = vdwg.mxu0
  %v6552 = vxor.u32 %v6477, 2147483648
  %v6553 = vmul.f32 %v6552, 1.442695
  %v6554 = vpow.pop %v6553
  %v6555 = vadd.f32 %v6554, 1.0
  %v6556 = vrcp.pop %v6555
  %v6557 = vmul.f32 1.0, %v6556
  %v6558 = vxor.u32 %v6479, 2147483648
  %v6559 = vmul.f32 %v6558, 1.442695
  %v6560 = vpow.pop %v6559
  %v6561 = vadd.f32 %v6560, 1.0
  %v6562 = vrcp.pop %v6561
  %v6563 = vmul.f32 1.0, %v6562
  %v6564 = vmul.f32 %v6557, %v6550
  %v6565 = vadd.f32 %v6548, %v6564
  %v6566 = vtanh.pop %v6565
  %v6567 = vsub.f32 1.0, %v6563
  %v6568 = vmul.f32 %v6567, %v6566
  %v6569 = vmul.f32 %v6563, %v5396
  %v6570 = vadd.f32 %v6568, %v6569
  %v6571 = vld [vmem:[%s1873] sm:$0xff]
  %v6572 = vld [vmem:[%s1873 + $0x8] sm:$0xff]
  %v6573 = vld [vmem:[%s1873 + $0x10] sm:$0xff]
  %v6574 = vld [vmem:[%s1873 + $0x18] sm:$0xff]
  %v6575 = vld [vmem:[%s1873 + $0x20] sm:$0xff]
  %v6576 = vld [vmem:[%s1873 + $0x28] sm:$0xff]
  %v6577 = vld [vmem:[%s1873 + $0x30] sm:$0xff]
  %v6578 = vld [vmem:[%s1873 + $0x38] sm:$0xff]
  %v6579 = vld [vmem:[%s1873 + $0x40] sm:$0xff]
  %v6580 = vld [vmem:[%s1873 + $0x48] sm:$0xff]
  %v6581 = vld [vmem:[%s1873 + $0x50] sm:$0xff]
  %v6582 = vld [vmem:[%s1873 + $0x58] sm:$0xff]
  %v6583 = vld [vmem:[%s1873 + $0x60] sm:$0xff]
  %v6584 = vld [vmem:[%s1873 + $0x68] sm:$0xff]
  %v6585 = vld [vmem:[%s1873 + $0x70] sm:$0xff]
  %v6586 = vld [vmem:[%s1873 + $0x78] sm:$0xff]
  %v6587 = vld [vmem:[%s1873 + $0x80] sm:$0xff]
  %v6588 = vld [vmem:[%s1873 + $0x88] sm:$0xff]
  %v6589 = vld [vmem:[%s1873 + $0x90] sm:$0xff]
  %v6590 = vld [vmem:[%s1873 + $0x98] sm:$0xff]
  %v6591 = vld [vmem:[%s1873 + $0xa0] sm:$0xff]
  %v6592 = vld [vmem:[%s1873 + $0xa8] sm:$0xff]
  %v6593 = vld [vmem:[%s1873 + $0xb0] sm:$0xff]
  %v6594 = vld [vmem:[%s1873 + $0xb8] sm:$0xff]
  %v6595 = vld [vmem:[%s1873 + $0xc0] sm:$0xff]
  %v6596 = vld [vmem:[%s1873 + $0xc8] sm:$0xff]
  %v6597 = vld [vmem:[%s1873 + $0xd0] sm:$0xff]
  %v6598 = vld [vmem:[%s1873 + $0xd8] sm:$0xff]
  %v6599 = vld [vmem:[%s1873 + $0xe0] sm:$0xff]
  %v6600 = vld [vmem:[%s1873 + $0xe8] sm:$0xff]
  %v6601 = vld [vmem:[%s1873 + $0xf0] sm:$0xff]
  %v6602 = vld [vmem:[%s1873 + $0xf8] sm:$0xff]
  %v6603 = vld [vmem:[%s1873 + $0x100] sm:$0xff]
  %v6604 = vld [vmem:[%s1873 + $0x108] sm:$0xff]
  %v6605 = vld [vmem:[%s1873 + $0x110] sm:$0xff]
  %v6606 = vld [vmem:[%s1873 + $0x118] sm:$0xff]
  %v6607 = vld [vmem:[%s1873 + $0x120] sm:$0xff]
  %v6608 = vld [vmem:[%s1873 + $0x128] sm:$0xff]
  %v6609 = vld [vmem:[%s1873 + $0x130] sm:$0xff]
  %v6610 = vld [vmem:[%s1873 + $0x138] sm:$0xff]
  %v6611 = vld [vmem:[%s1873 + $0x140] sm:$0xff]
  %v6612 = vld [vmem:[%s1873 + $0x148] sm:$0xff]
  %v6613 = vld [vmem:[%s1873 + $0x150] sm:$0xff]
  %v6614 = vld [vmem:[%s1873 + $0x158] sm:$0xff]
  %v6615 = vld [vmem:[%s1873 + $0x160] sm:$0xff]
  %v6616 = vld [vmem:[%s1873 + $0x168] sm:$0xff]
  %v6617 = vld [vmem:[%s1873 + $0x170] sm:$0xff]
  %v6618 = vld [vmem:[%s1873 + $0x178] sm:$0xff]
  %v6619 = vld [vmem:[%s1873 + $0x180] sm:$0xff]
  %v6620 = vld [vmem:[%s1873 + $0x188] sm:$0xff]
  %v6621 = vld [vmem:[%s1873 + $0x190] sm:$0xff]
  %v6622 = vld [vmem:[%s1873 + $0x198] sm:$0xff]
  %v6623 = vld [vmem:[%s1873 + $0x1a0] sm:$0xff]
  %v6624 = vld [vmem:[%s1873 + $0x1a8] sm:$0xff]
  %v6625 = vld [vmem:[%s1873 + $0x1b0] sm:$0xff]
  %v6626 = vld [vmem:[%s1873 + $0x1b8] sm:$0xff]
  %v6627 = vld [vmem:[%s1873 + $0x1c0] sm:$0xff]
  %v6628 = vld [vmem:[%s1873 + $0x1c8] sm:$0xff]
  %v6629 = vld [vmem:[%s1873 + $0x1d0] sm:$0xff]
  %v6630 = vld [vmem:[%s1873 + $0x1d8] sm:$0xff]
  %v6631 = vld [vmem:[%s1873 + $0x1e0] sm:$0xff]
  %v6632 = vld [vmem:[%s1873 + $0x1e8] sm:$0xff]
  %v6633 = vld [vmem:[%s1873 + $0x1f0] sm:$0xff]
  %v6634 = vld [vmem:[%s1873 + $0x1f8] sm:$0xff]
  %v6635 = vld [vmem:[%s1873 + $0x200] sm:$0xff]
  %v6636 = vld [vmem:[%s1873 + $0x208] sm:$0xff]
  %v6637 = vld [vmem:[%s1873 + $0x210] sm:$0xff]
  %v6638 = vld [vmem:[%s1873 + $0x218] sm:$0xff]
  %v6639 = vld [vmem:[%s1873 + $0x220] sm:$0xff]
  %v6640 = vld [vmem:[%s1873 + $0x228] sm:$0xff]
  %v6641 = vld [vmem:[%s1873 + $0x230] sm:$0xff]
  %v6642 = vld [vmem:[%s1873 + $0x238] sm:$0xff]
  %v6643 = vld [vmem:[%s1873 + $0x240] sm:$0xff]
  %v6644 = vld [vmem:[%s1873 + $0x248] sm:$0xff]
  %v6645 = vld [vmem:[%s1873 + $0x250] sm:$0xff]
  %v6646 = vld [vmem:[%s1873 + $0x258] sm:$0xff]
  %v6647 = vld [vmem:[%s1873 + $0x260] sm:$0xff]
  %v6648 = vld [vmem:[%s1873 + $0x268] sm:$0xff]
  %v6649 = vld [vmem:[%s1873 + $0x270] sm:$0xff]
  %v6650 = vld [vmem:[%s1873 + $0x278] sm:$0xff]
  %v6651 = vld [vmem:[%s1873 + $0x280] sm:$0xff]
  %v6652 = vld [vmem:[%s1873 + $0x288] sm:$0xff]
  %v6653 = vld [vmem:[%s1873 + $0x290] sm:$0xff]
  %v6654 = vld [vmem:[%s1873 + $0x298] sm:$0xff]
  %v6655 = vld [vmem:[%s1873 + $0x2a0] sm:$0xff]
  %v6656 = vld [vmem:[%s1873 + $0x2a8] sm:$0xff]
  %v6657 = vld [vmem:[%s1873 + $0x2b0] sm:$0xff]
  %v6658 = vld [vmem:[%s1873 + $0x2b8] sm:$0xff]
  %v6659 = vld [vmem:[%s1873 + $0x2c0] sm:$0xff]
  %v6660 = vld [vmem:[%s1873 + $0x2c8] sm:$0xff]
  %v6661 = vld [vmem:[%s1873 + $0x2d0] sm:$0xff]
  %v6662 = vld [vmem:[%s1873 + $0x2d8] sm:$0xff]
  %v6663 = vld [vmem:[%s1873 + $0x2e0] sm:$0xff]
  %v6664 = vld [vmem:[%s1873 + $0x2e8] sm:$0xff]
  %v6665 = vld [vmem:[%s1873 + $0x2f0] sm:$0xff]
  %v6666 = vld [vmem:[%s1873 + $0x2f8] sm:$0xff]
  %v6667 = vld [vmem:[%s1873 + $0x300] sm:$0xff]
  %v6668 = vld [vmem:[%s1873 + $0x308] sm:$0xff]
  %v6669 = vld [vmem:[%s1873 + $0x310] sm:$0xff]
  %v6670 = vld [vmem:[%s1873 + $0x318] sm:$0xff]
  %v6671 = vld [vmem:[%s1873 + $0x320] sm:$0xff]
  %v6672 = vld [vmem:[%s1873 + $0x328] sm:$0xff]
  %v6673 = vld [vmem:[%s1873 + $0x330] sm:$0xff]
  %v6674 = vld [vmem:[%s1873 + $0x338] sm:$0xff]
  %v6675 = vld [vmem:[%s1873 + $0x340] sm:$0xff]
  %v6676 = vld [vmem:[%s1873 + $0x348] sm:$0xff]
  %v6677 = vld [vmem:[%s1873 + $0x350] sm:$0xff]
  %v6678 = vld [vmem:[%s1873 + $0x358] sm:$0xff]
  %v6679 = vld [vmem:[%s1873 + $0x360] sm:$0xff]
  %v6680 = vld [vmem:[%s1873 + $0x368] sm:$0xff]
  %v6681 = vld [vmem:[%s1873 + $0x370] sm:$0xff]
  %v6682 = vld [vmem:[%s1873 + $0x378] sm:$0xff]
  %v6683 = vld [vmem:[%s1873 + $0x380] sm:$0xff]
  %v6684 = vld [vmem:[%s1873 + $0x388] sm:$0xff]
  %v6685 = vld [vmem:[%s1873 + $0x390] sm:$0xff]
  %v6686 = vld [vmem:[%s1873 + $0x398] sm:$0xff]
  %v6687 = vld [vmem:[%s1873 + $0x3a0] sm:$0xff]
  %v6688 = vld [vmem:[%s1873 + $0x3a8] sm:$0xff]
  %v6689 = vld [vmem:[%s1873 + $0x3b0] sm:$0xff]
  %v6690 = vld [vmem:[%s1873 + $0x3b8] sm:$0xff]
  %v6691 = vld [vmem:[%s1873 + $0x3c0] sm:$0xff]
  %v6692 = vld [vmem:[%s1873 + $0x3c8] sm:$0xff]
  %v6693 = vld [vmem:[%s1873 + $0x3d0] sm:$0xff]
  %v6694 = vld [vmem:[%s1873 + $0x3d8] sm:$0xff]
  %v6695 = vld [vmem:[%s1873 + $0x3e0] sm:$0xff]
  %v6696 = vld [vmem:[%s1873 + $0x3e8] sm:$0xff]
  %v6697 = vld [vmem:[%s1873 + $0x3f0] sm:$0xff]
  %v6698 = vld [vmem:[%s1873 + $0x3f8] sm:$0xff]
  %v6699 = vld [vmem:[%s2002] sm:$0xff]
  %v6700 = vld [vmem:[%s2002 + $0x8] sm:$0xff]
  %v6701 = vld [vmem:[%s2002 + $0x10] sm:$0xff]
  %v6702 = vld [vmem:[%s2002 + $0x18] sm:$0xff]
  %6703 = vmatprep.subr.mxu0 %v6572
  %6704 = vmatpush1.msra.mxu0 %v6571
  %6705 = vmatprep.subr.mxu0 %v6576
  %6706 = vmatpush1.msra.mxu0 %v6575
  %6707 = vmatprep.subr.mxu0 %v6580
  %6708 = vmatpush1.msra.mxu0 %v6579
  %6709 = vmatprep.subr.mxu0 %v6584
  %6710 = vmatpush1.msra.mxu0 %v6583
  %6711 = vmatprep.subr.mxu0 %v6588
  %6712 = vmatpush1.msra.mxu0 %v6587
  %6713 = vmatprep.subr.mxu0 %v6592
  %6714 = vmatpush1.msra.mxu0 %v6591
  %6715 = vmatprep.subr.mxu0 %v6596
  %6716 = vmatpush1.msra.mxu0 %v6595
  %6717 = vmatprep.subr.mxu0 %v6600
  %6718 = vmatpush1.msra.mxu0 %v6599
  %6719 = vmatprep.subr.mxu0 %v6604
  %6720 = vmatpush1.msra.mxu0 %v6603
  %6721 = vmatprep.subr.mxu0 %v6608
  %6722 = vmatpush1.msra.mxu0 %v6607
  %6723 = vmatprep.subr.mxu0 %v6612
  %6724 = vmatpush1.msra.mxu0 %v6611
  %6725 = vmatprep.subr.mxu0 %v6616
  %6726 = vmatpush1.msra.mxu0 %v6615
  %6727 = vmatprep.subr.mxu0 %v6620
  %6728 = vmatpush1.msra.mxu0 %v6619
  %6729 = vmatprep.subr.mxu0 %v6624
  %6730 = vmatpush1.msra.mxu0 %v6623
  %6731 = vmatprep.subr.mxu0 %v6628
  %6732 = vmatpush1.msra.mxu0 %v6627
  %6733 = vmatprep.subr.mxu0 %v6632
  %6734 = vmatpush1.msra.mxu0 %v6631
  %6735 = vmatprep.subr.mxu0 %v6636
  %6736 = vmatpush1.msra.mxu0 %v6635
  %6737 = vmatprep.subr.mxu0 %v6640
  %6738 = vmatpush1.msra.mxu0 %v6639
  %6739 = vmatprep.subr.mxu0 %v6644
  %6740 = vmatpush1.msra.mxu0 %v6643
  %6741 = vmatprep.subr.mxu0 %v6648
  %6742 = vmatpush1.msra.mxu0 %v6647
  %6743 = vmatprep.subr.mxu0 %v6652
  %6744 = vmatpush1.msra.mxu0 %v6651
  %6745 = vmatprep.subr.mxu0 %v6656
  %6746 = vmatpush1.msra.mxu0 %v6655
  %6747 = vmatprep.subr.mxu0 %v6660
  %6748 = vmatpush1.msra.mxu0 %v6659
  %6749 = vmatprep.subr.mxu0 %v6664
  %6750 = vmatpush1.msra.mxu0 %v6663
  %6751 = vmatprep.subr.mxu0 %v6668
  %6752 = vmatpush1.msra.mxu0 %v6667
  %6753 = vmatprep.subr.mxu0 %v6672
  %6754 = vmatpush1.msra.mxu0 %v6671
  %6755 = vmatprep.subr.mxu0 %v6676
  %6756 = vmatpush1.msra.mxu0 %v6675
  %6757 = vmatprep.subr.mxu0 %v6680
  %6758 = vmatpush1.msra.mxu0 %v6679
  %6759 = vmatprep.subr.mxu0 %v6684
  %6760 = vmatpush1.msra.mxu0 %v6683
  %6761 = vmatprep.subr.mxu0 %v6688
  %6762 = vmatpush1.msra.mxu0 %v6687
  %6763 = vmatprep.subr.mxu0 %v6692
  %6764 = vmatpush1.msra.mxu0 %v6691
  %6765 = vmatprep.subr.mxu0 %v6696
  %6766 = vmatpush1.msra.mxu0 %v6695
  %6767 = vmatprep.mubr.f32.mxu0 %v5689
  %6768 = vmatmul.mubr.f32.gmra.mrb[0].mxu0 %v5396
  %v6769 = vpop.f32.mrb[0].mxu0
  %v6770 = vadd.f32 %v6699, %v6769
  %v6771 = vpop.f32.mrb[0].mxu0
  %v6772 = vadd.f32 %v6700, %v6771
  %6773 = vdwg.mxu0
  %6774 = vmatprep.subr.mxu0 %v6574
  %6775 = vmatpush1.msra.mxu0 %v6573
  %6776 = vmatprep.subr.mxu0 %v6578
  %6777 = vmatpush1.msra.mxu0 %v6577
  %6778 = vmatprep.subr.mxu0 %v6582
  %6779 = vmatpush1.msra.mxu0 %v6581
  %6780 = vmatprep.subr.mxu0 %v6586
  %6781 = vmatpush1.msra.mxu0 %v6585
  %6782 = vmatprep.subr.mxu0 %v6590
  %6783 = vmatpush1.msra.mxu0 %v6589
  %6784 = vmatprep.subr.mxu0 %v6594
  %6785 = vmatpush1.msra.mxu0 %v6593
  %6786 = vmatprep.subr.mxu0 %v6598
  %6787 = vmatpush1.msra.mxu0 %v6597
  %6788 = vmatprep.subr.mxu0 %v6602
  %6789 = vmatpush1.msra.mxu0 %v6601
  %6790 = vmatprep.subr.mxu0 %v6606
  %6791 = vmatpush1.msra.mxu0 %v6605
  %6792 = vmatprep.subr.mxu0 %v6610
  %6793 = vmatpush1.msra.mxu0 %v6609
  %6794 = vmatprep.subr.mxu0 %v6614
  %6795 = vmatpush1.msra.mxu0 %v6613
  %6796 = vmatprep.subr.mxu0 %v6618
  %6797 = vmatpush1.msra.mxu0 %v6617
  %6798 = vmatprep.subr.mxu0 %v6622
  %6799 = vmatpush1.msra.mxu0 %v6621
  %6800 = vmatprep.subr.mxu0 %v6626
  %6801 = vmatpush1.msra.mxu0 %v6625
  %6802 = vmatprep.subr.mxu0 %v6630
  %6803 = vmatpush1.msra.mxu0 %v6629
  %6804 = vmatprep.subr.mxu0 %v6634
  %6805 = vmatpush1.msra.mxu0 %v6633
  %6806 = vmatprep.subr.mxu0 %v6638
  %6807 = vmatpush1.msra.mxu0 %v6637
  %6808 = vmatprep.subr.mxu0 %v6642
  %6809 = vmatpush1.msra.mxu0 %v6641
  %6810 = vmatprep.subr.mxu0 %v6646
  %6811 = vmatpush1.msra.mxu0 %v6645
  %6812 = vmatprep.subr.mxu0 %v6650
  %6813 = vmatpush1.msra.mxu0 %v6649
  %6814 = vmatprep.subr.mxu0 %v6654
  %6815 = vmatpush1.msra.mxu0 %v6653
  %6816 = vmatprep.subr.mxu0 %v6658
  %6817 = vmatpush1.msra.mxu0 %v6657
  %6818 = vmatprep.subr.mxu0 %v6662
  %6819 = vmatpush1.msra.mxu0 %v6661
  %6820 = vmatprep.subr.mxu0 %v6666
  %6821 = vmatpush1.msra.mxu0 %v6665
  %6822 = vmatprep.subr.mxu0 %v6670
  %6823 = vmatpush1.msra.mxu0 %v6669
  %6824 = vmatprep.subr.mxu0 %v6674
  %6825 = vmatpush1.msra.mxu0 %v6673
  %6826 = vmatprep.subr.mxu0 %v6678
  %6827 = vmatpush1.msra.mxu0 %v6677
  %6828 = vmatprep.subr.mxu0 %v6682
  %6829 = vmatpush1.msra.mxu0 %v6681
  %6830 = vmatprep.subr.mxu0 %v6686
  %6831 = vmatpush1.msra.mxu0 %v6685
  %6832 = vmatprep.subr.mxu0 %v6690
  %6833 = vmatpush1.msra.mxu0 %v6689
  %6834 = vmatprep.subr.mxu0 %v6694
  %6835 = vmatpush1.msra.mxu0 %v6693
  %6836 = vmatprep.subr.mxu0 %v6698
  %6837 = vmatpush1.msra.mxu0 %v6697
  %6838 = vmatprep.mubr.f32.mxu0 %v5689
  %6839 = vmatmul.mubr.f32.gmra.mrb[0].mxu0 %v5396
  %v6840 = vpop.f32.mrb[0].mxu0
  %v6841 = vadd.f32 %v6701, %v6840
  %v6842 = vpop.f32.mrb[0].mxu0
  %v6843 = vadd.f32 %v6702, %v6842
  %6844 = vdwg.mxu0
  %v6845 = vxor.u32 %v6770, 2147483648
  %v6846 = vmul.f32 %v6845, 1.442695
  %v6847 = vpow.pop %v6846
  %v6848 = vadd.f32 %v6847, 1.0
  %v6849 = vrcp.pop %v6848
  %v6850 = vmul.f32 1.0, %v6849
  %v6851 = vxor.u32 %v6772, 2147483648
  %v6852 = vmul.f32 %v6851, 1.442695
  %v6853 = vpow.pop %v6852
  %v6854 = vadd.f32 %v6853, 1.0
  %v6855 = vrcp.pop %v6854
  %v6856 = vmul.f32 1.0, %v6855
  %v6857 = vmul.f32 %v6850, %v6843
  %v6858 = vadd.f32 %v6841, %v6857
  %v6859 = vtanh.pop %v6858
  %v6860 = vsub.f32 1.0, %v6856
  %v6861 = vmul.f32 %v6860, %v6859
  %v6862 = vmul.f32 %v6856, %v5689
  %v6863 = vadd.f32 %v6861, %v6862
  %6864 = vst [vmem:[#allocation2 + $0x20] sm:$0xff] %v6863
  %v6865 = vld [vmem:[%s476] sm:$0xff]
  %v6866 = vld [vmem:[%s476 + $0x8] sm:$0xff]
  %v6867 = vld [vmem:[%s476 + $0x10] sm:$0xff]
  %v6868 = vld [vmem:[%s476 + $0x18] sm:$0xff]
  %v6869 = vld [vmem:[%s476 + $0x20] sm:$0xff]
  %v6870 = vld [vmem:[%s476 + $0x28] sm:$0xff]
  %v6871 = vld [vmem:[%s476 + $0x30] sm:$0xff]
  %v6872 = vld [vmem:[%s476 + $0x38] sm:$0xff]
  %v6873 = vld [vmem:[%s476 + $0x40] sm:$0xff]
  %v6874 = vld [vmem:[%s476 + $0x48] sm:$0xff]
  %v6875 = vld [vmem:[%s476 + $0x50] sm:$0xff]
  %v6876 = vld [vmem:[%s476 + $0x58] sm:$0xff]
  %v6877 = vld [vmem:[%s476 + $0x60] sm:$0xff]
  %v6878 = vld [vmem:[%s476 + $0x68] sm:$0xff]
  %v6879 = vld [vmem:[%s476 + $0x70] sm:$0xff]
  %v6880 = vld [vmem:[%s476 + $0x78] sm:$0xff]
  %v6881 = vld [vmem:[%s476 + $0x80] sm:$0xff]
  %v6882 = vld [vmem:[%s476 + $0x88] sm:$0xff]
  %v6883 = vld [vmem:[%s476 + $0x90] sm:$0xff]
  %v6884 = vld [vmem:[%s476 + $0x98] sm:$0xff]
  %v6885 = vld [vmem:[%s476 + $0xa0] sm:$0xff]
  %v6886 = vld [vmem:[%s476 + $0xa8] sm:$0xff]
  %v6887 = vld [vmem:[%s476 + $0xb0] sm:$0xff]
  %v6888 = vld [vmem:[%s476 + $0xb8] sm:$0xff]
  %v6889 = vld [vmem:[%s476 + $0xc0] sm:$0xff]
  %v6890 = vld [vmem:[%s476 + $0xc8] sm:$0xff]
  %v6891 = vld [vmem:[%s476 + $0xd0] sm:$0xff]
  %v6892 = vld [vmem:[%s476 + $0xd8] sm:$0xff]
  %v6893 = vld [vmem:[%s476 + $0xe0] sm:$0xff]
  %v6894 = vld [vmem:[%s476 + $0xe8] sm:$0xff]
  %v6895 = vld [vmem:[%s476 + $0xf0] sm:$0xff]
  %v6896 = vld [vmem:[%s476 + $0xf8] sm:$0xff]
  %v6897 = vld [vmem:[%s476 + $0x100] sm:$0xff]
  %v6898 = vld [vmem:[%s476 + $0x108] sm:$0xff]
  %v6899 = vld [vmem:[%s476 + $0x110] sm:$0xff]
  %v6900 = vld [vmem:[%s476 + $0x118] sm:$0xff]
  %v6901 = vld [vmem:[%s476 + $0x120] sm:$0xff]
  %v6902 = vld [vmem:[%s476 + $0x128] sm:$0xff]
  %v6903 = vld [vmem:[%s476 + $0x130] sm:$0xff]
  %v6904 = vld [vmem:[%s476 + $0x138] sm:$0xff]
  %v6905 = vld [vmem:[%s476 + $0x140] sm:$0xff]
  %v6906 = vld [vmem:[%s476 + $0x148] sm:$0xff]
  %v6907 = vld [vmem:[%s476 + $0x150] sm:$0xff]
  %v6908 = vld [vmem:[%s476 + $0x158] sm:$0xff]
  %v6909 = vld [vmem:[%s476 + $0x160] sm:$0xff]
  %v6910 = vld [vmem:[%s476 + $0x168] sm:$0xff]
  %v6911 = vld [vmem:[%s476 + $0x170] sm:$0xff]
  %v6912 = vld [vmem:[%s476 + $0x178] sm:$0xff]
  %v6913 = vld [vmem:[%s476 + $0x180] sm:$0xff]
  %v6914 = vld [vmem:[%s476 + $0x188] sm:$0xff]
  %v6915 = vld [vmem:[%s476 + $0x190] sm:$0xff]
  %v6916 = vld [vmem:[%s476 + $0x198] sm:$0xff]
  %v6917 = vld [vmem:[%s476 + $0x1a0] sm:$0xff]
  %v6918 = vld [vmem:[%s476 + $0x1a8] sm:$0xff]
  %v6919 = vld [vmem:[%s476 + $0x1b0] sm:$0xff]
  %v6920 = vld [vmem:[%s476 + $0x1b8] sm:$0xff]
  %v6921 = vld [vmem:[%s476 + $0x1c0] sm:$0xff]
  %v6922 = vld [vmem:[%s476 + $0x1c8] sm:$0xff]
  %v6923 = vld [vmem:[%s476 + $0x1d0] sm:$0xff]
  %v6924 = vld [vmem:[%s476 + $0x1d8] sm:$0xff]
  %v6925 = vld [vmem:[%s476 + $0x1e0] sm:$0xff]
  %v6926 = vld [vmem:[%s476 + $0x1e8] sm:$0xff]
  %v6927 = vld [vmem:[%s476 + $0x1f0] sm:$0xff]
  %v6928 = vld [vmem:[%s476 + $0x1f8] sm:$0xff]
  %v6929 = vld [vmem:[%s476 + $0x200] sm:$0xff]
  %v6930 = vld [vmem:[%s476 + $0x208] sm:$0xff]
  %v6931 = vld [vmem:[%s476 + $0x210] sm:$0xff]
  %v6932 = vld [vmem:[%s476 + $0x218] sm:$0xff]
  %v6933 = vld [vmem:[%s476 + $0x220] sm:$0xff]
  %v6934 = vld [vmem:[%s476 + $0x228] sm:$0xff]
  %v6935 = vld [vmem:[%s476 + $0x230] sm:$0xff]
  %v6936 = vld [vmem:[%s476 + $0x238] sm:$0xff]
  %v6937 = vld [vmem:[%s476 + $0x240] sm:$0xff]
  %v6938 = vld [vmem:[%s476 + $0x248] sm:$0xff]
  %v6939 = vld [vmem:[%s476 + $0x250] sm:$0xff]
  %v6940 = vld [vmem:[%s476 + $0x258] sm:$0xff]
  %v6941 = vld [vmem:[%s476 + $0x260] sm:$0xff]
  %v6942 = vld [vmem:[%s476 + $0x268] sm:$0xff]
  %v6943 = vld [vmem:[%s476 + $0x270] sm:$0xff]
  %v6944 = vld [vmem:[%s476 + $0x278] sm:$0xff]
  %v6945 = vld [vmem:[%s476 + $0x280] sm:$0xff]
  %v6946 = vld [vmem:[%s476 + $0x288] sm:$0xff]
  %v6947 = vld [vmem:[%s476 + $0x290] sm:$0xff]
  %v6948 = vld [vmem:[%s476 + $0x298] sm:$0xff]
  %v6949 = vld [vmem:[%s476 + $0x2a0] sm:$0xff]
  %v6950 = vld [vmem:[%s476 + $0x2a8] sm:$0xff]
  %v6951 = vld [vmem:[%s476 + $0x2b0] sm:$0xff]
  %v6952 = vld [vmem:[%s476 + $0x2b8] sm:$0xff]
  %v6953 = vld [vmem:[%s476 + $0x2c0] sm:$0xff]
  %v6954 = vld [vmem:[%s476 + $0x2c8] sm:$0xff]
  %v6955 = vld [vmem:[%s476 + $0x2d0] sm:$0xff]
  %v6956 = vld [vmem:[%s476 + $0x2d8] sm:$0xff]
  %v6957 = vld [vmem:[%s476 + $0x2e0] sm:$0xff]
  %v6958 = vld [vmem:[%s476 + $0x2e8] sm:$0xff]
  %v6959 = vld [vmem:[%s476 + $0x2f0] sm:$0xff]
  %v6960 = vld [vmem:[%s476 + $0x2f8] sm:$0xff]
  %v6961 = vld [vmem:[%s476 + $0x300] sm:$0xff]
  %v6962 = vld [vmem:[%s476 + $0x308] sm:$0xff]
  %v6963 = vld [vmem:[%s476 + $0x310] sm:$0xff]
  %v6964 = vld [vmem:[%s476 + $0x318] sm:$0xff]
  %v6965 = vld [vmem:[%s476 + $0x320] sm:$0xff]
  %v6966 = vld [vmem:[%s476 + $0x328] sm:$0xff]
  %v6967 = vld [vmem:[%s476 + $0x330] sm:$0xff]
  %v6968 = vld [vmem:[%s476 + $0x338] sm:$0xff]
  %v6969 = vld [vmem:[%s476 + $0x340] sm:$0xff]
  %v6970 = vld [vmem:[%s476 + $0x348] sm:$0xff]
  %v6971 = vld [vmem:[%s476 + $0x350] sm:$0xff]
  %v6972 = vld [vmem:[%s476 + $0x358] sm:$0xff]
  %v6973 = vld [vmem:[%s476 + $0x360] sm:$0xff]
  %v6974 = vld [vmem:[%s476 + $0x368] sm:$0xff]
  %v6975 = vld [vmem:[%s476 + $0x370] sm:$0xff]
  %v6976 = vld [vmem:[%s476 + $0x378] sm:$0xff]
  %v6977 = vld [vmem:[%s476 + $0x380] sm:$0xff]
  %v6978 = vld [vmem:[%s476 + $0x388] sm:$0xff]
  %v6979 = vld [vmem:[%s476 + $0x390] sm:$0xff]
  %v6980 = vld [vmem:[%s476 + $0x398] sm:$0xff]
  %v6981 = vld [vmem:[%s476 + $0x3a0] sm:$0xff]
  %v6982 = vld [vmem:[%s476 + $0x3a8] sm:$0xff]
  %v6983 = vld [vmem:[%s476 + $0x3b0] sm:$0xff]
  %v6984 = vld [vmem:[%s476 + $0x3b8] sm:$0xff]
  %v6985 = vld [vmem:[%s476 + $0x3c0] sm:$0xff]
  %v6986 = vld [vmem:[%s476 + $0x3c8] sm:$0xff]
  %v6987 = vld [vmem:[%s476 + $0x3d0] sm:$0xff]
  %v6988 = vld [vmem:[%s476 + $0x3d8] sm:$0xff]
  %v6989 = vld [vmem:[%s476 + $0x3e0] sm:$0xff]
  %v6990 = vld [vmem:[%s476 + $0x3e8] sm:$0xff]
  %v6991 = vld [vmem:[%s476 + $0x3f0] sm:$0xff]
  %v6992 = vld [vmem:[%s476 + $0x3f8] sm:$0xff]
  %v6993 = vld [vmem:[%s605] sm:$0xff]
  %v6994 = vld [vmem:[%s605 + $0x8] sm:$0xff]
  %v6995 = vld [vmem:[%s605 + $0x10] sm:$0xff]
  %v6996 = vld [vmem:[%s605 + $0x18] sm:$0xff]
  %6997 = vmatprep.subr.mxu0 %v6866
  %6998 = vmatpush1.msra.mxu0 %v6865
  %6999 = vmatprep.subr.mxu0 %v6870
  %7000 = vmatpush1.msra.mxu0 %v6869
  %7001 = vmatprep.subr.mxu0 %v6874
  %7002 = vmatpush1.msra.mxu0 %v6873
  %7003 = vmatprep.subr.mxu0 %v6878
  %7004 = vmatpush1.msra.mxu0 %v6877
  %7005 = vmatprep.subr.mxu0 %v6882
  %7006 = vmatpush1.msra.mxu0 %v6881
  %7007 = vmatprep.subr.mxu0 %v6886
  %7008 = vmatpush1.msra.mxu0 %v6885
  %7009 = vmatprep.subr.mxu0 %v6890
  %7010 = vmatpush1.msra.mxu0 %v6889
  %7011 = vmatprep.subr.mxu0 %v6894
  %7012 = vmatpush1.msra.mxu0 %v6893
  %7013 = vmatprep.subr.mxu0 %v6898
  %7014 = vmatpush1.msra.mxu0 %v6897
  %7015 = vmatprep.subr.mxu0 %v6902
  %7016 = vmatpush1.msra.mxu0 %v6901
  %7017 = vmatprep.subr.mxu0 %v6906
  %7018 = vmatpush1.msra.mxu0 %v6905
  %7019 = vmatprep.subr.mxu0 %v6910
  %7020 = vmatpush1.msra.mxu0 %v6909
  %7021 = vmatprep.subr.mxu0 %v6914
  %7022 = vmatpush1.msra.mxu0 %v6913
  %7023 = vmatprep.subr.mxu0 %v6918
  %7024 = vmatpush1.msra.mxu0 %v6917
  %7025 = vmatprep.subr.mxu0 %v6922
  %7026 = vmatpush1.msra.mxu0 %v6921
  %7027 = vmatprep.subr.mxu0 %v6926
  %7028 = vmatpush1.msra.mxu0 %v6925
  %7029 = vmatprep.subr.mxu0 %v6930
  %7030 = vmatpush1.msra.mxu0 %v6929
  %7031 = vmatprep.subr.mxu0 %v6934
  %7032 = vmatpush1.msra.mxu0 %v6933
  %7033 = vmatprep.subr.mxu0 %v6938
  %7034 = vmatpush1.msra.mxu0 %v6937
  %7035 = vmatprep.subr.mxu0 %v6942
  %7036 = vmatpush1.msra.mxu0 %v6941
  %7037 = vmatprep.subr.mxu0 %v6946
  %7038 = vmatpush1.msra.mxu0 %v6945
  %7039 = vmatprep.subr.mxu0 %v6950
  %7040 = vmatpush1.msra.mxu0 %v6949
  %7041 = vmatprep.subr.mxu0 %v6954
  %7042 = vmatpush1.msra.mxu0 %v6953
  %7043 = vmatprep.subr.mxu0 %v6958
  %7044 = vmatpush1.msra.mxu0 %v6957
  %7045 = vmatprep.subr.mxu0 %v6962
  %7046 = vmatpush1.msra.mxu0 %v6961
  %7047 = vmatprep.subr.mxu0 %v6966
  %7048 = vmatpush1.msra.mxu0 %v6965
  %7049 = vmatprep.subr.mxu0 %v6970
  %7050 = vmatpush1.msra.mxu0 %v6969
  %7051 = vmatprep.subr.mxu0 %v6974
  %7052 = vmatpush1.msra.mxu0 %v6973
  %7053 = vmatprep.subr.mxu0 %v6978
  %7054 = vmatpush1.msra.mxu0 %v6977
  %7055 = vmatprep.subr.mxu0 %v6982
  %7056 = vmatpush1.msra.mxu0 %v6981
  %7057 = vmatprep.subr.mxu0 %v6986
  %7058 = vmatpush1.msra.mxu0 %v6985
  %7059 = vmatprep.subr.mxu0 %v6990
  %7060 = vmatpush1.msra.mxu0 %v6989
  %7061 = vmatprep.mubr.f32.mxu0 %v6277
  %7062 = vmatmul.mubr.f32.gmra.mrb[0].mxu0 %v5984
  %v7063 = vpop.f32.mrb[0].mxu0
  %v7064 = vadd.f32 %v6993, %v7063
  %v7065 = vpop.f32.mrb[0].mxu0
  %v7066 = vadd.f32 %v6994, %v7065
  %7067 = vdwg.mxu0
  %7068 = vmatprep.subr.mxu0 %v6868
  %7069 = vmatpush1.msra.mxu0 %v6867
  %7070 = vmatprep.subr.mxu0 %v6872
  %7071 = vmatpush1.msra.mxu0 %v6871
  %7072 = vmatprep.subr.mxu0 %v6876
  %7073 = vmatpush1.msra.mxu0 %v6875
  %7074 = vmatprep.subr.mxu0 %v6880
  %7075 = vmatpush1.msra.mxu0 %v6879
  %7076 = vmatprep.subr.mxu0 %v6884
  %7077 = vmatpush1.msra.mxu0 %v6883
  %7078 = vmatprep.subr.mxu0 %v6888
  %7079 = vmatpush1.msra.mxu0 %v6887
  %7080 = vmatprep.subr.mxu0 %v6892
  %7081 = vmatpush1.msra.mxu0 %v6891
  %7082 = vmatprep.subr.mxu0 %v6896
  %7083 = vmatpush1.msra.mxu0 %v6895
  %7084 = vmatprep.subr.mxu0 %v6900
  %7085 = vmatpush1.msra.mxu0 %v6899
  %7086 = vmatprep.subr.mxu0 %v6904
  %7087 = vmatpush1.msra.mxu0 %v6903
  %7088 = vmatprep.subr.mxu0 %v6908
  %7089 = vmatpush1.msra.mxu0 %v6907
  %7090 = vmatprep.subr.mxu0 %v6912
  %7091 = vmatpush1.msra.mxu0 %v6911
  %7092 = vmatprep.subr.mxu0 %v6916
  %7093 = vmatpush1.msra.mxu0 %v6915
  %7094 = vmatprep.subr.mxu0 %v6920
  %7095 = vmatpush1.msra.mxu0 %v6919
  %7096 = vmatprep.subr.mxu0 %v6924
  %7097 = vmatpush1.msra.mxu0 %v6923
  %7098 = vmatprep.subr.mxu0 %v6928
  %7099 = vmatpush1.msra.mxu0 %v6927
  %7100 = vmatprep.subr.mxu0 %v6932
  %7101 = vmatpush1.msra.mxu0 %v6931
  %7102 = vmatprep.subr.mxu0 %v6936
  %7103 = vmatpush1.msra.mxu0 %v6935
  %7104 = vmatprep.subr.mxu0 %v6940
  %7105 = vmatpush1.msra.mxu0 %v6939
  %7106 = vmatprep.subr.mxu0 %v6944
  %7107 = vmatpush1.msra.mxu0 %v6943
  %7108 = vmatprep.subr.mxu0 %v6948
  %7109 = vmatpush1.msra.mxu0 %v6947
  %7110 = vmatprep.subr.mxu0 %v6952
  %7111 = vmatpush1.msra.mxu0 %v6951
  %7112 = vmatprep.subr.mxu0 %v6956
  %7113 = vmatpush1.msra.mxu0 %v6955
  %7114 = vmatprep.subr.mxu0 %v6960
  %7115 = vmatpush1.msra.mxu0 %v6959
  %7116 = vmatprep.subr.mxu0 %v6964
  %7117 = vmatpush1.msra.mxu0 %v6963
  %7118 = vmatprep.subr.mxu0 %v6968
  %7119 = vmatpush1.msra.mxu0 %v6967
  %7120 = vmatprep.subr.mxu0 %v6972
  %7121 = vmatpush1.msra.mxu0 %v6971
  %7122 = vmatprep.subr.mxu0 %v6976
  %7123 = vmatpush1.msra.mxu0 %v6975
  %7124 = vmatprep.subr.mxu0 %v6980
  %7125 = vmatpush1.msra.mxu0 %v6979
  %7126 = vmatprep.subr.mxu0 %v6984
  %7127 = vmatpush1.msra.mxu0 %v6983
  %7128 = vmatprep.subr.mxu0 %v6988
  %7129 = vmatpush1.msra.mxu0 %v6987
  %7130 = vmatprep.subr.mxu0 %v6992
  %7131 = vmatpush1.msra.mxu0 %v6991
  %7132 = vmatprep.mubr.f32.mxu0 %v6277
  %7133 = vmatmul.mubr.f32.gmra.mrb[0].mxu0 %v5984
  %v7134 = vpop.f32.mrb[0].mxu0
  %v7135 = vadd.f32 %v6995, %v7134
  %v7136 = vpop.f32.mrb[0].mxu0
  %v7137 = vadd.f32 %v6996, %v7136
  %7138 = vdwg.mxu0
  %v7139 = vxor.u32 %v7064, 2147483648
  %v7140 = vmul.f32 %v7139, 1.442695
  %v7141 = vpow.pop %v7140
  %v7142 = vadd.f32 %v7141, 1.0
  %v7143 = vrcp.pop %v7142
  %v7144 = vmul.f32 1.0, %v7143
  %v7145 = vxor.u32 %v7066, 2147483648
  %v7146 = vmul.f32 %v7145, 1.442695
  %v7147 = vpow.pop %v7146
  %v7148 = vadd.f32 %v7147, 1.0
  %v7149 = vrcp.pop %v7148
  %v7150 = vmul.f32 1.0, %v7149
  %v7151 = vmul.f32 %v7144, %v7137
  %v7152 = vadd.f32 %v7135, %v7151
  %v7153 = vtanh.pop %v7152
  %v7154 = vsub.f32 1.0, %v7150
  %v7155 = vmul.f32 %v7154, %v7153
  %v7156 = vmul.f32 %v7150, %v6277
  %v7157 = vadd.f32 %v7155, %v7156
  %v7158 = vld [vmem:[%s1094] sm:$0xff]
  %v7159 = vld [vmem:[%s1094 + $0x8] sm:$0xff]
  %v7160 = vld [vmem:[%s1094 + $0x10] sm:$0xff]
  %v7161 = vld [vmem:[%s1094 + $0x18] sm:$0xff]
  %v7162 = vld [vmem:[%s1094 + $0x20] sm:$0xff]
  %v7163 = vld [vmem:[%s1094 + $0x28] sm:$0xff]
  %v7164 = vld [vmem:[%s1094 + $0x30] sm:$0xff]
  %v7165 = vld [vmem:[%s1094 + $0x38] sm:$0xff]
  %v7166 = vld [vmem:[%s1094 + $0x40] sm:$0xff]
  %v7167 = vld [vmem:[%s1094 + $0x48] sm:$0xff]
  %v7168 = vld [vmem:[%s1094 + $0x50] sm:$0xff]
  %v7169 = vld [vmem:[%s1094 + $0x58] sm:$0xff]
  %v7170 = vld [vmem:[%s1094 + $0x60] sm:$0xff]
  %v7171 = vld [vmem:[%s1094 + $0x68] sm:$0xff]
  %v7172 = vld [vmem:[%s1094 + $0x70] sm:$0xff]
  %v7173 = vld [vmem:[%s1094 + $0x78] sm:$0xff]
  %v7174 = vld [vmem:[%s1094 + $0x80] sm:$0xff]
  %v7175 = vld [vmem:[%s1094 + $0x88] sm:$0xff]
  %v7176 = vld [vmem:[%s1094 + $0x90] sm:$0xff]
  %v7177 = vld [vmem:[%s1094 + $0x98] sm:$0xff]
  %v7178 = vld [vmem:[%s1094 + $0xa0] sm:$0xff]
  %v7179 = vld [vmem:[%s1094 + $0xa8] sm:$0xff]
  %v7180 = vld [vmem:[%s1094 + $0xb0] sm:$0xff]
  %v7181 = vld [vmem:[%s1094 + $0xb8] sm:$0xff]
  %v7182 = vld [vmem:[%s1094 + $0xc0] sm:$0xff]
  %v7183 = vld [vmem:[%s1094 + $0xc8] sm:$0xff]
  %v7184 = vld [vmem:[%s1094 + $0xd0] sm:$0xff]
  %v7185 = vld [vmem:[%s1094 + $0xd8] sm:$0xff]
  %v7186 = vld [vmem:[%s1094 + $0xe0] sm:$0xff]
  %v7187 = vld [vmem:[%s1094 + $0xe8] sm:$0xff]
  %v7188 = vld [vmem:[%s1094 + $0xf0] sm:$0xff]
  %v7189 = vld [vmem:[%s1094 + $0xf8] sm:$0xff]
  %v7190 = vld [vmem:[%s1094 + $0x100] sm:$0xff]
  %v7191 = vld [vmem:[%s1094 + $0x108] sm:$0xff]
  %v7192 = vld [vmem:[%s1094 + $0x110] sm:$0xff]
  %v7193 = vld [vmem:[%s1094 + $0x118] sm:$0xff]
  %v7194 = vld [vmem:[%s1094 + $0x120] sm:$0xff]
  %v7195 = vld [vmem:[%s1094 + $0x128] sm:$0xff]
  %v7196 = vld [vmem:[%s1094 + $0x130] sm:$0xff]
  %v7197 = vld [vmem:[%s1094 + $0x138] sm:$0xff]
  %v7198 = vld [vmem:[%s1094 + $0x140] sm:$0xff]
  %v7199 = vld [vmem:[%s1094 + $0x148] sm:$0xff]
  %v7200 = vld [vmem:[%s1094 + $0x150] sm:$0xff]
  %v7201 = vld [vmem:[%s1094 + $0x158] sm:$0xff]
  %v7202 = vld [vmem:[%s1094 + $0x160] sm:$0xff]
  %v7203 = vld [vmem:[%s1094 + $0x168] sm:$0xff]
  %v7204 = vld [vmem:[%s1094 + $0x170] sm:$0xff]
  %v7205 = vld [vmem:[%s1094 + $0x178] sm:$0xff]
  %v7206 = vld [vmem:[%s1094 + $0x180] sm:$0xff]
  %v7207 = vld [vmem:[%s1094 + $0x188] sm:$0xff]
  %v7208 = vld [vmem:[%s1094 + $0x190] sm:$0xff]
  %v7209 = vld [vmem:[%s1094 + $0x198] sm:$0xff]
  %v7210 = vld [vmem:[%s1094 + $0x1a0] sm:$0xff]
  %v7211 = vld [vmem:[%s1094 + $0x1a8] sm:$0xff]
  %v7212 = vld [vmem:[%s1094 + $0x1b0] sm:$0xff]
  %v7213 = vld [vmem:[%s1094 + $0x1b8] sm:$0xff]
  %v7214 = vld [vmem:[%s1094 + $0x1c0] sm:$0xff]
  %v7215 = vld [vmem:[%s1094 + $0x1c8] sm:$0xff]
  %v7216 = vld [vmem:[%s1094 + $0x1d0] sm:$0xff]
  %v7217 = vld [vmem:[%s1094 + $0x1d8] sm:$0xff]
  %v7218 = vld [vmem:[%s1094 + $0x1e0] sm:$0xff]
  %v7219 = vld [vmem:[%s1094 + $0x1e8] sm:$0xff]
  %v7220 = vld [vmem:[%s1094 + $0x1f0] sm:$0xff]
  %v7221 = vld [vmem:[%s1094 + $0x1f8] sm:$0xff]
  %v7222 = vld [vmem:[%s1094 + $0x200] sm:$0xff]
  %v7223 = vld [vmem:[%s1094 + $0x208] sm:$0xff]
  %v7224 = vld [vmem:[%s1094 + $0x210] sm:$0xff]
  %v7225 = vld [vmem:[%s1094 + $0x218] sm:$0xff]
  %v7226 = vld [vmem:[%s1094 + $0x220] sm:$0xff]
  %v7227 = vld [vmem:[%s1094 + $0x228] sm:$0xff]
  %v7228 = vld [vmem:[%s1094 + $0x230] sm:$0xff]
  %v7229 = vld [vmem:[%s1094 + $0x238] sm:$0xff]
  %v7230 = vld [vmem:[%s1094 + $0x240] sm:$0xff]
  %v7231 = vld [vmem:[%s1094 + $0x248] sm:$0xff]
  %v7232 = vld [vmem:[%s1094 + $0x250] sm:$0xff]
  %v7233 = vld [vmem:[%s1094 + $0x258] sm:$0xff]
  %v7234 = vld [vmem:[%s1094 + $0x260] sm:$0xff]
  %v7235 = vld [vmem:[%s1094 + $0x268] sm:$0xff]
  %v7236 = vld [vmem:[%s1094 + $0x270] sm:$0xff]
  %v7237 = vld [vmem:[%s1094 + $0x278] sm:$0xff]
  %v7238 = vld [vmem:[%s1094 + $0x280] sm:$0xff]
  %v7239 = vld [vmem:[%s1094 + $0x288] sm:$0xff]
  %v7240 = vld [vmem:[%s1094 + $0x290] sm:$0xff]
  %v7241 = vld [vmem:[%s1094 + $0x298] sm:$0xff]
  %v7242 = vld [vmem:[%s1094 + $0x2a0] sm:$0xff]
  %v7243 = vld [vmem:[%s1094 + $0x2a8] sm:$0xff]
  %v7244 = vld [vmem:[%s1094 + $0x2b0] sm:$0xff]
  %v7245 = vld [vmem:[%s1094 + $0x2b8] sm:$0xff]
  %v7246 = vld [vmem:[%s1094 + $0x2c0] sm:$0xff]
  %v7247 = vld [vmem:[%s1094 + $0x2c8] sm:$0xff]
  %v7248 = vld [vmem:[%s1094 + $0x2d0] sm:$0xff]
  %v7249 = vld [vmem:[%s1094 + $0x2d8] sm:$0xff]
  %v7250 = vld [vmem:[%s1094 + $0x2e0] sm:$0xff]
  %v7251 = vld [vmem:[%s1094 + $0x2e8] sm:$0xff]
  %v7252 = vld [vmem:[%s1094 + $0x2f0] sm:$0xff]
  %v7253 = vld [vmem:[%s1094 + $0x2f8] sm:$0xff]
  %v7254 = vld [vmem:[%s1094 + $0x300] sm:$0xff]
  %v7255 = vld [vmem:[%s1094 + $0x308] sm:$0xff]
  %v7256 = vld [vmem:[%s1094 + $0x310] sm:$0xff]
  %v7257 = vld [vmem:[%s1094 + $0x318] sm:$0xff]
  %v7258 = vld [vmem:[%s1094 + $0x320] sm:$0xff]
  %v7259 = vld [vmem:[%s1094 + $0x328] sm:$0xff]
  %v7260 = vld [vmem:[%s1094 + $0x330] sm:$0xff]
  %v7261 = vld [vmem:[%s1094 + $0x338] sm:$0xff]
  %v7262 = vld [vmem:[%s1094 + $0x340] sm:$0xff]
  %v7263 = vld [vmem:[%s1094 + $0x348] sm:$0xff]
  %v7264 = vld [vmem:[%s1094 + $0x350] sm:$0xff]
  %v7265 = vld [vmem:[%s1094 + $0x358] sm:$0xff]
  %v7266 = vld [vmem:[%s1094 + $0x360] sm:$0xff]
  %v7267 = vld [vmem:[%s1094 + $0x368] sm:$0xff]
  %v7268 = vld [vmem:[%s1094 + $0x370] sm:$0xff]
  %v7269 = vld [vmem:[%s1094 + $0x378] sm:$0xff]
  %v7270 = vld [vmem:[%s1094 + $0x380] sm:$0xff]
  %v7271 = vld [vmem:[%s1094 + $0x388] sm:$0xff]
  %v7272 = vld [vmem:[%s1094 + $0x390] sm:$0xff]
  %v7273 = vld [vmem:[%s1094 + $0x398] sm:$0xff]
  %v7274 = vld [vmem:[%s1094 + $0x3a0] sm:$0xff]
  %v7275 = vld [vmem:[%s1094 + $0x3a8] sm:$0xff]
  %v7276 = vld [vmem:[%s1094 + $0x3b0] sm:$0xff]
  %v7277 = vld [vmem:[%s1094 + $0x3b8] sm:$0xff]
  %v7278 = vld [vmem:[%s1094 + $0x3c0] sm:$0xff]
  %v7279 = vld [vmem:[%s1094 + $0x3c8] sm:$0xff]
  %v7280 = vld [vmem:[%s1094 + $0x3d0] sm:$0xff]
  %v7281 = vld [vmem:[%s1094 + $0x3d8] sm:$0xff]
  %v7282 = vld [vmem:[%s1094 + $0x3e0] sm:$0xff]
  %v7283 = vld [vmem:[%s1094 + $0x3e8] sm:$0xff]
  %v7284 = vld [vmem:[%s1094 + $0x3f0] sm:$0xff]
  %v7285 = vld [vmem:[%s1094 + $0x3f8] sm:$0xff]
  %v7286 = vld [vmem:[%s1223] sm:$0xff]
  %v7287 = vld [vmem:[%s1223 + $0x8] sm:$0xff]
  %v7288 = vld [vmem:[%s1223 + $0x10] sm:$0xff]
  %v7289 = vld [vmem:[%s1223 + $0x18] sm:$0xff]
  %7290 = vmatprep.subr.mxu0 %v7159
  %7291 = vmatpush1.msra.mxu0 %v7158
  %7292 = vmatprep.subr.mxu0 %v7163
  %7293 = vmatpush1.msra.mxu0 %v7162
  %7294 = vmatprep.subr.mxu0 %v7167
  %7295 = vmatpush1.msra.mxu0 %v7166
  %7296 = vmatprep.subr.mxu0 %v7171
  %7297 = vmatpush1.msra.mxu0 %v7170
  %7298 = vmatprep.subr.mxu0 %v7175
  %7299 = vmatpush1.msra.mxu0 %v7174
  %7300 = vmatprep.subr.mxu0 %v7179
  %7301 = vmatpush1.msra.mxu0 %v7178
  %7302 = vmatprep.subr.mxu0 %v7183
  %7303 = vmatpush1.msra.mxu0 %v7182
  %7304 = vmatprep.subr.mxu0 %v7187
  %7305 = vmatpush1.msra.mxu0 %v7186
  %7306 = vmatprep.subr.mxu0 %v7191
  %7307 = vmatpush1.msra.mxu0 %v7190
  %7308 = vmatprep.subr.mxu0 %v7195
  %7309 = vmatpush1.msra.mxu0 %v7194
  %7310 = vmatprep.subr.mxu0 %v7199
  %7311 = vmatpush1.msra.mxu0 %v7198
  %7312 = vmatprep.subr.mxu0 %v7203
  %7313 = vmatpush1.msra.mxu0 %v7202
  %7314 = vmatprep.subr.mxu0 %v7207
  %7315 = vmatpush1.msra.mxu0 %v7206
  %7316 = vmatprep.subr.mxu0 %v7211
  %7317 = vmatpush1.msra.mxu0 %v7210
  %7318 = vmatprep.subr.mxu0 %v7215
  %7319 = vmatpush1.msra.mxu0 %v7214
  %7320 = vmatprep.subr.mxu0 %v7219
  %7321 = vmatpush1.msra.mxu0 %v7218
  %7322 = vmatprep.subr.mxu0 %v7223
  %7323 = vmatpush1.msra.mxu0 %v7222
  %7324 = vmatprep.subr.mxu0 %v7227
  %7325 = vmatpush1.msra.mxu0 %v7226
  %7326 = vmatprep.subr.mxu0 %v7231
  %7327 = vmatpush1.msra.mxu0 %v7230
  %7328 = vmatprep.subr.mxu0 %v7235
  %7329 = vmatpush1.msra.mxu0 %v7234
  %7330 = vmatprep.subr.mxu0 %v7239
  %7331 = vmatpush1.msra.mxu0 %v7238
  %7332 = vmatprep.subr.mxu0 %v7243
  %7333 = vmatpush1.msra.mxu0 %v7242
  %7334 = vmatprep.subr.mxu0 %v7247
  %7335 = vmatpush1.msra.mxu0 %v7246
  %7336 = vmatprep.subr.mxu0 %v7251
  %7337 = vmatpush1.msra.mxu0 %v7250
  %7338 = vmatprep.subr.mxu0 %v7255
  %7339 = vmatpush1.msra.mxu0 %v7254
  %7340 = vmatprep.subr.mxu0 %v7259
  %7341 = vmatpush1.msra.mxu0 %v7258
  %7342 = vmatprep.subr.mxu0 %v7263
  %7343 = vmatpush1.msra.mxu0 %v7262
  %7344 = vmatprep.subr.mxu0 %v7267
  %7345 = vmatpush1.msra.mxu0 %v7266
  %7346 = vmatprep.subr.mxu0 %v7271
  %7347 = vmatpush1.msra.mxu0 %v7270
  %7348 = vmatprep.subr.mxu0 %v7275
  %7349 = vmatpush1.msra.mxu0 %v7274
  %7350 = vmatprep.subr.mxu0 %v7279
  %7351 = vmatpush1.msra.mxu0 %v7278
  %7352 = vmatprep.subr.mxu0 %v7283
  %7353 = vmatpush1.msra.mxu0 %v7282
  %7354 = vmatprep.mubr.f32.mxu0 %v6570
  %7355 = vmatmul.mubr.f32.gmra.mrb[0].mxu0 %v6277
  %v7356 = vpop.f32.mrb[0].mxu0
  %v7357 = vadd.f32 %v7286, %v7356
  %v7358 = vpop.f32.mrb[0].mxu0
  %v7359 = vadd.f32 %v7287, %v7358
  %7360 = vdwg.mxu0
  %7361 = vmatprep.subr.mxu0 %v7161
  %7362 = vmatpush1.msra.mxu0 %v7160
  %7363 = vmatprep.subr.mxu0 %v7165
  %7364 = vmatpush1.msra.mxu0 %v7164
  %7365 = vmatprep.subr.mxu0 %v7169
  %7366 = vmatpush1.msra.mxu0 %v7168
  %7367 = vmatprep.subr.mxu0 %v7173
  %7368 = vmatpush1.msra.mxu0 %v7172
  %7369 = vmatprep.subr.mxu0 %v7177
  %7370 = vmatpush1.msra.mxu0 %v7176
  %7371 = vmatprep.subr.mxu0 %v7181
  %7372 = vmatpush1.msra.mxu0 %v7180
  %7373 = vmatprep.subr.mxu0 %v7185
  %7374 = vmatpush1.msra.mxu0 %v7184
  %7375 = vmatprep.subr.mxu0 %v7189
  %7376 = vmatpush1.msra.mxu0 %v7188
  %7377 = vmatprep.subr.mxu0 %v7193
  %7378 = vmatpush1.msra.mxu0 %v7192
  %7379 = vmatprep.subr.mxu0 %v7197
  %7380 = vmatpush1.msra.mxu0 %v7196
  %7381 = vmatprep.subr.mxu0 %v7201
  %7382 = vmatpush1.msra.mxu0 %v7200
  %7383 = vmatprep.subr.mxu0 %v7205
  %7384 = vmatpush1.msra.mxu0 %v7204
  %7385 = vmatprep.subr.mxu0 %v7209
  %7386 = vmatpush1.msra.mxu0 %v7208
  %7387 = vmatprep.subr.mxu0 %v7213
  %7388 = vmatpush1.msra.mxu0 %v7212
  %7389 = vmatprep.subr.mxu0 %v7217
  %7390 = vmatpush1.msra.mxu0 %v7216
  %7391 = vmatprep.subr.mxu0 %v7221
  %7392 = vmatpush1.msra.mxu0 %v7220
  %7393 = vmatprep.subr.mxu0 %v7225
  %7394 = vmatpush1.msra.mxu0 %v7224
  %7395 = vmatprep.subr.mxu0 %v7229
  %7396 = vmatpush1.msra.mxu0 %v7228
  %7397 = vmatprep.subr.mxu0 %v7233
  %7398 = vmatpush1.msra.mxu0 %v7232
  %7399 = vmatprep.subr.mxu0 %v7237
  %7400 = vmatpush1.msra.mxu0 %v7236
  %7401 = vmatprep.subr.mxu0 %v7241
  %7402 = vmatpush1.msra.mxu0 %v7240
  %7403 = vmatprep.subr.mxu0 %v7245
  %7404 = vmatpush1.msra.mxu0 %v7244
  %7405 = vmatprep.subr.mxu0 %v7249
  %7406 = vmatpush1.msra.mxu0 %v7248
  %7407 = vmatprep.subr.mxu0 %v7253
  %7408 = vmatpush1.msra.mxu0 %v7252
  %7409 = vmatprep.subr.mxu0 %v7257
  %7410 = vmatpush1.msra.mxu0 %v7256
  %7411 = vmatprep.subr.mxu0 %v7261
  %7412 = vmatpush1.msra.mxu0 %v7260
  %7413 = vmatprep.subr.mxu0 %v7265
  %7414 = vmatpush1.msra.mxu0 %v7264
  %7415 = vmatprep.subr.mxu0 %v7269
  %7416 = vmatpush1.msra.mxu0 %v7268
  %7417 = vmatprep.subr.mxu0 %v7273
  %7418 = vmatpush1.msra.mxu0 %v7272
  %7419 = vmatprep.subr.mxu0 %v7277
  %7420 = vmatpush1.msra.mxu0 %v7276
  %7421 = vmatprep.subr.mxu0 %v7281
  %7422 = vmatpush1.msra.mxu0 %v7280
  %7423 = vmatprep.subr.mxu0 %v7285
  %7424 = vmatpush1.msra.mxu0 %v7284
  %7425 = vmatprep.mubr.f32.mxu0 %v6570
  %7426 = vmatmul.mubr.f32.gmra.mrb[0].mxu0 %v6277
  %v7427 = vpop.f32.mrb[0].mxu0
  %v7428 = vadd.f32 %v7288, %v7427
  %v7429 = vpop.f32.mrb[0].mxu0
  %v7430 = vadd.f32 %v7289, %v7429
  %7431 = vdwg.mxu0
  %v7432 = vxor.u32 %v7357, 2147483648
  %v7433 = vmul.f32 %v7432, 1.442695
  %v7434 = vpow.pop %v7433
  %v7435 = vadd.f32 %v7434, 1.0
  %v7436 = vrcp.pop %v7435
  %v7437 = vmul.f32 1.0, %v7436
  %v7438 = vxor.u32 %v7359, 2147483648
  %v7439 = vmul.f32 %v7438, 1.442695
  %v7440 = vpow.pop %v7439
  %v7441 = vadd.f32 %v7440, 1.0
  %v7442 = vrcp.pop %v7441
  %v7443 = vmul.f32 1.0, %v7442
  %v7444 = vmul.f32 %v7437, %v7430
  %v7445 = vadd.f32 %v7428, %v7444
  %v7446 = vtanh.pop %v7445
  %v7447 = vsub.f32 1.0, %v7443
  %v7448 = vmul.f32 %v7447, %v7446
  %v7449 = vmul.f32 %v7443, %v6570
  %v7450 = vadd.f32 %v7448, %v7449
  %v7451 = vld [vmem:[%s1873] sm:$0xff]
  %v7452 = vld [vmem:[%s1873 + $0x8] sm:$0xff]
  %v7453 = vld [vmem:[%s1873 + $0x10] sm:$0xff]
  %v7454 = vld [vmem:[%s1873 + $0x18] sm:$0xff]
  %v7455 = vld [vmem:[%s1873 + $0x20] sm:$0xff]
  %v7456 = vld [vmem:[%s1873 + $0x28] sm:$0xff]
  %v7457 = vld [vmem:[%s1873 + $0x30] sm:$0xff]
  %v7458 = vld [vmem:[%s1873 + $0x38] sm:$0xff]
  %v7459 = vld [vmem:[%s1873 + $0x40] sm:$0xff]
  %v7460 = vld [vmem:[%s1873 + $0x48] sm:$0xff]
  %v7461 = vld [vmem:[%s1873 + $0x50] sm:$0xff]
  %v7462 = vld [vmem:[%s1873 + $0x58] sm:$0xff]
  %v7463 = vld [vmem:[%s1873 + $0x60] sm:$0xff]
  %v7464 = vld [vmem:[%s1873 + $0x68] sm:$0xff]
  %v7465 = vld [vmem:[%s1873 + $0x70] sm:$0xff]
  %v7466 = vld [vmem:[%s1873 + $0x78] sm:$0xff]
  %v7467 = vld [vmem:[%s1873 + $0x80] sm:$0xff]
  %v7468 = vld [vmem:[%s1873 + $0x88] sm:$0xff]
  %v7469 = vld [vmem:[%s1873 + $0x90] sm:$0xff]
  %v7470 = vld [vmem:[%s1873 + $0x98] sm:$0xff]
  %v7471 = vld [vmem:[%s1873 + $0xa0] sm:$0xff]
  %v7472 = vld [vmem:[%s1873 + $0xa8] sm:$0xff]
  %v7473 = vld [vmem:[%s1873 + $0xb0] sm:$0xff]
  %v7474 = vld [vmem:[%s1873 + $0xb8] sm:$0xff]
  %v7475 = vld [vmem:[%s1873 + $0xc0] sm:$0xff]
  %v7476 = vld [vmem:[%s1873 + $0xc8] sm:$0xff]
  %v7477 = vld [vmem:[%s1873 + $0xd0] sm:$0xff]
  %v7478 = vld [vmem:[%s1873 + $0xd8] sm:$0xff]
  %v7479 = vld [vmem:[%s1873 + $0xe0] sm:$0xff]
  %v7480 = vld [vmem:[%s1873 + $0xe8] sm:$0xff]
  %v7481 = vld [vmem:[%s1873 + $0xf0] sm:$0xff]
  %v7482 = vld [vmem:[%s1873 + $0xf8] sm:$0xff]
  %v7483 = vld [vmem:[%s1873 + $0x100] sm:$0xff]
  %v7484 = vld [vmem:[%s1873 + $0x108] sm:$0xff]
  %v7485 = vld [vmem:[%s1873 + $0x110] sm:$0xff]
  %v7486 = vld [vmem:[%s1873 + $0x118] sm:$0xff]
  %v7487 = vld [vmem:[%s1873 + $0x120] sm:$0xff]
  %v7488 = vld [vmem:[%s1873 + $0x128] sm:$0xff]
  %v7489 = vld [vmem:[%s1873 + $0x130] sm:$0xff]
  %v7490 = vld [vmem:[%s1873 + $0x138] sm:$0xff]
  %v7491 = vld [vmem:[%s1873 + $0x140] sm:$0xff]
  %v7492 = vld [vmem:[%s1873 + $0x148] sm:$0xff]
  %v7493 = vld [vmem:[%s1873 + $0x150] sm:$0xff]
  %v7494 = vld [vmem:[%s1873 + $0x158] sm:$0xff]
  %v7495 = vld [vmem:[%s1873 + $0x160] sm:$0xff]
  %v7496 = vld [vmem:[%s1873 + $0x168] sm:$0xff]
  %v7497 = vld [vmem:[%s1873 + $0x170] sm:$0xff]
  %v7498 = vld [vmem:[%s1873 + $0x178] sm:$0xff]
  %v7499 = vld [vmem:[%s1873 + $0x180] sm:$0xff]
  %v7500 = vld [vmem:[%s1873 + $0x188] sm:$0xff]
  %v7501 = vld [vmem:[%s1873 + $0x190] sm:$0xff]
  %v7502 = vld [vmem:[%s1873 + $0x198] sm:$0xff]
  %v7503 = vld [vmem:[%s1873 + $0x1a0] sm:$0xff]
  %v7504 = vld [vmem:[%s1873 + $0x1a8] sm:$0xff]
  %v7505 = vld [vmem:[%s1873 + $0x1b0] sm:$0xff]
  %v7506 = vld [vmem:[%s1873 + $0x1b8] sm:$0xff]
  %v7507 = vld [vmem:[%s1873 + $0x1c0] sm:$0xff]
  %v7508 = vld [vmem:[%s1873 + $0x1c8] sm:$0xff]
  %v7509 = vld [vmem:[%s1873 + $0x1d0] sm:$0xff]
  %v7510 = vld [vmem:[%s1873 + $0x1d8] sm:$0xff]
  %v7511 = vld [vmem:[%s1873 + $0x1e0] sm:$0xff]
  %v7512 = vld [vmem:[%s1873 + $0x1e8] sm:$0xff]
  %v7513 = vld [vmem:[%s1873 + $0x1f0] sm:$0xff]
  %v7514 = vld [vmem:[%s1873 + $0x1f8] sm:$0xff]
  %v7515 = vld [vmem:[%s1873 + $0x200] sm:$0xff]
  %v7516 = vld [vmem:[%s1873 + $0x208] sm:$0xff]
  %v7517 = vld [vmem:[%s1873 + $0x210] sm:$0xff]
  %v7518 = vld [vmem:[%s1873 + $0x218] sm:$0xff]
  %v7519 = vld [vmem:[%s1873 + $0x220] sm:$0xff]
  %v7520 = vld [vmem:[%s1873 + $0x228] sm:$0xff]
  %v7521 = vld [vmem:[%s1873 + $0x230] sm:$0xff]
  %v7522 = vld [vmem:[%s1873 + $0x238] sm:$0xff]
  %v7523 = vld [vmem:[%s1873 + $0x240] sm:$0xff]
  %v7524 = vld [vmem:[%s1873 + $0x248] sm:$0xff]
  %v7525 = vld [vmem:[%s1873 + $0x250] sm:$0xff]
  %v7526 = vld [vmem:[%s1873 + $0x258] sm:$0xff]
  %v7527 = vld [vmem:[%s1873 + $0x260] sm:$0xff]
  %v7528 = vld [vmem:[%s1873 + $0x268] sm:$0xff]
  %v7529 = vld [vmem:[%s1873 + $0x270] sm:$0xff]
  %v7530 = vld [vmem:[%s1873 + $0x278] sm:$0xff]
  %v7531 = vld [vmem:[%s1873 + $0x280] sm:$0xff]
  %v7532 = vld [vmem:[%s1873 + $0x288] sm:$0xff]
  %v7533 = vld [vmem:[%s1873 + $0x290] sm:$0xff]
  %v7534 = vld [vmem:[%s1873 + $0x298] sm:$0xff]
  %v7535 = vld [vmem:[%s1873 + $0x2a0] sm:$0xff]
  %v7536 = vld [vmem:[%s1873 + $0x2a8] sm:$0xff]
  %v7537 = vld [vmem:[%s1873 + $0x2b0] sm:$0xff]
  %v7538 = vld [vmem:[%s1873 + $0x2b8] sm:$0xff]
  %v7539 = vld [vmem:[%s1873 + $0x2c0] sm:$0xff]
  %v7540 = vld [vmem:[%s1873 + $0x2c8] sm:$0xff]
  %v7541 = vld [vmem:[%s1873 + $0x2d0] sm:$0xff]
  %v7542 = vld [vmem:[%s1873 + $0x2d8] sm:$0xff]
  %v7543 = vld [vmem:[%s1873 + $0x2e0] sm:$0xff]
  %v7544 = vld [vmem:[%s1873 + $0x2e8] sm:$0xff]
  %v7545 = vld [vmem:[%s1873 + $0x2f0] sm:$0xff]
  %v7546 = vld [vmem:[%s1873 + $0x2f8] sm:$0xff]
  %v7547 = vld [vmem:[%s1873 + $0x300] sm:$0xff]
  %v7548 = vld [vmem:[%s1873 + $0x308] sm:$0xff]
  %v7549 = vld [vmem:[%s1873 + $0x310] sm:$0xff]
  %v7550 = vld [vmem:[%s1873 + $0x318] sm:$0xff]
  %v7551 = vld [vmem:[%s1873 + $0x320] sm:$0xff]
  %v7552 = vld [vmem:[%s1873 + $0x328] sm:$0xff]
  %v7553 = vld [vmem:[%s1873 + $0x330] sm:$0xff]
  %v7554 = vld [vmem:[%s1873 + $0x338] sm:$0xff]
  %v7555 = vld [vmem:[%s1873 + $0x340] sm:$0xff]
  %v7556 = vld [vmem:[%s1873 + $0x348] sm:$0xff]
  %v7557 = vld [vmem:[%s1873 + $0x350] sm:$0xff]
  %v7558 = vld [vmem:[%s1873 + $0x358] sm:$0xff]
  %v7559 = vld [vmem:[%s1873 + $0x360] sm:$0xff]
  %v7560 = vld [vmem:[%s1873 + $0x368] sm:$0xff]
  %v7561 = vld [vmem:[%s1873 + $0x370] sm:$0xff]
  %v7562 = vld [vmem:[%s1873 + $0x378] sm:$0xff]
  %v7563 = vld [vmem:[%s1873 + $0x380] sm:$0xff]
  %v7564 = vld [vmem:[%s1873 + $0x388] sm:$0xff]
  %v7565 = vld [vmem:[%s1873 + $0x390] sm:$0xff]
  %v7566 = vld [vmem:[%s1873 + $0x398] sm:$0xff]
  %v7567 = vld [vmem:[%s1873 + $0x3a0] sm:$0xff]
  %v7568 = vld [vmem:[%s1873 + $0x3a8] sm:$0xff]
  %v7569 = vld [vmem:[%s1873 + $0x3b0] sm:$0xff]
  %v7570 = vld [vmem:[%s1873 + $0x3b8] sm:$0xff]
  %v7571 = vld [vmem:[%s1873 + $0x3c0] sm:$0xff]
  %v7572 = vld [vmem:[%s1873 + $0x3c8] sm:$0xff]
  %v7573 = vld [vmem:[%s1873 + $0x3d0] sm:$0xff]
  %v7574 = vld [vmem:[%s1873 + $0x3d8] sm:$0xff]
  %v7575 = vld [vmem:[%s1873 + $0x3e0] sm:$0xff]
  %v7576 = vld [vmem:[%s1873 + $0x3e8] sm:$0xff]
  %v7577 = vld [vmem:[%s1873 + $0x3f0] sm:$0xff]
  %v7578 = vld [vmem:[%s1873 + $0x3f8] sm:$0xff]
  %v7579 = vld [vmem:[%s2002] sm:$0xff]
  %v7580 = vld [vmem:[%s2002 + $0x8] sm:$0xff]
  %v7581 = vld [vmem:[%s2002 + $0x10] sm:$0xff]
  %v7582 = vld [vmem:[%s2002 + $0x18] sm:$0xff]
  %7583 = vmatprep.subr.mxu0 %v7452
  %7584 = vmatpush1.msra.mxu0 %v7451
  %7585 = vmatprep.subr.mxu0 %v7456
  %7586 = vmatpush1.msra.mxu0 %v7455
  %7587 = vmatprep.subr.mxu0 %v7460
  %7588 = vmatpush1.msra.mxu0 %v7459
  %7589 = vmatprep.subr.mxu0 %v7464
  %7590 = vmatpush1.msra.mxu0 %v7463
  %7591 = vmatprep.subr.mxu0 %v7468
  %7592 = vmatpush1.msra.mxu0 %v7467
  %7593 = vmatprep.subr.mxu0 %v7472
  %7594 = vmatpush1.msra.mxu0 %v7471
  %7595 = vmatprep.subr.mxu0 %v7476
  %7596 = vmatpush1.msra.mxu0 %v7475
  %7597 = vmatprep.subr.mxu0 %v7480
  %7598 = vmatpush1.msra.mxu0 %v7479
  %7599 = vmatprep.subr.mxu0 %v7484
  %7600 = vmatpush1.msra.mxu0 %v7483
  %7601 = vmatprep.subr.mxu0 %v7488
  %7602 = vmatpush1.msra.mxu0 %v7487
  %7603 = vmatprep.subr.mxu0 %v7492
  %7604 = vmatpush1.msra.mxu0 %v7491
  %7605 = vmatprep.subr.mxu0 %v7496
  %7606 = vmatpush1.msra.mxu0 %v7495
  %7607 = vmatprep.subr.mxu0 %v7500
  %7608 = vmatpush1.msra.mxu0 %v7499
  %7609 = vmatprep.subr.mxu0 %v7504
  %7610 = vmatpush1.msra.mxu0 %v7503
  %7611 = vmatprep.subr.mxu0 %v7508
  %7612 = vmatpush1.msra.mxu0 %v7507
  %7613 = vmatprep.subr.mxu0 %v7512
  %7614 = vmatpush1.msra.mxu0 %v7511
  %7615 = vmatprep.subr.mxu0 %v7516
  %7616 = vmatpush1.msra.mxu0 %v7515
  %7617 = vmatprep.subr.mxu0 %v7520
  %7618 = vmatpush1.msra.mxu0 %v7519
  %7619 = vmatprep.subr.mxu0 %v7524
  %7620 = vmatpush1.msra.mxu0 %v7523
  %7621 = vmatprep.subr.mxu0 %v7528
  %7622 = vmatpush1.msra.mxu0 %v7527
  %7623 = vmatprep.subr.mxu0 %v7532
  %7624 = vmatpush1.msra.mxu0 %v7531
  %7625 = vmatprep.subr.mxu0 %v7536
  %7626 = vmatpush1.msra.mxu0 %v7535
  %7627 = vmatprep.subr.mxu0 %v7540
  %7628 = vmatpush1.msra.mxu0 %v7539
  %7629 = vmatprep.subr.mxu0 %v7544
  %7630 = vmatpush1.msra.mxu0 %v7543
  %7631 = vmatprep.subr.mxu0 %v7548
  %7632 = vmatpush1.msra.mxu0 %v7547
  %7633 = vmatprep.subr.mxu0 %v7552
  %7634 = vmatpush1.msra.mxu0 %v7551
  %7635 = vmatprep.subr.mxu0 %v7556
  %7636 = vmatpush1.msra.mxu0 %v7555
  %7637 = vmatprep.subr.mxu0 %v7560
  %7638 = vmatpush1.msra.mxu0 %v7559
  %7639 = vmatprep.subr.mxu0 %v7564
  %7640 = vmatpush1.msra.mxu0 %v7563
  %7641 = vmatprep.subr.mxu0 %v7568
  %7642 = vmatpush1.msra.mxu0 %v7567
  %7643 = vmatprep.subr.mxu0 %v7572
  %7644 = vmatpush1.msra.mxu0 %v7571
  %7645 = vmatprep.subr.mxu0 %v7576
  %7646 = vmatpush1.msra.mxu0 %v7575
  %7647 = vmatprep.mubr.f32.mxu0 %v6863
  %7648 = vmatmul.mubr.f32.gmra.mrb[0].mxu0 %v6570
  %v7649 = vpop.f32.mrb[0].mxu0
  %v7650 = vadd.f32 %v7579, %v7649
  %v7651 = vpop.f32.mrb[0].mxu0
  %v7652 = vadd.f32 %v7580, %v7651
  %7653 = vdwg.mxu0
  %7654 = vmatprep.subr.mxu0 %v7454
  %7655 = vmatpush1.msra.mxu0 %v7453
  %7656 = vmatprep.subr.mxu0 %v7458
  %7657 = vmatpush1.msra.mxu0 %v7457
  %7658 = vmatprep.subr.mxu0 %v7462
  %7659 = vmatpush1.msra.mxu0 %v7461
  %7660 = vmatprep.subr.mxu0 %v7466
  %7661 = vmatpush1.msra.mxu0 %v7465
  %7662 = vmatprep.subr.mxu0 %v7470
  %7663 = vmatpush1.msra.mxu0 %v7469
  %7664 = vmatprep.subr.mxu0 %v7474
  %7665 = vmatpush1.msra.mxu0 %v7473
  %7666 = vmatprep.subr.mxu0 %v7478
  %7667 = vmatpush1.msra.mxu0 %v7477
  %7668 = vmatprep.subr.mxu0 %v7482
  %7669 = vmatpush1.msra.mxu0 %v7481
  %7670 = vmatprep.subr.mxu0 %v7486
  %7671 = vmatpush1.msra.mxu0 %v7485
  %7672 = vmatprep.subr.mxu0 %v7490
  %7673 = vmatpush1.msra.mxu0 %v7489
  %7674 = vmatprep.subr.mxu0 %v7494
  %7675 = vmatpush1.msra.mxu0 %v7493
  %7676 = vmatprep.subr.mxu0 %v7498
  %7677 = vmatpush1.msra.mxu0 %v7497
  %7678 = vmatprep.subr.mxu0 %v7502
  %7679 = vmatpush1.msra.mxu0 %v7501
  %7680 = vmatprep.subr.mxu0 %v7506
  %7681 = vmatpush1.msra.mxu0 %v7505
  %7682 = vmatprep.subr.mxu0 %v7510
  %7683 = vmatpush1.msra.mxu0 %v7509
  %7684 = vmatprep.subr.mxu0 %v7514
  %7685 = vmatpush1.msra.mxu0 %v7513
  %7686 = vmatprep.subr.mxu0 %v7518
  %7687 = vmatpush1.msra.mxu0 %v7517
  %7688 = vmatprep.subr.mxu0 %v7522
  %7689 = vmatpush1.msra.mxu0 %v7521
  %7690 = vmatprep.subr.mxu0 %v7526
  %7691 = vmatpush1.msra.mxu0 %v7525
  %7692 = vmatprep.subr.mxu0 %v7530
  %7693 = vmatpush1.msra.mxu0 %v7529
  %7694 = vmatprep.subr.mxu0 %v7534
  %7695 = vmatpush1.msra.mxu0 %v7533
  %7696 = vmatprep.subr.mxu0 %v7538
  %7697 = vmatpush1.msra.mxu0 %v7537
  %7698 = vmatprep.subr.mxu0 %v7542
  %7699 = vmatpush1.msra.mxu0 %v7541
  %7700 = vmatprep.subr.mxu0 %v7546
  %7701 = vmatpush1.msra.mxu0 %v7545
  %7702 = vmatprep.subr.mxu0 %v7550
  %7703 = vmatpush1.msra.mxu0 %v7549
  %7704 = vmatprep.subr.mxu0 %v7554
  %7705 = vmatpush1.msra.mxu0 %v7553
  %7706 = vmatprep.subr.mxu0 %v7558
  %7707 = vmatpush1.msra.mxu0 %v7557
  %7708 = vmatprep.subr.mxu0 %v7562
  %7709 = vmatpush1.msra.mxu0 %v7561
  %7710 = vmatprep.subr.mxu0 %v7566
  %7711 = vmatpush1.msra.mxu0 %v7565
  %7712 = vmatprep.subr.mxu0 %v7570
  %7713 = vmatpush1.msra.mxu0 %v7569
  %7714 = vmatprep.subr.mxu0 %v7574
  %7715 = vmatpush1.msra.mxu0 %v7573
  %7716 = vmatprep.subr.mxu0 %v7578
  %7717 = vmatpush1.msra.mxu0 %v7577
  %7718 = vmatprep.mubr.f32.mxu0 %v6863
  %7719 = vmatmul.mubr.f32.gmra.mrb[0].mxu0 %v6570
  %v7720 = vpop.f32.mrb[0].mxu0
  %v7721 = vadd.f32 %v7581, %v7720
  %v7722 = vpop.f32.mrb[0].mxu0
  %v7723 = vadd.f32 %v7582, %v7722
  %7724 = vdwg.mxu0
  %v7725 = vxor.u32 %v7650, 2147483648
  %v7726 = vmul.f32 %v7725, 1.442695
  %v7727 = vpow.pop %v7726
  %v7728 = vadd.f32 %v7727, 1.0
  %v7729 = vrcp.pop %v7728
  %v7730 = vmul.f32 1.0, %v7729
  %v7731 = vxor.u32 %v7652, 2147483648
  %v7732 = vmul.f32 %v7731, 1.442695
  %v7733 = vpow.pop %v7732
  %v7734 = vadd.f32 %v7733, 1.0
  %v7735 = vrcp.pop %v7734
  %v7736 = vmul.f32 1.0, %v7735
  %v7737 = vmul.f32 %v7730, %v7723
  %v7738 = vadd.f32 %v7721, %v7737
  %v7739 = vtanh.pop %v7738
  %v7740 = vsub.f32 1.0, %v7736
  %v7741 = vmul.f32 %v7740, %v7739
  %v7742 = vmul.f32 %v7736, %v6863
  %v7743 = vadd.f32 %v7741, %v7742
  %7744 = vst [vmem:[#allocation2 + $0x28] sm:$0xff] %v7743
  %v7745 = vld [vmem:[%s1094] sm:$0xff]
  %v7746 = vld [vmem:[%s1094 + $0x8] sm:$0xff]
  %v7747 = vld [vmem:[%s1094 + $0x10] sm:$0xff]
  %v7748 = vld [vmem:[%s1094 + $0x18] sm:$0xff]
  %v7749 = vld [vmem:[%s1094 + $0x20] sm:$0xff]
  %v7750 = vld [vmem:[%s1094 + $0x28] sm:$0xff]
  %v7751 = vld [vmem:[%s1094 + $0x30] sm:$0xff]
  %v7752 = vld [vmem:[%s1094 + $0x38] sm:$0xff]
  %v7753 = vld [vmem:[%s1094 + $0x40] sm:$0xff]
  %v7754 = vld [vmem:[%s1094 + $0x48] sm:$0xff]
  %v7755 = vld [vmem:[%s1094 + $0x50] sm:$0xff]
  %v7756 = vld [vmem:[%s1094 + $0x58] sm:$0xff]
  %v7757 = vld [vmem:[%s1094 + $0x60] sm:$0xff]
  %v7758 = vld [vmem:[%s1094 + $0x68] sm:$0xff]
  %v7759 = vld [vmem:[%s1094 + $0x70] sm:$0xff]
  %v7760 = vld [vmem:[%s1094 + $0x78] sm:$0xff]
  %v7761 = vld [vmem:[%s1094 + $0x80] sm:$0xff]
  %v7762 = vld [vmem:[%s1094 + $0x88] sm:$0xff]
  %v7763 = vld [vmem:[%s1094 + $0x90] sm:$0xff]
  %v7764 = vld [vmem:[%s1094 + $0x98] sm:$0xff]
  %v7765 = vld [vmem:[%s1094 + $0xa0] sm:$0xff]
  %v7766 = vld [vmem:[%s1094 + $0xa8] sm:$0xff]
  %v7767 = vld [vmem:[%s1094 + $0xb0] sm:$0xff]
  %v7768 = vld [vmem:[%s1094 + $0xb8] sm:$0xff]
  %v7769 = vld [vmem:[%s1094 + $0xc0] sm:$0xff]
  %v7770 = vld [vmem:[%s1094 + $0xc8] sm:$0xff]
  %v7771 = vld [vmem:[%s1094 + $0xd0] sm:$0xff]
  %v7772 = vld [vmem:[%s1094 + $0xd8] sm:$0xff]
  %v7773 = vld [vmem:[%s1094 + $0xe0] sm:$0xff]
  %v7774 = vld [vmem:[%s1094 + $0xe8] sm:$0xff]
  %v7775 = vld [vmem:[%s1094 + $0xf0] sm:$0xff]
  %v7776 = vld [vmem:[%s1094 + $0xf8] sm:$0xff]
  %v7777 = vld [vmem:[%s1094 + $0x100] sm:$0xff]
  %v7778 = vld [vmem:[%s1094 + $0x108] sm:$0xff]
  %v7779 = vld [vmem:[%s1094 + $0x110] sm:$0xff]
  %v7780 = vld [vmem:[%s1094 + $0x118] sm:$0xff]
  %v7781 = vld [vmem:[%s1094 + $0x120] sm:$0xff]
  %v7782 = vld [vmem:[%s1094 + $0x128] sm:$0xff]
  %v7783 = vld [vmem:[%s1094 + $0x130] sm:$0xff]
  %v7784 = vld [vmem:[%s1094 + $0x138] sm:$0xff]
  %v7785 = vld [vmem:[%s1094 + $0x140] sm:$0xff]
  %v7786 = vld [vmem:[%s1094 + $0x148] sm:$0xff]
  %v7787 = vld [vmem:[%s1094 + $0x150] sm:$0xff]
  %v7788 = vld [vmem:[%s1094 + $0x158] sm:$0xff]
  %v7789 = vld [vmem:[%s1094 + $0x160] sm:$0xff]
  %v7790 = vld [vmem:[%s1094 + $0x168] sm:$0xff]
  %v7791 = vld [vmem:[%s1094 + $0x170] sm:$0xff]
  %v7792 = vld [vmem:[%s1094 + $0x178] sm:$0xff]
  %v7793 = vld [vmem:[%s1094 + $0x180] sm:$0xff]
  %v7794 = vld [vmem:[%s1094 + $0x188] sm:$0xff]
  %v7795 = vld [vmem:[%s1094 + $0x190] sm:$0xff]
  %v7796 = vld [vmem:[%s1094 + $0x198] sm:$0xff]
  %v7797 = vld [vmem:[%s1094 + $0x1a0] sm:$0xff]
  %v7798 = vld [vmem:[%s1094 + $0x1a8] sm:$0xff]
  %v7799 = vld [vmem:[%s1094 + $0x1b0] sm:$0xff]
  %v7800 = vld [vmem:[%s1094 + $0x1b8] sm:$0xff]
  %v7801 = vld [vmem:[%s1094 + $0x1c0] sm:$0xff]
  %v7802 = vld [vmem:[%s1094 + $0x1c8] sm:$0xff]
  %v7803 = vld [vmem:[%s1094 + $0x1d0] sm:$0xff]
  %v7804 = vld [vmem:[%s1094 + $0x1d8] sm:$0xff]
  %v7805 = vld [vmem:[%s1094 + $0x1e0] sm:$0xff]
  %v7806 = vld [vmem:[%s1094 + $0x1e8] sm:$0xff]
  %v7807 = vld [vmem:[%s1094 + $0x1f0] sm:$0xff]
  %v7808 = vld [vmem:[%s1094 + $0x1f8] sm:$0xff]
  %v7809 = vld [vmem:[%s1094 + $0x200] sm:$0xff]
  %v7810 = vld [vmem:[%s1094 + $0x208] sm:$0xff]
  %v7811 = vld [vmem:[%s1094 + $0x210] sm:$0xff]
  %v7812 = vld [vmem:[%s1094 + $0x218] sm:$0xff]
  %v7813 = vld [vmem:[%s1094 + $0x220] sm:$0xff]
  %v7814 = vld [vmem:[%s1094 + $0x228] sm:$0xff]
  %v7815 = vld [vmem:[%s1094 + $0x230] sm:$0xff]
  %v7816 = vld [vmem:[%s1094 + $0x238] sm:$0xff]
  %v7817 = vld [vmem:[%s1094 + $0x240] sm:$0xff]
  %v7818 = vld [vmem:[%s1094 + $0x248] sm:$0xff]
  %v7819 = vld [vmem:[%s1094 + $0x250] sm:$0xff]
  %v7820 = vld [vmem:[%s1094 + $0x258] sm:$0xff]
  %v7821 = vld [vmem:[%s1094 + $0x260] sm:$0xff]
  %v7822 = vld [vmem:[%s1094 + $0x268] sm:$0xff]
  %v7823 = vld [vmem:[%s1094 + $0x270] sm:$0xff]
  %v7824 = vld [vmem:[%s1094 + $0x278] sm:$0xff]
  %v7825 = vld [vmem:[%s1094 + $0x280] sm:$0xff]
  %v7826 = vld [vmem:[%s1094 + $0x288] sm:$0xff]
  %v7827 = vld [vmem:[%s1094 + $0x290] sm:$0xff]
  %v7828 = vld [vmem:[%s1094 + $0x298] sm:$0xff]
  %v7829 = vld [vmem:[%s1094 + $0x2a0] sm:$0xff]
  %v7830 = vld [vmem:[%s1094 + $0x2a8] sm:$0xff]
  %v7831 = vld [vmem:[%s1094 + $0x2b0] sm:$0xff]
  %v7832 = vld [vmem:[%s1094 + $0x2b8] sm:$0xff]
  %v7833 = vld [vmem:[%s1094 + $0x2c0] sm:$0xff]
  %v7834 = vld [vmem:[%s1094 + $0x2c8] sm:$0xff]
  %v7835 = vld [vmem:[%s1094 + $0x2d0] sm:$0xff]
  %v7836 = vld [vmem:[%s1094 + $0x2d8] sm:$0xff]
  %v7837 = vld [vmem:[%s1094 + $0x2e0] sm:$0xff]
  %v7838 = vld [vmem:[%s1094 + $0x2e8] sm:$0xff]
  %v7839 = vld [vmem:[%s1094 + $0x2f0] sm:$0xff]
  %v7840 = vld [vmem:[%s1094 + $0x2f8] sm:$0xff]
  %v7841 = vld [vmem:[%s1094 + $0x300] sm:$0xff]
  %v7842 = vld [vmem:[%s1094 + $0x308] sm:$0xff]
  %v7843 = vld [vmem:[%s1094 + $0x310] sm:$0xff]
  %v7844 = vld [vmem:[%s1094 + $0x318] sm:$0xff]
  %v7845 = vld [vmem:[%s1094 + $0x320] sm:$0xff]
  %v7846 = vld [vmem:[%s1094 + $0x328] sm:$0xff]
  %v7847 = vld [vmem:[%s1094 + $0x330] sm:$0xff]
  %v7848 = vld [vmem:[%s1094 + $0x338] sm:$0xff]
  %v7849 = vld [vmem:[%s1094 + $0x340] sm:$0xff]
  %v7850 = vld [vmem:[%s1094 + $0x348] sm:$0xff]
  %v7851 = vld [vmem:[%s1094 + $0x350] sm:$0xff]
  %v7852 = vld [vmem:[%s1094 + $0x358] sm:$0xff]
  %v7853 = vld [vmem:[%s1094 + $0x360] sm:$0xff]
  %v7854 = vld [vmem:[%s1094 + $0x368] sm:$0xff]
  %v7855 = vld [vmem:[%s1094 + $0x370] sm:$0xff]
  %v7856 = vld [vmem:[%s1094 + $0x378] sm:$0xff]
  %v7857 = vld [vmem:[%s1094 + $0x380] sm:$0xff]
  %v7858 = vld [vmem:[%s1094 + $0x388] sm:$0xff]
  %v7859 = vld [vmem:[%s1094 + $0x390] sm:$0xff]
  %v7860 = vld [vmem:[%s1094 + $0x398] sm:$0xff]
  %v7861 = vld [vmem:[%s1094 + $0x3a0] sm:$0xff]
  %v7862 = vld [vmem:[%s1094 + $0x3a8] sm:$0xff]
  %v7863 = vld [vmem:[%s1094 + $0x3b0] sm:$0xff]
  %v7864 = vld [vmem:[%s1094 + $0x3b8] sm:$0xff]
  %v7865 = vld [vmem:[%s1094 + $0x3c0] sm:$0xff]
  %v7866 = vld [vmem:[%s1094 + $0x3c8] sm:$0xff]
  %v7867 = vld [vmem:[%s1094 + $0x3d0] sm:$0xff]
  %v7868 = vld [vmem:[%s1094 + $0x3d8] sm:$0xff]
  %v7869 = vld [vmem:[%s1094 + $0x3e0] sm:$0xff]
  %v7870 = vld [vmem:[%s1094 + $0x3e8] sm:$0xff]
  %v7871 = vld [vmem:[%s1094 + $0x3f0] sm:$0xff]
  %v7872 = vld [vmem:[%s1094 + $0x3f8] sm:$0xff]
  %v7873 = vld [vmem:[%s1223] sm:$0xff]
  %v7874 = vld [vmem:[%s1223 + $0x8] sm:$0xff]
  %v7875 = vld [vmem:[%s1223 + $0x10] sm:$0xff]
  %v7876 = vld [vmem:[%s1223 + $0x18] sm:$0xff]
  %7877 = vmatprep.subr.mxu0 %v7746
  %7878 = vmatpush1.msra.mxu0 %v7745
  %7879 = vmatprep.subr.mxu0 %v7750
  %7880 = vmatpush1.msra.mxu0 %v7749
  %7881 = vmatprep.subr.mxu0 %v7754
  %7882 = vmatpush1.msra.mxu0 %v7753
  %7883 = vmatprep.subr.mxu0 %v7758
  %7884 = vmatpush1.msra.mxu0 %v7757
  %7885 = vmatprep.subr.mxu0 %v7762
  %7886 = vmatpush1.msra.mxu0 %v7761
  %7887 = vmatprep.subr.mxu0 %v7766
  %7888 = vmatpush1.msra.mxu0 %v7765
  %7889 = vmatprep.subr.mxu0 %v7770
  %7890 = vmatpush1.msra.mxu0 %v7769
  %7891 = vmatprep.subr.mxu0 %v7774
  %7892 = vmatpush1.msra.mxu0 %v7773
  %7893 = vmatprep.subr.mxu0 %v7778
  %7894 = vmatpush1.msra.mxu0 %v7777
  %7895 = vmatprep.subr.mxu0 %v7782
  %7896 = vmatpush1.msra.mxu0 %v7781
  %7897 = vmatprep.subr.mxu0 %v7786
  %7898 = vmatpush1.msra.mxu0 %v7785
  %7899 = vmatprep.subr.mxu0 %v7790
  %7900 = vmatpush1.msra.mxu0 %v7789
  %7901 = vmatprep.subr.mxu0 %v7794
  %7902 = vmatpush1.msra.mxu0 %v7793
  %7903 = vmatprep.subr.mxu0 %v7798
  %7904 = vmatpush1.msra.mxu0 %v7797
  %7905 = vmatprep.subr.mxu0 %v7802
  %7906 = vmatpush1.msra.mxu0 %v7801
  %7907 = vmatprep.subr.mxu0 %v7806
  %7908 = vmatpush1.msra.mxu0 %v7805
  %7909 = vmatprep.subr.mxu0 %v7810
  %7910 = vmatpush1.msra.mxu0 %v7809
  %7911 = vmatprep.subr.mxu0 %v7814
  %7912 = vmatpush1.msra.mxu0 %v7813
  %7913 = vmatprep.subr.mxu0 %v7818
  %7914 = vmatpush1.msra.mxu0 %v7817
  %7915 = vmatprep.subr.mxu0 %v7822
  %7916 = vmatpush1.msra.mxu0 %v7821
  %7917 = vmatprep.subr.mxu0 %v7826
  %7918 = vmatpush1.msra.mxu0 %v7825
  %7919 = vmatprep.subr.mxu0 %v7830
  %7920 = vmatpush1.msra.mxu0 %v7829
  %7921 = vmatprep.subr.mxu0 %v7834
  %7922 = vmatpush1.msra.mxu0 %v7833
  %7923 = vmatprep.subr.mxu0 %v7838
  %7924 = vmatpush1.msra.mxu0 %v7837
  %7925 = vmatprep.subr.mxu0 %v7842
  %7926 = vmatpush1.msra.mxu0 %v7841
  %7927 = vmatprep.subr.mxu0 %v7846
  %7928 = vmatpush1.msra.mxu0 %v7845
  %7929 = vmatprep.subr.mxu0 %v7850
  %7930 = vmatpush1.msra.mxu0 %v7849
  %7931 = vmatprep.subr.mxu0 %v7854
  %7932 = vmatpush1.msra.mxu0 %v7853
  %7933 = vmatprep.subr.mxu0 %v7858
  %7934 = vmatpush1.msra.mxu0 %v7857
  %7935 = vmatprep.subr.mxu0 %v7862
  %7936 = vmatpush1.msra.mxu0 %v7861
  %7937 = vmatprep.subr.mxu0 %v7866
  %7938 = vmatpush1.msra.mxu0 %v7865
  %7939 = vmatprep.subr.mxu0 %v7870
  %7940 = vmatpush1.msra.mxu0 %v7869
  %7941 = vmatprep.mubr.f32.mxu0 %v7450
  %7942 = vmatmul.mubr.f32.gmra.mrb[0].mxu0 %v7157
  %v7943 = vpop.f32.mrb[0].mxu0
  %v7944 = vadd.f32 %v7873, %v7943
  %v7945 = vpop.f32.mrb[0].mxu0
  %v7946 = vadd.f32 %v7874, %v7945
  %7947 = vdwg.mxu0
  %7948 = vmatprep.subr.mxu0 %v7748
  %7949 = vmatpush1.msra.mxu0 %v7747
  %7950 = vmatprep.subr.mxu0 %v7752
  %7951 = vmatpush1.msra.mxu0 %v7751
  %7952 = vmatprep.subr.mxu0 %v7756
  %7953 = vmatpush1.msra.mxu0 %v7755
  %7954 = vmatprep.subr.mxu0 %v7760
  %7955 = vmatpush1.msra.mxu0 %v7759
  %7956 = vmatprep.subr.mxu0 %v7764
  %7957 = vmatpush1.msra.mxu0 %v7763
  %7958 = vmatprep.subr.mxu0 %v7768
  %7959 = vmatpush1.msra.mxu0 %v7767
  %7960 = vmatprep.subr.mxu0 %v7772
  %7961 = vmatpush1.msra.mxu0 %v7771
  %7962 = vmatprep.subr.mxu0 %v7776
  %7963 = vmatpush1.msra.mxu0 %v7775
  %7964 = vmatprep.subr.mxu0 %v7780
  %7965 = vmatpush1.msra.mxu0 %v7779
  %7966 = vmatprep.subr.mxu0 %v7784
  %7967 = vmatpush1.msra.mxu0 %v7783
  %7968 = vmatprep.subr.mxu0 %v7788
  %7969 = vmatpush1.msra.mxu0 %v7787
  %7970 = vmatprep.subr.mxu0 %v7792
  %7971 = vmatpush1.msra.mxu0 %v7791
  %7972 = vmatprep.subr.mxu0 %v7796
  %7973 = vmatpush1.msra.mxu0 %v7795
  %7974 = vmatprep.subr.mxu0 %v7800
  %7975 = vmatpush1.msra.mxu0 %v7799
  %7976 = vmatprep.subr.mxu0 %v7804
  %7977 = vmatpush1.msra.mxu0 %v7803
  %7978 = vmatprep.subr.mxu0 %v7808
  %7979 = vmatpush1.msra.mxu0 %v7807
  %7980 = vmatprep.subr.mxu0 %v7812
  %7981 = vmatpush1.msra.mxu0 %v7811
  %7982 = vmatprep.subr.mxu0 %v7816
  %7983 = vmatpush1.msra.mxu0 %v7815
  %7984 = vmatprep.subr.mxu0 %v7820
  %7985 = vmatpush1.msra.mxu0 %v7819
  %7986 = vmatprep.subr.mxu0 %v7824
  %7987 = vmatpush1.msra.mxu0 %v7823
  %7988 = vmatprep.subr.mxu0 %v7828
  %7989 = vmatpush1.msra.mxu0 %v7827
  %7990 = vmatprep.subr.mxu0 %v7832
  %7991 = vmatpush1.msra.mxu0 %v7831
  %7992 = vmatprep.subr.mxu0 %v7836
  %7993 = vmatpush1.msra.mxu0 %v7835
  %7994 = vmatprep.subr.mxu0 %v7840
  %7995 = vmatpush1.msra.mxu0 %v7839
  %7996 = vmatprep.subr.mxu0 %v7844
  %7997 = vmatpush1.msra.mxu0 %v7843
  %7998 = vmatprep.subr.mxu0 %v7848
  %7999 = vmatpush1.msra.mxu0 %v7847
  %8000 = vmatprep.subr.mxu0 %v7852
  %8001 = vmatpush1.msra.mxu0 %v7851
  %8002 = vmatprep.subr.mxu0 %v7856
  %8003 = vmatpush1.msra.mxu0 %v7855
  %8004 = vmatprep.subr.mxu0 %v7860
  %8005 = vmatpush1.msra.mxu0 %v7859
  %8006 = vmatprep.subr.mxu0 %v7864
  %8007 = vmatpush1.msra.mxu0 %v7863
  %8008 = vmatprep.subr.mxu0 %v7868
  %8009 = vmatpush1.msra.mxu0 %v7867
  %8010 = vmatprep.subr.mxu0 %v7872
  %8011 = vmatpush1.msra.mxu0 %v7871
  %8012 = vmatprep.mubr.f32.mxu0 %v7450
  %8013 = vmatmul.mubr.f32.gmra.mrb[0].mxu0 %v7157
  %v8014 = vpop.f32.mrb[0].mxu0
  %v8015 = vadd.f32 %v7875, %v8014
  %v8016 = vpop.f32.mrb[0].mxu0
  %v8017 = vadd.f32 %v7876, %v8016
  %8018 = vdwg.mxu0
  %v8019 = vxor.u32 %v7944, 2147483648
  %v8020 = vmul.f32 %v8019, 1.442695
  %v8021 = vpow.pop %v8020
  %v8022 = vadd.f32 %v8021, 1.0
  %v8023 = vrcp.pop %v8022
  %v8024 = vmul.f32 1.0, %v8023
  %v8025 = vxor.u32 %v7946, 2147483648
  %v8026 = vmul.f32 %v8025, 1.442695
  %v8027 = vpow.pop %v8026
  %v8028 = vadd.f32 %v8027, 1.0
  %v8029 = vrcp.pop %v8028
  %v8030 = vmul.f32 1.0, %v8029
  %v8031 = vmul.f32 %v8024, %v8017
  %v8032 = vadd.f32 %v8015, %v8031
  %v8033 = vtanh.pop %v8032
  %v8034 = vsub.f32 1.0, %v8030
  %v8035 = vmul.f32 %v8034, %v8033
  %v8036 = vmul.f32 %v8030, %v7450
  %v8037 = vadd.f32 %v8035, %v8036
  %v8038 = vld [vmem:[%s1873] sm:$0xff]
  %v8039 = vld [vmem:[%s1873 + $0x8] sm:$0xff]
  %v8040 = vld [vmem:[%s1873 + $0x10] sm:$0xff]
  %v8041 = vld [vmem:[%s1873 + $0x18] sm:$0xff]
  %v8042 = vld [vmem:[%s1873 + $0x20] sm:$0xff]
  %v8043 = vld [vmem:[%s1873 + $0x28] sm:$0xff]
  %v8044 = vld [vmem:[%s1873 + $0x30] sm:$0xff]
  %v8045 = vld [vmem:[%s1873 + $0x38] sm:$0xff]
  %v8046 = vld [vmem:[%s1873 + $0x40] sm:$0xff]
  %v8047 = vld [vmem:[%s1873 + $0x48] sm:$0xff]
  %v8048 = vld [vmem:[%s1873 + $0x50] sm:$0xff]
  %v8049 = vld [vmem:[%s1873 + $0x58] sm:$0xff]
  %v8050 = vld [vmem:[%s1873 + $0x60] sm:$0xff]
  %v8051 = vld [vmem:[%s1873 + $0x68] sm:$0xff]
  %v8052 = vld [vmem:[%s1873 + $0x70] sm:$0xff]
  %v8053 = vld [vmem:[%s1873 + $0x78] sm:$0xff]
  %v8054 = vld [vmem:[%s1873 + $0x80] sm:$0xff]
  %v8055 = vld [vmem:[%s1873 + $0x88] sm:$0xff]
  %v8056 = vld [vmem:[%s1873 + $0x90] sm:$0xff]
  %v8057 = vld [vmem:[%s1873 + $0x98] sm:$0xff]
  %v8058 = vld [vmem:[%s1873 + $0xa0] sm:$0xff]
  %v8059 = vld [vmem:[%s1873 + $0xa8] sm:$0xff]
  %v8060 = vld [vmem:[%s1873 + $0xb0] sm:$0xff]
  %v8061 = vld [vmem:[%s1873 + $0xb8] sm:$0xff]
  %v8062 = vld [vmem:[%s1873 + $0xc0] sm:$0xff]
  %v8063 = vld [vmem:[%s1873 + $0xc8] sm:$0xff]
  %v8064 = vld [vmem:[%s1873 + $0xd0] sm:$0xff]
  %v8065 = vld [vmem:[%s1873 + $0xd8] sm:$0xff]
  %v8066 = vld [vmem:[%s1873 + $0xe0] sm:$0xff]
  %v8067 = vld [vmem:[%s1873 + $0xe8] sm:$0xff]
  %v8068 = vld [vmem:[%s1873 + $0xf0] sm:$0xff]
  %v8069 = vld [vmem:[%s1873 + $0xf8] sm:$0xff]
  %v8070 = vld [vmem:[%s1873 + $0x100] sm:$0xff]
  %v8071 = vld [vmem:[%s1873 + $0x108] sm:$0xff]
  %v8072 = vld [vmem:[%s1873 + $0x110] sm:$0xff]
  %v8073 = vld [vmem:[%s1873 + $0x118] sm:$0xff]
  %v8074 = vld [vmem:[%s1873 + $0x120] sm:$0xff]
  %v8075 = vld [vmem:[%s1873 + $0x128] sm:$0xff]
  %v8076 = vld [vmem:[%s1873 + $0x130] sm:$0xff]
  %v8077 = vld [vmem:[%s1873 + $0x138] sm:$0xff]
  %v8078 = vld [vmem:[%s1873 + $0x140] sm:$0xff]
  %v8079 = vld [vmem:[%s1873 + $0x148] sm:$0xff]
  %v8080 = vld [vmem:[%s1873 + $0x150] sm:$0xff]
  %v8081 = vld [vmem:[%s1873 + $0x158] sm:$0xff]
  %v8082 = vld [vmem:[%s1873 + $0x160] sm:$0xff]
  %v8083 = vld [vmem:[%s1873 + $0x168] sm:$0xff]
  %v8084 = vld [vmem:[%s1873 + $0x170] sm:$0xff]
  %v8085 = vld [vmem:[%s1873 + $0x178] sm:$0xff]
  %v8086 = vld [vmem:[%s1873 + $0x180] sm:$0xff]
  %v8087 = vld [vmem:[%s1873 + $0x188] sm:$0xff]
  %v8088 = vld [vmem:[%s1873 + $0x190] sm:$0xff]
  %v8089 = vld [vmem:[%s1873 + $0x198] sm:$0xff]
  %v8090 = vld [vmem:[%s1873 + $0x1a0] sm:$0xff]
  %v8091 = vld [vmem:[%s1873 + $0x1a8] sm:$0xff]
  %v8092 = vld [vmem:[%s1873 + $0x1b0] sm:$0xff]
  %v8093 = vld [vmem:[%s1873 + $0x1b8] sm:$0xff]
  %v8094 = vld [vmem:[%s1873 + $0x1c0] sm:$0xff]
  %v8095 = vld [vmem:[%s1873 + $0x1c8] sm:$0xff]
  %v8096 = vld [vmem:[%s1873 + $0x1d0] sm:$0xff]
  %v8097 = vld [vmem:[%s1873 + $0x1d8] sm:$0xff]
  %v8098 = vld [vmem:[%s1873 + $0x1e0] sm:$0xff]
  %v8099 = vld [vmem:[%s1873 + $0x1e8] sm:$0xff]
  %v8100 = vld [vmem:[%s1873 + $0x1f0] sm:$0xff]
  %v8101 = vld [vmem:[%s1873 + $0x1f8] sm:$0xff]
  %v8102 = vld [vmem:[%s1873 + $0x200] sm:$0xff]
  %v8103 = vld [vmem:[%s1873 + $0x208] sm:$0xff]
  %v8104 = vld [vmem:[%s1873 + $0x210] sm:$0xff]
  %v8105 = vld [vmem:[%s1873 + $0x218] sm:$0xff]
  %v8106 = vld [vmem:[%s1873 + $0x220] sm:$0xff]
  %v8107 = vld [vmem:[%s1873 + $0x228] sm:$0xff]
  %v8108 = vld [vmem:[%s1873 + $0x230] sm:$0xff]
  %v8109 = vld [vmem:[%s1873 + $0x238] sm:$0xff]
  %v8110 = vld [vmem:[%s1873 + $0x240] sm:$0xff]
  %v8111 = vld [vmem:[%s1873 + $0x248] sm:$0xff]
  %v8112 = vld [vmem:[%s1873 + $0x250] sm:$0xff]
  %v8113 = vld [vmem:[%s1873 + $0x258] sm:$0xff]
  %v8114 = vld [vmem:[%s1873 + $0x260] sm:$0xff]
  %v8115 = vld [vmem:[%s1873 + $0x268] sm:$0xff]
  %v8116 = vld [vmem:[%s1873 + $0x270] sm:$0xff]
  %v8117 = vld [vmem:[%s1873 + $0x278] sm:$0xff]
  %v8118 = vld [vmem:[%s1873 + $0x280] sm:$0xff]
  %v8119 = vld [vmem:[%s1873 + $0x288] sm:$0xff]
  %v8120 = vld [vmem:[%s1873 + $0x290] sm:$0xff]
  %v8121 = vld [vmem:[%s1873 + $0x298] sm:$0xff]
  %v8122 = vld [vmem:[%s1873 + $0x2a0] sm:$0xff]
  %v8123 = vld [vmem:[%s1873 + $0x2a8] sm:$0xff]
  %v8124 = vld [vmem:[%s1873 + $0x2b0] sm:$0xff]
  %v8125 = vld [vmem:[%s1873 + $0x2b8] sm:$0xff]
  %v8126 = vld [vmem:[%s1873 + $0x2c0] sm:$0xff]
  %v8127 = vld [vmem:[%s1873 + $0x2c8] sm:$0xff]
  %v8128 = vld [vmem:[%s1873 + $0x2d0] sm:$0xff]
  %v8129 = vld [vmem:[%s1873 + $0x2d8] sm:$0xff]
  %v8130 = vld [vmem:[%s1873 + $0x2e0] sm:$0xff]
  %v8131 = vld [vmem:[%s1873 + $0x2e8] sm:$0xff]
  %v8132 = vld [vmem:[%s1873 + $0x2f0] sm:$0xff]
  %v8133 = vld [vmem:[%s1873 + $0x2f8] sm:$0xff]
  %v8134 = vld [vmem:[%s1873 + $0x300] sm:$0xff]
  %v8135 = vld [vmem:[%s1873 + $0x308] sm:$0xff]
  %v8136 = vld [vmem:[%s1873 + $0x310] sm:$0xff]
  %v8137 = vld [vmem:[%s1873 + $0x318] sm:$0xff]
  %v8138 = vld [vmem:[%s1873 + $0x320] sm:$0xff]
  %v8139 = vld [vmem:[%s1873 + $0x328] sm:$0xff]
  %v8140 = vld [vmem:[%s1873 + $0x330] sm:$0xff]
  %v8141 = vld [vmem:[%s1873 + $0x338] sm:$0xff]
  %v8142 = vld [vmem:[%s1873 + $0x340] sm:$0xff]
  %v8143 = vld [vmem:[%s1873 + $0x348] sm:$0xff]
  %v8144 = vld [vmem:[%s1873 + $0x350] sm:$0xff]
  %v8145 = vld [vmem:[%s1873 + $0x358] sm:$0xff]
  %v8146 = vld [vmem:[%s1873 + $0x360] sm:$0xff]
  %v8147 = vld [vmem:[%s1873 + $0x368] sm:$0xff]
  %v8148 = vld [vmem:[%s1873 + $0x370] sm:$0xff]
  %v8149 = vld [vmem:[%s1873 + $0x378] sm:$0xff]
  %v8150 = vld [vmem:[%s1873 + $0x380] sm:$0xff]
  %v8151 = vld [vmem:[%s1873 + $0x388] sm:$0xff]
  %v8152 = vld [vmem:[%s1873 + $0x390] sm:$0xff]
  %v8153 = vld [vmem:[%s1873 + $0x398] sm:$0xff]
  %v8154 = vld [vmem:[%s1873 + $0x3a0] sm:$0xff]
  %v8155 = vld [vmem:[%s1873 + $0x3a8] sm:$0xff]
  %v8156 = vld [vmem:[%s1873 + $0x3b0] sm:$0xff]
  %v8157 = vld [vmem:[%s1873 + $0x3b8] sm:$0xff]
  %v8158 = vld [vmem:[%s1873 + $0x3c0] sm:$0xff]
  %v8159 = vld [vmem:[%s1873 + $0x3c8] sm:$0xff]
  %v8160 = vld [vmem:[%s1873 + $0x3d0] sm:$0xff]
  %v8161 = vld [vmem:[%s1873 + $0x3d8] sm:$0xff]
  %v8162 = vld [vmem:[%s1873 + $0x3e0] sm:$0xff]
  %v8163 = vld [vmem:[%s1873 + $0x3e8] sm:$0xff]
  %v8164 = vld [vmem:[%s1873 + $0x3f0] sm:$0xff]
  %v8165 = vld [vmem:[%s1873 + $0x3f8] sm:$0xff]
  %v8166 = vld [vmem:[%s2002] sm:$0xff]
  %v8167 = vld [vmem:[%s2002 + $0x8] sm:$0xff]
  %v8168 = vld [vmem:[%s2002 + $0x10] sm:$0xff]
  %v8169 = vld [vmem:[%s2002 + $0x18] sm:$0xff]
  %8170 = vmatprep.subr.mxu0 %v8039
  %8171 = vmatpush1.msra.mxu0 %v8038
  %8172 = vmatprep.subr.mxu0 %v8043
  %8173 = vmatpush1.msra.mxu0 %v8042
  %8174 = vmatprep.subr.mxu0 %v8047
  %8175 = vmatpush1.msra.mxu0 %v8046
  %8176 = vmatprep.subr.mxu0 %v8051
  %8177 = vmatpush1.msra.mxu0 %v8050
  %8178 = vmatprep.subr.mxu0 %v8055
  %8179 = vmatpush1.msra.mxu0 %v8054
  %8180 = vmatprep.subr.mxu0 %v8059
  %8181 = vmatpush1.msra.mxu0 %v8058
  %8182 = vmatprep.subr.mxu0 %v8063
  %8183 = vmatpush1.msra.mxu0 %v8062
  %8184 = vmatprep.subr.mxu0 %v8067
  %8185 = vmatpush1.msra.mxu0 %v8066
  %8186 = vmatprep.subr.mxu0 %v8071
  %8187 = vmatpush1.msra.mxu0 %v8070
  %8188 = vmatprep.subr.mxu0 %v8075
  %8189 = vmatpush1.msra.mxu0 %v8074
  %8190 = vmatprep.subr.mxu0 %v8079
  %8191 = vmatpush1.msra.mxu0 %v8078
  %8192 = vmatprep.subr.mxu0 %v8083
  %8193 = vmatpush1.msra.mxu0 %v8082
  %8194 = vmatprep.subr.mxu0 %v8087
  %8195 = vmatpush1.msra.mxu0 %v8086
  %8196 = vmatprep.subr.mxu0 %v8091
  %8197 = vmatpush1.msra.mxu0 %v8090
  %8198 = vmatprep.subr.mxu0 %v8095
  %8199 = vmatpush1.msra.mxu0 %v8094
  %8200 = vmatprep.subr.mxu0 %v8099
  %8201 = vmatpush1.msra.mxu0 %v8098
  %8202 = vmatprep.subr.mxu0 %v8103
  %8203 = vmatpush1.msra.mxu0 %v8102
  %8204 = vmatprep.subr.mxu0 %v8107
  %8205 = vmatpush1.msra.mxu0 %v8106
  %8206 = vmatprep.subr.mxu0 %v8111
  %8207 = vmatpush1.msra.mxu0 %v8110
  %8208 = vmatprep.subr.mxu0 %v8115
  %8209 = vmatpush1.msra.mxu0 %v8114
  %8210 = vmatprep.subr.mxu0 %v8119
  %8211 = vmatpush1.msra.mxu0 %v8118
  %8212 = vmatprep.subr.mxu0 %v8123
  %8213 = vmatpush1.msra.mxu0 %v8122
  %8214 = vmatprep.subr.mxu0 %v8127
  %8215 = vmatpush1.msra.mxu0 %v8126
  %8216 = vmatprep.subr.mxu0 %v8131
  %8217 = vmatpush1.msra.mxu0 %v8130
  %8218 = vmatprep.subr.mxu0 %v8135
  %8219 = vmatpush1.msra.mxu0 %v8134
  %8220 = vmatprep.subr.mxu0 %v8139
  %8221 = vmatpush1.msra.mxu0 %v8138
  %8222 = vmatprep.subr.mxu0 %v8143
  %8223 = vmatpush1.msra.mxu0 %v8142
  %8224 = vmatprep.subr.mxu0 %v8147
  %8225 = vmatpush1.msra.mxu0 %v8146
  %8226 = vmatprep.subr.mxu0 %v8151
  %8227 = vmatpush1.msra.mxu0 %v8150
  %8228 = vmatprep.subr.mxu0 %v8155
  %8229 = vmatpush1.msra.mxu0 %v8154
  %8230 = vmatprep.subr.mxu0 %v8159
  %8231 = vmatpush1.msra.mxu0 %v8158
  %8232 = vmatprep.subr.mxu0 %v8163
  %8233 = vmatpush1.msra.mxu0 %v8162
  %8234 = vmatprep.mubr.f32.mxu0 %v7743
  %8235 = vmatmul.mubr.f32.gmra.mrb[0].mxu0 %v7450
  %v8236 = vpop.f32.mrb[0].mxu0
  %v8237 = vadd.f32 %v8166, %v8236
  %v8238 = vpop.f32.mrb[0].mxu0
  %v8239 = vadd.f32 %v8167, %v8238
  %8240 = vdwg.mxu0
  %8241 = vmatprep.subr.mxu0 %v8041
  %8242 = vmatpush1.msra.mxu0 %v8040
  %8243 = vmatprep.subr.mxu0 %v8045
  %8244 = vmatpush1.msra.mxu0 %v8044
  %8245 = vmatprep.subr.mxu0 %v8049
  %8246 = vmatpush1.msra.mxu0 %v8048
  %8247 = vmatprep.subr.mxu0 %v8053
  %8248 = vmatpush1.msra.mxu0 %v8052
  %8249 = vmatprep.subr.mxu0 %v8057
  %8250 = vmatpush1.msra.mxu0 %v8056
  %8251 = vmatprep.subr.mxu0 %v8061
  %8252 = vmatpush1.msra.mxu0 %v8060
  %8253 = vmatprep.subr.mxu0 %v8065
  %8254 = vmatpush1.msra.mxu0 %v8064
  %8255 = vmatprep.subr.mxu0 %v8069
  %8256 = vmatpush1.msra.mxu0 %v8068
  %8257 = vmatprep.subr.mxu0 %v8073
  %8258 = vmatpush1.msra.mxu0 %v8072
  %8259 = vmatprep.subr.mxu0 %v8077
  %8260 = vmatpush1.msra.mxu0 %v8076
  %8261 = vmatprep.subr.mxu0 %v8081
  %8262 = vmatpush1.msra.mxu0 %v8080
  %8263 = vmatprep.subr.mxu0 %v8085
  %8264 = vmatpush1.msra.mxu0 %v8084
  %8265 = vmatprep.subr.mxu0 %v8089
  %8266 = vmatpush1.msra.mxu0 %v8088
  %8267 = vmatprep.subr.mxu0 %v8093
  %8268 = vmatpush1.msra.mxu0 %v8092
  %8269 = vmatprep.subr.mxu0 %v8097
  %8270 = vmatpush1.msra.mxu0 %v8096
  %8271 = vmatprep.subr.mxu0 %v8101
  %8272 = vmatpush1.msra.mxu0 %v8100
  %8273 = vmatprep.subr.mxu0 %v8105
  %8274 = vmatpush1.msra.mxu0 %v8104
  %8275 = vmatprep.subr.mxu0 %v8109
  %8276 = vmatpush1.msra.mxu0 %v8108
  %8277 = vmatprep.subr.mxu0 %v8113
  %8278 = vmatpush1.msra.mxu0 %v8112
  %8279 = vmatprep.subr.mxu0 %v8117
  %8280 = vmatpush1.msra.mxu0 %v8116
  %8281 = vmatprep.subr.mxu0 %v8121
  %8282 = vmatpush1.msra.mxu0 %v8120
  %8283 = vmatprep.subr.mxu0 %v8125
  %8284 = vmatpush1.msra.mxu0 %v8124
  %8285 = vmatprep.subr.mxu0 %v8129
  %8286 = vmatpush1.msra.mxu0 %v8128
  %8287 = vmatprep.subr.mxu0 %v8133
  %8288 = vmatpush1.msra.mxu0 %v8132
  %8289 = vmatprep.subr.mxu0 %v8137
  %8290 = vmatpush1.msra.mxu0 %v8136
  %8291 = vmatprep.subr.mxu0 %v8141
  %8292 = vmatpush1.msra.mxu0 %v8140
  %8293 = vmatprep.subr.mxu0 %v8145
  %8294 = vmatpush1.msra.mxu0 %v8144
  %8295 = vmatprep.subr.mxu0 %v8149
  %8296 = vmatpush1.msra.mxu0 %v8148
  %8297 = vmatprep.subr.mxu0 %v8153
  %8298 = vmatpush1.msra.mxu0 %v8152
  %8299 = vmatprep.subr.mxu0 %v8157
  %8300 = vmatpush1.msra.mxu0 %v8156
  %8301 = vmatprep.subr.mxu0 %v8161
  %8302 = vmatpush1.msra.mxu0 %v8160
  %8303 = vmatprep.subr.mxu0 %v8165
  %8304 = vmatpush1.msra.mxu0 %v8164
  %8305 = vmatprep.mubr.f32.mxu0 %v7743
  %8306 = vmatmul.mubr.f32.gmra.mrb[0].mxu0 %v7450
  %v8307 = vpop.f32.mrb[0].mxu0
  %v8308 = vadd.f32 %v8168, %v8307
  %v8309 = vpop.f32.mrb[0].mxu0
  %v8310 = vadd.f32 %v8169, %v8309
  %8311 = vdwg.mxu0
  %v8312 = vxor.u32 %v8237, 2147483648
  %v8313 = vmul.f32 %v8312, 1.442695
  %v8314 = vpow.pop %v8313
  %v8315 = vadd.f32 %v8314, 1.0
  %v8316 = vrcp.pop %v8315
  %v8317 = vmul.f32 1.0, %v8316
  %v8318 = vxor.u32 %v8239, 2147483648
  %v8319 = vmul.f32 %v8318, 1.442695
  %v8320 = vpow.pop %v8319
  %v8321 = vadd.f32 %v8320, 1.0
  %v8322 = vrcp.pop %v8321
  %v8323 = vmul.f32 1.0, %v8322
  %v8324 = vmul.f32 %v8317, %v8310
  %v8325 = vadd.f32 %v8308, %v8324
  %v8326 = vtanh.pop %v8325
  %v8327 = vsub.f32 1.0, %v8323
  %v8328 = vmul.f32 %v8327, %v8326
  %v8329 = vmul.f32 %v8323, %v7743
  %v8330 = vadd.f32 %v8328, %v8329
  %8331 = vst [vmem:[#allocation2 + $0x30] sm:$0xff] %v8330
  %v8332 = vld [vmem:[%s1873] sm:$0xff]
  %v8333 = vld [vmem:[%s1873 + $0x8] sm:$0xff]
  %v8334 = vld [vmem:[%s1873 + $0x10] sm:$0xff]
  %v8335 = vld [vmem:[%s1873 + $0x18] sm:$0xff]
  %v8336 = vld [vmem:[%s1873 + $0x20] sm:$0xff]
  %v8337 = vld [vmem:[%s1873 + $0x28] sm:$0xff]
  %v8338 = vld [vmem:[%s1873 + $0x30] sm:$0xff]
  %v8339 = vld [vmem:[%s1873 + $0x38] sm:$0xff]
  %v8340 = vld [vmem:[%s1873 + $0x40] sm:$0xff]
  %v8341 = vld [vmem:[%s1873 + $0x48] sm:$0xff]
  %v8342 = vld [vmem:[%s1873 + $0x50] sm:$0xff]
  %v8343 = vld [vmem:[%s1873 + $0x58] sm:$0xff]
  %v8344 = vld [vmem:[%s1873 + $0x60] sm:$0xff]
  %v8345 = vld [vmem:[%s1873 + $0x68] sm:$0xff]
  %v8346 = vld [vmem:[%s1873 + $0x70] sm:$0xff]
  %v8347 = vld [vmem:[%s1873 + $0x78] sm:$0xff]
  %v8348 = vld [vmem:[%s1873 + $0x80] sm:$0xff]
  %v8349 = vld [vmem:[%s1873 + $0x88] sm:$0xff]
  %v8350 = vld [vmem:[%s1873 + $0x90] sm:$0xff]
  %v8351 = vld [vmem:[%s1873 + $0x98] sm:$0xff]
  %v8352 = vld [vmem:[%s1873 + $0xa0] sm:$0xff]
  %v8353 = vld [vmem:[%s1873 + $0xa8] sm:$0xff]
  %v8354 = vld [vmem:[%s1873 + $0xb0] sm:$0xff]
  %v8355 = vld [vmem:[%s1873 + $0xb8] sm:$0xff]
  %v8356 = vld [vmem:[%s1873 + $0xc0] sm:$0xff]
  %v8357 = vld [vmem:[%s1873 + $0xc8] sm:$0xff]
  %v8358 = vld [vmem:[%s1873 + $0xd0] sm:$0xff]
  %v8359 = vld [vmem:[%s1873 + $0xd8] sm:$0xff]
  %v8360 = vld [vmem:[%s1873 + $0xe0] sm:$0xff]
  %v8361 = vld [vmem:[%s1873 + $0xe8] sm:$0xff]
  %v8362 = vld [vmem:[%s1873 + $0xf0] sm:$0xff]
  %v8363 = vld [vmem:[%s1873 + $0xf8] sm:$0xff]
  %v8364 = vld [vmem:[%s1873 + $0x100] sm:$0xff]
  %v8365 = vld [vmem:[%s1873 + $0x108] sm:$0xff]
  %v8366 = vld [vmem:[%s1873 + $0x110] sm:$0xff]
  %v8367 = vld [vmem:[%s1873 + $0x118] sm:$0xff]
  %v8368 = vld [vmem:[%s1873 + $0x120] sm:$0xff]
  %v8369 = vld [vmem:[%s1873 + $0x128] sm:$0xff]
  %v8370 = vld [vmem:[%s1873 + $0x130] sm:$0xff]
  %v8371 = vld [vmem:[%s1873 + $0x138] sm:$0xff]
  %v8372 = vld [vmem:[%s1873 + $0x140] sm:$0xff]
  %v8373 = vld [vmem:[%s1873 + $0x148] sm:$0xff]
  %v8374 = vld [vmem:[%s1873 + $0x150] sm:$0xff]
  %v8375 = vld [vmem:[%s1873 + $0x158] sm:$0xff]
  %v8376 = vld [vmem:[%s1873 + $0x160] sm:$0xff]
  %v8377 = vld [vmem:[%s1873 + $0x168] sm:$0xff]
  %v8378 = vld [vmem:[%s1873 + $0x170] sm:$0xff]
  %v8379 = vld [vmem:[%s1873 + $0x178] sm:$0xff]
  %v8380 = vld [vmem:[%s1873 + $0x180] sm:$0xff]
  %v8381 = vld [vmem:[%s1873 + $0x188] sm:$0xff]
  %v8382 = vld [vmem:[%s1873 + $0x190] sm:$0xff]
  %v8383 = vld [vmem:[%s1873 + $0x198] sm:$0xff]
  %v8384 = vld [vmem:[%s1873 + $0x1a0] sm:$0xff]
  %v8385 = vld [vmem:[%s1873 + $0x1a8] sm:$0xff]
  %v8386 = vld [vmem:[%s1873 + $0x1b0] sm:$0xff]
  %v8387 = vld [vmem:[%s1873 + $0x1b8] sm:$0xff]
  %v8388 = vld [vmem:[%s1873 + $0x1c0] sm:$0xff]
  %v8389 = vld [vmem:[%s1873 + $0x1c8] sm:$0xff]
  %v8390 = vld [vmem:[%s1873 + $0x1d0] sm:$0xff]
  %v8391 = vld [vmem:[%s1873 + $0x1d8] sm:$0xff]
  %v8392 = vld [vmem:[%s1873 + $0x1e0] sm:$0xff]
  %v8393 = vld [vmem:[%s1873 + $0x1e8] sm:$0xff]
  %v8394 = vld [vmem:[%s1873 + $0x1f0] sm:$0xff]
  %v8395 = vld [vmem:[%s1873 + $0x1f8] sm:$0xff]
  %v8396 = vld [vmem:[%s1873 + $0x200] sm:$0xff]
  %v8397 = vld [vmem:[%s1873 + $0x208] sm:$0xff]
  %v8398 = vld [vmem:[%s1873 + $0x210] sm:$0xff]
  %v8399 = vld [vmem:[%s1873 + $0x218] sm:$0xff]
  %v8400 = vld [vmem:[%s1873 + $0x220] sm:$0xff]
  %v8401 = vld [vmem:[%s1873 + $0x228] sm:$0xff]
  %v8402 = vld [vmem:[%s1873 + $0x230] sm:$0xff]
  %v8403 = vld [vmem:[%s1873 + $0x238] sm:$0xff]
  %v8404 = vld [vmem:[%s1873 + $0x240] sm:$0xff]
  %v8405 = vld [vmem:[%s1873 + $0x248] sm:$0xff]
  %v8406 = vld [vmem:[%s1873 + $0x250] sm:$0xff]
  %v8407 = vld [vmem:[%s1873 + $0x258] sm:$0xff]
  %v8408 = vld [vmem:[%s1873 + $0x260] sm:$0xff]
  %v8409 = vld [vmem:[%s1873 + $0x268] sm:$0xff]
  %v8410 = vld [vmem:[%s1873 + $0x270] sm:$0xff]
  %v8411 = vld [vmem:[%s1873 + $0x278] sm:$0xff]
  %v8412 = vld [vmem:[%s1873 + $0x280] sm:$0xff]
  %v8413 = vld [vmem:[%s1873 + $0x288] sm:$0xff]
  %v8414 = vld [vmem:[%s1873 + $0x290] sm:$0xff]
  %v8415 = vld [vmem:[%s1873 + $0x298] sm:$0xff]
  %v8416 = vld [vmem:[%s1873 + $0x2a0] sm:$0xff]
  %v8417 = vld [vmem:[%s1873 + $0x2a8] sm:$0xff]
  %v8418 = vld [vmem:[%s1873 + $0x2b0] sm:$0xff]
  %v8419 = vld [vmem:[%s1873 + $0x2b8] sm:$0xff]
  %v8420 = vld [vmem:[%s1873 + $0x2c0] sm:$0xff]
  %v8421 = vld [vmem:[%s1873 + $0x2c8] sm:$0xff]
  %v8422 = vld [vmem:[%s1873 + $0x2d0] sm:$0xff]
  %v8423 = vld [vmem:[%s1873 + $0x2d8] sm:$0xff]
  %v8424 = vld [vmem:[%s1873 + $0x2e0] sm:$0xff]
  %v8425 = vld [vmem:[%s1873 + $0x2e8] sm:$0xff]
  %v8426 = vld [vmem:[%s1873 + $0x2f0] sm:$0xff]
  %v8427 = vld [vmem:[%s1873 + $0x2f8] sm:$0xff]
  %v8428 = vld [vmem:[%s1873 + $0x300] sm:$0xff]
  %v8429 = vld [vmem:[%s1873 + $0x308] sm:$0xff]
  %v8430 = vld [vmem:[%s1873 + $0x310] sm:$0xff]
  %v8431 = vld [vmem:[%s1873 + $0x318] sm:$0xff]
  %v8432 = vld [vmem:[%s1873 + $0x320] sm:$0xff]
  %v8433 = vld [vmem:[%s1873 + $0x328] sm:$0xff]
  %v8434 = vld [vmem:[%s1873 + $0x330] sm:$0xff]
  %v8435 = vld [vmem:[%s1873 + $0x338] sm:$0xff]
  %v8436 = vld [vmem:[%s1873 + $0x340] sm:$0xff]
  %v8437 = vld [vmem:[%s1873 + $0x348] sm:$0xff]
  %v8438 = vld [vmem:[%s1873 + $0x350] sm:$0xff]
  %v8439 = vld [vmem:[%s1873 + $0x358] sm:$0xff]
  %v8440 = vld [vmem:[%s1873 + $0x360] sm:$0xff]
  %v8441 = vld [vmem:[%s1873 + $0x368] sm:$0xff]
  %v8442 = vld [vmem:[%s1873 + $0x370] sm:$0xff]
  %v8443 = vld [vmem:[%s1873 + $0x378] sm:$0xff]
  %v8444 = vld [vmem:[%s1873 + $0x380] sm:$0xff]
  %v8445 = vld [vmem:[%s1873 + $0x388] sm:$0xff]
  %v8446 = vld [vmem:[%s1873 + $0x390] sm:$0xff]
  %v8447 = vld [vmem:[%s1873 + $0x398] sm:$0xff]
  %v8448 = vld [vmem:[%s1873 + $0x3a0] sm:$0xff]
  %v8449 = vld [vmem:[%s1873 + $0x3a8] sm:$0xff]
  %v8450 = vld [vmem:[%s1873 + $0x3b0] sm:$0xff]
  %v8451 = vld [vmem:[%s1873 + $0x3b8] sm:$0xff]
  %v8452 = vld [vmem:[%s1873 + $0x3c0] sm:$0xff]
  %v8453 = vld [vmem:[%s1873 + $0x3c8] sm:$0xff]
  %v8454 = vld [vmem:[%s1873 + $0x3d0] sm:$0xff]
  %v8455 = vld [vmem:[%s1873 + $0x3d8] sm:$0xff]
  %v8456 = vld [vmem:[%s1873 + $0x3e0] sm:$0xff]
  %v8457 = vld [vmem:[%s1873 + $0x3e8] sm:$0xff]
  %v8458 = vld [vmem:[%s1873 + $0x3f0] sm:$0xff]
  %v8459 = vld [vmem:[%s1873 + $0x3f8] sm:$0xff]
  %v8460 = vld [vmem:[%s2002] sm:$0xff]
  %v8461 = vld [vmem:[%s2002 + $0x8] sm:$0xff]
  %v8462 = vld [vmem:[%s2002 + $0x10] sm:$0xff]
  %v8463 = vld [vmem:[%s2002 + $0x18] sm:$0xff]
  %8464 = vmatprep.subr.mxu0 %v8333
  %8465 = vmatpush1.msra.mxu0 %v8332
  %8466 = vmatprep.subr.mxu0 %v8337
  %8467 = vmatpush1.msra.mxu0 %v8336
  %8468 = vmatprep.subr.mxu0 %v8341
  %8469 = vmatpush1.msra.mxu0 %v8340
  %8470 = vmatprep.subr.mxu0 %v8345
  %8471 = vmatpush1.msra.mxu0 %v8344
  %8472 = vmatprep.subr.mxu0 %v8349
  %8473 = vmatpush1.msra.mxu0 %v8348
  %8474 = vmatprep.subr.mxu0 %v8353
  %8475 = vmatpush1.msra.mxu0 %v8352
  %8476 = vmatprep.subr.mxu0 %v8357
  %8477 = vmatpush1.msra.mxu0 %v8356
  %8478 = vmatprep.subr.mxu0 %v8361
  %8479 = vmatpush1.msra.mxu0 %v8360
  %8480 = vmatprep.subr.mxu0 %v8365
  %8481 = vmatpush1.msra.mxu0 %v8364
  %8482 = vmatprep.subr.mxu0 %v8369
  %8483 = vmatpush1.msra.mxu0 %v8368
  %8484 = vmatprep.subr.mxu0 %v8373
  %8485 = vmatpush1.msra.mxu0 %v8372
  %8486 = vmatprep.subr.mxu0 %v8377
  %8487 = vmatpush1.msra.mxu0 %v8376
  %8488 = vmatprep.subr.mxu0 %v8381
  %8489 = vmatpush1.msra.mxu0 %v8380
  %8490 = vmatprep.subr.mxu0 %v8385
  %8491 = vmatpush1.msra.mxu0 %v8384
  %8492 = vmatprep.subr.mxu0 %v8389
  %8493 = vmatpush1.msra.mxu0 %v8388
  %8494 = vmatprep.subr.mxu0 %v8393
  %8495 = vmatpush1.msra.mxu0 %v8392
  %8496 = vmatprep.subr.mxu0 %v8397
  %8497 = vmatpush1.msra.mxu0 %v8396
  %8498 = vmatprep.subr.mxu0 %v8401
  %8499 = vmatpush1.msra.mxu0 %v8400
  %8500 = vmatprep.subr.mxu0 %v8405
  %8501 = vmatpush1.msra.mxu0 %v8404
  %8502 = vmatprep.subr.mxu0 %v8409
  %8503 = vmatpush1.msra.mxu0 %v8408
  %8504 = vmatprep.subr.mxu0 %v8413
  %8505 = vmatpush1.msra.mxu0 %v8412
  %8506 = vmatprep.subr.mxu0 %v8417
  %8507 = vmatpush1.msra.mxu0 %v8416
  %8508 = vmatprep.subr.mxu0 %v8421
  %8509 = vmatpush1.msra.mxu0 %v8420
  %8510 = vmatprep.subr.mxu0 %v8425
  %8511 = vmatpush1.msra.mxu0 %v8424
  %8512 = vmatprep.subr.mxu0 %v8429
  %8513 = vmatpush1.msra.mxu0 %v8428
  %8514 = vmatprep.subr.mxu0 %v8433
  %8515 = vmatpush1.msra.mxu0 %v8432
  %8516 = vmatprep.subr.mxu0 %v8437
  %8517 = vmatpush1.msra.mxu0 %v8436
  %8518 = vmatprep.subr.mxu0 %v8441
  %8519 = vmatpush1.msra.mxu0 %v8440
  %8520 = vmatprep.subr.mxu0 %v8445
  %8521 = vmatpush1.msra.mxu0 %v8444
  %8522 = vmatprep.subr.mxu0 %v8449
  %8523 = vmatpush1.msra.mxu0 %v8448
  %8524 = vmatprep.subr.mxu0 %v8453
  %8525 = vmatpush1.msra.mxu0 %v8452
  %8526 = vmatprep.subr.mxu0 %v8457
  %8527 = vmatpush1.msra.mxu0 %v8456
  %8528 = vmatprep.mubr.f32.mxu0 %v8330
  %8529 = vmatmul.mubr.f32.gmra.mrb[0].mxu0 %v8037
  %v8530 = vpop.f32.mrb[0].mxu0
  %v8531 = vadd.f32 %v8460, %v8530
  %v8532 = vpop.f32.mrb[0].mxu0
  %v8533 = vadd.f32 %v8461, %v8532
  %8534 = vdwg.mxu0
  %8535 = vmatprep.subr.mxu0 %v8335
  %8536 = vmatpush1.msra.mxu0 %v8334
  %8537 = vmatprep.subr.mxu0 %v8339
  %8538 = vmatpush1.msra.mxu0 %v8338
  %8539 = vmatprep.subr.mxu0 %v8343
  %8540 = vmatpush1.msra.mxu0 %v8342
  %8541 = vmatprep.subr.mxu0 %v8347
  %8542 = vmatpush1.msra.mxu0 %v8346
  %8543 = vmatprep.subr.mxu0 %v8351
  %8544 = vmatpush1.msra.mxu0 %v8350
  %8545 = vmatprep.subr.mxu0 %v8355
  %8546 = vmatpush1.msra.mxu0 %v8354
  %8547 = vmatprep.subr.mxu0 %v8359
  %8548 = vmatpush1.msra.mxu0 %v8358
  %8549 = vmatprep.subr.mxu0 %v8363
  %8550 = vmatpush1.msra.mxu0 %v8362
  %8551 = vmatprep.subr.mxu0 %v8367
  %8552 = vmatpush1.msra.mxu0 %v8366
  %8553 = vmatprep.subr.mxu0 %v8371
  %8554 = vmatpush1.msra.mxu0 %v8370
  %8555 = vmatprep.subr.mxu0 %v8375
  %8556 = vmatpush1.msra.mxu0 %v8374
  %8557 = vmatprep.subr.mxu0 %v8379
  %8558 = vmatpush1.msra.mxu0 %v8378
  %8559 = vmatprep.subr.mxu0 %v8383
  %8560 = vmatpush1.msra.mxu0 %v8382
  %8561 = vmatprep.subr.mxu0 %v8387
  %8562 = vmatpush1.msra.mxu0 %v8386
  %8563 = vmatprep.subr.mxu0 %v8391
  %8564 = vmatpush1.msra.mxu0 %v8390
  %8565 = vmatprep.subr.mxu0 %v8395
  %8566 = vmatpush1.msra.mxu0 %v8394
  %8567 = vmatprep.subr.mxu0 %v8399
  %8568 = vmatpush1.msra.mxu0 %v8398
  %8569 = vmatprep.subr.mxu0 %v8403
  %8570 = vmatpush1.msra.mxu0 %v8402
  %8571 = vmatprep.subr.mxu0 %v8407
  %8572 = vmatpush1.msra.mxu0 %v8406
  %8573 = vmatprep.subr.mxu0 %v8411
  %8574 = vmatpush1.msra.mxu0 %v8410
  %8575 = vmatprep.subr.mxu0 %v8415
  %8576 = vmatpush1.msra.mxu0 %v8414
  %8577 = vmatprep.subr.mxu0 %v8419
  %8578 = vmatpush1.msra.mxu0 %v8418
  %8579 = vmatprep.subr.mxu0 %v8423
  %8580 = vmatpush1.msra.mxu0 %v8422
  %8581 = vmatprep.subr.mxu0 %v8427
  %8582 = vmatpush1.msra.mxu0 %v8426
  %8583 = vmatprep.subr.mxu0 %v8431
  %8584 = vmatpush1.msra.mxu0 %v8430
  %8585 = vmatprep.subr.mxu0 %v8435
  %8586 = vmatpush1.msra.mxu0 %v8434
  %8587 = vmatprep.subr.mxu0 %v8439
  %8588 = vmatpush1.msra.mxu0 %v8438
  %8589 = vmatprep.subr.mxu0 %v8443
  %8590 = vmatpush1.msra.mxu0 %v8442
  %8591 = vmatprep.subr.mxu0 %v8447
  %8592 = vmatpush1.msra.mxu0 %v8446
  %8593 = vmatprep.subr.mxu0 %v8451
  %8594 = vmatpush1.msra.mxu0 %v8450
  %8595 = vmatprep.subr.mxu0 %v8455
  %8596 = vmatpush1.msra.mxu0 %v8454
  %8597 = vmatprep.subr.mxu0 %v8459
  %8598 = vmatpush1.msra.mxu0 %v8458
  %8599 = vmatprep.mubr.f32.mxu0 %v8330
  %8600 = vmatmul.mubr.f32.gmra.mrb[0].mxu0 %v8037
  %v8601 = vpop.f32.mrb[0].mxu0
  %v8602 = vadd.f32 %v8462, %v8601
  %v8603 = vpop.f32.mrb[0].mxu0
  %v8604 = vadd.f32 %v8463, %v8603
  %8605 = vdwg.mxu0
  %v8606 = vxor.u32 %v8531, 2147483648
  %v8607 = vmul.f32 %v8606, 1.442695
  %v8608 = vpow.pop %v8607
  %v8609 = vadd.f32 %v8608, 1.0
  %v8610 = vrcp.pop %v8609
  %v8611 = vmul.f32 1.0, %v8610
  %v8612 = vxor.u32 %v8533, 2147483648
  %v8613 = vmul.f32 %v8612, 1.442695
  %v8614 = vpow.pop %v8613
  %v8615 = vadd.f32 %v8614, 1.0
  %v8616 = vrcp.pop %v8615
  %v8617 = vmul.f32 1.0, %v8616
  %v8618 = vmul.f32 %v8611, %v8604
  %v8619 = vadd.f32 %v8602, %v8618
  %v8620 = vtanh.pop %v8619
  %v8621 = vsub.f32 1.0, %v8617
  %v8622 = vmul.f32 %v8621, %v8620
  %v8623 = vmul.f32 %v8617, %v8330
  %v8624 = vadd.f32 %v8622, %v8623
  %8625 = vst [vmem:[#allocation2 + $0x38] sm:$0xff] %v8624
  %v8626 = vld [vmem:[#allocation2] sm:$0xff]
  %v8627 = vld [vmem:[#allocation2 + $0x8] sm:$0xff]
  %v8628 = vld [vmem:[#allocation2 + $0x10] sm:$0xff]
  %v8629 = vld [vmem:[#allocation2 + $0x18] sm:$0xff]
  %v8630 = vld [vmem:[#allocation2 + $0x20] sm:$0xff]
  %v8631 = vld [vmem:[#allocation2 + $0x28] sm:$0xff]
  %v8632 = vld [vmem:[#allocation2 + $0x30] sm:$0xff]
  %v8633 = vld [vmem:[#allocation2 + $0x38] sm:$0xff]
  %v8634 = vld [vmem:[%s3] sm:$0xff]
  %v8635 = vld [vmem:[%s3 + $0x8] sm:$0xff]
  %v8636 = vld [vmem:[%s3 + $0x10] sm:$0xff]
  %v8637 = vld [vmem:[%s3 + $0x18] sm:$0xff]
  %v8638 = vld [vmem:[%s3 + $0x20] sm:$0xff]
  %v8639 = vld [vmem:[%s3 + $0x28] sm:$0xff]
  %v8640 = vld [vmem:[%s3 + $0x30] sm:$0xff]
  %v8641 = vld [vmem:[%s3 + $0x38] sm:$0xff]
  %v8642 = vld [vmem:[%s3 + $0x40] sm:$0xff]
  %v8643 = vld [vmem:[%s3 + $0x48] sm:$0xff]
  %v8644 = vld [vmem:[%s3 + $0x50] sm:$0xff]
  %v8645 = vld [vmem:[%s3 + $0x58] sm:$0xff]
  %v8646 = vld [vmem:[%s3 + $0x60] sm:$0xff]
  %v8647 = vld [vmem:[%s3 + $0x68] sm:$0xff]
  %v8648 = vld [vmem:[%s3 + $0x70] sm:$0xff]
  %v8649 = vld [vmem:[%s3 + $0x78] sm:$0xff]
  %v8650 = vld [vmem:[%s4] sm:$0x1]
  %v8652 = vlaneseq
  %v8653 = vshrl.u32 %v8652, 7
  %v8654 = vsub.s32 0, %v8653
  %v8655 = vrot.slane %v8650, %v8654
  %8657 = vmatprep.subr.mxu0 0.0
  %8658 = vmatpush1.msra.mxu0 %v8634
  %8659 = vmatprep.subr.mxu0 0.0
  %8660 = vmatpush1.msra.mxu0 %v8635
  %8661 = vmatprep.subr.mxu0 0.0
  %8662 = vmatpush1.msra.mxu0 %v8636
  %8663 = vmatprep.subr.mxu0 0.0
  %8664 = vmatpush1.msra.mxu0 %v8637
  %8665 = vmatprep.subr.mxu0 0.0
  %8666 = vmatpush1.msra.mxu0 %v8638
  %8667 = vmatprep.subr.mxu0 0.0
  %8668 = vmatpush1.msra.mxu0 %v8639
  %8669 = vmatprep.subr.mxu0 0.0
  %8670 = vmatpush1.msra.mxu0 %v8640
  %8671 = vmatprep.subr.mxu0 0.0
  %8672 = vmatpush1.msra.mxu0 %v8641
  %8673 = vmatprep.subr.mxu0 0.0
  %8674 = vmatpush1.msra.mxu0 %v8642
  %8675 = vmatprep.subr.mxu0 0.0
  %8676 = vmatpush1.msra.mxu0 %v8643
  %8677 = vmatprep.subr.mxu0 0.0
  %8678 = vmatpush1.msra.mxu0 %v8644
  %8679 = vmatprep.subr.mxu0 0.0
  %8680 = vmatpush1.msra.mxu0 %v8645
  %8681 = vmatprep.subr.mxu0 0.0
  %8682 = vmatpush1.msra.mxu0 %v8646
  %8683 = vmatprep.subr.mxu0 0.0
  %8684 = vmatpush1.msra.mxu0 %v8647
  %8685 = vmatprep.subr.mxu0 0.0
  %8686 = vmatpush1.msra.mxu0 %v8648
  %8687 = vmatprep.subr.mxu0 0.0
  %8688 = vmatpush1.msra.mxu0 %v8649
  %8689 = vmatprep.subr.mxu0 0.0
  %8690 = vmatpush1.msra.mxu0 0.0
  %8691 = vmatprep.subr.mxu0 0.0
  %8692 = vmatpush1.msra.mxu0 0.0
  %8693 = vmatprep.subr.mxu0 0.0
  %8694 = vmatpush1.msra.mxu0 0.0
  %8695 = vmatprep.subr.mxu0 0.0
  %8696 = vmatpush1.msra.mxu0 0.0
  %8697 = vmatprep.subr.mxu0 0.0
  %8698 = vmatpush1.msra.mxu0 0.0
  %8699 = vmatprep.subr.mxu0 0.0
  %8700 = vmatpush1.msra.mxu0 0.0
  %8701 = vmatprep.subr.mxu0 0.0
  %8702 = vmatpush1.msra.mxu0 0.0
  %8703 = vmatprep.subr.mxu0 0.0
  %8704 = vmatpush1.msra.mxu0 0.0
  %8705 = vmatprep.subr.mxu0 0.0
  %8706 = vmatpush1.msra.mxu0 0.0
  %8707 = vmatprep.subr.mxu0 0.0
  %8708 = vmatpush1.msra.mxu0 0.0
  %8709 = vmatprep.subr.mxu0 0.0
  %8710 = vmatpush1.msra.mxu0 0.0
  %8711 = vmatprep.subr.mxu0 0.0
  %8712 = vmatpush1.msra.mxu0 0.0
  %8713 = vmatprep.subr.mxu0 0.0
  %8714 = vmatpush1.msra.mxu0 0.0
  %8715 = vmatprep.subr.mxu0 0.0
  %8716 = vmatpush1.msra.mxu0 0.0
  %8717 = vmatprep.subr.mxu0 0.0
  %8718 = vmatpush1.msra.mxu0 0.0
  %8719 = vmatprep.subr.mxu0 0.0
  %8720 = vmatpush1.msra.mxu0 0.0
  %8721 = vmatprep.mubr.f32.mxu0 0.0
  %8722 = vmatmul.mubr.f32.gmra.mrb[0].mxu0 %v8626
  %v8723 = vpop.f32.mrb[0].mxu0
  %v8724 = vadd.f32 %v8655, %v8723
  %v8725 = vpop.f32.mrb[0].mxu0
  %8726 = vmatprep.mubr.f32.mxu0 0.0
  %8727 = vmatmul.mubr.f32.gmra.mrb[0].mxu0 %v8627
  %v8728 = vpop.f32.mrb[0].mxu0
  %v8729 = vadd.f32 %v8655, %v8728
  %v8730 = vpop.f32.mrb[0].mxu0
  %8731 = vmatprep.mubr.f32.mxu0 0.0
  %8732 = vmatmul.mubr.f32.gmra.mrb[0].mxu0 %v8628
  %v8733 = vpop.f32.mrb[0].mxu0
  %v8734 = vadd.f32 %v8655, %v8733
  %v8735 = vpop.f32.mrb[0].mxu0
  %8736 = vmatprep.mubr.f32.mxu0 0.0
  %8737 = vmatmul.mubr.f32.gmra.mrb[0].mxu0 %v8629
  %v8738 = vpop.f32.mrb[0].mxu0
  %v8739 = vadd.f32 %v8655, %v8738
  %v8740 = vpop.f32.mrb[0].mxu0
  %8741 = vmatprep.mubr.f32.mxu0 0.0
  %8742 = vmatmul.mubr.f32.gmra.mrb[0].mxu0 %v8630
  %v8743 = vpop.f32.mrb[0].mxu0
  %v8744 = vadd.f32 %v8655, %v8743
  %v8745 = vpop.f32.mrb[0].mxu0
  %8746 = vmatprep.mubr.f32.mxu0 0.0
  %8747 = vmatmul.mubr.f32.gmra.mrb[0].mxu0 %v8631
  %v8748 = vpop.f32.mrb[0].mxu0
  %v8749 = vadd.f32 %v8655, %v8748
  %v8750 = vpop.f32.mrb[0].mxu0
  %8751 = vmatprep.mubr.f32.mxu0 0.0
  %8752 = vmatmul.mubr.f32.gmra.mrb[0].mxu0 %v8632
  %v8753 = vpop.f32.mrb[0].mxu0
  %v8754 = vadd.f32 %v8655, %v8753
  %v8755 = vpop.f32.mrb[0].mxu0
  %8756 = vmatprep.mubr.f32.mxu0 0.0
  %8757 = vmatmul.mubr.f32.gmra.mrb[0].mxu0 %v8633
  %v8758 = vpop.f32.mrb[0].mxu0
  %v8759 = vadd.f32 %v8655, %v8758
  %v8760 = vpop.f32.mrb[0].mxu0
  %8761 = vdwg.mxu0
  %8762 = vst [vmem:[%s5] sm:$0xff] %v8724
  %8763 = vst [vmem:[%s5 + $0x8] sm:$0xff] %v8729
  %8764 = vst [vmem:[%s5 + $0x10] sm:$0xff] %v8734
  %8765 = vst [vmem:[%s5 + $0x18] sm:$0xff] %v8739
  %8766 = vst [vmem:[%s5 + $0x20] sm:$0xff] %v8744
  %8767 = vst [vmem:[%s5 + $0x28] sm:$0xff] %v8749
  %8768 = vst [vmem:[%s5 + $0x30] sm:$0xff] %v8754
  %8769 = vst [vmem:[%s5 + $0x38] sm:$0xff] %v8759
  // Predicated region
  $region22: #{druglikeness_forward.1} parent=0 // pred_check
    _
  $region23: #{druglikeness_forward.1} parent=0 // pred_check_branch
    %8771 = sbr.rel (0) target = $region25
  $region24: #{druglikeness_forward.1} parent=0 // pred_region
    _
  $region25: #{druglikeness_forward.1} parent=0 // pred_fallthru
    _
  // Predicated region
  $region26: #{druglikeness_forward.1} parent=0 // pred_check
    _
  $region27: #{druglikeness_forward.1} parent=0 // pred_check_branch
    %8773 = sbr.rel (0) target = $region29
  $region28: #{druglikeness_forward.1} parent=0 // pred_region
    _
  $region29: #{druglikeness_forward.1} parent=0 // pred_fallthru
    _

</llo_original>
